<compile_context>
chip_gen: v6e
topology: v6e:2x2x1
jax: 0.10.0
libtpu: 0.0.40
codegen_flags: <defaults>
</compile_context>

<pallas_src>
import functools

import jax
import jax.numpy as jnp
from jax.experimental import pallas as pl
from jax.experimental.pallas import tpu as pltpu


# ----------------------------------------------------------------------------
# Fused DecoderBlock kernel (one batch element per grid step)
# ----------------------------------------------------------------------------
def _decoder_block_kernel(has_skip, *refs):
    if has_skip:
        (x_ref, skip_ref, up_ref, w1_ref, s1_ref, b1_ref,
         w2_ref, s2_ref, b2_ref, ws_ref, bs_ref,
         out_ref, cat_pad, y1_pad, mx_pad, av_pad) = refs
    else:
        (x_ref, up_ref, w1_ref, s1_ref, b1_ref,
         w2_ref, s2_ref, b2_ref, ws_ref, bs_ref,
         out_ref, cat_pad, y1_pad, mx_pad, av_pad) = refs
        skip_ref = None

    H2, W2, Cout = out_ref.shape[1], out_ref.shape[2], out_ref.shape[3]
    Ct = cat_pad.shape[-1]
    Cin = x_ref.shape[-1]

    # ---- 1) bilinear x2 upsample (align_corners=True) as one MXU matmul ----
    x0 = x_ref[0].astype(jnp.float32)                        # (H*W, Cin)
    xu = jnp.dot(up_ref[...], x0,
                 preferred_element_type=jnp.float32)         # (H2*W2, Cin)
    xu3 = xu.reshape(H2, W2, Cin)

    # ---- 2) channel concat with skip; zero-pad(1) into VMEM scratch --------
    if has_skip:
        cat3 = jnp.concatenate(
            [xu3, skip_ref[0].astype(jnp.float32)], axis=-1)  # (H2, W2, Ct)
    else:
        cat3 = xu3
    cat_pad[...] = jnp.zeros((H2 + 2, W2 + 2, Ct), jnp.float32)
    cat_pad[1:1 + H2, 1:1 + W2, :] = cat3

    # single-matmul im2col 3x3 conv: (H2*W2, 9*C) @ (9*C, Cout), bf16 on MXU
    def conv3x3_bn_relu(xpad, w_ref, s_ref, b_ref):
        c = xpad.shape[-1]
        cols = [xpad[dy:dy + H2, dx:dx + W2, :].reshape(H2 * W2, c)
                for dy in range(3) for dx in range(3)]
        patches = jnp.concatenate(cols, axis=1).astype(jnp.bfloat16)
        y = jnp.dot(patches, w_ref[...],
                    preferred_element_type=jnp.float32)       # (H2*W2, Cout)
        return jnp.maximum(y * s_ref[...] + b_ref[...], 0.0)  # folded BN + ReLU

    # ---- 3) conv1 -> BN -> ReLU --------------------------------------------
    y1 = conv3x3_bn_relu(cat_pad[...], w1_ref, s1_ref, b1_ref)

    # ---- 4) conv2 -> BN -> ReLU (input never leaves VMEM) ------------------
    y1_pad[...] = jnp.zeros((H2 + 2, W2 + 2, Cout), jnp.float32)
    y1_pad[1:1 + H2, 1:1 + W2, :] = y1.reshape(H2, W2, Cout)
    y2 = conv3x3_bn_relu(y1_pad[...], w2_ref, s2_ref, b2_ref)
    y2_3 = y2.reshape(H2, W2, Cout)

    # TODO(synk): CPM module definition is not provided in the source file;
    #             it is applied as identity here.

    # ---- 5) SpatialAttention: channel max/mean -> 7x7 conv -> sigmoid ------
    mx_pad[...] = jnp.zeros((H2 + 6, W2 + 6), jnp.float32)
    av_pad[...] = jnp.zeros((H2 + 6, W2 + 6), jnp.float32)
    mx_pad[3:3 + H2, 3:3 + W2] = jnp.max(y2_3, axis=-1)
    av_pad[3:3 + H2, 3:3 + W2] = jnp.mean(y2_3, axis=-1)
    mx = mx_pad[...]
    av = av_pad[...]
    acc = jnp.zeros((H2, W2), jnp.float32) + bs_ref[0]
    # TODO(synk): for large spatial sizes restructure the 7x7 taps with
    #             pltpu.roll / a lane-dense map layout; negligible at 16x16.
    for dy in range(7):
        for dx in range(7):
            acc += ws_ref[dy * 7 + dx] * mx[dy:dy + H2, dx:dx + W2]        # max ch
            acc += ws_ref[49 + dy * 7 + dx] * av[dy:dy + H2, dx:dx + W2]   # mean ch
    gate = jax.nn.sigmoid(acc)                                # (H2, W2)

    out_ref[0] = y2_3 * gate[:, :, None]


# ----------------------------------------------------------------------------
# Wrapper: parameter packing + pallas_call (NCHW in / NCHW out)
# ----------------------------------------------------------------------------
def _upsample2x_matrix(n_in, n_out):
    """Row-interpolation matrix of UpsamplingBilinear2d (align_corners=True)."""
    if n_in == 1:
        return jnp.ones((n_out, 1), jnp.float32)
    src = jnp.arange(n_out, dtype=jnp.float32) * (n_in - 1) / (n_out - 1)
    i0 = jnp.floor(src).astype(jnp.int32)
    i1 = jnp.minimum(i0 + 1, n_in - 1)
    f = src - i0.astype(jnp.float32)
    rows = jnp.arange(n_out)
    m = jnp.zeros((n_out, n_in), jnp.float32)
    m = m.at[rows, i0].add(1.0 - f)
    m = m.at[rows, i1].add(f)
    return m


def _fold_bn(gamma, beta, mean, var, eps=1e-5):
    scale = gamma / jnp.sqrt(var + eps)
    shift = beta - mean * scale
    return scale[None, :].astype(jnp.float32), shift[None, :].astype(jnp.float32)


def _pack_conv(w_oihw):
    """PyTorch OIHW conv weight -> im2col (kh*kw*Cin, Cout), bf16 for the MXU."""
    cout = w_oihw.shape[0]
    return (jnp.transpose(w_oihw, (2, 3, 1, 0))          # -> HWIO
            .reshape(-1, cout).astype(jnp.bfloat16))


@jax.jit
def decoder_block_forward(x_nchw, skip_nchw, params):
    N, Cin, H, W = x_nchw.shape
    H2, W2 = 2 * H, 2 * W
    has_skip = skip_nchw is not None
    Cs = skip_nchw.shape[1] if has_skip else 0
    Ct = Cin + Cs
    Cout = params["conv1_w"].shape[0]

    # weights / folded BN / spatial-attention taps
    w1 = _pack_conv(params["conv1_w"])                    # (9*Ct,   Cout) bf16
    w2 = _pack_conv(params["conv2_w"])                    # (9*Cout, Cout) bf16
    s1, b1 = _fold_bn(params["bn1_gamma"], params["bn1_beta"],
                      params["bn1_mean"], params["bn1_var"])
    s2, b2 = _fold_bn(params["bn2_gamma"], params["bn2_beta"],
                      params["bn2_mean"], params["bn2_var"])
    ws = params["spat_w"].reshape(98).astype(jnp.float32)  # [c*49+dy*7+dx], c0=max
    bs = params["spat_b"].astype(jnp.float32)              # (1,)

    # combined x2 bilinear (align_corners) operator: (H2*W2, H*W)
    u_h = _upsample2x_matrix(H, H2)
    u_w = _upsample2x_matrix(W, W2)
    up = jnp.einsum("ah,bw->abhw", u_h, u_w).reshape(H2 * W2, H * W)

    # activations: NHWC, bf16 across HBM, spatial flattened (channels on lanes)
    xf = (jnp.transpose(x_nchw, (0, 2, 3, 1))
          .reshape(N, H * W, Cin).astype(jnp.bfloat16))
    inputs = [xf]
    in_specs = [pl.BlockSpec((1, H * W, Cin), lambda n: (n, 0, 0))]
    if has_skip:
        sk = jnp.transpose(skip_nchw, (0, 2, 3, 1)).astype(jnp.bfloat16)
        inputs.append(sk)
        in_specs.append(pl.BlockSpec((1, H2, W2, Cs), lambda n: (n, 0, 0, 0)))
    inputs += [up, w1, s1, b1, w2, s2, b2, ws, bs]
    in_specs += [
        pl.BlockSpec((H2 * W2, H * W), lambda n: (0, 0)),
        pl.BlockSpec((9 * Ct, Cout), lambda n: (0, 0)),
        pl.BlockSpec((1, Cout), lambda n: (0, 0)),
        pl.BlockSpec((1, Cout), lambda n: (0, 0)),
        pl.BlockSpec((9 * Cout, Cout), lambda n: (0, 0)),
        pl.BlockSpec((1, Cout), lambda n: (0, 0)),
        pl.BlockSpec((1, Cout), lambda n: (0, 0)),
        pl.BlockSpec(memory_space=pltpu.SMEM),
        pl.BlockSpec(memory_space=pltpu.SMEM),
    ]

    out_nhwc = pl.pallas_call(
        functools.partial(_decoder_block_kernel, has_skip),
        out_shape=jax.ShapeDtypeStruct((N, H2, W2, Cout), jnp.float32),
        grid=(N,),
        in_specs=in_specs,
        out_specs=pl.BlockSpec((1, H2, W2, Cout), lambda n: (n, 0, 0, 0)),
        scratch_shapes=[
            pltpu.VMEM((H2 + 2, W2 + 2, Ct), jnp.float32),    # padded concat
            pltpu.VMEM((H2 + 2, W2 + 2, Cout), jnp.float32),  # padded conv1 out
            pltpu.VMEM((H2 + 6, W2 + 6), jnp.float32),        # padded max map
            pltpu.VMEM((H2 + 6, W2 + 6), jnp.float32),        # padded mean map
        ],
        compiler_params=pltpu.CompilerParams(
            dimension_semantics=("parallel",)),
    )(*inputs)

    return jnp.transpose(out_nhwc, (0, 3, 1, 2))              # -> NCHW


# ----------------------------------------------------------------------------
# Pure-JAX reference (mirrors the PyTorch module; CPM = identity)
# ----------------------------------------------------------------------------
def _upsample2x_ref(x_nchw):
    N, C, H, W = x_nchw.shape

    def idx(n_in, n_out):
        if n_in == 1:
            z = jnp.zeros((n_out,), jnp.int32)
            return z, z, jnp.zeros((n_out,), jnp.float32)
        src = jnp.arange(n_out, dtype=jnp.float32) * (n_in - 1) / (n_out - 1)
        i0 = jnp.floor(src).astype(jnp.int32)
        i1 = jnp.minimum(i0 + 1, n_in - 1)
        return i0, i1, src - i0.astype(jnp.float32)

    i0, i1, fh = idx(H, 2 * H)
    x = (x_nchw[:, :, i0, :] * (1.0 - fh)[None, None, :, None]
         + x_nchw[:, :, i1, :] * fh[None, None, :, None])
    j0, j1, fw = idx(W, 2 * W)
    x = x[:, :, :, j0] * (1.0 - fw) + x[:, :, :, j1] * fw
    return x


def decoder_block_reference(x_nchw, skip_nchw, params, eps=1e-5):
    dn = ("NCHW", "OIHW", "NCHW")
    hp = jax.lax.Precision.HIGHEST

    def bn(x, g, b, m, v):
        s = g / jnp.sqrt(v + eps)
        return x * s[None, :, None, None] + (b - m * s)[None, :, None, None]

    x = _upsample2x_ref(x_nchw)
    if skip_nchw is not None:
        x = jnp.concatenate([x, skip_nchw], axis=1)
    x = jax.lax.conv_general_dilated(x, params["conv1_w"], (1, 1),
                                     ((1, 1), (1, 1)), dimension_numbers=dn,
                                     precision=hp)
    x = jnp.maximum(bn(x, params["bn1_gamma"], params["bn1_beta"],
                       params["bn1_mean"], params["bn1_var"]), 0.0)
    x = jax.lax.conv_general_dilated(x, params["conv2_w"], (1, 1),
                                     ((1, 1), (1, 1)), dimension_numbers=dn,
                                     precision=hp)
    x = jnp.maximum(bn(x, params["bn2_gamma"], params["bn2_beta"],
                       params["bn2_mean"], params["bn2_var"]), 0.0)
    mx = jnp.max(x, axis=1, keepdims=True)
    av = jnp.mean(x, axis=1, keepdims=True)
    a = jax.lax.conv_general_dilated(jnp.concatenate([mx, av], axis=1),
                                     params["spat_w"], (1, 1),
                                     ((3, 3), (3, 3)), dimension_numbers=dn,
                                     precision=hp)
    gate = jax.nn.sigmoid(a + params["spat_b"][None, :, None, None])
    return x * gate


# ----------------------------------------------------------------------------
# Deterministic synthetic parameters (PyTorch layouts: OIHW convs, BN stats)
# ----------------------------------------------------------------------------
def init_params(key, in_channels, skip_channels, out_channels):
    keys = jax.random.split(key, 12)
    ct = in_channels + skip_channels

    def bn(kg, kb, km, kv, c):
        return (1.0 + 0.1 * jax.random.normal(kg, (c,), jnp.float32),
                0.1 * jax.random.normal(kb, (c,), jnp.float32),
                0.1 * jax.random.normal(km, (c,), jnp.float32),
                1.0 + 0.1 * jax.random.uniform(kv, (c,), jnp.float32))

    g1, b1, m1, v1 = bn(*keys[1:5], out_channels)
    g2, b2, m2, v2 = bn(*keys[6:10], out_channels)
    return dict(
        conv1_w=0.1 * jax.random.normal(keys[0], (out_channels, ct, 3, 3),
                                        jnp.float32),
        bn1_gamma=g1, bn1_beta=b1, bn1_mean=m1, bn1_var=v1,
        conv2_w=0.1 * jax.random.normal(keys[5], (out_channels, out_channels,
                                                  3, 3), jnp.float32),
        bn2_gamma=g2, bn2_beta=b2, bn2_mean=m2, bn2_var=v2,
        spat_w=0.1 * jax.random.normal(keys[10], (1, 2, 7, 7), jnp.float32),
        spat_b=0.1 * jax.random.normal(keys[11], (1,), jnp.float32),
    )


if __name__ == "__main__":
    N = 2
    in_channels = 8
    skip_channels = 4
    out_channels = 8
    H = W = 8                       # input spatial; upsampled to 16x16

    key = jax.random.PRNGKey(0)
    kx, ks, kp = jax.random.split(key, 3)
    x = jax.random.normal(kx, (N, in_channels, H, W), jnp.float32)       # NCHW
    skip = jax.random.normal(ks, (N, skip_channels, 2 * H, 2 * W),
                             jnp.float32)                                # NCHW
    params = init_params(kp, in_channels, skip_channels, out_channels)

    out = jax.block_until_ready(decoder_block_forward(x, skip, params))
    assert out.shape == (N, out_channels, 2 * H, 2 * W), out.shape
    assert bool(jnp.all(jnp.isfinite(out)))

    # numerical check vs pure-JAX reference (bf16 MXU inputs -> loose tolerance)
    ref = jax.block_until_ready(decoder_block_reference(x, skip, params))
    err = float(jnp.max(jnp.abs(out - ref)))
    assert err < 0.1, f"max |kernel - reference| = {err}"
    print("KERNEL_OK")
</pallas_src>

<mosaic_0001>
module attributes {stable_mosaic.version = 11 : i64} {
  func.func private @main(%arg0: i32) attributes {dimension_semantics = [#tpu.dimension_semantics<core_parallel>], iteration_bounds = array<i64: 2>, tpu.core_type = #tpu.core_type<sc_scalar_subcore>, window_params = []} {
    return
  }
}

module attributes {stable_mosaic.version = 11 : i64} {
  func.func private @main(%arg0: i32) attributes {dimension_semantics = [#tpu.dimension_semantics<core_parallel>], iteration_bounds = array<i64: 2>, tpu.core_type = #tpu.core_type<sc_scalar_subcore>, window_params = []} {
    return
  }
}

module attributes {stable_mosaic.version = 11 : i64} {
  func.func @_decoder_block_kernel(%arg0: i32, %arg1: memref<1x64x8xbf16, #tpu.memory_space<vmem>>, %arg2: memref<1x16x16x4xbf16, #tpu.memory_space<vmem>>, %arg3: memref<256x64xf32, #tpu.memory_space<vmem>>, %arg4: memref<108x8xbf16, #tpu.memory_space<vmem>>, %arg5: memref<1x8xf32, #tpu.memory_space<vmem>>, %arg6: memref<1x8xf32, #tpu.memory_space<vmem>>, %arg7: memref<72x8xbf16, #tpu.memory_space<vmem>>, %arg8: memref<1x8xf32, #tpu.memory_space<vmem>>, %arg9: memref<1x8xf32, #tpu.memory_space<vmem>>, %arg10: memref<98xf32, #tpu.memory_space<smem>>, %arg11: memref<1xf32, #tpu.memory_space<smem>>, %arg12: memref<1x16x16x8xf32, #tpu.memory_space<vmem>>, %arg13: memref<18x18x12xf32, #tpu.memory_space<vmem>>, %arg14: memref<18x18x8xf32, #tpu.memory_space<vmem>>, %arg15: memref<22x22xf32, #tpu.memory_space<vmem>>, %arg16: memref<22x22xf32, #tpu.memory_space<vmem>>) attributes {dimension_semantics = [#tpu.dimension_semantics<parallel>], iteration_bounds = array<i64: 2>, scalar_prefetch = 0 : i64, scratch_operands = 4 : i64, tpu.core_type = #tpu.core_type<tc>, window_params = [{transform_indices = @transform_0, window_bounds = array<i64: 1, 64, 8>}, {transform_indices = @transform_1, window_bounds = array<i64: 1, 16, 16, 4>}, {pipeline_mode = #tpu.pipeline_mode<synchronous>, transform_indices = @transform_2, window_bounds = array<i64: 256, 64>}, {pipeline_mode = #tpu.pipeline_mode<synchronous>, transform_indices = @transform_3, window_bounds = array<i64: 108, 8>}, {pipeline_mode = #tpu.pipeline_mode<synchronous>, transform_indices = @transform_4, window_bounds = array<i64: 1, 8>}, {pipeline_mode = #tpu.pipeline_mode<synchronous>, transform_indices = @transform_5, window_bounds = array<i64: 1, 8>}, {pipeline_mode = #tpu.pipeline_mode<synchronous>, transform_indices = @transform_6, window_bounds = array<i64: 72, 8>}, {pipeline_mode = #tpu.pipeline_mode<synchronous>, transform_indices = @transform_7, window_bounds = array<i64: 1, 8>}, {pipeline_mode = #tpu.pipeline_mode<synchronous>, transform_indices = @transform_8, window_bounds = array<i64: 1, 8>}, {transform_indices = @transform_9, window_bounds = array<i64: 98>}, {transform_indices = @transform_10, window_bounds = array<i64: 1>}, {transform_indices = @transform_11, window_bounds = array<i64: 1, 16, 16, 8>}]} {
    %c0 = arith.constant 0 : index
    %c0_0 = arith.constant 0 : index
    %c0_1 = arith.constant 0 : index
    %0 = vector.load %arg1[%c0, %c0_0, %c0_1] : memref<1x64x8xbf16, #tpu.memory_space<vmem>>, vector<1x64x8xbf16>
    %1 = vector.shape_cast %0 : vector<1x64x8xbf16> to vector<64x8xbf16>
    %2 = arith.extf %1 : vector<64x8xbf16> to vector<64x8xf32>
    %c0_2 = arith.constant 0 : index
    %c0_3 = arith.constant 0 : index
    %3 = vector.load %arg3[%c0_2, %c0_3] : memref<256x64xf32, #tpu.memory_space<vmem>>, vector<256x64xf32>
    %cst = arith.constant dense<0.000000e+00> : vector<256x8xf32>
    %4 = tpu.matmul %3, %2, %cst {dimension_numbers = #tpu.dot_dimension_numbers<[1], [0], [0], [1], [0, 0, 1, 1], [], []>} : vector<256x64xf32>, vector<64x8xf32>, vector<256x8xf32> -> vector<256x8xf32>
    %5 = vector.shape_cast %4 : vector<256x8xf32> to vector<16x16x8xf32>
    %c0_4 = arith.constant 0 : index
    %c0_5 = arith.constant 0 : index
    %c0_6 = arith.constant 0 : index
    %c0_7 = arith.constant 0 : index
    %6 = vector.load %arg2[%c0_4, %c0_5, %c0_6, %c0_7] : memref<1x16x16x4xbf16, #tpu.memory_space<vmem>>, vector<1x16x16x4xbf16>
    %7 = vector.shape_cast %6 : vector<1x16x16x4xbf16> to vector<16x16x4xbf16>
    %8 = arith.extf %7 : vector<16x16x4xbf16> to vector<16x16x4xf32>
    %9 = tpu.concatenate %5, %8 in 2 : vector<16x16x8xf32>, vector<16x16x4xf32> -> vector<16x16x12xf32>
    %cst_8 = arith.constant 0.000000e+00 : f32
    %10 = vector.broadcast %cst_8 : f32 to vector<18x18x12xf32>
    %c0_9 = arith.constant 0 : index
    %c0_10 = arith.constant 0 : index
    %c0_11 = arith.constant 0 : index
    %11 = vector.load %arg13[%c0_9, %c0_10, %c0_11] : memref<18x18x12xf32, #tpu.memory_space<vmem>>, vector<18x18x12xf32>
    tpu.vector_store %arg13[%c0_9, %c0_10, %c0_11], %10 {strides = array<i32>} : memref<18x18x12xf32, #tpu.memory_space<vmem>>, vector<18x18x12xf32>,
    %c1 = arith.constant 1 : index
    %c1_12 = arith.constant 1 : index
    %c0_13 = arith.constant 0 : index
    %12 = vector.load %arg13[%c1, %c1_12, %c0_13] : memref<18x18x12xf32, #tpu.memory_space<vmem>>, vector<16x16x12xf32>
    tpu.vector_store %arg13[%c1, %c1_12, %c0_13], %9 {strides = array<i32>} : memref<18x18x12xf32, #tpu.memory_space<vmem>>, vector<16x16x12xf32>,
    %c0_14 = arith.constant 0 : index
    %c0_15 = arith.constant 0 : index
    %c0_16 = arith.constant 0 : index
    %13 = vector.load %arg13[%c0_14, %c0_15, %c0_16] : memref<18x18x12xf32, #tpu.memory_space<vmem>>, vector<18x18x12xf32>
    %14 = vector.extract_strided_slice %13 {offsets = [0, 0, 0], sizes = [16, 16, 12], strides = [1, 1, 1]} : vector<18x18x12xf32> to vector<16x16x12xf32>
    %15 = vector.shape_cast %14 : vector<16x16x12xf32> to vector<256x12xf32>
    %16 = vector.extract_strided_slice %13 {offsets = [0, 1, 0], sizes = [16, 16, 12], strides = [1, 1, 1]} : vector<18x18x12xf32> to vector<16x16x12xf32>
    %17 = vector.shape_cast %16 : vector<16x16x12xf32> to vector<256x12xf32>
    %18 = vector.extract_strided_slice %13 {offsets = [0, 2, 0], sizes = [16, 16, 12], strides = [1, 1, 1]} : vector<18x18x12xf32> to vector<16x16x12xf32>
    %19 = vector.shape_cast %18 : vector<16x16x12xf32> to vector<256x12xf32>
    %20 = vector.extract_strided_slice %13 {offsets = [1, 0, 0], sizes = [16, 16, 12], strides = [1, 1, 1]} : vector<18x18x12xf32> to vector<16x16x12xf32>
    %21 = vector.shape_cast %20 : vector<16x16x12xf32> to vector<256x12xf32>
    %22 = vector.extract_strided_slice %13 {offsets = [1, 1, 0], sizes = [16, 16, 12], strides = [1, 1, 1]} : vector<18x18x12xf32> to vector<16x16x12xf32>
    %23 = vector.shape_cast %22 : vector<16x16x12xf32> to vector<256x12xf32>
    %24 = vector.extract_strided_slice %13 {offsets = [1, 2, 0], sizes = [16, 16, 12], strides = [1, 1, 1]} : vector<18x18x12xf32> to vector<16x16x12xf32>
    %25 = vector.shape_cast %24 : vector<16x16x12xf32> to vector<256x12xf32>
    %26 = vector.extract_strided_slice %13 {offsets = [2, 0, 0], sizes = [16, 16, 12], strides = [1, 1, 1]} : vector<18x18x12xf32> to vector<16x16x12xf32>
    %27 = vector.shape_cast %26 : vector<16x16x12xf32> to vector<256x12xf32>
    %28 = vector.extract_strided_slice %13 {offsets = [2, 1, 0], sizes = [16, 16, 12], strides = [1, 1, 1]} : vector<18x18x12xf32> to vector<16x16x12xf32>
    %29 = vector.shape_cast %28 : vector<16x16x12xf32> to vector<256x12xf32>
    %30 = vector.extract_strided_slice %13 {offsets = [2, 2, 0], sizes = [16, 16, 12], strides = [1, 1, 1]} : vector<18x18x12xf32> to vector<16x16x12xf32>
    %31 = vector.shape_cast %30 : vector<16x16x12xf32> to vector<256x12xf32>
    %32 = tpu.concatenate %15, %17, %19, %21, %23, %25, %27, %29, %31 in 1 : vector<256x12xf32>, vector<256x12xf32>, vector<256x12xf32>, vector<256x12xf32>, vector<256x12xf32>, vector<256x12xf32>, vector<256x12xf32>, vector<256x12xf32>, vector<256x12xf32> -> vector<256x108xf32>
    %33 = arith.truncf %32 : vector<256x108xf32> to vector<256x108xbf16>
    %c0_17 = arith.constant 0 : index
    %c0_18 = arith.constant 0 : index
    %34 = vector.load %arg4[%c0_17, %c0_18] : memref<108x8xbf16, #tpu.memory_space<vmem>>, vector<108x8xbf16>
    %cst_19 = arith.constant dense<0.000000e+00> : vector<256x8xf32>
    %35 = tpu.matmul %33, %34, %cst_19 {dimension_numbers = #tpu.dot_dimension_numbers<[1], [0], [0], [1], [0, 0, 1, 1], [], []>} : vector<256x108xbf16>, vector<108x8xbf16>, vector<256x8xf32> -> vector<256x8xf32>
    %c0_20 = arith.constant 0 : index
    %c0_21 = arith.constant 0 : index
    %36 = vector.load %arg5[%c0_20, %c0_21] : memref<1x8xf32, #tpu.memory_space<vmem>>, vector<1x8xf32>
    %37 = vector.broadcast %36 : vector<1x8xf32> to vector<256x8xf32>
    %38 = arith.mulf %35, %37 : vector<256x8xf32>
    %c0_22 = arith.constant 0 : index
    %c0_23 = arith.constant 0 : index
    %39 = vector.load %arg6[%c0_22, %c0_23] : memref<1x8xf32, #tpu.memory_space<vmem>>, vector<1x8xf32>
    %40 = vector.broadcast %39 : vector<1x8xf32> to vector<256x8xf32>
    %41 = arith.addf %38, %40 : vector<256x8xf32>
    %cst_24 = arith.constant 0.000000e+00 : f32
    %42 = vector.broadcast %cst_24 : f32 to vector<256x8xf32>
    %43 = arith.maximumf %41, %42 : vector<256x8xf32>
    %cst_25 = arith.constant 0.000000e+00 : f32
    %44 = vector.broadcast %cst_25 : f32 to vector<18x18x8xf32>
    %c0_26 = arith.constant 0 : index
    %c0_27 = arith.constant 0 : index
    %c0_28 = arith.constant 0 : index
    %45 = vector.load %arg14[%c0_26, %c0_27, %c0_28] : memref<18x18x8xf32, #tpu.memory_space<vmem>>, vector<18x18x8xf32>
    tpu.vector_store %arg14[%c0_26, %c0_27, %c0_28], %44 {strides = array<i32>} : memref<18x18x8xf32, #tpu.memory_space<vmem>>, vector<18x18x8xf32>,
    %46 = vector.shape_cast %43 : vector<256x8xf32> to vector<16x16x8xf32>
    %c1_29 = arith.constant 1 : index
    %c1_30 = arith.constant 1 : index
    %c0_31 = arith.constant 0 : index
    %47 = vector.load %arg14[%c1_29, %c1_30, %c0_31] : memref<18x18x8xf32, #tpu.memory_space<vmem>>, vector<16x16x8xf32>
    tpu.vector_store %arg14[%c1_29, %c1_30, %c0_31], %46 {strides = array<i32>} : memref<18x18x8xf32, #tpu.memory_space<vmem>>, vector<16x16x8xf32>,
    %c0_32 = arith.constant 0 : index
    %c0_33 = arith.constant 0 : index
    %c0_34 = arith.constant 0 : index
    %48 = vector.load %arg14[%c0_32, %c0_33, %c0_34] : memref<18x18x8xf32, #tpu.memory_space<vmem>>, vector<18x18x8xf32>
    %49 = vector.extract_strided_slice %48 {offsets = [0, 0, 0], sizes = [16, 16, 8], strides = [1, 1, 1]} : vector<18x18x8xf32> to vector<16x16x8xf32>
    %50 = vector.shape_cast %49 : vector<16x16x8xf32> to vector<256x8xf32>
    %51 = vector.extract_strided_slice %48 {offsets = [0, 1, 0], sizes = [16, 16, 8], strides = [1, 1, 1]} : vector<18x18x8xf32> to vector<16x16x8xf32>
    %52 = vector.shape_cast %51 : vector<16x16x8xf32> to vector<256x8xf32>
    %53 = vector.extract_strided_slice %48 {offsets = [0, 2, 0], sizes = [16, 16, 8], strides = [1, 1, 1]} : vector<18x18x8xf32> to vector<16x16x8xf32>
    %54 = vector.shape_cast %53 : vector<16x16x8xf32> to vector<256x8xf32>
    %55 = vector.extract_strided_slice %48 {offsets = [1, 0, 0], sizes = [16, 16, 8], strides = [1, 1, 1]} : vector<18x18x8xf32> to vector<16x16x8xf32>
    %56 = vector.shape_cast %55 : vector<16x16x8xf32> to vector<256x8xf32>
    %57 = vector.extract_strided_slice %48 {offsets = [1, 1, 0], sizes = [16, 16, 8], strides = [1, 1, 1]} : vector<18x18x8xf32> to vector<16x16x8xf32>
    %58 = vector.shape_cast %57 : vector<16x16x8xf32> to vector<256x8xf32>
    %59 = vector.extract_strided_slice %48 {offsets = [1, 2, 0], sizes = [16, 16, 8], strides = [1, 1, 1]} : vector<18x18x8xf32> to vector<16x16x8xf32>
    %60 = vector.shape_cast %59 : vector<16x16x8xf32> to vector<256x8xf32>
    %61 = vector.extract_strided_slice %48 {offsets = [2, 0, 0], sizes = [16, 16, 8], strides = [1, 1, 1]} : vector<18x18x8xf32> to vector<16x16x8xf32>
    %62 = vector.shape_cast %61 : vector<16x16x8xf32> to vector<256x8xf32>
    %63 = vector.extract_strided_slice %48 {offsets = [2, 1, 0], sizes = [16, 16, 8], strides = [1, 1, 1]} : vector<18x18x8xf32> to vector<16x16x8xf32>
    %64 = vector.shape_cast %63 : vector<16x16x8xf32> to vector<256x8xf32>
    %65 = vector.extract_strided_slice %48 {offsets = [2, 2, 0], sizes = [16, 16, 8], strides = [1, 1, 1]} : vector<18x18x8xf32> to vector<16x16x8xf32>
    %66 = vector.shape_cast %65 : vector<16x16x8xf32> to vector<256x8xf32>
    %67 = tpu.concatenate %50, %52, %54, %56, %58, %60, %62, %64, %66 in 1 : vector<256x8xf32>, vector<256x8xf32>, vector<256x8xf32>, vector<256x8xf32>, vector<256x8xf32>, vector<256x8xf32>, vector<256x8xf32>, vector<256x8xf32>, vector<256x8xf32> -> vector<256x72xf32>
    %68 = arith.truncf %67 : vector<256x72xf32> to vector<256x72xbf16>
    %c0_35 = arith.constant 0 : index
    %c0_36 = arith.constant 0 : index
    %69 = vector.load %arg7[%c0_35, %c0_36] : memref<72x8xbf16, #tpu.memory_space<vmem>>, vector<72x8xbf16>
    %cst_37 = arith.constant dense<0.000000e+00> : vector<256x8xf32>
    %70 = tpu.matmul %68, %69, %cst_37 {dimension_numbers = #tpu.dot_dimension_numbers<[1], [0], [0], [1], [0, 0, 1, 1], [], []>} : vector<256x72xbf16>, vector<72x8xbf16>, vector<256x8xf32> -> vector<256x8xf32>
    %c0_38 = arith.constant 0 : index
    %c0_39 = arith.constant 0 : index
    %71 = vector.load %arg8[%c0_38, %c0_39] : memref<1x8xf32, #tpu.memory_space<vmem>>, vector<1x8xf32>
    %72 = vector.broadcast %71 : vector<1x8xf32> to vector<256x8xf32>
    %73 = arith.mulf %70, %72 : vector<256x8xf32>
    %c0_40 = arith.constant 0 : index
    %c0_41 = arith.constant 0 : index
    %74 = vector.load %arg9[%c0_40, %c0_41] : memref<1x8xf32, #tpu.memory_space<vmem>>, vector<1x8xf32>
    %75 = vector.broadcast %74 : vector<1x8xf32> to vector<256x8xf32>
    %76 = arith.addf %73, %75 : vector<256x8xf32>
    %cst_42 = arith.constant 0.000000e+00 : f32
    %77 = vector.broadcast %cst_42 : f32 to vector<256x8xf32>
    %78 = arith.maximumf %76, %77 : vector<256x8xf32>
    %79 = vector.shape_cast %78 : vector<256x8xf32> to vector<16x16x8xf32>
    %cst_43 = arith.constant 0.000000e+00 : f32
    %80 = vector.broadcast %cst_43 : f32 to vector<22x22xf32>
    %c0_44 = arith.constant 0 : index
    %c0_45 = arith.constant 0 : index
    %81 = vector.load %arg15[%c0_44, %c0_45] : memref<22x22xf32, #tpu.memory_space<vmem>>, vector<22x22xf32>
    tpu.vector_store %arg15[%c0_44, %c0_45], %80 {strides = array<i32>} : memref<22x22xf32, #tpu.memory_space<vmem>>, vector<22x22xf32>,
    %cst_46 = arith.constant 0.000000e+00 : f32
    %82 = vector.broadcast %cst_46 : f32 to vector<22x22xf32>
    %c0_47 = arith.constant 0 : index
    %c0_48 = arith.constant 0 : index
    %83 = vector.load %arg16[%c0_47, %c0_48] : memref<22x22xf32, #tpu.memory_space<vmem>>, vector<22x22xf32>
    tpu.vector_store %arg16[%c0_47, %c0_48], %82 {strides = array<i32>} : memref<22x22xf32, #tpu.memory_space<vmem>>, vector<22x22xf32>,
    %cst_49 = arith.constant dense<0xFF800000> : vector<16x16xf32>
    %84 = vector.multi_reduction <maximumf>, %79, %cst_49 [2] : vector<16x16x8xf32> to vector<16x16xf32>
    %c3 = arith.constant 3 : index
    %c3_50 = arith.constant 3 : index
    %85 = vector.load %arg15[%c3, %c3_50] : memref<22x22xf32, #tpu.memory_space<vmem>>, vector<16x16xf32>
    tpu.vector_store %arg15[%c3, %c3_50], %84 {strides = array<i32>} : memref<22x22xf32, #tpu.memory_space<vmem>>, vector<16x16xf32>,
    %cst_51 = arith.constant dense<0.000000e+00> : vector<16x16xf32>
    %86 = vector.multi_reduction <add>, %79, %cst_51 [2] : vector<16x16x8xf32> to vector<16x16xf32>
    %cst_52 = arith.constant 8.000000e+00 : f32
    %87 = vector.broadcast %cst_52 : f32 to vector<16x16xf32>
    %88 = arith.divf %86, %87 : vector<16x16xf32>
    %c3_53 = arith.constant 3 : index
    %c3_54 = arith.constant 3 : index
    %89 = vector.load %arg16[%c3_53, %c3_54] : memref<22x22xf32, #tpu.memory_space<vmem>>, vector<16x16xf32>
    tpu.vector_store %arg16[%c3_53, %c3_54], %88 {strides = array<i32>} : memref<22x22xf32, #tpu.memory_space<vmem>>, vector<16x16xf32>,
    %c0_55 = arith.constant 0 : index
    %c0_56 = arith.constant 0 : index
    %90 = vector.load %arg15[%c0_55, %c0_56] : memref<22x22xf32, #tpu.memory_space<vmem>>, vector<22x22xf32>
    %c0_57 = arith.constant 0 : index
    %c0_58 = arith.constant 0 : index
    %91 = vector.load %arg16[%c0_57, %c0_58] : memref<22x22xf32, #tpu.memory_space<vmem>>, vector<22x22xf32>
    %cst_59 = arith.constant 0.000000e+00 : f32
    %92 = vector.broadcast %cst_59 : f32 to vector<16x16xf32>
    %c0_60 = arith.constant 0 : index
    %93 = memref.load %arg11[%c0_60] : memref<1xf32, #tpu.memory_space<smem>>
    %94 = vector.broadcast %93 : f32 to vector<16x16xf32>
    %95 = arith.addf %92, %94 : vector<16x16xf32>
    %c0_61 = arith.constant 0 : index
    %96 = memref.load %arg10[%c0_61] : memref<98xf32, #tpu.memory_space<smem>>
    %97 = vector.extract_strided_slice %90 {offsets = [0, 0], sizes = [16, 16], strides = [1, 1]} : vector<22x22xf32> to vector<16x16xf32>
    %98 = vector.broadcast %96 : f32 to vector<16x16xf32>
    %99 = arith.mulf %98, %97 : vector<16x16xf32>
    %100 = arith.addf %95, %99 : vector<16x16xf32>
    %c49 = arith.constant 49 : index
    %101 = memref.load %arg10[%c49] : memref<98xf32, #tpu.memory_space<smem>>
    %102 = vector.extract_strided_slice %91 {offsets = [0, 0], sizes = [16, 16], strides = [1, 1]} : vector<22x22xf32> to vector<16x16xf32>
    %103 = vector.broadcast %101 : f32 to vector<16x16xf32>
    %104 = arith.mulf %103, %102 : vector<16x16xf32>
    %105 = arith.addf %100, %104 : vector<16x16xf32>
    %c1_62 = arith.constant 1 : index
    %106 = memref.load %arg10[%c1_62] : memref<98xf32, #tpu.memory_space<smem>>
    %107 = vector.extract_strided_slice %90 {offsets = [0, 1], sizes = [16, 16], strides = [1, 1]} : vector<22x22xf32> to vector<16x16xf32>
    %108 = vector.broadcast %106 : f32 to vector<16x16xf32>
    %109 = arith.mulf %108, %107 : vector<16x16xf32>
    %110 = arith.addf %105, %109 : vector<16x16xf32>
    %c50 = arith.constant 50 : index
    %111 = memref.load %arg10[%c50] : memref<98xf32, #tpu.memory_space<smem>>
    %112 = vector.extract_strided_slice %91 {offsets = [0, 1], sizes = [16, 16], strides = [1, 1]} : vector<22x22xf32> to vector<16x16xf32>
    %113 = vector.broadcast %111 : f32 to vector<16x16xf32>
    %114 = arith.mulf %113, %112 : vector<16x16xf32>
    %115 = arith.addf %110, %114 : vector<16x16xf32>
    %c2 = arith.constant 2 : index
    %116 = memref.load %arg10[%c2] : memref<98xf32, #tpu.memory_space<smem>>
    %117 = vector.extract_strided_slice %90 {offsets = [0, 2], sizes = [16, 16], strides = [1, 1]} : vector<22x22xf32> to vector<16x16xf32>
    %118 = vector.broadcast %116 : f32 to vector<16x16xf32>
    %119 = arith.mulf %118, %117 : vector<16x16xf32>
    %120 = arith.addf %115, %119 : vector<16x16xf32>
    %c51 = arith.constant 51 : index
    %121 = memref.load %arg10[%c51] : memref<98xf32, #tpu.memory_space<smem>>
    %122 = vector.extract_strided_slice %91 {offsets = [0, 2], sizes = [16, 16], strides = [1, 1]} : vector<22x22xf32> to vector<16x16xf32>
    %123 = vector.broadcast %121 : f32 to vector<16x16xf32>
    %124 = arith.mulf %123, %122 : vector<16x16xf32>
    %125 = arith.addf %120, %124 : vector<16x16xf32>
    %c3_63 = arith.constant 3 : index
    %126 = memref.load %arg10[%c3_63] : memref<98xf32, #tpu.memory_space<smem>>
    %127 = vector.extract_strided_slice %90 {offsets = [0, 3], sizes = [16, 16], strides = [1, 1]} : vector<22x22xf32> to vector<16x16xf32>
    %128 = vector.broadcast %126 : f32 to vector<16x16xf32>
    %129 = arith.mulf %128, %127 : vector<16x16xf32>
    %130 = arith.addf %125, %129 : vector<16x16xf32>
    %c52 = arith.constant 52 : index
    %131 = memref.load %arg10[%c52] : memref<98xf32, #tpu.memory_space<smem>>
    %132 = vector.extract_strided_slice %91 {offsets = [0, 3], sizes = [16, 16], strides = [1, 1]} : vector<22x22xf32> to vector<16x16xf32>
    %133 = vector.broadcast %131 : f32 to vector<16x16xf32>
    %134 = arith.mulf %133, %132 : vector<16x16xf32>
    %135 = arith.addf %130, %134 : vector<16x16xf32>
    %c4 = arith.constant 4 : index
    %136 = memref.load %arg10[%c4] : memref<98xf32, #tpu.memory_space<smem>>
    %137 = vector.extract_strided_slice %90 {offsets = [0, 4], sizes = [16, 16], strides = [1, 1]} : vector<22x22xf32> to vector<16x16xf32>
    %138 = vector.broadcast %136 : f32 to vector<16x16xf32>
    %139 = arith.mulf %138, %137 : vector<16x16xf32>
    %140 = arith.addf %135, %139 : vector<16x16xf32>
    %c53 = arith.constant 53 : index
    %141 = memref.load %arg10[%c53] : memref<98xf32, #tpu.memory_space<smem>>
    %142 = vector.extract_strided_slice %91 {offsets = [0, 4], sizes = [16, 16], strides = [1, 1]} : vector<22x22xf32> to vector<16x16xf32>
    %143 = vector.broadcast %141 : f32 to vector<16x16xf32>
    %144 = arith.mulf %143, %142 : vector<16x16xf32>
    %145 = arith.addf %140, %144 : vector<16x16xf32>
    %c5 = arith.constant 5 : index
    %146 = memref.load %arg10[%c5] : memref<98xf32, #tpu.memory_space<smem>>
    %147 = vector.extract_strided_slice %90 {offsets = [0, 5], sizes = [16, 16], strides = [1, 1]} : vector<22x22xf32> to vector<16x16xf32>
    %148 = vector.broadcast %146 : f32 to vector<16x16xf32>
    %149 = arith.mulf %148, %147 : vector<16x16xf32>
    %150 = arith.addf %145, %149 : vector<16x16xf32>
    %c54 = arith.constant 54 : index
    %151 = memref.load %arg10[%c54] : memref<98xf32, #tpu.memory_space<smem>>
    %152 = vector.extract_strided_slice %91 {offsets = [0, 5], sizes = [16, 16], strides = [1, 1]} : vector<22x22xf32> to vector<16x16xf32>
    %153 = vector.broadcast %151 : f32 to vector<16x16xf32>
    %154 = arith.mulf %153, %152 : vector<16x16xf32>
    %155 = arith.addf %150, %154 : vector<16x16xf32>
    %c6 = arith.constant 6 : index
    %156 = memref.load %arg10[%c6] : memref<98xf32, #tpu.memory_space<smem>>
    %157 = vector.extract_strided_slice %90 {offsets = [0, 6], sizes = [16, 16], strides = [1, 1]} : vector<22x22xf32> to vector<16x16xf32>
    %158 = vector.broadcast %156 : f32 to vector<16x16xf32>
    %159 = arith.mulf %158, %157 : vector<16x16xf32>
    %160 = arith.addf %155, %159 : vector<16x16xf32>
    %c55 = arith.constant 55 : index
    %161 = memref.load %arg10[%c55] : memref<98xf32, #tpu.memory_space<smem>>
    %162 = vector.extract_strided_slice %91 {offsets = [0, 6], sizes = [16, 16], strides = [1, 1]} : vector<22x22xf32> to vector<16x16xf32>
    %163 = vector.broadcast %161 : f32 to vector<16x16xf32>
    %164 = arith.mulf %163, %162 : vector<16x16xf32>
    %165 = arith.addf %160, %164 : vector<16x16xf32>
    %c7 = arith.constant 7 : index
    %166 = memref.load %arg10[%c7] : memref<98xf32, #tpu.memory_space<smem>>
    %167 = vector.extract_strided_slice %90 {offsets = [1, 0], sizes = [16, 16], strides = [1, 1]} : vector<22x22xf32> to vector<16x16xf32>
    %168 = vector.broadcast %166 : f32 to vector<16x16xf32>
    %169 = arith.mulf %168, %167 : vector<16x16xf32>
    %170 = arith.addf %165, %169 : vector<16x16xf32>
    %c56 = arith.constant 56 : index
    %171 = memref.load %arg10[%c56] : memref<98xf32, #tpu.memory_space<smem>>
    %172 = vector.extract_strided_slice %91 {offsets = [1, 0], sizes = [16, 16], strides = [1, 1]} : vector<22x22xf32> to vector<16x16xf32>
    %173 = vector.broadcast %171 : f32 to vector<16x16xf32>
    %174 = arith.mulf %173, %172 : vector<16x16xf32>
    %175 = arith.addf %170, %174 : vector<16x16xf32>
    %c8 = arith.constant 8 : index
    %176 = memref.load %arg10[%c8] : memref<98xf32, #tpu.memory_space<smem>>
    %177 = vector.extract_strided_slice %90 {offsets = [1, 1], sizes = [16, 16], strides = [1, 1]} : vector<22x22xf32> to vector<16x16xf32>
    %178 = vector.broadcast %176 : f32 to vector<16x16xf32>
    %179 = arith.mulf %178, %177 : vector<16x16xf32>
    %180 = arith.addf %175, %179 : vector<16x16xf32>
    %c57 = arith.constant 57 : index
    %181 = memref.load %arg10[%c57] : memref<98xf32, #tpu.memory_space<smem>>
    %182 = vector.extract_strided_slice %91 {offsets = [1, 1], sizes = [16, 16], strides = [1, 1]} : vector<22x22xf32> to vector<16x16xf32>
    %183 = vector.broadcast %181 : f32 to vector<16x16xf32>
    %184 = arith.mulf %183, %182 : vector<16x16xf32>
    %185 = arith.addf %180, %184 : vector<16x16xf32>
    %c9 = arith.constant 9 : index
    %186 = memref.load %arg10[%c9] : memref<98xf32, #tpu.memory_space<smem>>
    %187 = vector.extract_strided_slice %90 {offsets = [1, 2], sizes = [16, 16], strides = [1, 1]} : vector<22x22xf32> to vector<16x16xf32>
    %188 = vector.broadcast %186 : f32 to vector<16x16xf32>
    %189 = arith.mulf %188, %187 : vector<16x16xf32>
    %190 = arith.addf %185, %189 : vector<16x16xf32>
    %c58 = arith.constant 58 : index
    %191 = memref.load %arg10[%c58] : memref<98xf32, #tpu.memory_space<smem>>
    %192 = vector.extract_strided_slice %91 {offsets = [1, 2], sizes = [16, 16], strides = [1, 1]} : vector<22x22xf32> to vector<16x16xf32>
    %193 = vector.broadcast %191 : f32 to vector<16x16xf32>
    %194 = arith.mulf %193, %192 : vector<16x16xf32>
    %195 = arith.addf %190, %194 : vector<16x16xf32>
    %c10 = arith.constant 10 : index
    %196 = memref.load %arg10[%c10] : memref<98xf32, #tpu.memory_space<smem>>
    %197 = vector.extract_strided_slice %90 {offsets = [1, 3], sizes = [16, 16], strides = [1, 1]} : vector<22x22xf32> to vector<16x16xf32>
    %198 = vector.broadcast %196 : f32 to vector<16x16xf32>
    %199 = arith.mulf %198, %197 : vector<16x16xf32>
    %200 = arith.addf %195, %199 : vector<16x16xf32>
    %c59 = arith.constant 59 : index
    %201 = memref.load %arg10[%c59] : memref<98xf32, #tpu.memory_space<smem>>
    %202 = vector.extract_strided_slice %91 {offsets = [1, 3], sizes = [16, 16], strides = [1, 1]} : vector<22x22xf32> to vector<16x16xf32>
    %203 = vector.broadcast %201 : f32 to vector<16x16xf32>
    %204 = arith.mulf %203, %202 : vector<16x16xf32>
    %205 = arith.addf %200, %204 : vector<16x16xf32>
    %c11 = arith.constant 11 : index
    %206 = memref.load %arg10[%c11] : memref<98xf32, #tpu.memory_space<smem>>
    %207 = vector.extract_strided_slice %90 {offsets = [1, 4], sizes = [16, 16], strides = [1, 1]} : vector<22x22xf32> to vector<16x16xf32>
    %208 = vector.broadcast %206 : f32 to vector<16x16xf32>
    %209 = arith.mulf %208, %207 : vector<16x16xf32>
    %210 = arith.addf %205, %209 : vector<16x16xf32>
    %c60 = arith.constant 60 : index
    %211 = memref.load %arg10[%c60] : memref<98xf32, #tpu.memory_space<smem>>
    %212 = vector.extract_strided_slice %91 {offsets = [1, 4], sizes = [16, 16], strides = [1, 1]} : vector<22x22xf32> to vector<16x16xf32>
    %213 = vector.broadcast %211 : f32 to vector<16x16xf32>
    %214 = arith.mulf %213, %212 : vector<16x16xf32>
    %215 = arith.addf %210, %214 : vector<16x16xf32>
    %c12 = arith.constant 12 : index
    %216 = memref.load %arg10[%c12] : memref<98xf32, #tpu.memory_space<smem>>
    %217 = vector.extract_strided_slice %90 {offsets = [1, 5], sizes = [16, 16], strides = [1, 1]} : vector<22x22xf32> to vector<16x16xf32>
    %218 = vector.broadcast %216 : f32 to vector<16x16xf32>
    %219 = arith.mulf %218, %217 : vector<16x16xf32>
    %220 = arith.addf %215, %219 : vector<16x16xf32>
    %c61 = arith.constant 61 : index
    %221 = memref.load %arg10[%c61] : memref<98xf32, #tpu.memory_space<smem>>
    %222 = vector.extract_strided_slice %91 {offsets = [1, 5], sizes = [16, 16], strides = [1, 1]} : vector<22x22xf32> to vector<16x16xf32>
    %223 = vector.broadcast %221 : f32 to vector<16x16xf32>
    %224 = arith.mulf %223, %222 : vector<16x16xf32>
    %225 = arith.addf %220, %224 : vector<16x16xf32>
    %c13 = arith.constant 13 : index
    %226 = memref.load %arg10[%c13] : memref<98xf32, #tpu.memory_space<smem>>
    %227 = vector.extract_strided_slice %90 {offsets = [1, 6], sizes = [16, 16], strides = [1, 1]} : vector<22x22xf32> to vector<16x16xf32>
    %228 = vector.broadcast %226 : f32 to vector<16x16xf32>
    %229 = arith.mulf %228, %227 : vector<16x16xf32>
    %230 = arith.addf %225, %229 : vector<16x16xf32>
    %c62 = arith.constant 62 : index
    %231 = memref.load %arg10[%c62] : memref<98xf32, #tpu.memory_space<smem>>
    %232 = vector.extract_strided_slice %91 {offsets = [1, 6], sizes = [16, 16], strides = [1, 1]} : vector<22x22xf32> to vector<16x16xf32>
    %233 = vector.broadcast %231 : f32 to vector<16x16xf32>
    %234 = arith.mulf %233, %232 : vector<16x16xf32>
    %235 = arith.addf %230, %234 : vector<16x16xf32>
    %c14 = arith.constant 14 : index
    %236 = memref.load %arg10[%c14] : memref<98xf32, #tpu.memory_space<smem>>
    %237 = vector.extract_strided_slice %90 {offsets = [2, 0], sizes = [16, 16], strides = [1, 1]} : vector<22x22xf32> to vector<16x16xf32>
    %238 = vector.broadcast %236 : f32 to vector<16x16xf32>
    %239 = arith.mulf %238, %237 : vector<16x16xf32>
    %240 = arith.addf %235, %239 : vector<16x16xf32>
    %c63 = arith.constant 63 : index
    %241 = memref.load %arg10[%c63] : memref<98xf32, #tpu.memory_space<smem>>
    %242 = vector.extract_strided_slice %91 {offsets = [2, 0], sizes = [16, 16], strides = [1, 1]} : vector<22x22xf32> to vector<16x16xf32>
    %243 = vector.broadcast %241 : f32 to vector<16x16xf32>
    %244 = arith.mulf %243, %242 : vector<16x16xf32>
    %245 = arith.addf %240, %244 : vector<16x16xf32>
    %c15 = arith.constant 15 : index
    %246 = memref.load %arg10[%c15] : memref<98xf32, #tpu.memory_space<smem>>
    %247 = vector.extract_strided_slice %90 {offsets = [2, 1], sizes = [16, 16], strides = [1, 1]} : vector<22x22xf32> to vector<16x16xf32>
    %248 = vector.broadcast %246 : f32 to vector<16x16xf32>
    %249 = arith.mulf %248, %247 : vector<16x16xf32>
    %250 = arith.addf %245, %249 : vector<16x16xf32>
    %c64 = arith.constant 64 : index
    %251 = memref.load %arg10[%c64] : memref<98xf32, #tpu.memory_space<smem>>
    %252 = vector.extract_strided_slice %91 {offsets = [2, 1], sizes = [16, 16], strides = [1, 1]} : vector<22x22xf32> to vector<16x16xf32>
    %253 = vector.broadcast %251 : f32 to vector<16x16xf32>
    %254 = arith.mulf %253, %252 : vector<16x16xf32>
    %255 = arith.addf %250, %254 : vector<16x16xf32>
    %c16 = arith.constant 16 : index
    %256 = memref.load %arg10[%c16] : memref<98xf32, #tpu.memory_space<smem>>
    %257 = vector.extract_strided_slice %90 {offsets = [2, 2], sizes = [16, 16], strides = [1, 1]} : vector<22x22xf32> to vector<16x16xf32>
    %258 = vector.broadcast %256 : f32 to vector<16x16xf32>
    %259 = arith.mulf %258, %257 : vector<16x16xf32>
    %260 = arith.addf %255, %259 : vector<16x16xf32>
    %c65 = arith.constant 65 : index
    %261 = memref.load %arg10[%c65] : memref<98xf32, #tpu.memory_space<smem>>
    %262 = vector.extract_strided_slice %91 {offsets = [2, 2], sizes = [16, 16], strides = [1, 1]} : vector<22x22xf32> to vector<16x16xf32>
    %263 = vector.broadcast %261 : f32 to vector<16x16xf32>
    %264 = arith.mulf %263, %262 : vector<16x16xf32>
    %265 = arith.addf %260, %264 : vector<16x16xf32>
    %c17 = arith.constant 17 : index
    %266 = memref.load %arg10[%c17] : memref<98xf32, #tpu.memory_space<smem>>
    %267 = vector.extract_strided_slice %90 {offsets = [2, 3], sizes = [16, 16], strides = [1, 1]} : vector<22x22xf32> to vector<16x16xf32>
    %268 = vector.broadcast %266 : f32 to vector<16x16xf32>
    %269 = arith.mulf %268, %267 : vector<16x16xf32>
    %270 = arith.addf %265, %269 : vector<16x16xf32>
    %c66 = arith.constant 66 : index
    %271 = memref.load %arg10[%c66] : memref<98xf32, #tpu.memory_space<smem>>
    %272 = vector.extract_strided_slice %91 {offsets = [2, 3], sizes = [16, 16], strides = [1, 1]} : vector<22x22xf32> to vector<16x16xf32>
    %273 = vector.broadcast %271 : f32 to vector<16x16xf32>
    %274 = arith.mulf %273, %272 : vector<16x16xf32>
    %275 = arith.addf %270, %274 : vector<16x16xf32>
    %c18 = arith.constant 18 : index
    %276 = memref.load %arg10[%c18] : memref<98xf32, #tpu.memory_space<smem>>
    %277 = vector.extract_strided_slice %90 {offsets = [2, 4], sizes = [16, 16], strides = [1, 1]} : vector<22x22xf32> to vector<16x16xf32>
    %278 = vector.broadcast %276 : f32 to vector<16x16xf32>
    %279 = arith.mulf %278, %277 : vector<16x16xf32>
    %280 = arith.addf %275, %279 : vector<16x16xf32>
    %c67 = arith.constant 67 : index
    %281 = memref.load %arg10[%c67] : memref<98xf32, #tpu.memory_space<smem>>
    %282 = vector.extract_strided_slice %91 {offsets = [2, 4], sizes = [16, 16], strides = [1, 1]} : vector<22x22xf32> to vector<16x16xf32>
    %283 = vector.broadcast %281 : f32 to vector<16x16xf32>
    %284 = arith.mulf %283, %282 : vector<16x16xf32>
    %285 = arith.addf %280, %284 : vector<16x16xf32>
    %c19 = arith.constant 19 : index
    %286 = memref.load %arg10[%c19] : memref<98xf32, #tpu.memory_space<smem>>
    %287 = vector.extract_strided_slice %90 {offsets = [2, 5], sizes = [16, 16], strides = [1, 1]} : vector<22x22xf32> to vector<16x16xf32>
    %288 = vector.broadcast %286 : f32 to vector<16x16xf32>
    %289 = arith.mulf %288, %287 : vector<16x16xf32>
    %290 = arith.addf %285, %289 : vector<16x16xf32>
    %c68 = arith.constant 68 : index
    %291 = memref.load %arg10[%c68] : memref<98xf32, #tpu.memory_space<smem>>
    %292 = vector.extract_strided_slice %91 {offsets = [2, 5], sizes = [16, 16], strides = [1, 1]} : vector<22x22xf32> to vector<16x16xf32>
    %293 = vector.broadcast %291 : f32 to vector<16x16xf32>
    %294 = arith.mulf %293, %292 : vector<16x16xf32>
    %295 = arith.addf %290, %294 : vector<16x16xf32>
    %c20 = arith.constant 20 : index
    %296 = memref.load %arg10[%c20] : memref<98xf32, #tpu.memory_space<smem>>
    %297 = vector.extract_strided_slice %90 {offsets = [2, 6], sizes = [16, 16], strides = [1, 1]} : vector<22x22xf32> to vector<16x16xf32>
    %298 = vector.broadcast %296 : f32 to vector<16x16xf32>
    %299 = arith.mulf %298, %297 : vector<16x16xf32>
    %300 = arith.addf %295, %299 : vector<16x16xf32>
    %c69 = arith.constant 69 : index
    %301 = memref.load %arg10[%c69] : memref<98xf32, #tpu.memory_space<smem>>
    %302 = vector.extract_strided_slice %91 {offsets = [2, 6], sizes = [16, 16], strides = [1, 1]} : vector<22x22xf32> to vector<16x16xf32>
    %303 = vector.broadcast %301 : f32 to vector<16x16xf32>
    %304 = arith.mulf %303, %302 : vector<16x16xf32>
    %305 = arith.addf %300, %304 : vector<16x16xf32>
    %c21 = arith.constant 21 : index
    %306 = memref.load %arg10[%c21] : memref<98xf32, #tpu.memory_space<smem>>
    %307 = vector.extract_strided_slice %90 {offsets = [3, 0], sizes = [16, 16], strides = [1, 1]} : vector<22x22xf32> to vector<16x16xf32>
    %308 = vector.broadcast %306 : f32 to vector<16x16xf32>
    %309 = arith.mulf %308, %307 : vector<16x16xf32>
    %310 = arith.addf %305, %309 : vector<16x16xf32>
    %c70 = arith.constant 70 : index
    %311 = memref.load %arg10[%c70] : memref<98xf32, #tpu.memory_space<smem>>
    %312 = vector.extract_strided_slice %91 {offsets = [3, 0], sizes = [16, 16], strides = [1, 1]} : vector<22x22xf32> to vector<16x16xf32>
    %313 = vector.broadcast %311 : f32 to vector<16x16xf32>
    %314 = arith.mulf %313, %312 : vector<16x16xf32>
    %315 = arith.addf %310, %314 : vector<16x16xf32>
    %c22 = arith.constant 22 : index
    %316 = memref.load %arg10[%c22] : memref<98xf32, #tpu.memory_space<smem>>
    %317 = vector.extract_strided_slice %90 {offsets = [3, 1], sizes = [16, 16], strides = [1, 1]} : vector<22x22xf32> to vector<16x16xf32>
    %318 = vector.broadcast %316 : f32 to vector<16x16xf32>
    %319 = arith.mulf %318, %317 : vector<16x16xf32>
    %320 = arith.addf %315, %319 : vector<16x16xf32>
    %c71 = arith.constant 71 : index
    %321 = memref.load %arg10[%c71] : memref<98xf32, #tpu.memory_space<smem>>
    %322 = vector.extract_strided_slice %91 {offsets = [3, 1], sizes = [16, 16], strides = [1, 1]} : vector<22x22xf32> to vector<16x16xf32>
    %323 = vector.broadcast %321 : f32 to vector<16x16xf32>
    %324 = arith.mulf %323, %322 : vector<16x16xf32>
    %325 = arith.addf %320, %324 : vector<16x16xf32>
    %c23 = arith.constant 23 : index
    %326 = memref.load %arg10[%c23] : memref<98xf32, #tpu.memory_space<smem>>
    %327 = vector.extract_strided_slice %90 {offsets = [3, 2], sizes = [16, 16], strides = [1, 1]} : vector<22x22xf32> to vector<16x16xf32>
    %328 = vector.broadcast %326 : f32 to vector<16x16xf32>
    %329 = arith.mulf %328, %327 : vector<16x16xf32>
    %330 = arith.addf %325, %329 : vector<16x16xf32>
    %c72 = arith.constant 72 : index
    %331 = memref.load %arg10[%c72] : memref<98xf32, #tpu.memory_space<smem>>
    %332 = vector.extract_strided_slice %91 {offsets = [3, 2], sizes = [16, 16], strides = [1, 1]} : vector<22x22xf32> to vector<16x16xf32>
    %333 = vector.broadcast %331 : f32 to vector<16x16xf32>
    %334 = arith.mulf %333, %332 : vector<16x16xf32>
    %335 = arith.addf %330, %334 : vector<16x16xf32>
    %c24 = arith.constant 24 : index
    %336 = memref.load %arg10[%c24] : memref<98xf32, #tpu.memory_space<smem>>
    %337 = vector.extract_strided_slice %90 {offsets = [3, 3], sizes = [16, 16], strides = [1, 1]} : vector<22x22xf32> to vector<16x16xf32>
    %338 = vector.broadcast %336 : f32 to vector<16x16xf32>
    %339 = arith.mulf %338, %337 : vector<16x16xf32>
    %340 = arith.addf %335, %339 : vector<16x16xf32>
    %c73 = arith.constant 73 : index
    %341 = memref.load %arg10[%c73] : memref<98xf32, #tpu.memory_space<smem>>
    %342 = vector.extract_strided_slice %91 {offsets = [3, 3], sizes = [16, 16], strides = [1, 1]} : vector<22x22xf32> to vector<16x16xf32>
    %343 = vector.broadcast %341 : f32 to vector<16x16xf32>
    %344 = arith.mulf %343, %342 : vector<16x16xf32>
    %345 = arith.addf %340, %344 : vector<16x16xf32>
    %c25 = arith.constant 25 : index
    %346 = memref.load %arg10[%c25] : memref<98xf32, #tpu.memory_space<smem>>
    %347 = vector.extract_strided_slice %90 {offsets = [3, 4], sizes = [16, 16], strides = [1, 1]} : vector<22x22xf32> to vector<16x16xf32>
    %348 = vector.broadcast %346 : f32 to vector<16x16xf32>
    %349 = arith.mulf %348, %347 : vector<16x16xf32>
    %350 = arith.addf %345, %349 : vector<16x16xf32>
    %c74 = arith.constant 74 : index
    %351 = memref.load %arg10[%c74] : memref<98xf32, #tpu.memory_space<smem>>
    %352 = vector.extract_strided_slice %91 {offsets = [3, 4], sizes = [16, 16], strides = [1, 1]} : vector<22x22xf32> to vector<16x16xf32>
    %353 = vector.broadcast %351 : f32 to vector<16x16xf32>
    %354 = arith.mulf %353, %352 : vector<16x16xf32>
    %355 = arith.addf %350, %354 : vector<16x16xf32>
    %c26 = arith.constant 26 : index
    %356 = memref.load %arg10[%c26] : memref<98xf32, #tpu.memory_space<smem>>
    %357 = vector.extract_strided_slice %90 {offsets = [3, 5], sizes = [16, 16], strides = [1, 1]} : vector<22x22xf32> to vector<16x16xf32>
    %358 = vector.broadcast %356 : f32 to vector<16x16xf32>
    %359 = arith.mulf %358, %357 : vector<16x16xf32>
    %360 = arith.addf %355, %359 : vector<16x16xf32>
    %c75 = arith.constant 75 : index
    %361 = memref.load %arg10[%c75] : memref<98xf32, #tpu.memory_space<smem>>
    %362 = vector.extract_strided_slice %91 {offsets = [3, 5], sizes = [16, 16], strides = [1, 1]} : vector<22x22xf32> to vector<16x16xf32>
    %363 = vector.broadcast %361 : f32 to vector<16x16xf32>
    %364 = arith.mulf %363, %362 : vector<16x16xf32>
    %365 = arith.addf %360, %364 : vector<16x16xf32>
    %c27 = arith.constant 27 : index
    %366 = memref.load %arg10[%c27] : memref<98xf32, #tpu.memory_space<smem>>
    %367 = vector.extract_strided_slice %90 {offsets = [3, 6], sizes = [16, 16], strides = [1, 1]} : vector<22x22xf32> to vector<16x16xf32>
    %368 = vector.broadcast %366 : f32 to vector<16x16xf32>
    %369 = arith.mulf %368, %367 : vector<16x16xf32>
    %370 = arith.addf %365, %369 : vector<16x16xf32>
    %c76 = arith.constant 76 : index
    %371 = memref.load %arg10[%c76] : memref<98xf32, #tpu.memory_space<smem>>
    %372 = vector.extract_strided_slice %91 {offsets = [3, 6], sizes = [16, 16], strides = [1, 1]} : vector<22x22xf32> to vector<16x16xf32>
    %373 = vector.broadcast %371 : f32 to vector<16x16xf32>
    %374 = arith.mulf %373, %372 : vector<16x16xf32>
    %375 = arith.addf %370, %374 : vector<16x16xf32>
    %c28 = arith.constant 28 : index
    %376 = memref.load %arg10[%c28] : memref<98xf32, #tpu.memory_space<smem>>
    %377 = vector.extract_strided_slice %90 {offsets = [4, 0], sizes = [16, 16], strides = [1, 1]} : vector<22x22xf32> to vector<16x16xf32>
    %378 = vector.broadcast %376 : f32 to vector<16x16xf32>
    %379 = arith.mulf %378, %377 : vector<16x16xf32>
    %380 = arith.addf %375, %379 : vector<16x16xf32>
    %c77 = arith.constant 77 : index
    %381 = memref.load %arg10[%c77] : memref<98xf32, #tpu.memory_space<smem>>
    %382 = vector.extract_strided_slice %91 {offsets = [4, 0], sizes = [16, 16], strides = [1, 1]} : vector<22x22xf32> to vector<16x16xf32>
    %383 = vector.broadcast %381 : f32 to vector<16x16xf32>
    %384 = arith.mulf %383, %382 : vector<16x16xf32>
    %385 = arith.addf %380, %384 : vector<16x16xf32>
    %c29 = arith.constant 29 : index
    %386 = memref.load %arg10[%c29] : memref<98xf32, #tpu.memory_space<smem>>
    %387 = vector.extract_strided_slice %90 {offsets = [4, 1], sizes = [16, 16], strides = [1, 1]} : vector<22x22xf32> to vector<16x16xf32>
    %388 = vector.broadcast %386 : f32 to vector<16x16xf32>
    %389 = arith.mulf %388, %387 : vector<16x16xf32>
    %390 = arith.addf %385, %389 : vector<16x16xf32>
    %c78 = arith.constant 78 : index
    %391 = memref.load %arg10[%c78] : memref<98xf32, #tpu.memory_space<smem>>
    %392 = vector.extract_strided_slice %91 {offsets = [4, 1], sizes = [16, 16], strides = [1, 1]} : vector<22x22xf32> to vector<16x16xf32>
    %393 = vector.broadcast %391 : f32 to vector<16x16xf32>
    %394 = arith.mulf %393, %392 : vector<16x16xf32>
    %395 = arith.addf %390, %394 : vector<16x16xf32>
    %c30 = arith.constant 30 : index
    %396 = memref.load %arg10[%c30] : memref<98xf32, #tpu.memory_space<smem>>
    %397 = vector.extract_strided_slice %90 {offsets = [4, 2], sizes = [16, 16], strides = [1, 1]} : vector<22x22xf32> to vector<16x16xf32>
    %398 = vector.broadcast %396 : f32 to vector<16x16xf32>
    %399 = arith.mulf %398, %397 : vector<16x16xf32>
    %400 = arith.addf %395, %399 : vector<16x16xf32>
    %c79 = arith.constant 79 : index
    %401 = memref.load %arg10[%c79] : memref<98xf32, #tpu.memory_space<smem>>
    %402 = vector.extract_strided_slice %91 {offsets = [4, 2], sizes = [16, 16], strides = [1, 1]} : vector<22x22xf32> to vector<16x16xf32>
    %403 = vector.broadcast %401 : f32 to vector<16x16xf32>
    %404 = arith.mulf %403, %402 : vector<16x16xf32>
    %405 = arith.addf %400, %404 : vector<16x16xf32>
    %c31 = arith.constant 31 : index
    %406 = memref.load %arg10[%c31] : memref<98xf32, #tpu.memory_space<smem>>
    %407 = vector.extract_strided_slice %90 {offsets = [4, 3], sizes = [16, 16], strides = [1, 1]} : vector<22x22xf32> to vector<16x16xf32>
    %408 = vector.broadcast %406 : f32 to vector<16x16xf32>
    %409 = arith.mulf %408, %407 : vector<16x16xf32>
    %410 = arith.addf %405, %409 : vector<16x16xf32>
    %c80 = arith.constant 80 : index
    %411 = memref.load %arg10[%c80] : memref<98xf32, #tpu.memory_space<smem>>
    %412 = vector.extract_strided_slice %91 {offsets = [4, 3], sizes = [16, 16], strides = [1, 1]} : vector<22x22xf32> to vector<16x16xf32>
    %413 = vector.broadcast %411 : f32 to vector<16x16xf32>
    %414 = arith.mulf %413, %412 : vector<16x16xf32>
    %415 = arith.addf %410, %414 : vector<16x16xf32>
    %c32 = arith.constant 32 : index
    %416 = memref.load %arg10[%c32] : memref<98xf32, #tpu.memory_space<smem>>
    %417 = vector.extract_strided_slice %90 {offsets = [4, 4], sizes = [16, 16], strides = [1, 1]} : vector<22x22xf32> to vector<16x16xf32>
    %418 = vector.broadcast %416 : f32 to vector<16x16xf32>
    %419 = arith.mulf %418, %417 : vector<16x16xf32>
    %420 = arith.addf %415, %419 : vector<16x16xf32>
    %c81 = arith.constant 81 : index
    %421 = memref.load %arg10[%c81] : memref<98xf32, #tpu.memory_space<smem>>
    %422 = vector.extract_strided_slice %91 {offsets = [4, 4], sizes = [16, 16], strides = [1, 1]} : vector<22x22xf32> to vector<16x16xf32>
    %423 = vector.broadcast %421 : f32 to vector<16x16xf32>
    %424 = arith.mulf %423, %422 : vector<16x16xf32>
    %425 = arith.addf %420, %424 : vector<16x16xf32>
    %c33 = arith.constant 33 : index
    %426 = memref.load %arg10[%c33] : memref<98xf32, #tpu.memory_space<smem>>
    %427 = vector.extract_strided_slice %90 {offsets = [4, 5], sizes = [16, 16], strides = [1, 1]} : vector<22x22xf32> to vector<16x16xf32>
    %428 = vector.broadcast %426 : f32 to vector<16x16xf32>
    %429 = arith.mulf %428, %427 : vector<16x16xf32>
    %430 = arith.addf %425, %429 : vector<16x16xf32>
    %c82 = arith.constant 82 : index
    %431 = memref.load %arg10[%c82] : memref<98xf32, #tpu.memory_space<smem>>
    %432 = vector.extract_strided_slice %91 {offsets = [4, 5], sizes = [16, 16], strides = [1, 1]} : vector<22x22xf32> to vector<16x16xf32>
    %433 = vector.broadcast %431 : f32 to vector<16x16xf32>
    %434 = arith.mulf %433, %432 : vector<16x16xf32>
    %435 = arith.addf %430, %434 : vector<16x16xf32>
    %c34 = arith.constant 34 : index
    %436 = memref.load %arg10[%c34] : memref<98xf32, #tpu.memory_space<smem>>
    %437 = vector.extract_strided_slice %90 {offsets = [4, 6], sizes = [16, 16], strides = [1, 1]} : vector<22x22xf32> to vector<16x16xf32>
    %438 = vector.broadcast %436 : f32 to vector<16x16xf32>
    %439 = arith.mulf %438, %437 : vector<16x16xf32>
    %440 = arith.addf %435, %439 : vector<16x16xf32>
    %c83 = arith.constant 83 : index
    %441 = memref.load %arg10[%c83] : memref<98xf32, #tpu.memory_space<smem>>
    %442 = vector.extract_strided_slice %91 {offsets = [4, 6], sizes = [16, 16], strides = [1, 1]} : vector<22x22xf32> to vector<16x16xf32>
    %443 = vector.broadcast %441 : f32 to vector<16x16xf32>
    %444 = arith.mulf %443, %442 : vector<16x16xf32>
    %445 = arith.addf %440, %444 : vector<16x16xf32>
    %c35 = arith.constant 35 : index
    %446 = memref.load %arg10[%c35] : memref<98xf32, #tpu.memory_space<smem>>
    %447 = vector.extract_strided_slice %90 {offsets = [5, 0], sizes = [16, 16], strides = [1, 1]} : vector<22x22xf32> to vector<16x16xf32>
    %448 = vector.broadcast %446 : f32 to vector<16x16xf32>
    %449 = arith.mulf %448, %447 : vector<16x16xf32>
    %450 = arith.addf %445, %449 : vector<16x16xf32>
    %c84 = arith.constant 84 : index
    %451 = memref.load %arg10[%c84] : memref<98xf32, #tpu.memory_space<smem>>
    %452 = vector.extract_strided_slice %91 {offsets = [5, 0], sizes = [16, 16], strides = [1, 1]} : vector<22x22xf32> to vector<16x16xf32>
    %453 = vector.broadcast %451 : f32 to vector<16x16xf32>
    %454 = arith.mulf %453, %452 : vector<16x16xf32>
    %455 = arith.addf %450, %454 : vector<16x16xf32>
    %c36 = arith.constant 36 : index
    %456 = memref.load %arg10[%c36] : memref<98xf32, #tpu.memory_space<smem>>
    %457 = vector.extract_strided_slice %90 {offsets = [5, 1], sizes = [16, 16], strides = [1, 1]} : vector<22x22xf32> to vector<16x16xf32>
    %458 = vector.broadcast %456 : f32 to vector<16x16xf32>
    %459 = arith.mulf %458, %457 : vector<16x16xf32>
    %460 = arith.addf %455, %459 : vector<16x16xf32>
    %c85 = arith.constant 85 : index
    %461 = memref.load %arg10[%c85] : memref<98xf32, #tpu.memory_space<smem>>
    %462 = vector.extract_strided_slice %91 {offsets = [5, 1], sizes = [16, 16], strides = [1, 1]} : vector<22x22xf32> to vector<16x16xf32>
    %463 = vector.broadcast %461 : f32 to vector<16x16xf32>
    %464 = arith.mulf %463, %462 : vector<16x16xf32>
    %465 = arith.addf %460, %464 : vector<16x16xf32>
    %c37 = arith.constant 37 : index
    %466 = memref.load %arg10[%c37] : memref<98xf32, #tpu.memory_space<smem>>
    %467 = vector.extract_strided_slice %90 {offsets = [5, 2], sizes = [16, 16], strides = [1, 1]} : vector<22x22xf32> to vector<16x16xf32>
    %468 = vector.broadcast %466 : f32 to vector<16x16xf32>
    %469 = arith.mulf %468, %467 : vector<16x16xf32>
    %470 = arith.addf %465, %469 : vector<16x16xf32>
    %c86 = arith.constant 86 : index
    %471 = memref.load %arg10[%c86] : memref<98xf32, #tpu.memory_space<smem>>
    %472 = vector.extract_strided_slice %91 {offsets = [5, 2], sizes = [16, 16], strides = [1, 1]} : vector<22x22xf32> to vector<16x16xf32>
    %473 = vector.broadcast %471 : f32 to vector<16x16xf32>
    %474 = arith.mulf %473, %472 : vector<16x16xf32>
    %475 = arith.addf %470, %474 : vector<16x16xf32>
    %c38 = arith.constant 38 : index
    %476 = memref.load %arg10[%c38] : memref<98xf32, #tpu.memory_space<smem>>
    %477 = vector.extract_strided_slice %90 {offsets = [5, 3], sizes = [16, 16], strides = [1, 1]} : vector<22x22xf32> to vector<16x16xf32>
    %478 = vector.broadcast %476 : f32 to vector<16x16xf32>
    %479 = arith.mulf %478, %477 : vector<16x16xf32>
    %480 = arith.addf %475, %479 : vector<16x16xf32>
    %c87 = arith.constant 87 : index
    %481 = memref.load %arg10[%c87] : memref<98xf32, #tpu.memory_space<smem>>
    %482 = vector.extract_strided_slice %91 {offsets = [5, 3], sizes = [16, 16], strides = [1, 1]} : vector<22x22xf32> to vector<16x16xf32>
    %483 = vector.broadcast %481 : f32 to vector<16x16xf32>
    %484 = arith.mulf %483, %482 : vector<16x16xf32>
    %485 = arith.addf %480, %484 : vector<16x16xf32>
    %c39 = arith.constant 39 : index
    %486 = memref.load %arg10[%c39] : memref<98xf32, #tpu.memory_space<smem>>
    %487 = vector.extract_strided_slice %90 {offsets = [5, 4], sizes = [16, 16], strides = [1, 1]} : vector<22x22xf32> to vector<16x16xf32>
    %488 = vector.broadcast %486 : f32 to vector<16x16xf32>
    %489 = arith.mulf %488, %487 : vector<16x16xf32>
    %490 = arith.addf %485, %489 : vector<16x16xf32>
    %c88 = arith.constant 88 : index
    %491 = memref.load %arg10[%c88] : memref<98xf32, #tpu.memory_space<smem>>
    %492 = vector.extract_strided_slice %91 {offsets = [5, 4], sizes = [16, 16], strides = [1, 1]} : vector<22x22xf32> to vector<16x16xf32>
    %493 = vector.broadcast %491 : f32 to vector<16x16xf32>
    %494 = arith.mulf %493, %492 : vector<16x16xf32>
    %495 = arith.addf %490, %494 : vector<16x16xf32>
    %c40 = arith.constant 40 : index
    %496 = memref.load %arg10[%c40] : memref<98xf32, #tpu.memory_space<smem>>
    %497 = vector.extract_strided_slice %90 {offsets = [5, 5], sizes = [16, 16], strides = [1, 1]} : vector<22x22xf32> to vector<16x16xf32>
    %498 = vector.broadcast %496 : f32 to vector<16x16xf32>
    %499 = arith.mulf %498, %497 : vector<16x16xf32>
    %500 = arith.addf %495, %499 : vector<16x16xf32>
    %c89 = arith.constant 89 : index
    %501 = memref.load %arg10[%c89] : memref<98xf32, #tpu.memory_space<smem>>
    %502 = vector.extract_strided_slice %91 {offsets = [5, 5], sizes = [16, 16], strides = [1, 1]} : vector<22x22xf32> to vector<16x16xf32>
    %503 = vector.broadcast %501 : f32 to vector<16x16xf32>
    %504 = arith.mulf %503, %502 : vector<16x16xf32>
    %505 = arith.addf %500, %504 : vector<16x16xf32>
    %c41 = arith.constant 41 : index
    %506 = memref.load %arg10[%c41] : memref<98xf32, #tpu.memory_space<smem>>
    %507 = vector.extract_strided_slice %90 {offsets = [5, 6], sizes = [16, 16], strides = [1, 1]} : vector<22x22xf32> to vector<16x16xf32>
    %508 = vector.broadcast %506 : f32 to vector<16x16xf32>
    %509 = arith.mulf %508, %507 : vector<16x16xf32>
    %510 = arith.addf %505, %509 : vector<16x16xf32>
    %c90 = arith.constant 90 : index
    %511 = memref.load %arg10[%c90] : memref<98xf32, #tpu.memory_space<smem>>
    %512 = vector.extract_strided_slice %91 {offsets = [5, 6], sizes = [16, 16], strides = [1, 1]} : vector<22x22xf32> to vector<16x16xf32>
    %513 = vector.broadcast %511 : f32 to vector<16x16xf32>
    %514 = arith.mulf %513, %512 : vector<16x16xf32>
    %515 = arith.addf %510, %514 : vector<16x16xf32>
    %c42 = arith.constant 42 : index
    %516 = memref.load %arg10[%c42] : memref<98xf32, #tpu.memory_space<smem>>
    %517 = vector.extract_strided_slice %90 {offsets = [6, 0], sizes = [16, 16], strides = [1, 1]} : vector<22x22xf32> to vector<16x16xf32>
    %518 = vector.broadcast %516 : f32 to vector<16x16xf32>
    %519 = arith.mulf %518, %517 : vector<16x16xf32>
    %520 = arith.addf %515, %519 : vector<16x16xf32>
    %c91 = arith.constant 91 : index
    %521 = memref.load %arg10[%c91] : memref<98xf32, #tpu.memory_space<smem>>
    %522 = vector.extract_strided_slice %91 {offsets = [6, 0], sizes = [16, 16], strides = [1, 1]} : vector<22x22xf32> to vector<16x16xf32>
    %523 = vector.broadcast %521 : f32 to vector<16x16xf32>
    %524 = arith.mulf %523, %522 : vector<16x16xf32>
    %525 = arith.addf %520, %524 : vector<16x16xf32>
    %c43 = arith.constant 43 : index
    %526 = memref.load %arg10[%c43] : memref<98xf32, #tpu.memory_space<smem>>
    %527 = vector.extract_strided_slice %90 {offsets = [6, 1], sizes = [16, 16], strides = [1, 1]} : vector<22x22xf32> to vector<16x16xf32>
    %528 = vector.broadcast %526 : f32 to vector<16x16xf32>
    %529 = arith.mulf %528, %527 : vector<16x16xf32>
    %530 = arith.addf %525, %529 : vector<16x16xf32>
    %c92 = arith.constant 92 : index
    %531 = memref.load %arg10[%c92] : memref<98xf32, #tpu.memory_space<smem>>
    %532 = vector.extract_strided_slice %91 {offsets = [6, 1], sizes = [16, 16], strides = [1, 1]} : vector<22x22xf32> to vector<16x16xf32>
    %533 = vector.broadcast %531 : f32 to vector<16x16xf32>
    %534 = arith.mulf %533, %532 : vector<16x16xf32>
    %535 = arith.addf %530, %534 : vector<16x16xf32>
    %c44 = arith.constant 44 : index
    %536 = memref.load %arg10[%c44] : memref<98xf32, #tpu.memory_space<smem>>
    %537 = vector.extract_strided_slice %90 {offsets = [6, 2], sizes = [16, 16], strides = [1, 1]} : vector<22x22xf32> to vector<16x16xf32>
    %538 = vector.broadcast %536 : f32 to vector<16x16xf32>
    %539 = arith.mulf %538, %537 : vector<16x16xf32>
    %540 = arith.addf %535, %539 : vector<16x16xf32>
    %c93 = arith.constant 93 : index
    %541 = memref.load %arg10[%c93] : memref<98xf32, #tpu.memory_space<smem>>
    %542 = vector.extract_strided_slice %91 {offsets = [6, 2], sizes = [16, 16], strides = [1, 1]} : vector<22x22xf32> to vector<16x16xf32>
    %543 = vector.broadcast %541 : f32 to vector<16x16xf32>
    %544 = arith.mulf %543, %542 : vector<16x16xf32>
    %545 = arith.addf %540, %544 : vector<16x16xf32>
    %c45 = arith.constant 45 : index
    %546 = memref.load %arg10[%c45] : memref<98xf32, #tpu.memory_space<smem>>
    %547 = vector.extract_strided_slice %90 {offsets = [6, 3], sizes = [16, 16], strides = [1, 1]} : vector<22x22xf32> to vector<16x16xf32>
    %548 = vector.broadcast %546 : f32 to vector<16x16xf32>
    %549 = arith.mulf %548, %547 : vector<16x16xf32>
    %550 = arith.addf %545, %549 : vector<16x16xf32>
    %c94 = arith.constant 94 : index
    %551 = memref.load %arg10[%c94] : memref<98xf32, #tpu.memory_space<smem>>
    %552 = vector.extract_strided_slice %91 {offsets = [6, 3], sizes = [16, 16], strides = [1, 1]} : vector<22x22xf32> to vector<16x16xf32>
    %553 = vector.broadcast %551 : f32 to vector<16x16xf32>
    %554 = arith.mulf %553, %552 : vector<16x16xf32>
    %555 = arith.addf %550, %554 : vector<16x16xf32>
    %c46 = arith.constant 46 : index
    %556 = memref.load %arg10[%c46] : memref<98xf32, #tpu.memory_space<smem>>
    %557 = vector.extract_strided_slice %90 {offsets = [6, 4], sizes = [16, 16], strides = [1, 1]} : vector<22x22xf32> to vector<16x16xf32>
    %558 = vector.broadcast %556 : f32 to vector<16x16xf32>
    %559 = arith.mulf %558, %557 : vector<16x16xf32>
    %560 = arith.addf %555, %559 : vector<16x16xf32>
    %c95 = arith.constant 95 : index
    %561 = memref.load %arg10[%c95] : memref<98xf32, #tpu.memory_space<smem>>
    %562 = vector.extract_strided_slice %91 {offsets = [6, 4], sizes = [16, 16], strides = [1, 1]} : vector<22x22xf32> to vector<16x16xf32>
    %563 = vector.broadcast %561 : f32 to vector<16x16xf32>
    %564 = arith.mulf %563, %562 : vector<16x16xf32>
    %565 = arith.addf %560, %564 : vector<16x16xf32>
    %c47 = arith.constant 47 : index
    %566 = memref.load %arg10[%c47] : memref<98xf32, #tpu.memory_space<smem>>
    %567 = vector.extract_strided_slice %90 {offsets = [6, 5], sizes = [16, 16], strides = [1, 1]} : vector<22x22xf32> to vector<16x16xf32>
    %568 = vector.broadcast %566 : f32 to vector<16x16xf32>
    %569 = arith.mulf %568, %567 : vector<16x16xf32>
    %570 = arith.addf %565, %569 : vector<16x16xf32>
    %c96 = arith.constant 96 : index
    %571 = memref.load %arg10[%c96] : memref<98xf32, #tpu.memory_space<smem>>
    %572 = vector.extract_strided_slice %91 {offsets = [6, 5], sizes = [16, 16], strides = [1, 1]} : vector<22x22xf32> to vector<16x16xf32>
    %573 = vector.broadcast %571 : f32 to vector<16x16xf32>
    %574 = arith.mulf %573, %572 : vector<16x16xf32>
    %575 = arith.addf %570, %574 : vector<16x16xf32>
    %c48 = arith.constant 48 : index
    %576 = memref.load %arg10[%c48] : memref<98xf32, #tpu.memory_space<smem>>
    %577 = vector.extract_strided_slice %90 {offsets = [6, 6], sizes = [16, 16], strides = [1, 1]} : vector<22x22xf32> to vector<16x16xf32>
    %578 = vector.broadcast %576 : f32 to vector<16x16xf32>
    %579 = arith.mulf %578, %577 : vector<16x16xf32>
    %580 = arith.addf %575, %579 : vector<16x16xf32>
    %c97 = arith.constant 97 : index
    %581 = memref.load %arg10[%c97] : memref<98xf32, #tpu.memory_space<smem>>
    %582 = vector.extract_strided_slice %91 {offsets = [6, 6], sizes = [16, 16], strides = [1, 1]} : vector<22x22xf32> to vector<16x16xf32>
    %583 = vector.broadcast %581 : f32 to vector<16x16xf32>
    %584 = arith.mulf %583, %582 : vector<16x16xf32>
    %585 = arith.addf %580, %584 : vector<16x16xf32>
    %586 = arith.negf %585 : vector<16x16xf32>
    %587 = math.exp %586 : vector<16x16xf32>
    %cst_64 = arith.constant 1.000000e+00 : f32
    %588 = vector.broadcast %cst_64 : f32 to vector<16x16xf32>
    %589 = arith.addf %588, %587 : vector<16x16xf32>
    %590 = arith.divf %588, %589 : vector<16x16xf32>
    %591 = vector.shape_cast %590 : vector<16x16xf32> to vector<16x16x1xf32>
    %592 = vector.broadcast %591 : vector<16x16x1xf32> to vector<16x16x8xf32>
    %593 = arith.mulf %79, %592 : vector<16x16x8xf32>
    %c0_65 = arith.constant 0 : index
    %c0_66 = arith.constant 0 : index
    %c0_67 = arith.constant 0 : index
    %c0_68 = arith.constant 0 : index
    %594 = vector.load %arg12[%c0_65, %c0_66, %c0_67, %c0_68] : memref<1x16x16x8xf32, #tpu.memory_space<vmem>>, vector<1x16x16x8xf32>
    %595 = vector.shape_cast %594 : vector<1x16x16x8xf32> to vector<16x16x8xf32>
    %596 = vector.shape_cast %593 : vector<16x16x8xf32> to vector<1x16x16x8xf32>
    tpu.vector_store %arg12[%c0_65, %c0_66, %c0_67, %c0_68], %596 {strides = array<i32>} : memref<1x16x16x8xf32, #tpu.memory_space<vmem>>, vector<1x16x16x8xf32>,
    return
  }
  func.func @transform_0(%arg0: i32) -> (i32, i32, i32) {
    %c0_i32 = arith.constant 0 : i32
    %c0_i32_0 = arith.constant 0 : i32
    %c0_i32_1 = arith.constant 0 : i32
    return %arg0, %c0_i32, %c0_i32_0 : i32, i32, i32
  }
  func.func @transform_1(%arg0: i32) -> (i32, i32, i32, i32) {
    %c0_i32 = arith.constant 0 : i32
    %c0_i32_0 = arith.constant 0 : i32
    %c0_i32_1 = arith.constant 0 : i32
    %c0_i32_2 = arith.constant 0 : i32
    return %arg0, %c0_i32, %c0_i32_0, %c0_i32_1 : i32, i32, i32, i32
  }
  func.func @transform_2(%arg0: i32) -> (i32, i32) {
    %c0_i32 = arith.constant 0 : i32
    %c0_i32_0 = arith.constant 0 : i32
    %c0_i32_1 = arith.constant 0 : i32
    return %c0_i32, %c0_i32_0 : i32, i32
  }
  func.func @transform_3(%arg0: i32) -> (i32, i32) {
    %c0_i32 = arith.constant 0 : i32
    %c0_i32_0 = arith.constant 0 : i32
    %c0_i32_1 = arith.constant 0 : i32
    return %c0_i32, %c0_i32_0 : i32, i32
  }
  func.func @transform_4(%arg0: i32) -> (i32, i32) {
    %c0_i32 = arith.constant 0 : i32
    %c0_i32_0 = arith.constant 0 : i32
    %c0_i32_1 = arith.constant 0 : i32
    return %c0_i32, %c0_i32_0 : i32, i32
  }
  func.func @transform_5(%arg0: i32) -> (i32, i32) {
    %c0_i32 = arith.constant 0 : i32
    %c0_i32_0 = arith.constant 0 : i32
    %c0_i32_1 = arith.constant 0 : i32
    return %c0_i32, %c0_i32_0 : i32, i32
  }
  func.func @transform_6(%arg0: i32) -> (i32, i32) {
    %c0_i32 = arith.constant 0 : i32
    %c0_i32_0 = arith.constant 0 : i32
    %c0_i32_1 = arith.constant 0 : i32
    return %c0_i32, %c0_i32_0 : i32, i32
  }
  func.func @transform_7(%arg0: i32) -> (i32, i32) {
    %c0_i32 = arith.constant 0 : i32
    %c0_i32_0 = arith.constant 0 : i32
    %c0_i32_1 = arith.constant 0 : i32
    return %c0_i32, %c0_i32_0 : i32, i32
  }
  func.func @transform_8(%arg0: i32) -> (i32, i32) {
    %c0_i32 = arith.constant 0 : i32
    %c0_i32_0 = arith.constant 0 : i32
    %c0_i32_1 = arith.constant 0 : i32
    return %c0_i32, %c0_i32_0 : i32, i32
  }
  func.func @transform_9(%arg0: i32) -> i32 {
    %c0_i32 = arith.constant 0 : i32
    %c0_i32_0 = arith.constant 0 : i32
    return %c0_i32 : i32
  }
  func.func @transform_10(%arg0: i32) -> i32 {
    %c0_i32 = arith.constant 0 : i32
    %c0_i32_0 = arith.constant 0 : i32
    return %c0_i32 : i32
  }
  func.func @transform_11(%arg0: i32) -> (i32, i32, i32, i32) {
    %c0_i32 = arith.constant 0 : i32
    %c0_i32_0 = arith.constant 0 : i32
    %c0_i32_1 = arith.constant 0 : i32
    %c0_i32_2 = arith.constant 0 : i32
    return %arg0, %c0_i32, %c0_i32_0, %c0_i32_1 : i32, i32, i32, i32
  }
}

</mosaic_0001>

<llo_original>
// kernel: decoder_block_forward.1
$region0: #{decoder_block_forward.1}
  #allocation0 [shape = 'u32[]', space=smem, size = 0x4, offset = 0x4, fixed_abs, tag = 'smem constant byte address 0x4 - core index']
  #allocation1 [shape = 'u32[144,128]{1,0:T(1,128)}', space=vmem, size = 0x12000, scoped, tag = 'internal scratch']
  #allocation2 [shape = 'f32[18,18,12]{2,1,0:T(8,128)}', space=vmem, size = 0x36000, scoped, tag = 'scratch operand']
  #allocation3 [shape = 'f32[18,18,8]{2,1,0:T(8,128)}', space=vmem, size = 0x36000, scoped, tag = 'scratch operand']
  #allocation4 [shape = 'f32[22,22]{1,0:T(8,128)}', space=vmem, size = 0x3000, scoped, tag = 'scratch operand']
  #allocation5 [shape = 'f32[22,22]{1,0:T(8,128)}', space=vmem, size = 0x3000, scoped, tag = 'scratch operand']
  #allocation6 [shape = 'f32[1]{0:T(128)S(6)}', space=smem, size = 0x200, scoped, tag = 'scoped memory for decoder_block_forward.1']
  %s0 = inlined_call_operand.vmem [shape: bf16[2,64,8], index: 0, kind: input, shape index: {}]
  %s1 = inlined_call_operand.vmem [shape: bf16[2,16,16,4], index: 1, kind: input, shape index: {}]
  %s2 = inlined_call_operand.vmem [shape: f32[256,64], index: 2, kind: input, shape index: {}]
  %s3 = inlined_call_operand.vmem [shape: bf16[108,8], index: 3, kind: input, shape index: {}]
  %s4 = inlined_call_operand.vmem [shape: f32[1,8], index: 4, kind: input, shape index: {}]
  %s5 = inlined_call_operand.vmem [shape: f32[1,8], index: 5, kind: input, shape index: {}]
  %s6 = inlined_call_operand.vmem [shape: bf16[72,8], index: 6, kind: input, shape index: {}]
  %s7 = inlined_call_operand.vmem [shape: f32[1,8], index: 7, kind: input, shape index: {}]
  %s8 = inlined_call_operand.vmem [shape: f32[1,8], index: 8, kind: input, shape index: {}]
  %s9 = inlined_call_operand.vmem [shape: f32[98], index: 9, kind: input, shape index: {}]
  %s10 = inlined_call_operand.<no memory space> [shape: f32[1], index: 10, kind: input, shape index: {}]
  %s11 = inlined_call_operand.vmem [shape: f32[2,16,16,8], index: 11, kind: output, shape index: {}]
  %s12 = sld [smem:[#allocation0]]
  $region81: #{decoder_block_forward.1} parent=0
    _
  %s14 = ssub.s32 1, %s12
  %s15 = scalar_select 0, %s14, %s12
  %16 = sst [smem:[#allocation6]] %s10
  $region1: #{decoder_block_forward.1} parent=0
    #allocation7 [shape = 'u8[512]{0}', space=smem, size = 0x200, scoped, tag = 'input window, operand 9, single buffered']
    #allocation8 [shape = 's32[2]{0}', space=sflag, size = 0x8, scoped, tag = 'scoped memory for decoder_block_forward.1']
    %17 = vsyncpa [#allocation8], 0
    loop: start=0, step=1, limit=4
    $region2: #{decoder_block_forward.1} parent=1 // loop_pre_header
      _
    $region3: #{decoder_block_forward.1} parent=1 // loop_header
      %s19 = sphi 0, %s23
      %p20 = scmp.ge.s32.totalorder %s19, 4
      %s29 = sphi 0, %s31
      %s32 = sphi 0, %s29
      %s33 = sphi 0, %s32
      %s49 = sphi 0, %s33
      %s55 = sphi 0, %s57
      %s58 = sphi 0, %s55
      %s59 = sphi 0, %s58
      %s75 = sphi 0, %s59
      %s79 = sphi 0, %s79
      %s81 = sphi 0, %s79
      %s82 = sphi 0, %s81
      %s96 = sphi 0, %s82
      %s100 = sphi 0, %s100
      %s102 = sphi 0, %s100
      %s103 = sphi 0, %s102
      %s117 = sphi 0, %s103
      %s121 = sphi 0, %s121
      %s123 = sphi 0, %s121
      %s124 = sphi 0, %s123
      %s138 = sphi 0, %s124
      %s142 = sphi 0, %s142
      %s144 = sphi 0, %s142
      %s145 = sphi 0, %s144
      %s159 = sphi 0, %s145
      %s163 = sphi 0, %s163
      %s165 = sphi 0, %s163
      %s166 = sphi 0, %s165
      %s180 = sphi 0, %s166
      %s184 = sphi 0, %s184
      %s186 = sphi 0, %s184
      %s187 = sphi 0, %s186
      %s201 = sphi 0, %s187
      %s205 = sphi 0, %s205
      %s207 = sphi 0, %s205
      %s208 = sphi 0, %s207
      %s222 = sphi 0, %s208
      %s226 = sphi 0, %s226
      %s228 = sphi 0, %s226
      %s229 = sphi 0, %s228
      %s243 = sphi 0, %s229
      %s247 = sphi 0, %s247
      %s249 = sphi 0, %s247
      %s250 = sphi 0, %s249
      %s264 = sphi 0, %s250
      %s270 = sphi 0, %s272
      %s273 = sphi 0, %s270
      %s274 = sphi 0, %s273
      %s290 = sphi 0, %s274
    $region4: #{decoder_block_forward.1} parent=1 // loop_header_branch
      %22 = sbr.rel (%p20) target = $region8
    $region5: #{decoder_block_forward.1} parent=1 // loop_body
      %s24 = ssub.s32 %s19, 1
      %s25 = ssub.s32 %s19, 2
      %s26 = sadd.s32 %s19, 1
      %s27 = ssub.s32 %s19, %s26
      %p28 = scmp.eq.s32.totalorder %s27, 0
      %s30 = sadd.s32 %s29, 1
      %s31 = scalar_select %p28, %s29, %s30
      %p34 = pneg %p28
      %p35 = scmp.eq.s32.totalorder %s19, 1
      %p36 = por %p34, %p35
      %p37 = scmp.ne.s32.totalorder %s29, %s32
      %p38 = scmp.eq.s32.totalorder %s19, 0
      %p39 = por %p37, %p38
      %p40 = scmp.ne.s32.totalorder %s29, %s32
      %p41 = scmp.eq.s32.totalorder %s24, 1
      %p42 = por %p40, %p41
      %p43 = scmp.ne.s32.totalorder %s32, %s33
      %p44 = scmp.eq.s32.totalorder %s24, 0
      %p45 = por %p43, %p44
      %p46 = scmp.ne.s32.totalorder %s32, %s33
      %p47 = scmp.eq.s32.totalorder %s25, 1
      %p48 = por %p46, %p47
      %p50 = scmp.ne.s32.totalorder %s33, %s49
      %p51 = scmp.eq.s32.totalorder %s25, 0
      %p52 = por %p50, %p51
      %s53 = ssub.s32 %s19, %s26
      %p54 = scmp.eq.s32.totalorder %s53, 0
      %s56 = sadd.s32 %s55, 1
      %s57 = scalar_select %p54, %s55, %s56
      %p60 = pneg %p54
      %p61 = scmp.eq.s32.totalorder %s19, 1
      %p62 = por %p60, %p61
      %p63 = scmp.ne.s32.totalorder %s55, %s58
      %p64 = scmp.eq.s32.totalorder %s19, 0
      %p65 = por %p63, %p64
      %p66 = scmp.ne.s32.totalorder %s55, %s58
      %p67 = scmp.eq.s32.totalorder %s24, 1
      %p68 = por %p66, %p67
      %p69 = scmp.ne.s32.totalorder %s58, %s59
      %p70 = scmp.eq.s32.totalorder %s24, 0
      %p71 = por %p69, %p70
      %p72 = scmp.ne.s32.totalorder %s58, %s59
      %p73 = scmp.eq.s32.totalorder %s25, 1
      %p74 = por %p72, %p73
      %p76 = scmp.ne.s32.totalorder %s59, %s75
      %p77 = scmp.eq.s32.totalorder %s25, 0
      %p78 = por %p76, %p77
      %s80 = sadd.s32 %s79, 1
      %p83 = scmp.eq.s32.totalorder %s19, 1
      %p84 = scmp.ne.s32.totalorder %s79, %s81
      %p85 = scmp.eq.s32.totalorder %s19, 0
      %p86 = por %p84, %p85
      %p87 = scmp.ne.s32.totalorder %s79, %s81
      %p88 = scmp.eq.s32.totalorder %s24, 1
      %p89 = por %p87, %p88
      %p90 = scmp.ne.s32.totalorder %s81, %s82
      %p91 = scmp.eq.s32.totalorder %s24, 0
      %p92 = por %p90, %p91
      %p93 = scmp.ne.s32.totalorder %s81, %s82
      %p94 = scmp.eq.s32.totalorder %s25, 1
      %p95 = por %p93, %p94
      %p97 = scmp.ne.s32.totalorder %s82, %s96
      %p98 = scmp.eq.s32.totalorder %s25, 0
      %p99 = por %p97, %p98
      %s101 = sadd.s32 %s100, 1
      %p104 = scmp.eq.s32.totalorder %s19, 1
      %p105 = scmp.ne.s32.totalorder %s100, %s102
      %p106 = scmp.eq.s32.totalorder %s19, 0
      %p107 = por %p105, %p106
      %p108 = scmp.ne.s32.totalorder %s100, %s102
      %p109 = scmp.eq.s32.totalorder %s24, 1
      %p110 = por %p108, %p109
      %p111 = scmp.ne.s32.totalorder %s102, %s103
      %p112 = scmp.eq.s32.totalorder %s24, 0
      %p113 = por %p111, %p112
      %p114 = scmp.ne.s32.totalorder %s102, %s103
      %p115 = scmp.eq.s32.totalorder %s25, 1
      %p116 = por %p114, %p115
      %p118 = scmp.ne.s32.totalorder %s103, %s117
      %p119 = scmp.eq.s32.totalorder %s25, 0
      %p120 = por %p118, %p119
      %s122 = sadd.s32 %s121, 1
      %p125 = scmp.eq.s32.totalorder %s19, 1
      %p126 = scmp.ne.s32.totalorder %s121, %s123
      %p127 = scmp.eq.s32.totalorder %s19, 0
      %p128 = por %p126, %p127
      %p129 = scmp.ne.s32.totalorder %s121, %s123
      %p130 = scmp.eq.s32.totalorder %s24, 1
      %p131 = por %p129, %p130
      %p132 = scmp.ne.s32.totalorder %s123, %s124
      %p133 = scmp.eq.s32.totalorder %s24, 0
      %p134 = por %p132, %p133
      %p135 = scmp.ne.s32.totalorder %s123, %s124
      %p136 = scmp.eq.s32.totalorder %s25, 1
      %p137 = por %p135, %p136
      %p139 = scmp.ne.s32.totalorder %s124, %s138
      %p140 = scmp.eq.s32.totalorder %s25, 0
      %p141 = por %p139, %p140
      %s143 = sadd.s32 %s142, 1
      %p146 = scmp.eq.s32.totalorder %s19, 1
      %p147 = scmp.ne.s32.totalorder %s142, %s144
      %p148 = scmp.eq.s32.totalorder %s19, 0
      %p149 = por %p147, %p148
      %p150 = scmp.ne.s32.totalorder %s142, %s144
      %p151 = scmp.eq.s32.totalorder %s24, 1
      %p152 = por %p150, %p151
      %p153 = scmp.ne.s32.totalorder %s144, %s145
      %p154 = scmp.eq.s32.totalorder %s24, 0
      %p155 = por %p153, %p154
      %p156 = scmp.ne.s32.totalorder %s144, %s145
      %p157 = scmp.eq.s32.totalorder %s25, 1
      %p158 = por %p156, %p157
      %p160 = scmp.ne.s32.totalorder %s145, %s159
      %p161 = scmp.eq.s32.totalorder %s25, 0
      %p162 = por %p160, %p161
      %s164 = sadd.s32 %s163, 1
      %p167 = scmp.eq.s32.totalorder %s19, 1
      %p168 = scmp.ne.s32.totalorder %s163, %s165
      %p169 = scmp.eq.s32.totalorder %s19, 0
      %p170 = por %p168, %p169
      %p171 = scmp.ne.s32.totalorder %s163, %s165
      %p172 = scmp.eq.s32.totalorder %s24, 1
      %p173 = por %p171, %p172
      %p174 = scmp.ne.s32.totalorder %s165, %s166
      %p175 = scmp.eq.s32.totalorder %s24, 0
      %p176 = por %p174, %p175
      %p177 = scmp.ne.s32.totalorder %s165, %s166
      %p178 = scmp.eq.s32.totalorder %s25, 1
      %p179 = por %p177, %p178
      %p181 = scmp.ne.s32.totalorder %s166, %s180
      %p182 = scmp.eq.s32.totalorder %s25, 0
      %p183 = por %p181, %p182
      %s185 = sadd.s32 %s184, 1
      %p188 = scmp.eq.s32.totalorder %s19, 1
      %p189 = scmp.ne.s32.totalorder %s184, %s186
      %p190 = scmp.eq.s32.totalorder %s19, 0
      %p191 = por %p189, %p190
      %p192 = scmp.ne.s32.totalorder %s184, %s186
      %p193 = scmp.eq.s32.totalorder %s24, 1
      %p194 = por %p192, %p193
      %p195 = scmp.ne.s32.totalorder %s186, %s187
      %p196 = scmp.eq.s32.totalorder %s24, 0
      %p197 = por %p195, %p196
      %p198 = scmp.ne.s32.totalorder %s186, %s187
      %p199 = scmp.eq.s32.totalorder %s25, 1
      %p200 = por %p198, %p199
      %p202 = scmp.ne.s32.totalorder %s187, %s201
      %p203 = scmp.eq.s32.totalorder %s25, 0
      %p204 = por %p202, %p203
      %s206 = sadd.s32 %s205, 1
      %p209 = scmp.eq.s32.totalorder %s19, 1
      %p210 = scmp.ne.s32.totalorder %s205, %s207
      %p211 = scmp.eq.s32.totalorder %s19, 0
      %p212 = por %p210, %p211
      %p213 = scmp.ne.s32.totalorder %s205, %s207
      %p214 = scmp.eq.s32.totalorder %s24, 1
      %p215 = por %p213, %p214
      %p216 = scmp.ne.s32.totalorder %s207, %s208
      %p217 = scmp.eq.s32.totalorder %s24, 0
      %p218 = por %p216, %p217
      %p219 = scmp.ne.s32.totalorder %s207, %s208
      %p220 = scmp.eq.s32.totalorder %s25, 1
      %p221 = por %p219, %p220
      %p223 = scmp.ne.s32.totalorder %s208, %s222
      %p224 = scmp.eq.s32.totalorder %s25, 0
      %p225 = por %p223, %p224
      %s227 = sadd.s32 %s226, 1
      %p230 = scmp.eq.s32.totalorder %s19, 1
      %p231 = scmp.ne.s32.totalorder %s226, %s228
      %p232 = scmp.eq.s32.totalorder %s19, 0
      %p233 = por %p231, %p232
      %p234 = scmp.ne.s32.totalorder %s226, %s228
      %p235 = scmp.eq.s32.totalorder %s24, 1
      %p236 = por %p234, %p235
      %p237 = scmp.ne.s32.totalorder %s228, %s229
      %p238 = scmp.eq.s32.totalorder %s24, 0
      %p239 = por %p237, %p238
      %p240 = scmp.ne.s32.totalorder %s228, %s229
      %p241 = scmp.eq.s32.totalorder %s25, 1
      %p242 = por %p240, %p241
      %p244 = scmp.ne.s32.totalorder %s229, %s243
      %p245 = scmp.eq.s32.totalorder %s25, 0
      %p246 = por %p244, %p245
      %s248 = sadd.s32 %s247, 1
      %p251 = scmp.eq.s32.totalorder %s19, 1
      %p252 = scmp.ne.s32.totalorder %s247, %s249
      %p253 = scmp.eq.s32.totalorder %s19, 0
      %p254 = por %p252, %p253
      %p255 = scmp.ne.s32.totalorder %s247, %s249
      %p256 = scmp.eq.s32.totalorder %s24, 1
      %p257 = por %p255, %p256
      %p258 = scmp.ne.s32.totalorder %s249, %s250
      %p259 = scmp.eq.s32.totalorder %s24, 0
      %p260 = por %p258, %p259
      %p261 = scmp.ne.s32.totalorder %s249, %s250
      %p262 = scmp.eq.s32.totalorder %s25, 1
      %p263 = por %p261, %p262
      %p265 = scmp.ne.s32.totalorder %s250, %s264
      %p266 = scmp.eq.s32.totalorder %s25, 0
      %p267 = por %p265, %p266
      %s268 = ssub.s32 %s19, %s26
      %p269 = scmp.eq.s32.totalorder %s268, 0
      %s271 = sadd.s32 %s270, 1
      %s272 = scalar_select %p269, %s270, %s271
      %p275 = pneg %p269
      %p276 = scmp.eq.s32.totalorder %s19, 1
      %p277 = por %p275, %p276
      %p278 = scmp.ne.s32.totalorder %s270, %s273
      %p279 = scmp.eq.s32.totalorder %s19, 0
      %p280 = por %p278, %p279
      %p281 = scmp.ne.s32.totalorder %s270, %s273
      %p282 = scmp.eq.s32.totalorder %s24, 1
      %p283 = por %p281, %p282
      %p284 = scmp.ne.s32.totalorder %s273, %s274
      %p285 = scmp.eq.s32.totalorder %s24, 0
      %p286 = por %p284, %p285
      %p287 = scmp.ne.s32.totalorder %s273, %s274
      %p288 = scmp.eq.s32.totalorder %s25, 1
      %p289 = por %p287, %p288
      %p291 = scmp.ne.s32.totalorder %s274, %s290
      %p292 = scmp.eq.s32.totalorder %s25, 0
      %p293 = por %p291, %p292
      %p294 = scmp.le.s32.totalorder 1, %s19
      %p295 = scmp.lt.s32.totalorder %s19, 3
      %p296 = pnand %p294, %p295
      %p297 = pneg %p296
      // Predicated region
      $region9: #{decoder_block_forward.1} parent=5 // pred_check
        _
      $region10: #{decoder_block_forward.1} parent=5 // pred_check_branch
        %299 = sbr.rel (%p296) target = $region12
      $region11: #{decoder_block_forward.1} parent=5 // pred_region
        %s300 = ssub.s32 %s19, 1
        // Predicated region
        $region13: #{decoder_block_forward.1} parent=11 // pred_check
          %p301 = pneg %p92
        $region14: #{decoder_block_forward.1} parent=11 // pred_check_branch
          %303 = sbr.rel (%p301) target = $region16
        $region15: #{decoder_block_forward.1} parent=11 // pred_region
          _
        $region16: #{decoder_block_forward.1} parent=11 // pred_fallthru
          _
        // Predicated region
        $region17: #{decoder_block_forward.1} parent=11 // pred_check
          %p304 = pneg %p113
        $region18: #{decoder_block_forward.1} parent=11 // pred_check_branch
          %306 = sbr.rel (%p304) target = $region20
        $region19: #{decoder_block_forward.1} parent=11 // pred_region
          _
        $region20: #{decoder_block_forward.1} parent=11 // pred_fallthru
          _
        // Predicated region
        $region21: #{decoder_block_forward.1} parent=11 // pred_check
          %p307 = pneg %p134
        $region22: #{decoder_block_forward.1} parent=11 // pred_check_branch
          %309 = sbr.rel (%p307) target = $region24
        $region23: #{decoder_block_forward.1} parent=11 // pred_region
          _
        $region24: #{decoder_block_forward.1} parent=11 // pred_fallthru
          _
        // Predicated region
        $region25: #{decoder_block_forward.1} parent=11 // pred_check
          %p310 = pneg %p155
        $region26: #{decoder_block_forward.1} parent=11 // pred_check_branch
          %312 = sbr.rel (%p310) target = $region28
        $region27: #{decoder_block_forward.1} parent=11 // pred_region
          _
        $region28: #{decoder_block_forward.1} parent=11 // pred_fallthru
          _
        // Predicated region
        $region29: #{decoder_block_forward.1} parent=11 // pred_check
          %p313 = pneg %p176
        $region30: #{decoder_block_forward.1} parent=11 // pred_check_branch
          %315 = sbr.rel (%p313) target = $region32
        $region31: #{decoder_block_forward.1} parent=11 // pred_region
          _
        $region32: #{decoder_block_forward.1} parent=11 // pred_fallthru
          _
        // Predicated region
        $region33: #{decoder_block_forward.1} parent=11 // pred_check
          %p316 = pneg %p197
        $region34: #{decoder_block_forward.1} parent=11 // pred_check_branch
          %318 = sbr.rel (%p316) target = $region36
        $region35: #{decoder_block_forward.1} parent=11 // pred_region
          _
        $region36: #{decoder_block_forward.1} parent=11 // pred_fallthru
          _
        // Predicated region
        $region37: #{decoder_block_forward.1} parent=11 // pred_check
          %p319 = pneg %p218
        $region38: #{decoder_block_forward.1} parent=11 // pred_check_branch
          %321 = sbr.rel (%p319) target = $region40
        $region39: #{decoder_block_forward.1} parent=11 // pred_region
          _
        $region40: #{decoder_block_forward.1} parent=11 // pred_fallthru
          _
        // Predicated region
        $region41: #{decoder_block_forward.1} parent=11 // pred_check
          %p322 = pneg %p239
        $region42: #{decoder_block_forward.1} parent=11 // pred_check_branch
          %324 = sbr.rel (%p322) target = $region44
        $region43: #{decoder_block_forward.1} parent=11 // pred_region
          %s326 = ssub.s32 16, 16
          %327 = vsyncadd [#allocation8], %s326
          %s329 = sshll.u32 %s9, 4
          %s330 = int_to_ptr.vmem [resolvable:$true] %s329
          %332 = dma.vmem_to_smem %s330, 16, [#allocation7], [#allocation8]
        $region44: #{decoder_block_forward.1} parent=11 // pred_fallthru
          _
        // Predicated region
        $region45: #{decoder_block_forward.1} parent=11 // pred_check
          %p333 = pneg %p260
        $region46: #{decoder_block_forward.1} parent=11 // pred_check_branch
          %335 = sbr.rel (%p333) target = $region48
        $region47: #{decoder_block_forward.1} parent=11 // pred_region
          _
        $region48: #{decoder_block_forward.1} parent=11 // pred_fallthru
          _
      $region12: #{decoder_block_forward.1} parent=5 // pred_fallthru
        _
      %p336 = scmp.lt.s32.totalorder %s19, 2
      // Predicated region
      $region49: #{decoder_block_forward.1} parent=5 // pred_check
        %p337 = pneg %p336
      $region50: #{decoder_block_forward.1} parent=5 // pred_check_branch
        %339 = sbr.rel (%p337) target = $region52
      $region51: #{decoder_block_forward.1} parent=5 // pred_region
        // Predicated region
        $region53: #{decoder_block_forward.1} parent=51 // pred_check
          %p340 = pneg %p39
        $region54: #{decoder_block_forward.1} parent=51 // pred_check_branch
          %342 = sbr.rel (%p340) target = $region56
        $region55: #{decoder_block_forward.1} parent=51 // pred_region
          %p343 = scmp.lt.s32.totalorder %s19, 1
          %s344 = scalar_select %p343, %s19, 1
          %s345 = smul.addr %s344, 8
          %s346 = smul.addr %s345, 4
          %s347 = scalar_lea.vmem %s0, %s346
        $region56: #{decoder_block_forward.1} parent=51 // pred_fallthru
          _
        // Predicated region
        $region57: #{decoder_block_forward.1} parent=51 // pred_check
          %p348 = pneg %p65
        $region58: #{decoder_block_forward.1} parent=51 // pred_check_branch
          %350 = sbr.rel (%p348) target = $region60
        $region59: #{decoder_block_forward.1} parent=51 // pred_region
          %p351 = scmp.lt.s32.totalorder %s19, 1
          %s352 = scalar_select %p351, %s19, 1
          %s353 = smul.addr %s352, 32
          %s354 = smul.addr %s353, 4
          %s355 = scalar_lea.vmem %s1, %s354
        $region60: #{decoder_block_forward.1} parent=51 // pred_fallthru
          _
      $region52: #{decoder_block_forward.1} parent=5 // pred_fallthru
        _
      %p356 = scmp.le.s32.totalorder 1, %s19
      %p357 = scmp.lt.s32.totalorder %s19, 3
      %p358 = pnand %p356, %p357
      %p359 = pneg %p358
      // Predicated region
      $region61: #{decoder_block_forward.1} parent=5 // pred_check
        _
      $region62: #{decoder_block_forward.1} parent=5 // pred_check_branch
        %361 = sbr.rel (%p358) target = $region64
      $region63: #{decoder_block_forward.1} parent=5 // pred_region
        %s362 = ssub.s32 %s19, 1
        // Predicated region
        $region65: #{decoder_block_forward.1} parent=63 // pred_check
          %p363 = pneg %p239
        $region66: #{decoder_block_forward.1} parent=63 // pred_check_branch
          %365 = sbr.rel (%p363) target = $region68
        $region67: #{decoder_block_forward.1} parent=63 // pred_region
          %366 = dma.done [#allocation8], 16
        $region68: #{decoder_block_forward.1} parent=63 // pred_fallthru
          _
        %367 = sfence
        %p368 = scmp.lt.s32.totalorder %s24, 1
        %s369 = scalar_select %p368, %s24, 1
        %s370 = smul.addr %s369, 8
        %s371 = smul.addr %s370, 4
        %s372 = scalar_lea.vmem %s0, %s371
        %p373 = pneg %p45
        %p374 = pneg %p42
        %p375 = scmp.lt.s32.totalorder %s24, 1
        %s376 = scalar_select %p375, %s24, 1
        %s377 = smul.addr %s376, 32
        %s378 = smul.addr %s377, 4
        %s379 = scalar_lea.vmem %s1, %s378
        %p380 = pneg %p71
        %p381 = pneg %p68
        %p382 = pneg %p92
        %p383 = pneg %p89
        %p384 = pneg %p113
        %p385 = pneg %p110
        %p386 = pneg %p134
        %p387 = pneg %p131
        %p388 = pneg %p155
        %p389 = pneg %p152
        %p390 = pneg %p176
        %p391 = pneg %p173
        %p392 = pneg %p197
        %p393 = pneg %p194
        %p394 = pneg %p218
        %p395 = pneg %p215
        %p396 = pneg %p239
        %p397 = pneg %p236
        %p398 = pneg %p260
        %p399 = pneg %p257
        %p400 = pneg %p286
        %p401 = pneg %p283
        %p402 = scmp.lt.s32.totalorder %s24, 1
        %s403 = scalar_select %p402, %s24, 1
        %s404 = smul.addr %s403, 32
        %s405 = smul.addr %s404, 8
        %s406 = scalar_lea.vmem %s11, %s405
        %p407 = scmp.lt.s32.totalorder %s24, 1
        %s408 = scalar_select %p407, %s24, 1
        %s409 = smul.addr %s408, 8
        %s410 = smul.addr %s409, 4
        %s411 = scalar_lea.vmem %s0, %s410
        %p412 = scmp.lt.s32.totalorder %s24, 1
        %s413 = scalar_select %p412, %s24, 1
        %s414 = smul.addr %s413, 32
        %s415 = smul.addr %s414, 4
        %s416 = scalar_lea.vmem %s1, %s415
        %p417 = scmp.lt.s32.totalorder %s24, 1
        %s418 = scalar_select %p417, %s24, 1
        %s419 = smul.addr %s418, 32
        %s420 = smul.addr %s419, 8
        %s421 = scalar_lea.vmem %s11, %s420
        %v423 = vld [vmem:[%s411] sm:$0xf]
        %v424 = vld [vmem:[%s411 + $0x4] sm:$0xf]
        %v425 = vld [vmem:[%s411 + $0x8] sm:$0xf]
        %v426 = vld [vmem:[%s411 + $0xc] sm:$0xf]
        %v427 = vld [vmem:[%s411 + $0x10] sm:$0xf]
        %v428 = vld [vmem:[%s411 + $0x14] sm:$0xf]
        %v429 = vld [vmem:[%s411 + $0x18] sm:$0xf]
        %v430 = vld [vmem:[%s411 + $0x1c] sm:$0xf]
        %v431 = vunpack.c.l.bf16 %v423
        %v432 = vunpack.c.l.bf16 %v424
        %v433 = vunpack.c.l.bf16 %v425
        %v434 = vunpack.c.l.bf16 %v426
        %v435 = vunpack.c.l.bf16 %v427
        %v436 = vunpack.c.l.bf16 %v428
        %v437 = vunpack.c.l.bf16 %v429
        %v438 = vunpack.c.l.bf16 %v430
        %v439 = vld [vmem:[%s2] sm:$0xff]
        %v440 = vld [vmem:[%s2 + $0x8] sm:$0xff]
        %v441 = vld [vmem:[%s2 + $0x10] sm:$0xff]
        %v442 = vld [vmem:[%s2 + $0x18] sm:$0xff]
        %v443 = vld [vmem:[%s2 + $0x20] sm:$0xff]
        %v444 = vld [vmem:[%s2 + $0x28] sm:$0xff]
        %v445 = vld [vmem:[%s2 + $0x30] sm:$0xff]
        %v446 = vld [vmem:[%s2 + $0x38] sm:$0xff]
        %v447 = vld [vmem:[%s2 + $0x40] sm:$0xff]
        %v448 = vld [vmem:[%s2 + $0x48] sm:$0xff]
        %v449 = vld [vmem:[%s2 + $0x50] sm:$0xff]
        %v450 = vld [vmem:[%s2 + $0x58] sm:$0xff]
        %v451 = vld [vmem:[%s2 + $0x60] sm:$0xff]
        %v452 = vld [vmem:[%s2 + $0x68] sm:$0xff]
        %v453 = vld [vmem:[%s2 + $0x70] sm:$0xff]
        %v454 = vld [vmem:[%s2 + $0x78] sm:$0xff]
        %v455 = vld [vmem:[%s2 + $0x80] sm:$0xff]
        %v456 = vld [vmem:[%s2 + $0x88] sm:$0xff]
        %v457 = vld [vmem:[%s2 + $0x90] sm:$0xff]
        %v458 = vld [vmem:[%s2 + $0x98] sm:$0xff]
        %v459 = vld [vmem:[%s2 + $0xa0] sm:$0xff]
        %v460 = vld [vmem:[%s2 + $0xa8] sm:$0xff]
        %v461 = vld [vmem:[%s2 + $0xb0] sm:$0xff]
        %v462 = vld [vmem:[%s2 + $0xb8] sm:$0xff]
        %v463 = vld [vmem:[%s2 + $0xc0] sm:$0xff]
        %v464 = vld [vmem:[%s2 + $0xc8] sm:$0xff]
        %v465 = vld [vmem:[%s2 + $0xd0] sm:$0xff]
        %v466 = vld [vmem:[%s2 + $0xd8] sm:$0xff]
        %v467 = vld [vmem:[%s2 + $0xe0] sm:$0xff]
        %v468 = vld [vmem:[%s2 + $0xe8] sm:$0xff]
        %v469 = vld [vmem:[%s2 + $0xf0] sm:$0xff]
        %v470 = vld [vmem:[%s2 + $0xf8] sm:$0xff]
        %vm471 = vcmask 523264
        %v473 = vsel %vm471, %v439, 0
        %v476 = vsel %vm471, %v440, 0
        %v479 = vsel %vm471, %v441, 0
        %v482 = vsel %vm471, %v442, 0
        %v485 = vsel %vm471, %v443, 0
        %v488 = vsel %vm471, %v444, 0
        %v491 = vsel %vm471, %v445, 0
        %v494 = vsel %vm471, %v446, 0
        %v497 = vsel %vm471, %v447, 0
        %v500 = vsel %vm471, %v448, 0
        %v503 = vsel %vm471, %v449, 0
        %v506 = vsel %vm471, %v450, 0
        %v509 = vsel %vm471, %v451, 0
        %v512 = vsel %vm471, %v452, 0
        %v515 = vsel %vm471, %v453, 0
        %v518 = vsel %vm471, %v454, 0
        %v521 = vsel %vm471, %v455, 0
        %v524 = vsel %vm471, %v456, 0
        %v527 = vsel %vm471, %v457, 0
        %v530 = vsel %vm471, %v458, 0
        %v533 = vsel %vm471, %v459, 0
        %v536 = vsel %vm471, %v460, 0
        %v539 = vsel %vm471, %v461, 0
        %v542 = vsel %vm471, %v462, 0
        %v545 = vsel %vm471, %v463, 0
        %v548 = vsel %vm471, %v464, 0
        %v551 = vsel %vm471, %v465, 0
        %v554 = vsel %vm471, %v466, 0
        %v557 = vsel %vm471, %v467, 0
        %v560 = vsel %vm471, %v468, 0
        %v563 = vsel %vm471, %v469, 0
        %v566 = vsel %vm471, %v470, 0
        %568 = vmatprep.subr.mxu0 0.0
        %569 = vmatpush1.msra.mxu0 0.0
        %570 = vmatprep.subr.mxu0 0.0
        %571 = vmatpush1.msra.mxu0 0.0
        %572 = vmatprep.subr.mxu0 0.0
        %573 = vmatpush1.msra.mxu0 0.0
        %574 = vmatprep.subr.mxu0 0.0
        %575 = vmatpush1.msra.mxu0 0.0
        %576 = vmatprep.subr.mxu0 0.0
        %577 = vmatpush1.msra.mxu0 0.0
        %578 = vmatprep.subr.mxu0 0.0
        %579 = vmatpush1.msra.mxu0 0.0
        %580 = vmatprep.subr.mxu0 0.0
        %581 = vmatpush1.msra.mxu0 0.0
        %582 = vmatprep.subr.mxu0 0.0
        %583 = vmatpush1.msra.mxu0 0.0
        %584 = vmatprep.subr.mxu0 0.0
        %585 = vmatpush1.msra.mxu0 %v438
        %586 = vmatprep.subr.mxu0 0.0
        %587 = vmatpush1.msra.mxu0 %v437
        %588 = vmatprep.subr.mxu0 0.0
        %589 = vmatpush1.msra.mxu0 %v436
        %590 = vmatprep.subr.mxu0 0.0
        %591 = vmatpush1.msra.mxu0 %v435
        %592 = vmatprep.subr.mxu0 0.0
        %593 = vmatpush1.msra.mxu0 %v434
        %594 = vmatprep.subr.mxu0 0.0
        %595 = vmatpush1.msra.mxu0 %v433
        %596 = vmatprep.subr.mxu0 0.0
        %597 = vmatpush1.msra.mxu0 %v432
        %598 = vmatprep.subr.mxu0 0.0
        %599 = vmatpush1.msra.mxu0 %v431
        %600 = vmatprep.subr.mxu0 0.0
        %601 = vmatpush2.msra.mxu0 0.0
        %602 = vmatprep.subr.mxu0 0.0
        %603 = vmatpush2.msra.mxu0 0.0
        %604 = vmatprep.subr.mxu0 0.0
        %605 = vmatpush2.msra.mxu0 0.0
        %606 = vmatprep.subr.mxu0 0.0
        %607 = vmatpush2.msra.mxu0 0.0
        %608 = vmatprep.subr.mxu0 0.0
        %609 = vmatpush2.msra.mxu0 0.0
        %610 = vmatprep.subr.mxu0 0.0
        %611 = vmatpush2.msra.mxu0 0.0
        %612 = vmatprep.subr.mxu0 0.0
        %613 = vmatpush2.msra.mxu0 0.0
        %614 = vmatprep.subr.mxu0 0.0
        %615 = vmatpush2.msra.mxu0 0.0
        %616 = vmatprep.subr.mxu0 0.0
        %617 = vmatpush2.msra.mxu0 0.0
        %618 = vmatprep.subr.mxu0 0.0
        %619 = vmatpush2.msra.mxu0 0.0
        %620 = vmatprep.subr.mxu0 0.0
        %621 = vmatpush2.msra.mxu0 0.0
        %622 = vmatprep.subr.mxu0 0.0
        %623 = vmatpush2.msra.mxu0 0.0
        %624 = vmatprep.subr.mxu0 0.0
        %625 = vmatpush2.msra.mxu0 0.0
        %626 = vmatprep.subr.mxu0 0.0
        %627 = vmatpush2.msra.mxu0 0.0
        %628 = vmatprep.subr.mxu0 0.0
        %629 = vmatpush2.msra.mxu0 0.0
        %630 = vmatprep.subr.mxu0 0.0
        %631 = vmatpush2.msra.mxu0 0.0
        %632 = vmatprep.mubr.f32.mxu0 0.0
        %633 = vmatmul.mubr.f32.gmra.mxu0 %v473
        %v634 = vpop.f32.mrf.mxu0
        %v635 = vadd.f32 0.0, %v634
        %v636 = vpop.f32.mrf.mxu0
        %637 = vmatprep.mubr.f32.mxu0 0.0
        %638 = vmatmul.mubr.f32.gmra.mxu0 %v476
        %v639 = vpop.f32.mrf.mxu0
        %v640 = vadd.f32 0.0, %v639
        %v641 = vpop.f32.mrf.mxu0
        %642 = vmatprep.mubr.f32.mxu0 0.0
        %643 = vmatmul.mubr.f32.gmra.mxu0 %v479
        %v644 = vpop.f32.mrf.mxu0
        %v645 = vadd.f32 0.0, %v644
        %v646 = vpop.f32.mrf.mxu0
        %647 = vmatprep.mubr.f32.mxu0 0.0
        %648 = vmatmul.mubr.f32.gmra.mxu0 %v482
        %v649 = vpop.f32.mrf.mxu0
        %v650 = vadd.f32 0.0, %v649
        %v651 = vpop.f32.mrf.mxu0
        %652 = vmatprep.mubr.f32.mxu0 0.0
        %653 = vmatmul.mubr.f32.gmra.mxu0 %v485
        %v654 = vpop.f32.mrf.mxu0
        %v655 = vadd.f32 0.0, %v654
        %v656 = vpop.f32.mrf.mxu0
        %657 = vmatprep.mubr.f32.mxu0 0.0
        %658 = vmatmul.mubr.f32.gmra.mxu0 %v488
        %v659 = vpop.f32.mrf.mxu0
        %v660 = vadd.f32 0.0, %v659
        %v661 = vpop.f32.mrf.mxu0
        %662 = vmatprep.mubr.f32.mxu0 0.0
        %663 = vmatmul.mubr.f32.gmra.mxu0 %v491
        %v664 = vpop.f32.mrf.mxu0
        %v665 = vadd.f32 0.0, %v664
        %v666 = vpop.f32.mrf.mxu0
        %667 = vmatprep.mubr.f32.mxu0 0.0
        %668 = vmatmul.mubr.f32.gmra.mxu0 %v494
        %v669 = vpop.f32.mrf.mxu0
        %v670 = vadd.f32 0.0, %v669
        %v671 = vpop.f32.mrf.mxu0
        %672 = vmatprep.mubr.f32.mxu0 0.0
        %673 = vmatmul.mubr.f32.gmra.mxu0 %v497
        %v674 = vpop.f32.mrf.mxu0
        %v675 = vadd.f32 0.0, %v674
        %v676 = vpop.f32.mrf.mxu0
        %677 = vmatprep.mubr.f32.mxu0 0.0
        %678 = vmatmul.mubr.f32.gmra.mxu0 %v500
        %v679 = vpop.f32.mrf.mxu0
        %v680 = vadd.f32 0.0, %v679
        %v681 = vpop.f32.mrf.mxu0
        %682 = vmatprep.mubr.f32.mxu0 0.0
        %683 = vmatmul.mubr.f32.gmra.mxu0 %v503
        %v684 = vpop.f32.mrf.mxu0
        %v685 = vadd.f32 0.0, %v684
        %v686 = vpop.f32.mrf.mxu0
        %687 = vmatprep.mubr.f32.mxu0 0.0
        %688 = vmatmul.mubr.f32.gmra.mxu0 %v506
        %v689 = vpop.f32.mrf.mxu0
        %v690 = vadd.f32 0.0, %v689
        %v691 = vpop.f32.mrf.mxu0
        %692 = vmatprep.mubr.f32.mxu0 0.0
        %693 = vmatmul.mubr.f32.gmra.mxu0 %v509
        %v694 = vpop.f32.mrf.mxu0
        %v695 = vadd.f32 0.0, %v694
        %v696 = vpop.f32.mrf.mxu0
        %697 = vmatprep.mubr.f32.mxu0 0.0
        %698 = vmatmul.mubr.f32.gmra.mxu0 %v512
        %v699 = vpop.f32.mrf.mxu0
        %v700 = vadd.f32 0.0, %v699
        %v701 = vpop.f32.mrf.mxu0
        %702 = vmatprep.mubr.f32.mxu0 0.0
        %703 = vmatmul.mubr.f32.gmra.mxu0 %v515
        %v704 = vpop.f32.mrf.mxu0
        %v705 = vadd.f32 0.0, %v704
        %v706 = vpop.f32.mrf.mxu0
        %707 = vmatprep.mubr.f32.mxu0 0.0
        %708 = vmatmul.mubr.f32.gmra.mxu0 %v518
        %v709 = vpop.f32.mrf.mxu0
        %v710 = vadd.f32 0.0, %v709
        %v711 = vpop.f32.mrf.mxu0
        %712 = vmatprep.mubr.f32.mxu0 0.0
        %713 = vmatmul.mubr.f32.gmra.mxu0 %v521
        %v714 = vpop.f32.mrf.mxu0
        %v715 = vadd.f32 0.0, %v714
        %v716 = vpop.f32.mrf.mxu0
        %717 = vmatprep.mubr.f32.mxu0 0.0
        %718 = vmatmul.mubr.f32.gmra.mxu0 %v524
        %v719 = vpop.f32.mrf.mxu0
        %v720 = vadd.f32 0.0, %v719
        %v721 = vpop.f32.mrf.mxu0
        %722 = vmatprep.mubr.f32.mxu0 0.0
        %723 = vmatmul.mubr.f32.gmra.mxu0 %v527
        %v724 = vpop.f32.mrf.mxu0
        %v725 = vadd.f32 0.0, %v724
        %v726 = vpop.f32.mrf.mxu0
        %727 = vmatprep.mubr.f32.mxu0 0.0
        %728 = vmatmul.mubr.f32.gmra.mxu0 %v530
        %v729 = vpop.f32.mrf.mxu0
        %v730 = vadd.f32 0.0, %v729
        %v731 = vpop.f32.mrf.mxu0
        %732 = vmatprep.mubr.f32.mxu0 0.0
        %733 = vmatmul.mubr.f32.gmra.mxu0 %v533
        %v734 = vpop.f32.mrf.mxu0
        %v735 = vadd.f32 0.0, %v734
        %v736 = vpop.f32.mrf.mxu0
        %737 = vmatprep.mubr.f32.mxu0 0.0
        %738 = vmatmul.mubr.f32.gmra.mxu0 %v536
        %v739 = vpop.f32.mrf.mxu0
        %v740 = vadd.f32 0.0, %v739
        %v741 = vpop.f32.mrf.mxu0
        %742 = vmatprep.mubr.f32.mxu0 0.0
        %743 = vmatmul.mubr.f32.gmra.mxu0 %v539
        %v744 = vpop.f32.mrf.mxu0
        %v745 = vadd.f32 0.0, %v744
        %v746 = vpop.f32.mrf.mxu0
        %747 = vmatprep.mubr.f32.mxu0 0.0
        %748 = vmatmul.mubr.f32.gmra.mxu0 %v542
        %v749 = vpop.f32.mrf.mxu0
        %v750 = vadd.f32 0.0, %v749
        %v751 = vpop.f32.mrf.mxu0
        %752 = vmatprep.mubr.f32.mxu0 0.0
        %753 = vmatmul.mubr.f32.gmra.mxu0 %v545
        %v754 = vpop.f32.mrf.mxu0
        %v755 = vadd.f32 0.0, %v754
        %v756 = vpop.f32.mrf.mxu0
        %757 = vmatprep.mubr.f32.mxu0 0.0
        %758 = vmatmul.mubr.f32.gmra.mxu0 %v548
        %v759 = vpop.f32.mrf.mxu0
        %v760 = vadd.f32 0.0, %v759
        %v761 = vpop.f32.mrf.mxu0
        %762 = vmatprep.mubr.f32.mxu0 0.0
        %763 = vmatmul.mubr.f32.gmra.mxu0 %v551
        %v764 = vpop.f32.mrf.mxu0
        %v765 = vadd.f32 0.0, %v764
        %v766 = vpop.f32.mrf.mxu0
        %767 = vmatprep.mubr.f32.mxu0 0.0
        %768 = vmatmul.mubr.f32.gmra.mxu0 %v554
        %v769 = vpop.f32.mrf.mxu0
        %v770 = vadd.f32 0.0, %v769
        %v771 = vpop.f32.mrf.mxu0
        %772 = vmatprep.mubr.f32.mxu0 0.0
        %773 = vmatmul.mubr.f32.gmra.mxu0 %v557
        %v774 = vpop.f32.mrf.mxu0
        %v775 = vadd.f32 0.0, %v774
        %v776 = vpop.f32.mrf.mxu0
        %777 = vmatprep.mubr.f32.mxu0 0.0
        %778 = vmatmul.mubr.f32.gmra.mxu0 %v560
        %v779 = vpop.f32.mrf.mxu0
        %v780 = vadd.f32 0.0, %v779
        %v781 = vpop.f32.mrf.mxu0
        %782 = vmatprep.mubr.f32.mxu0 0.0
        %783 = vmatmul.mubr.f32.gmra.mxu0 %v563
        %v784 = vpop.f32.mrf.mxu0
        %v785 = vadd.f32 0.0, %v784
        %v786 = vpop.f32.mrf.mxu0
        %787 = vmatprep.mubr.f32.mxu0 0.0
        %788 = vmatmul.mubr.f32.gmra.mxu0 %v566
        %v789 = vpop.f32.mrf.mxu0
        %v790 = vadd.f32 0.0, %v789
        %v791 = vpop.f32.mrf.mxu0
        %792 = vdwg.mxu0
        %v793 = vld [vmem:[%s416] sm:$0xf]
        %v794 = vld [vmem:[%s416 + $0x4] sm:$0xf]
        %v795 = vld [vmem:[%s416 + $0x8] sm:$0xf]
        %v796 = vld [vmem:[%s416 + $0xc] sm:$0xf]
        %v797 = vld [vmem:[%s416 + $0x10] sm:$0xf]
        %v798 = vld [vmem:[%s416 + $0x14] sm:$0xf]
        %v799 = vld [vmem:[%s416 + $0x18] sm:$0xf]
        %v800 = vld [vmem:[%s416 + $0x1c] sm:$0xf]
        %v801 = vld [vmem:[%s416 + $0x20] sm:$0xf]
        %v802 = vld [vmem:[%s416 + $0x24] sm:$0xf]
        %v803 = vld [vmem:[%s416 + $0x28] sm:$0xf]
        %v804 = vld [vmem:[%s416 + $0x2c] sm:$0xf]
        %v805 = vld [vmem:[%s416 + $0x30] sm:$0xf]
        %v806 = vld [vmem:[%s416 + $0x34] sm:$0xf]
        %v807 = vld [vmem:[%s416 + $0x38] sm:$0xf]
        %v808 = vld [vmem:[%s416 + $0x3c] sm:$0xf]
        %v809 = vld [vmem:[%s416 + $0x40] sm:$0xf]
        %v810 = vld [vmem:[%s416 + $0x44] sm:$0xf]
        %v811 = vld [vmem:[%s416 + $0x48] sm:$0xf]
        %v812 = vld [vmem:[%s416 + $0x4c] sm:$0xf]
        %v813 = vld [vmem:[%s416 + $0x50] sm:$0xf]
        %v814 = vld [vmem:[%s416 + $0x54] sm:$0xf]
        %v815 = vld [vmem:[%s416 + $0x58] sm:$0xf]
        %v816 = vld [vmem:[%s416 + $0x5c] sm:$0xf]
        %v817 = vld [vmem:[%s416 + $0x60] sm:$0xf]
        %v818 = vld [vmem:[%s416 + $0x64] sm:$0xf]
        %v819 = vld [vmem:[%s416 + $0x68] sm:$0xf]
        %v820 = vld [vmem:[%s416 + $0x6c] sm:$0xf]
        %v821 = vld [vmem:[%s416 + $0x70] sm:$0xf]
        %v822 = vld [vmem:[%s416 + $0x74] sm:$0xf]
        %v823 = vld [vmem:[%s416 + $0x78] sm:$0xf]
        %v824 = vld [vmem:[%s416 + $0x7c] sm:$0xf]
        %v825 = vunpack.c.l.bf16 %v793
        %v826 = vunpack.c.l.bf16 %v794
        %v827 = vunpack.c.l.bf16 %v795
        %v828 = vunpack.c.l.bf16 %v796
        %v829 = vunpack.c.l.bf16 %v797
        %v830 = vunpack.c.l.bf16 %v798
        %v831 = vunpack.c.l.bf16 %v799
        %v832 = vunpack.c.l.bf16 %v800
        %v833 = vunpack.c.l.bf16 %v801
        %v834 = vunpack.c.l.bf16 %v802
        %v835 = vunpack.c.l.bf16 %v803
        %v836 = vunpack.c.l.bf16 %v804
        %v837 = vunpack.c.l.bf16 %v805
        %v838 = vunpack.c.l.bf16 %v806
        %v839 = vunpack.c.l.bf16 %v807
        %v840 = vunpack.c.l.bf16 %v808
        %v841 = vunpack.c.l.bf16 %v809
        %v842 = vunpack.c.l.bf16 %v810
        %v843 = vunpack.c.l.bf16 %v811
        %v844 = vunpack.c.l.bf16 %v812
        %v845 = vunpack.c.l.bf16 %v813
        %v846 = vunpack.c.l.bf16 %v814
        %v847 = vunpack.c.l.bf16 %v815
        %v848 = vunpack.c.l.bf16 %v816
        %v849 = vunpack.c.l.bf16 %v817
        %v850 = vunpack.c.l.bf16 %v818
        %v851 = vunpack.c.l.bf16 %v819
        %v852 = vunpack.c.l.bf16 %v820
        %v853 = vunpack.c.l.bf16 %v821
        %v854 = vunpack.c.l.bf16 %v822
        %v855 = vunpack.c.l.bf16 %v823
        %v856 = vunpack.c.l.bf16 %v824
        %889 = vrot.lane.b32.xlu0 %v825, 8
        %v890 = vpop.permute.xlu0 %889
        %891 = vrot.lane.b32.xlu0 %v826, 8
        %v892 = vpop.permute.xlu0 %891
        %893 = vrot.lane.b32.xlu0 %v827, 8
        %v894 = vpop.permute.xlu0 %893
        %895 = vrot.lane.b32.xlu0 %v828, 8
        %v896 = vpop.permute.xlu0 %895
        %897 = vrot.lane.b32.xlu0 %v829, 8
        %v898 = vpop.permute.xlu0 %897
        %899 = vrot.lane.b32.xlu0 %v830, 8
        %v900 = vpop.permute.xlu0 %899
        %901 = vrot.lane.b32.xlu0 %v831, 8
        %v902 = vpop.permute.xlu0 %901
        %903 = vrot.lane.b32.xlu0 %v832, 8
        %v904 = vpop.permute.xlu0 %903
        %905 = vrot.lane.b32.xlu0 %v833, 8
        %v906 = vpop.permute.xlu0 %905
        %907 = vrot.lane.b32.xlu0 %v834, 8
        %v908 = vpop.permute.xlu0 %907
        %909 = vrot.lane.b32.xlu0 %v835, 8
        %v910 = vpop.permute.xlu0 %909
        %911 = vrot.lane.b32.xlu0 %v836, 8
        %v912 = vpop.permute.xlu0 %911
        %913 = vrot.lane.b32.xlu0 %v837, 8
        %v914 = vpop.permute.xlu0 %913
        %915 = vrot.lane.b32.xlu0 %v838, 8
        %v916 = vpop.permute.xlu0 %915
        %917 = vrot.lane.b32.xlu0 %v839, 8
        %v918 = vpop.permute.xlu0 %917
        %919 = vrot.lane.b32.xlu0 %v840, 8
        %v920 = vpop.permute.xlu0 %919
        %921 = vrot.lane.b32.xlu0 %v841, 8
        %v922 = vpop.permute.xlu0 %921
        %923 = vrot.lane.b32.xlu0 %v842, 8
        %v924 = vpop.permute.xlu0 %923
        %925 = vrot.lane.b32.xlu0 %v843, 8
        %v926 = vpop.permute.xlu0 %925
        %927 = vrot.lane.b32.xlu0 %v844, 8
        %v928 = vpop.permute.xlu0 %927
        %929 = vrot.lane.b32.xlu0 %v845, 8
        %v930 = vpop.permute.xlu0 %929
        %931 = vrot.lane.b32.xlu0 %v846, 8
        %v932 = vpop.permute.xlu0 %931
        %933 = vrot.lane.b32.xlu0 %v847, 8
        %v934 = vpop.permute.xlu0 %933
        %935 = vrot.lane.b32.xlu0 %v848, 8
        %v936 = vpop.permute.xlu0 %935
        %937 = vrot.lane.b32.xlu0 %v849, 8
        %v938 = vpop.permute.xlu0 %937
        %939 = vrot.lane.b32.xlu0 %v850, 8
        %v940 = vpop.permute.xlu0 %939
        %941 = vrot.lane.b32.xlu0 %v851, 8
        %v942 = vpop.permute.xlu0 %941
        %943 = vrot.lane.b32.xlu0 %v852, 8
        %v944 = vpop.permute.xlu0 %943
        %945 = vrot.lane.b32.xlu0 %v853, 8
        %v946 = vpop.permute.xlu0 %945
        %947 = vrot.lane.b32.xlu0 %v854, 8
        %v948 = vpop.permute.xlu0 %947
        %949 = vrot.lane.b32.xlu0 %v855, 8
        %v950 = vpop.permute.xlu0 %949
        %951 = vrot.lane.b32.xlu0 %v856, 8
        %v952 = vpop.permute.xlu0 %951
        %vm985 = vcmask 64512
        %v986 = vsel %vm985, %v635, %v890
        %v987 = vsel %vm985, %v640, %v892
        %v988 = vsel %vm985, %v645, %v894
        %v989 = vsel %vm985, %v650, %v896
        %v990 = vsel %vm985, %v655, %v898
        %v991 = vsel %vm985, %v660, %v900
        %v992 = vsel %vm985, %v665, %v902
        %v993 = vsel %vm985, %v670, %v904
        %v994 = vsel %vm985, %v675, %v906
        %v995 = vsel %vm985, %v680, %v908
        %v996 = vsel %vm985, %v685, %v910
        %v997 = vsel %vm985, %v690, %v912
        %v998 = vsel %vm985, %v695, %v914
        %v999 = vsel %vm985, %v700, %v916
        %v1000 = vsel %vm985, %v705, %v918
        %v1001 = vsel %vm985, %v710, %v920
        %v1002 = vsel %vm985, %v715, %v922
        %v1003 = vsel %vm985, %v720, %v924
        %v1004 = vsel %vm985, %v725, %v926
        %v1005 = vsel %vm985, %v730, %v928
        %v1006 = vsel %vm985, %v735, %v930
        %v1007 = vsel %vm985, %v740, %v932
        %v1008 = vsel %vm985, %v745, %v934
        %v1009 = vsel %vm985, %v750, %v936
        %v1010 = vsel %vm985, %v755, %v938
        %v1011 = vsel %vm985, %v760, %v940
        %v1012 = vsel %vm985, %v765, %v942
        %v1013 = vsel %vm985, %v770, %v944
        %v1014 = vsel %vm985, %v775, %v946
        %v1015 = vsel %vm985, %v780, %v948
        %v1016 = vsel %vm985, %v785, %v950
        %v1017 = vsel %vm985, %v790, %v952
        %vm1018 = vcmask 97280
        %1019 = vst.msk [vmem:[#allocation2] sm:$0xff] %vm1018, 0.0
        %1020 = vst.msk [vmem:[#allocation2 + $0x8] sm:$0xff] %vm1018, 0.0
        %vm1021 = vcmask 91136
        %1022 = vst.msk [vmem:[#allocation2 + $0x10] sm:$0x3] %vm1021, 0.0
        %1023 = vst.msk [vmem:[#allocation2 + $0x18] sm:$0xff] %vm1018, 0.0
        %1024 = vst.msk [vmem:[#allocation2 + $0x20] sm:$0xff] %vm1018, 0.0
        %1025 = vst.msk [vmem:[#allocation2 + $0x28] sm:$0x3] %vm1021, 0.0
        %1026 = vst.msk [vmem:[#allocation2 + $0x30] sm:$0xff] %vm1018, 0.0
        %1027 = vst.msk [vmem:[#allocation2 + $0x38] sm:$0xff] %vm1018, 0.0
        %1028 = vst.msk [vmem:[#allocation2 + $0x40] sm:$0x3] %vm1021, 0.0
        %1029 = vst.msk [vmem:[#allocation2 + $0x48] sm:$0xff] %vm1018, 0.0
        %1030 = vst.msk [vmem:[#allocation2 + $0x50] sm:$0xff] %vm1018, 0.0
        %1031 = vst.msk [vmem:[#allocation2 + $0x58] sm:$0x3] %vm1021, 0.0
        %1032 = vst.msk [vmem:[#allocation2 + $0x60] sm:$0xff] %vm1018, 0.0
        %1033 = vst.msk [vmem:[#allocation2 + $0x68] sm:$0xff] %vm1018, 0.0
        %1034 = vst.msk [vmem:[#allocation2 + $0x70] sm:$0x3] %vm1021, 0.0
        %1035 = vst.msk [vmem:[#allocation2 + $0x78] sm:$0xff] %vm1018, 0.0
        %1036 = vst.msk [vmem:[#allocation2 + $0x80] sm:$0xff] %vm1018, 0.0
        %1037 = vst.msk [vmem:[#allocation2 + $0x88] sm:$0x3] %vm1021, 0.0
        %1038 = vst.msk [vmem:[#allocation2 + $0x90] sm:$0xff] %vm1018, 0.0
        %1039 = vst.msk [vmem:[#allocation2 + $0x98] sm:$0xff] %vm1018, 0.0
        %1040 = vst.msk [vmem:[#allocation2 + $0xa0] sm:$0x3] %vm1021, 0.0
        %1041 = vst.msk [vmem:[#allocation2 + $0xa8] sm:$0xff] %vm1018, 0.0
        %1042 = vst.msk [vmem:[#allocation2 + $0xb0] sm:$0xff] %vm1018, 0.0
        %1043 = vst.msk [vmem:[#allocation2 + $0xb8] sm:$0x3] %vm1021, 0.0
        %1044 = vst.msk [vmem:[#allocation2 + $0xc0] sm:$0xff] %vm1018, 0.0
        %1045 = vst.msk [vmem:[#allocation2 + $0xc8] sm:$0xff] %vm1018, 0.0
        %1046 = vst.msk [vmem:[#allocation2 + $0xd0] sm:$0x3] %vm1021, 0.0
        %1047 = vst.msk [vmem:[#allocation2 + $0xd8] sm:$0xff] %vm1018, 0.0
        %1048 = vst.msk [vmem:[#allocation2 + $0xe0] sm:$0xff] %vm1018, 0.0
        %1049 = vst.msk [vmem:[#allocation2 + $0xe8] sm:$0x3] %vm1021, 0.0
        %1050 = vst.msk [vmem:[#allocation2 + $0xf0] sm:$0xff] %vm1018, 0.0
        %1051 = vst.msk [vmem:[#allocation2 + $0xf8] sm:$0xff] %vm1018, 0.0
        %1052 = vst.msk [vmem:[#allocation2 + $0x100] sm:$0x3] %vm1021, 0.0
        %1053 = vst.msk [vmem:[#allocation2 + $0x108] sm:$0xff] %vm1018, 0.0
        %1054 = vst.msk [vmem:[#allocation2 + $0x110] sm:$0xff] %vm1018, 0.0
        %1055 = vst.msk [vmem:[#allocation2 + $0x118] sm:$0x3] %vm1021, 0.0
        %1056 = vst.msk [vmem:[#allocation2 + $0x120] sm:$0xff] %vm1018, 0.0
        %1057 = vst.msk [vmem:[#allocation2 + $0x128] sm:$0xff] %vm1018, 0.0
        %1058 = vst.msk [vmem:[#allocation2 + $0x130] sm:$0x3] %vm1021, 0.0
        %1059 = vst.msk [vmem:[#allocation2 + $0x138] sm:$0xff] %vm1018, 0.0
        %1060 = vst.msk [vmem:[#allocation2 + $0x140] sm:$0xff] %vm1018, 0.0
        %1061 = vst.msk [vmem:[#allocation2 + $0x148] sm:$0x3] %vm1021, 0.0
        %1062 = vst.msk [vmem:[#allocation2 + $0x150] sm:$0xff] %vm1018, 0.0
        %1063 = vst.msk [vmem:[#allocation2 + $0x158] sm:$0xff] %vm1018, 0.0
        %1064 = vst.msk [vmem:[#allocation2 + $0x160] sm:$0x3] %vm1021, 0.0
        %1065 = vst.msk [vmem:[#allocation2 + $0x168] sm:$0xff] %vm1018, 0.0
        %1066 = vst.msk [vmem:[#allocation2 + $0x170] sm:$0xff] %vm1018, 0.0
        %1067 = vst.msk [vmem:[#allocation2 + $0x178] sm:$0x3] %vm1021, 0.0
        %1068 = vst.msk [vmem:[#allocation2 + $0x180] sm:$0xff] %vm1018, 0.0
        %1069 = vst.msk [vmem:[#allocation2 + $0x188] sm:$0xff] %vm1018, 0.0
        %1070 = vst.msk [vmem:[#allocation2 + $0x190] sm:$0x3] %vm1021, 0.0
        %1071 = vst.msk [vmem:[#allocation2 + $0x198] sm:$0xff] %vm1018, 0.0
        %1072 = vst.msk [vmem:[#allocation2 + $0x1a0] sm:$0xff] %vm1018, 0.0
        %1073 = vst.msk [vmem:[#allocation2 + $0x1a8] sm:$0x3] %vm1021, 0.0
        %s1074 = scalar_lea.vmem [#allocation2], 24
        %1075 = vst.msk [vmem:[%s1074 + $0x1] sm:$0xff] %vm1018, %v986
        %1076 = vst.msk [vmem:[%s1074 + $0x9] sm:$0xff] %vm1018, %v987
        %1077 = vst.msk [vmem:[%s1074 + $0x19] sm:$0xff] %vm1018, %v988
        %1078 = vst.msk [vmem:[%s1074 + $0x21] sm:$0xff] %vm1018, %v989
        %1079 = vst.msk [vmem:[%s1074 + $0x31] sm:$0xff] %vm1018, %v990
        %1080 = vst.msk [vmem:[%s1074 + $0x39] sm:$0xff] %vm1018, %v991
        %1081 = vst.msk [vmem:[%s1074 + $0x49] sm:$0xff] %vm1018, %v992
        %1082 = vst.msk [vmem:[%s1074 + $0x51] sm:$0xff] %vm1018, %v993
        %1083 = vst.msk [vmem:[%s1074 + $0x61] sm:$0xff] %vm1018, %v994
        %1084 = vst.msk [vmem:[%s1074 + $0x69] sm:$0xff] %vm1018, %v995
        %1085 = vst.msk [vmem:[%s1074 + $0x79] sm:$0xff] %vm1018, %v996
        %1086 = vst.msk [vmem:[%s1074 + $0x81] sm:$0xff] %vm1018, %v997
        %1087 = vst.msk [vmem:[%s1074 + $0x91] sm:$0xff] %vm1018, %v998
        %1088 = vst.msk [vmem:[%s1074 + $0x99] sm:$0xff] %vm1018, %v999
        %1089 = vst.msk [vmem:[%s1074 + $0xa9] sm:$0xff] %vm1018, %v1000
        %1090 = vst.msk [vmem:[%s1074 + $0xb1] sm:$0xff] %vm1018, %v1001
        %1091 = vst.msk [vmem:[%s1074 + $0xc1] sm:$0xff] %vm1018, %v1002
        %1092 = vst.msk [vmem:[%s1074 + $0xc9] sm:$0xff] %vm1018, %v1003
        %1093 = vst.msk [vmem:[%s1074 + $0xd9] sm:$0xff] %vm1018, %v1004
        %1094 = vst.msk [vmem:[%s1074 + $0xe1] sm:$0xff] %vm1018, %v1005
        %1095 = vst.msk [vmem:[%s1074 + $0xf1] sm:$0xff] %vm1018, %v1006
        %1096 = vst.msk [vmem:[%s1074 + $0xf9] sm:$0xff] %vm1018, %v1007
        %1097 = vst.msk [vmem:[%s1074 + $0x109] sm:$0xff] %vm1018, %v1008
        %1098 = vst.msk [vmem:[%s1074 + $0x111] sm:$0xff] %vm1018, %v1009
        %1099 = vst.msk [vmem:[%s1074 + $0x121] sm:$0xff] %vm1018, %v1010
        %1100 = vst.msk [vmem:[%s1074 + $0x129] sm:$0xff] %vm1018, %v1011
        %1101 = vst.msk [vmem:[%s1074 + $0x139] sm:$0xff] %vm1018, %v1012
        %1102 = vst.msk [vmem:[%s1074 + $0x141] sm:$0xff] %vm1018, %v1013
        %1103 = vst.msk [vmem:[%s1074 + $0x151] sm:$0xff] %vm1018, %v1014
        %1104 = vst.msk [vmem:[%s1074 + $0x159] sm:$0xff] %vm1018, %v1015
        %1105 = vst.msk [vmem:[%s1074 + $0x169] sm:$0xff] %vm1018, %v1016
        %1106 = vst.msk [vmem:[%s1074 + $0x171] sm:$0xff] %vm1018, %v1017
        %v1107 = vld [vmem:[#allocation2] sm:$0xff]
        %v1108 = vld [vmem:[#allocation2 + $0x8] sm:$0xff]
        %v1109 = vld [vmem:[#allocation2 + $0x10] sm:$0x3]
        %v1110 = vld [vmem:[#allocation2 + $0x18] sm:$0xff]
        %v1111 = vld [vmem:[#allocation2 + $0x20] sm:$0xff]
        %v1112 = vld [vmem:[#allocation2 + $0x28] sm:$0x3]
        %v1113 = vld [vmem:[#allocation2 + $0x30] sm:$0xff]
        %v1114 = vld [vmem:[#allocation2 + $0x38] sm:$0xff]
        %v1115 = vld [vmem:[#allocation2 + $0x40] sm:$0x3]
        %v1116 = vld [vmem:[#allocation2 + $0x48] sm:$0xff]
        %v1117 = vld [vmem:[#allocation2 + $0x50] sm:$0xff]
        %v1118 = vld [vmem:[#allocation2 + $0x58] sm:$0x3]
        %v1119 = vld [vmem:[#allocation2 + $0x60] sm:$0xff]
        %v1120 = vld [vmem:[#allocation2 + $0x68] sm:$0xff]
        %v1121 = vld [vmem:[#allocation2 + $0x70] sm:$0x3]
        %v1122 = vld [vmem:[#allocation2 + $0x78] sm:$0xff]
        %v1123 = vld [vmem:[#allocation2 + $0x80] sm:$0xff]
        %v1124 = vld [vmem:[#allocation2 + $0x88] sm:$0x3]
        %v1125 = vld [vmem:[#allocation2 + $0x90] sm:$0xff]
        %v1126 = vld [vmem:[#allocation2 + $0x98] sm:$0xff]
        %v1127 = vld [vmem:[#allocation2 + $0xa0] sm:$0x3]
        %v1128 = vld [vmem:[#allocation2 + $0xa8] sm:$0xff]
        %v1129 = vld [vmem:[#allocation2 + $0xb0] sm:$0xff]
        %v1130 = vld [vmem:[#allocation2 + $0xb8] sm:$0x3]
        %v1131 = vld [vmem:[#allocation2 + $0xc0] sm:$0xff]
        %v1132 = vld [vmem:[#allocation2 + $0xc8] sm:$0xff]
        %v1133 = vld [vmem:[#allocation2 + $0xd0] sm:$0x3]
        %v1134 = vld [vmem:[#allocation2 + $0xd8] sm:$0xff]
        %v1135 = vld [vmem:[#allocation2 + $0xe0] sm:$0xff]
        %v1136 = vld [vmem:[#allocation2 + $0xe8] sm:$0x3]
        %v1137 = vld [vmem:[#allocation2 + $0xf0] sm:$0xff]
        %v1138 = vld [vmem:[#allocation2 + $0xf8] sm:$0xff]
        %v1139 = vld [vmem:[#allocation2 + $0x100] sm:$0x3]
        %v1140 = vld [vmem:[#allocation2 + $0x108] sm:$0xff]
        %v1141 = vld [vmem:[#allocation2 + $0x110] sm:$0xff]
        %v1142 = vld [vmem:[#allocation2 + $0x118] sm:$0x3]
        %v1143 = vld [vmem:[#allocation2 + $0x120] sm:$0xff]
        %v1144 = vld [vmem:[#allocation2 + $0x128] sm:$0xff]
        %v1145 = vld [vmem:[#allocation2 + $0x130] sm:$0x3]
        %v1146 = vld [vmem:[#allocation2 + $0x138] sm:$0xff]
        %v1147 = vld [vmem:[#allocation2 + $0x140] sm:$0xff]
        %v1148 = vld [vmem:[#allocation2 + $0x148] sm:$0x3]
        %v1149 = vld [vmem:[#allocation2 + $0x150] sm:$0xff]
        %v1150 = vld [vmem:[#allocation2 + $0x158] sm:$0xff]
        %v1151 = vld [vmem:[#allocation2 + $0x160] sm:$0x3]
        %v1152 = vld [vmem:[#allocation2 + $0x168] sm:$0xff]
        %v1153 = vld [vmem:[#allocation2 + $0x170] sm:$0xff]
        %v1154 = vld [vmem:[#allocation2 + $0x178] sm:$0x3]
        %v1155 = vld [vmem:[#allocation2 + $0x180] sm:$0xff]
        %v1156 = vld [vmem:[#allocation2 + $0x188] sm:$0xff]
        %v1157 = vld [vmem:[#allocation2 + $0x190] sm:$0x3]
        %v1158 = vld [vmem:[#allocation2 + $0x198] sm:$0xff]
        %v1159 = vld [vmem:[#allocation2 + $0x1a0] sm:$0xff]
        %v1160 = vld [vmem:[#allocation2 + $0x1a8] sm:$0x3]
        %vm1209 = vcmask 1046528
        %v1210 = vrot.slane %v1107, 1
        %v1211 = vrot.slane %v1108, 1
        %v1212 = vsel %vm1209, %v1210, %v1211
        %v1213 = vrot.slane %v1109, 1
        %v1214 = vsel %vm1209, %v1211, %v1213
        %v1215 = vrot.slane %v1110, 1
        %v1216 = vrot.slane %v1111, 1
        %v1217 = vsel %vm1209, %v1215, %v1216
        %v1218 = vrot.slane %v1112, 1
        %v1219 = vsel %vm1209, %v1216, %v1218
        %v1220 = vrot.slane %v1113, 1
        %v1221 = vrot.slane %v1114, 1
        %v1222 = vsel %vm1209, %v1220, %v1221
        %v1223 = vrot.slane %v1115, 1
        %v1224 = vsel %vm1209, %v1221, %v1223
        %v1225 = vrot.slane %v1116, 1
        %v1226 = vrot.slane %v1117, 1
        %v1227 = vsel %vm1209, %v1225, %v1226
        %v1228 = vrot.slane %v1118, 1
        %v1229 = vsel %vm1209, %v1226, %v1228
        %v1230 = vrot.slane %v1119, 1
        %v1231 = vrot.slane %v1120, 1
        %v1232 = vsel %vm1209, %v1230, %v1231
        %v1233 = vrot.slane %v1121, 1
        %v1234 = vsel %vm1209, %v1231, %v1233
        %v1235 = vrot.slane %v1122, 1
        %v1236 = vrot.slane %v1123, 1
        %v1237 = vsel %vm1209, %v1235, %v1236
        %v1238 = vrot.slane %v1124, 1
        %v1239 = vsel %vm1209, %v1236, %v1238
        %v1240 = vrot.slane %v1125, 1
        %v1241 = vrot.slane %v1126, 1
        %v1242 = vsel %vm1209, %v1240, %v1241
        %v1243 = vrot.slane %v1127, 1
        %v1244 = vsel %vm1209, %v1241, %v1243
        %v1245 = vrot.slane %v1128, 1
        %v1246 = vrot.slane %v1129, 1
        %v1247 = vsel %vm1209, %v1245, %v1246
        %v1248 = vrot.slane %v1130, 1
        %v1249 = vsel %vm1209, %v1246, %v1248
        %v1250 = vrot.slane %v1131, 1
        %v1251 = vrot.slane %v1132, 1
        %v1252 = vsel %vm1209, %v1250, %v1251
        %v1253 = vrot.slane %v1133, 1
        %v1254 = vsel %vm1209, %v1251, %v1253
        %v1255 = vrot.slane %v1134, 1
        %v1256 = vrot.slane %v1135, 1
        %v1257 = vsel %vm1209, %v1255, %v1256
        %v1258 = vrot.slane %v1136, 1
        %v1259 = vsel %vm1209, %v1256, %v1258
        %v1260 = vrot.slane %v1137, 1
        %v1261 = vrot.slane %v1138, 1
        %v1262 = vsel %vm1209, %v1260, %v1261
        %v1263 = vrot.slane %v1139, 1
        %v1264 = vsel %vm1209, %v1261, %v1263
        %v1265 = vrot.slane %v1140, 1
        %v1266 = vrot.slane %v1141, 1
        %v1267 = vsel %vm1209, %v1265, %v1266
        %v1268 = vrot.slane %v1142, 1
        %v1269 = vsel %vm1209, %v1266, %v1268
        %v1270 = vrot.slane %v1143, 1
        %v1271 = vrot.slane %v1144, 1
        %v1272 = vsel %vm1209, %v1270, %v1271
        %v1273 = vrot.slane %v1145, 1
        %v1274 = vsel %vm1209, %v1271, %v1273
        %v1275 = vrot.slane %v1146, 1
        %v1276 = vrot.slane %v1147, 1
        %v1277 = vsel %vm1209, %v1275, %v1276
        %v1278 = vrot.slane %v1148, 1
        %v1279 = vsel %vm1209, %v1276, %v1278
        %v1280 = vrot.slane %v1149, 1
        %v1281 = vrot.slane %v1150, 1
        %v1282 = vsel %vm1209, %v1280, %v1281
        %v1283 = vrot.slane %v1151, 1
        %v1284 = vsel %vm1209, %v1281, %v1283
        %v1285 = vrot.slane %v1152, 1
        %v1286 = vrot.slane %v1153, 1
        %v1287 = vsel %vm1209, %v1285, %v1286
        %v1288 = vrot.slane %v1154, 1
        %v1289 = vsel %vm1209, %v1286, %v1288
        %vm1290 = vcmask 1045504
        %v1291 = vrot.slane %v1107, 2
        %v1292 = vrot.slane %v1108, 2
        %v1293 = vsel %vm1290, %v1291, %v1292
        %v1294 = vrot.slane %v1109, 2
        %v1295 = vsel %vm1290, %v1292, %v1294
        %v1296 = vrot.slane %v1110, 2
        %v1297 = vrot.slane %v1111, 2
        %v1298 = vsel %vm1290, %v1296, %v1297
        %v1299 = vrot.slane %v1112, 2
        %v1300 = vsel %vm1290, %v1297, %v1299
        %v1301 = vrot.slane %v1113, 2
        %v1302 = vrot.slane %v1114, 2
        %v1303 = vsel %vm1290, %v1301, %v1302
        %v1304 = vrot.slane %v1115, 2
        %v1305 = vsel %vm1290, %v1302, %v1304
        %v1306 = vrot.slane %v1116, 2
        %v1307 = vrot.slane %v1117, 2
        %v1308 = vsel %vm1290, %v1306, %v1307
        %v1309 = vrot.slane %v1118, 2
        %v1310 = vsel %vm1290, %v1307, %v1309
        %v1311 = vrot.slane %v1119, 2
        %v1312 = vrot.slane %v1120, 2
        %v1313 = vsel %vm1290, %v1311, %v1312
        %v1314 = vrot.slane %v1121, 2
        %v1315 = vsel %vm1290, %v1312, %v1314
        %v1316 = vrot.slane %v1122, 2
        %v1317 = vrot.slane %v1123, 2
        %v1318 = vsel %vm1290, %v1316, %v1317
        %v1319 = vrot.slane %v1124, 2
        %v1320 = vsel %vm1290, %v1317, %v1319
        %v1321 = vrot.slane %v1125, 2
        %v1322 = vrot.slane %v1126, 2
        %v1323 = vsel %vm1290, %v1321, %v1322
        %v1324 = vrot.slane %v1127, 2
        %v1325 = vsel %vm1290, %v1322, %v1324
        %v1326 = vrot.slane %v1128, 2
        %v1327 = vrot.slane %v1129, 2
        %v1328 = vsel %vm1290, %v1326, %v1327
        %v1329 = vrot.slane %v1130, 2
        %v1330 = vsel %vm1290, %v1327, %v1329
        %v1331 = vrot.slane %v1131, 2
        %v1332 = vrot.slane %v1132, 2
        %v1333 = vsel %vm1290, %v1331, %v1332
        %v1334 = vrot.slane %v1133, 2
        %v1335 = vsel %vm1290, %v1332, %v1334
        %v1336 = vrot.slane %v1134, 2
        %v1337 = vrot.slane %v1135, 2
        %v1338 = vsel %vm1290, %v1336, %v1337
        %v1339 = vrot.slane %v1136, 2
        %v1340 = vsel %vm1290, %v1337, %v1339
        %v1341 = vrot.slane %v1137, 2
        %v1342 = vrot.slane %v1138, 2
        %v1343 = vsel %vm1290, %v1341, %v1342
        %v1344 = vrot.slane %v1139, 2
        %v1345 = vsel %vm1290, %v1342, %v1344
        %v1346 = vrot.slane %v1140, 2
        %v1347 = vrot.slane %v1141, 2
        %v1348 = vsel %vm1290, %v1346, %v1347
        %v1349 = vrot.slane %v1142, 2
        %v1350 = vsel %vm1290, %v1347, %v1349
        %v1351 = vrot.slane %v1143, 2
        %v1352 = vrot.slane %v1144, 2
        %v1353 = vsel %vm1290, %v1351, %v1352
        %v1354 = vrot.slane %v1145, 2
        %v1355 = vsel %vm1290, %v1352, %v1354
        %v1356 = vrot.slane %v1146, 2
        %v1357 = vrot.slane %v1147, 2
        %v1358 = vsel %vm1290, %v1356, %v1357
        %v1359 = vrot.slane %v1148, 2
        %v1360 = vsel %vm1290, %v1357, %v1359
        %v1361 = vrot.slane %v1149, 2
        %v1362 = vrot.slane %v1150, 2
        %v1363 = vsel %vm1290, %v1361, %v1362
        %v1364 = vrot.slane %v1151, 2
        %v1365 = vsel %vm1290, %v1362, %v1364
        %v1366 = vrot.slane %v1152, 2
        %v1367 = vrot.slane %v1153, 2
        %v1368 = vsel %vm1290, %v1366, %v1367
        %v1369 = vrot.slane %v1154, 2
        %v1370 = vsel %vm1290, %v1367, %v1369
        %v1374 = vrot.slane %v1155, 1
        %v1375 = vrot.slane %v1156, 1
        %v1376 = vsel %vm1209, %v1374, %v1375
        %v1377 = vrot.slane %v1157, 1
        %v1378 = vsel %vm1209, %v1375, %v1377
        %v1379 = vrot.slane %v1155, 2
        %v1380 = vrot.slane %v1156, 2
        %v1381 = vsel %vm1290, %v1379, %v1380
        %v1382 = vrot.slane %v1157, 2
        %v1383 = vsel %vm1290, %v1380, %v1382
        %v1387 = vrot.slane %v1158, 1
        %v1388 = vrot.slane %v1159, 1
        %v1389 = vsel %vm1209, %v1387, %v1388
        %v1390 = vrot.slane %v1160, 1
        %v1391 = vsel %vm1209, %v1388, %v1390
        %v1392 = vrot.slane %v1158, 2
        %v1393 = vrot.slane %v1159, 2
        %v1394 = vsel %vm1290, %v1392, %v1393
        %v1395 = vrot.slane %v1160, 2
        %v1396 = vsel %vm1290, %v1393, %v1395
        %1397 = vrot.lane.b32.xlu0 %v1212, 12
        %v1398 = vpop.permute.xlu0 %1397
        %1399 = vrot.lane.b32.xlu0 %v1214, 12
        %v1400 = vpop.permute.xlu0 %1399
        %1401 = vrot.lane.b32.xlu0 %v1217, 12
        %v1402 = vpop.permute.xlu0 %1401
        %1403 = vrot.lane.b32.xlu0 %v1219, 12
        %v1404 = vpop.permute.xlu0 %1403
        %1405 = vrot.lane.b32.xlu0 %v1222, 12
        %v1406 = vpop.permute.xlu0 %1405
        %1407 = vrot.lane.b32.xlu0 %v1224, 12
        %v1408 = vpop.permute.xlu0 %1407
        %1409 = vrot.lane.b32.xlu0 %v1227, 12
        %v1410 = vpop.permute.xlu0 %1409
        %1411 = vrot.lane.b32.xlu0 %v1229, 12
        %v1412 = vpop.permute.xlu0 %1411
        %1413 = vrot.lane.b32.xlu0 %v1232, 12
        %v1414 = vpop.permute.xlu0 %1413
        %1415 = vrot.lane.b32.xlu0 %v1234, 12
        %v1416 = vpop.permute.xlu0 %1415
        %1417 = vrot.lane.b32.xlu0 %v1237, 12
        %v1418 = vpop.permute.xlu0 %1417
        %1419 = vrot.lane.b32.xlu0 %v1239, 12
        %v1420 = vpop.permute.xlu0 %1419
        %1421 = vrot.lane.b32.xlu0 %v1242, 12
        %v1422 = vpop.permute.xlu0 %1421
        %1423 = vrot.lane.b32.xlu0 %v1244, 12
        %v1424 = vpop.permute.xlu0 %1423
        %1425 = vrot.lane.b32.xlu0 %v1247, 12
        %v1426 = vpop.permute.xlu0 %1425
        %1427 = vrot.lane.b32.xlu0 %v1249, 12
        %v1428 = vpop.permute.xlu0 %1427
        %1429 = vrot.lane.b32.xlu0 %v1252, 12
        %v1430 = vpop.permute.xlu0 %1429
        %1431 = vrot.lane.b32.xlu0 %v1254, 12
        %v1432 = vpop.permute.xlu0 %1431
        %1433 = vrot.lane.b32.xlu0 %v1257, 12
        %v1434 = vpop.permute.xlu0 %1433
        %1435 = vrot.lane.b32.xlu0 %v1259, 12
        %v1436 = vpop.permute.xlu0 %1435
        %1437 = vrot.lane.b32.xlu0 %v1262, 12
        %v1438 = vpop.permute.xlu0 %1437
        %1439 = vrot.lane.b32.xlu0 %v1264, 12
        %v1440 = vpop.permute.xlu0 %1439
        %1441 = vrot.lane.b32.xlu0 %v1267, 12
        %v1442 = vpop.permute.xlu0 %1441
        %1443 = vrot.lane.b32.xlu0 %v1269, 12
        %v1444 = vpop.permute.xlu0 %1443
        %1445 = vrot.lane.b32.xlu0 %v1272, 12
        %v1446 = vpop.permute.xlu0 %1445
        %1447 = vrot.lane.b32.xlu0 %v1274, 12
        %v1448 = vpop.permute.xlu0 %1447
        %1449 = vrot.lane.b32.xlu0 %v1277, 12
        %v1450 = vpop.permute.xlu0 %1449
        %1451 = vrot.lane.b32.xlu0 %v1279, 12
        %v1452 = vpop.permute.xlu0 %1451
        %1453 = vrot.lane.b32.xlu0 %v1282, 12
        %v1454 = vpop.permute.xlu0 %1453
        %1455 = vrot.lane.b32.xlu0 %v1284, 12
        %v1456 = vpop.permute.xlu0 %1455
        %1457 = vrot.lane.b32.xlu0 %v1287, 12
        %v1458 = vpop.permute.xlu0 %1457
        %1459 = vrot.lane.b32.xlu0 %v1289, 12
        %v1460 = vpop.permute.xlu0 %1459
        %1493 = vrot.lane.b32.xlu0 %v1293, 24
        %v1494 = vpop.permute.xlu0 %1493
        %1495 = vrot.lane.b32.xlu0 %v1295, 24
        %v1496 = vpop.permute.xlu0 %1495
        %1497 = vrot.lane.b32.xlu0 %v1298, 24
        %v1498 = vpop.permute.xlu0 %1497
        %1499 = vrot.lane.b32.xlu0 %v1300, 24
        %v1500 = vpop.permute.xlu0 %1499
        %1501 = vrot.lane.b32.xlu0 %v1303, 24
        %v1502 = vpop.permute.xlu0 %1501
        %1503 = vrot.lane.b32.xlu0 %v1305, 24
        %v1504 = vpop.permute.xlu0 %1503
        %1505 = vrot.lane.b32.xlu0 %v1308, 24
        %v1506 = vpop.permute.xlu0 %1505
        %1507 = vrot.lane.b32.xlu0 %v1310, 24
        %v1508 = vpop.permute.xlu0 %1507
        %1509 = vrot.lane.b32.xlu0 %v1313, 24
        %v1510 = vpop.permute.xlu0 %1509
        %1511 = vrot.lane.b32.xlu0 %v1315, 24
        %v1512 = vpop.permute.xlu0 %1511
        %1513 = vrot.lane.b32.xlu0 %v1318, 24
        %v1514 = vpop.permute.xlu0 %1513
        %1515 = vrot.lane.b32.xlu0 %v1320, 24
        %v1516 = vpop.permute.xlu0 %1515
        %1517 = vrot.lane.b32.xlu0 %v1323, 24
        %v1518 = vpop.permute.xlu0 %1517
        %1519 = vrot.lane.b32.xlu0 %v1325, 24
        %v1520 = vpop.permute.xlu0 %1519
        %1521 = vrot.lane.b32.xlu0 %v1328, 24
        %v1522 = vpop.permute.xlu0 %1521
        %1523 = vrot.lane.b32.xlu0 %v1330, 24
        %v1524 = vpop.permute.xlu0 %1523
        %1525 = vrot.lane.b32.xlu0 %v1333, 24
        %v1526 = vpop.permute.xlu0 %1525
        %1527 = vrot.lane.b32.xlu0 %v1335, 24
        %v1528 = vpop.permute.xlu0 %1527
        %1529 = vrot.lane.b32.xlu0 %v1338, 24
        %v1530 = vpop.permute.xlu0 %1529
        %1531 = vrot.lane.b32.xlu0 %v1340, 24
        %v1532 = vpop.permute.xlu0 %1531
        %1533 = vrot.lane.b32.xlu0 %v1343, 24
        %v1534 = vpop.permute.xlu0 %1533
        %1535 = vrot.lane.b32.xlu0 %v1345, 24
        %v1536 = vpop.permute.xlu0 %1535
        %1537 = vrot.lane.b32.xlu0 %v1348, 24
        %v1538 = vpop.permute.xlu0 %1537
        %1539 = vrot.lane.b32.xlu0 %v1350, 24
        %v1540 = vpop.permute.xlu0 %1539
        %1541 = vrot.lane.b32.xlu0 %v1353, 24
        %v1542 = vpop.permute.xlu0 %1541
        %1543 = vrot.lane.b32.xlu0 %v1355, 24
        %v1544 = vpop.permute.xlu0 %1543
        %1545 = vrot.lane.b32.xlu0 %v1358, 24
        %v1546 = vpop.permute.xlu0 %1545
        %1547 = vrot.lane.b32.xlu0 %v1360, 24
        %v1548 = vpop.permute.xlu0 %1547
        %1549 = vrot.lane.b32.xlu0 %v1363, 24
        %v1550 = vpop.permute.xlu0 %1549
        %1551 = vrot.lane.b32.xlu0 %v1365, 24
        %v1552 = vpop.permute.xlu0 %1551
        %1553 = vrot.lane.b32.xlu0 %v1368, 24
        %v1554 = vpop.permute.xlu0 %1553
        %1555 = vrot.lane.b32.xlu0 %v1370, 24
        %v1556 = vpop.permute.xlu0 %1555
        %1589 = vrot.lane.b32.xlu0 %v1110, 36
        %v1590 = vpop.permute.xlu0 %1589
        %1591 = vrot.lane.b32.xlu0 %v1111, 36
        %v1592 = vpop.permute.xlu0 %1591
        %1593 = vrot.lane.b32.xlu0 %v1113, 36
        %v1594 = vpop.permute.xlu0 %1593
        %1595 = vrot.lane.b32.xlu0 %v1114, 36
        %v1596 = vpop.permute.xlu0 %1595
        %1597 = vrot.lane.b32.xlu0 %v1116, 36
        %v1598 = vpop.permute.xlu0 %1597
        %1599 = vrot.lane.b32.xlu0 %v1117, 36
        %v1600 = vpop.permute.xlu0 %1599
        %1601 = vrot.lane.b32.xlu0 %v1119, 36
        %v1602 = vpop.permute.xlu0 %1601
        %1603 = vrot.lane.b32.xlu0 %v1120, 36
        %v1604 = vpop.permute.xlu0 %1603
        %1605 = vrot.lane.b32.xlu0 %v1122, 36
        %v1606 = vpop.permute.xlu0 %1605
        %1607 = vrot.lane.b32.xlu0 %v1123, 36
        %v1608 = vpop.permute.xlu0 %1607
        %1609 = vrot.lane.b32.xlu0 %v1125, 36
        %v1610 = vpop.permute.xlu0 %1609
        %1611 = vrot.lane.b32.xlu0 %v1126, 36
        %v1612 = vpop.permute.xlu0 %1611
        %1613 = vrot.lane.b32.xlu0 %v1128, 36
        %v1614 = vpop.permute.xlu0 %1613
        %1615 = vrot.lane.b32.xlu0 %v1129, 36
        %v1616 = vpop.permute.xlu0 %1615
        %1617 = vrot.lane.b32.xlu0 %v1131, 36
        %v1618 = vpop.permute.xlu0 %1617
        %1619 = vrot.lane.b32.xlu0 %v1132, 36
        %v1620 = vpop.permute.xlu0 %1619
        %1621 = vrot.lane.b32.xlu0 %v1134, 36
        %v1622 = vpop.permute.xlu0 %1621
        %1623 = vrot.lane.b32.xlu0 %v1135, 36
        %v1624 = vpop.permute.xlu0 %1623
        %1625 = vrot.lane.b32.xlu0 %v1137, 36
        %v1626 = vpop.permute.xlu0 %1625
        %1627 = vrot.lane.b32.xlu0 %v1138, 36
        %v1628 = vpop.permute.xlu0 %1627
        %1629 = vrot.lane.b32.xlu0 %v1140, 36
        %v1630 = vpop.permute.xlu0 %1629
        %1631 = vrot.lane.b32.xlu0 %v1141, 36
        %v1632 = vpop.permute.xlu0 %1631
        %1633 = vrot.lane.b32.xlu0 %v1143, 36
        %v1634 = vpop.permute.xlu0 %1633
        %1635 = vrot.lane.b32.xlu0 %v1144, 36
        %v1636 = vpop.permute.xlu0 %1635
        %1637 = vrot.lane.b32.xlu0 %v1146, 36
        %v1638 = vpop.permute.xlu0 %1637
        %1639 = vrot.lane.b32.xlu0 %v1147, 36
        %v1640 = vpop.permute.xlu0 %1639
        %1641 = vrot.lane.b32.xlu0 %v1149, 36
        %v1642 = vpop.permute.xlu0 %1641
        %1643 = vrot.lane.b32.xlu0 %v1150, 36
        %v1644 = vpop.permute.xlu0 %1643
        %1645 = vrot.lane.b32.xlu0 %v1152, 36
        %v1646 = vpop.permute.xlu0 %1645
        %1647 = vrot.lane.b32.xlu0 %v1153, 36
        %v1648 = vpop.permute.xlu0 %1647
        %1649 = vrot.lane.b32.xlu0 %v1155, 36
        %v1650 = vpop.permute.xlu0 %1649
        %1651 = vrot.lane.b32.xlu0 %v1156, 36
        %v1652 = vpop.permute.xlu0 %1651
        %1685 = vrot.lane.b32.xlu0 %v1217, 48
        %v1686 = vpop.permute.xlu0 %1685
        %1687 = vrot.lane.b32.xlu0 %v1219, 48
        %v1688 = vpop.permute.xlu0 %1687
        %1689 = vrot.lane.b32.xlu0 %v1222, 48
        %v1690 = vpop.permute.xlu0 %1689
        %1691 = vrot.lane.b32.xlu0 %v1224, 48
        %v1692 = vpop.permute.xlu0 %1691
        %1693 = vrot.lane.b32.xlu0 %v1227, 48
        %v1694 = vpop.permute.xlu0 %1693
        %1695 = vrot.lane.b32.xlu0 %v1229, 48
        %v1696 = vpop.permute.xlu0 %1695
        %1697 = vrot.lane.b32.xlu0 %v1232, 48
        %v1698 = vpop.permute.xlu0 %1697
        %1699 = vrot.lane.b32.xlu0 %v1234, 48
        %v1700 = vpop.permute.xlu0 %1699
        %1701 = vrot.lane.b32.xlu0 %v1237, 48
        %v1702 = vpop.permute.xlu0 %1701
        %1703 = vrot.lane.b32.xlu0 %v1239, 48
        %v1704 = vpop.permute.xlu0 %1703
        %1705 = vrot.lane.b32.xlu0 %v1242, 48
        %v1706 = vpop.permute.xlu0 %1705
        %1707 = vrot.lane.b32.xlu0 %v1244, 48
        %v1708 = vpop.permute.xlu0 %1707
        %1709 = vrot.lane.b32.xlu0 %v1247, 48
        %v1710 = vpop.permute.xlu0 %1709
        %1711 = vrot.lane.b32.xlu0 %v1249, 48
        %v1712 = vpop.permute.xlu0 %1711
        %1713 = vrot.lane.b32.xlu0 %v1252, 48
        %v1714 = vpop.permute.xlu0 %1713
        %1715 = vrot.lane.b32.xlu0 %v1254, 48
        %v1716 = vpop.permute.xlu0 %1715
        %1717 = vrot.lane.b32.xlu0 %v1257, 48
        %v1718 = vpop.permute.xlu0 %1717
        %1719 = vrot.lane.b32.xlu0 %v1259, 48
        %v1720 = vpop.permute.xlu0 %1719
        %1721 = vrot.lane.b32.xlu0 %v1262, 48
        %v1722 = vpop.permute.xlu0 %1721
        %1723 = vrot.lane.b32.xlu0 %v1264, 48
        %v1724 = vpop.permute.xlu0 %1723
        %1725 = vrot.lane.b32.xlu0 %v1267, 48
        %v1726 = vpop.permute.xlu0 %1725
        %1727 = vrot.lane.b32.xlu0 %v1269, 48
        %v1728 = vpop.permute.xlu0 %1727
        %1729 = vrot.lane.b32.xlu0 %v1272, 48
        %v1730 = vpop.permute.xlu0 %1729
        %1731 = vrot.lane.b32.xlu0 %v1274, 48
        %v1732 = vpop.permute.xlu0 %1731
        %1733 = vrot.lane.b32.xlu0 %v1277, 48
        %v1734 = vpop.permute.xlu0 %1733
        %1735 = vrot.lane.b32.xlu0 %v1279, 48
        %v1736 = vpop.permute.xlu0 %1735
        %1737 = vrot.lane.b32.xlu0 %v1282, 48
        %v1738 = vpop.permute.xlu0 %1737
        %1739 = vrot.lane.b32.xlu0 %v1284, 48
        %v1740 = vpop.permute.xlu0 %1739
        %1741 = vrot.lane.b32.xlu0 %v1287, 48
        %v1742 = vpop.permute.xlu0 %1741
        %1743 = vrot.lane.b32.xlu0 %v1289, 48
        %v1744 = vpop.permute.xlu0 %1743
        %1745 = vrot.lane.b32.xlu0 %v1376, 48
        %v1746 = vpop.permute.xlu0 %1745
        %1747 = vrot.lane.b32.xlu0 %v1378, 48
        %v1748 = vpop.permute.xlu0 %1747
        %1781 = vrot.lane.b32.xlu0 %v1298, 60
        %v1782 = vpop.permute.xlu0 %1781
        %1783 = vrot.lane.b32.xlu0 %v1300, 60
        %v1784 = vpop.permute.xlu0 %1783
        %1785 = vrot.lane.b32.xlu0 %v1303, 60
        %v1786 = vpop.permute.xlu0 %1785
        %1787 = vrot.lane.b32.xlu0 %v1305, 60
        %v1788 = vpop.permute.xlu0 %1787
        %1789 = vrot.lane.b32.xlu0 %v1308, 60
        %v1790 = vpop.permute.xlu0 %1789
        %1791 = vrot.lane.b32.xlu0 %v1310, 60
        %v1792 = vpop.permute.xlu0 %1791
        %1793 = vrot.lane.b32.xlu0 %v1313, 60
        %v1794 = vpop.permute.xlu0 %1793
        %1795 = vrot.lane.b32.xlu0 %v1315, 60
        %v1796 = vpop.permute.xlu0 %1795
        %1797 = vrot.lane.b32.xlu0 %v1318, 60
        %v1798 = vpop.permute.xlu0 %1797
        %1799 = vrot.lane.b32.xlu0 %v1320, 60
        %v1800 = vpop.permute.xlu0 %1799
        %1801 = vrot.lane.b32.xlu0 %v1323, 60
        %v1802 = vpop.permute.xlu0 %1801
        %1803 = vrot.lane.b32.xlu0 %v1325, 60
        %v1804 = vpop.permute.xlu0 %1803
        %1805 = vrot.lane.b32.xlu0 %v1328, 60
        %v1806 = vpop.permute.xlu0 %1805
        %1807 = vrot.lane.b32.xlu0 %v1330, 60
        %v1808 = vpop.permute.xlu0 %1807
        %1809 = vrot.lane.b32.xlu0 %v1333, 60
        %v1810 = vpop.permute.xlu0 %1809
        %1811 = vrot.lane.b32.xlu0 %v1335, 60
        %v1812 = vpop.permute.xlu0 %1811
        %1813 = vrot.lane.b32.xlu0 %v1338, 60
        %v1814 = vpop.permute.xlu0 %1813
        %1815 = vrot.lane.b32.xlu0 %v1340, 60
        %v1816 = vpop.permute.xlu0 %1815
        %1817 = vrot.lane.b32.xlu0 %v1343, 60
        %v1818 = vpop.permute.xlu0 %1817
        %1819 = vrot.lane.b32.xlu0 %v1345, 60
        %v1820 = vpop.permute.xlu0 %1819
        %1821 = vrot.lane.b32.xlu0 %v1348, 60
        %v1822 = vpop.permute.xlu0 %1821
        %1823 = vrot.lane.b32.xlu0 %v1350, 60
        %v1824 = vpop.permute.xlu0 %1823
        %1825 = vrot.lane.b32.xlu0 %v1353, 60
        %v1826 = vpop.permute.xlu0 %1825
        %1827 = vrot.lane.b32.xlu0 %v1355, 60
        %v1828 = vpop.permute.xlu0 %1827
        %1829 = vrot.lane.b32.xlu0 %v1358, 60
        %v1830 = vpop.permute.xlu0 %1829
        %1831 = vrot.lane.b32.xlu0 %v1360, 60
        %v1832 = vpop.permute.xlu0 %1831
        %1833 = vrot.lane.b32.xlu0 %v1363, 60
        %v1834 = vpop.permute.xlu0 %1833
        %1835 = vrot.lane.b32.xlu0 %v1365, 60
        %v1836 = vpop.permute.xlu0 %1835
        %1837 = vrot.lane.b32.xlu0 %v1368, 60
        %v1838 = vpop.permute.xlu0 %1837
        %1839 = vrot.lane.b32.xlu0 %v1370, 60
        %v1840 = vpop.permute.xlu0 %1839
        %1841 = vrot.lane.b32.xlu0 %v1381, 60
        %v1842 = vpop.permute.xlu0 %1841
        %1843 = vrot.lane.b32.xlu0 %v1383, 60
        %v1844 = vpop.permute.xlu0 %1843
        %1877 = vrot.lane.b32.xlu0 %v1113, 72
        %v1878 = vpop.permute.xlu0 %1877
        %1879 = vrot.lane.b32.xlu0 %v1114, 72
        %v1880 = vpop.permute.xlu0 %1879
        %1881 = vrot.lane.b32.xlu0 %v1116, 72
        %v1882 = vpop.permute.xlu0 %1881
        %1883 = vrot.lane.b32.xlu0 %v1117, 72
        %v1884 = vpop.permute.xlu0 %1883
        %1885 = vrot.lane.b32.xlu0 %v1119, 72
        %v1886 = vpop.permute.xlu0 %1885
        %1887 = vrot.lane.b32.xlu0 %v1120, 72
        %v1888 = vpop.permute.xlu0 %1887
        %1889 = vrot.lane.b32.xlu0 %v1122, 72
        %v1890 = vpop.permute.xlu0 %1889
        %1891 = vrot.lane.b32.xlu0 %v1123, 72
        %v1892 = vpop.permute.xlu0 %1891
        %1893 = vrot.lane.b32.xlu0 %v1125, 72
        %v1894 = vpop.permute.xlu0 %1893
        %1895 = vrot.lane.b32.xlu0 %v1126, 72
        %v1896 = vpop.permute.xlu0 %1895
        %1897 = vrot.lane.b32.xlu0 %v1128, 72
        %v1898 = vpop.permute.xlu0 %1897
        %1899 = vrot.lane.b32.xlu0 %v1129, 72
        %v1900 = vpop.permute.xlu0 %1899
        %1901 = vrot.lane.b32.xlu0 %v1131, 72
        %v1902 = vpop.permute.xlu0 %1901
        %1903 = vrot.lane.b32.xlu0 %v1132, 72
        %v1904 = vpop.permute.xlu0 %1903
        %1905 = vrot.lane.b32.xlu0 %v1134, 72
        %v1906 = vpop.permute.xlu0 %1905
        %1907 = vrot.lane.b32.xlu0 %v1135, 72
        %v1908 = vpop.permute.xlu0 %1907
        %1909 = vrot.lane.b32.xlu0 %v1137, 72
        %v1910 = vpop.permute.xlu0 %1909
        %1911 = vrot.lane.b32.xlu0 %v1138, 72
        %v1912 = vpop.permute.xlu0 %1911
        %1913 = vrot.lane.b32.xlu0 %v1140, 72
        %v1914 = vpop.permute.xlu0 %1913
        %1915 = vrot.lane.b32.xlu0 %v1141, 72
        %v1916 = vpop.permute.xlu0 %1915
        %1917 = vrot.lane.b32.xlu0 %v1143, 72
        %v1918 = vpop.permute.xlu0 %1917
        %1919 = vrot.lane.b32.xlu0 %v1144, 72
        %v1920 = vpop.permute.xlu0 %1919
        %1921 = vrot.lane.b32.xlu0 %v1146, 72
        %v1922 = vpop.permute.xlu0 %1921
        %1923 = vrot.lane.b32.xlu0 %v1147, 72
        %v1924 = vpop.permute.xlu0 %1923
        %1925 = vrot.lane.b32.xlu0 %v1149, 72
        %v1926 = vpop.permute.xlu0 %1925
        %1927 = vrot.lane.b32.xlu0 %v1150, 72
        %v1928 = vpop.permute.xlu0 %1927
        %1929 = vrot.lane.b32.xlu0 %v1152, 72
        %v1930 = vpop.permute.xlu0 %1929
        %1931 = vrot.lane.b32.xlu0 %v1153, 72
        %v1932 = vpop.permute.xlu0 %1931
        %1933 = vrot.lane.b32.xlu0 %v1155, 72
        %v1934 = vpop.permute.xlu0 %1933
        %1935 = vrot.lane.b32.xlu0 %v1156, 72
        %v1936 = vpop.permute.xlu0 %1935
        %1937 = vrot.lane.b32.xlu0 %v1158, 72
        %v1938 = vpop.permute.xlu0 %1937
        %1939 = vrot.lane.b32.xlu0 %v1159, 72
        %v1940 = vpop.permute.xlu0 %1939
        %1973 = vrot.lane.b32.xlu0 %v1222, 84
        %v1974 = vpop.permute.xlu0 %1973
        %1975 = vrot.lane.b32.xlu0 %v1224, 84
        %v1976 = vpop.permute.xlu0 %1975
        %1977 = vrot.lane.b32.xlu0 %v1227, 84
        %v1978 = vpop.permute.xlu0 %1977
        %1979 = vrot.lane.b32.xlu0 %v1229, 84
        %v1980 = vpop.permute.xlu0 %1979
        %1981 = vrot.lane.b32.xlu0 %v1232, 84
        %v1982 = vpop.permute.xlu0 %1981
        %1983 = vrot.lane.b32.xlu0 %v1234, 84
        %v1984 = vpop.permute.xlu0 %1983
        %1985 = vrot.lane.b32.xlu0 %v1237, 84
        %v1986 = vpop.permute.xlu0 %1985
        %1987 = vrot.lane.b32.xlu0 %v1239, 84
        %v1988 = vpop.permute.xlu0 %1987
        %1989 = vrot.lane.b32.xlu0 %v1242, 84
        %v1990 = vpop.permute.xlu0 %1989
        %1991 = vrot.lane.b32.xlu0 %v1244, 84
        %v1992 = vpop.permute.xlu0 %1991
        %1993 = vrot.lane.b32.xlu0 %v1247, 84
        %v1994 = vpop.permute.xlu0 %1993
        %1995 = vrot.lane.b32.xlu0 %v1249, 84
        %v1996 = vpop.permute.xlu0 %1995
        %1997 = vrot.lane.b32.xlu0 %v1252, 84
        %v1998 = vpop.permute.xlu0 %1997
        %1999 = vrot.lane.b32.xlu0 %v1254, 84
        %v2000 = vpop.permute.xlu0 %1999
        %2001 = vrot.lane.b32.xlu0 %v1257, 84
        %v2002 = vpop.permute.xlu0 %2001
        %2003 = vrot.lane.b32.xlu0 %v1259, 84
        %v2004 = vpop.permute.xlu0 %2003
        %2005 = vrot.lane.b32.xlu0 %v1262, 84
        %v2006 = vpop.permute.xlu0 %2005
        %2007 = vrot.lane.b32.xlu0 %v1264, 84
        %v2008 = vpop.permute.xlu0 %2007
        %2009 = vrot.lane.b32.xlu0 %v1267, 84
        %v2010 = vpop.permute.xlu0 %2009
        %2011 = vrot.lane.b32.xlu0 %v1269, 84
        %v2012 = vpop.permute.xlu0 %2011
        %2013 = vrot.lane.b32.xlu0 %v1272, 84
        %v2014 = vpop.permute.xlu0 %2013
        %2015 = vrot.lane.b32.xlu0 %v1274, 84
        %v2016 = vpop.permute.xlu0 %2015
        %2017 = vrot.lane.b32.xlu0 %v1277, 84
        %v2018 = vpop.permute.xlu0 %2017
        %2019 = vrot.lane.b32.xlu0 %v1279, 84
        %v2020 = vpop.permute.xlu0 %2019
        %2021 = vrot.lane.b32.xlu0 %v1282, 84
        %v2022 = vpop.permute.xlu0 %2021
        %2023 = vrot.lane.b32.xlu0 %v1284, 84
        %v2024 = vpop.permute.xlu0 %2023
        %2025 = vrot.lane.b32.xlu0 %v1287, 84
        %v2026 = vpop.permute.xlu0 %2025
        %2027 = vrot.lane.b32.xlu0 %v1289, 84
        %v2028 = vpop.permute.xlu0 %2027
        %2029 = vrot.lane.b32.xlu0 %v1376, 84
        %v2030 = vpop.permute.xlu0 %2029
        %2031 = vrot.lane.b32.xlu0 %v1378, 84
        %v2032 = vpop.permute.xlu0 %2031
        %2033 = vrot.lane.b32.xlu0 %v1389, 84
        %v2034 = vpop.permute.xlu0 %2033
        %2035 = vrot.lane.b32.xlu0 %v1391, 84
        %v2036 = vpop.permute.xlu0 %2035
        %2069 = vrot.lane.b32.xlu0 %v1303, 96
        %v2070 = vpop.permute.xlu0 %2069
        %2071 = vrot.lane.b32.xlu0 %v1305, 96
        %v2072 = vpop.permute.xlu0 %2071
        %2073 = vrot.lane.b32.xlu0 %v1308, 96
        %v2074 = vpop.permute.xlu0 %2073
        %2075 = vrot.lane.b32.xlu0 %v1310, 96
        %v2076 = vpop.permute.xlu0 %2075
        %2077 = vrot.lane.b32.xlu0 %v1313, 96
        %v2078 = vpop.permute.xlu0 %2077
        %2079 = vrot.lane.b32.xlu0 %v1315, 96
        %v2080 = vpop.permute.xlu0 %2079
        %2081 = vrot.lane.b32.xlu0 %v1318, 96
        %v2082 = vpop.permute.xlu0 %2081
        %2083 = vrot.lane.b32.xlu0 %v1320, 96
        %v2084 = vpop.permute.xlu0 %2083
        %2085 = vrot.lane.b32.xlu0 %v1323, 96
        %v2086 = vpop.permute.xlu0 %2085
        %2087 = vrot.lane.b32.xlu0 %v1325, 96
        %v2088 = vpop.permute.xlu0 %2087
        %2089 = vrot.lane.b32.xlu0 %v1328, 96
        %v2090 = vpop.permute.xlu0 %2089
        %2091 = vrot.lane.b32.xlu0 %v1330, 96
        %v2092 = vpop.permute.xlu0 %2091
        %2093 = vrot.lane.b32.xlu0 %v1333, 96
        %v2094 = vpop.permute.xlu0 %2093
        %2095 = vrot.lane.b32.xlu0 %v1335, 96
        %v2096 = vpop.permute.xlu0 %2095
        %2097 = vrot.lane.b32.xlu0 %v1338, 96
        %v2098 = vpop.permute.xlu0 %2097
        %2099 = vrot.lane.b32.xlu0 %v1340, 96
        %v2100 = vpop.permute.xlu0 %2099
        %2101 = vrot.lane.b32.xlu0 %v1343, 96
        %v2102 = vpop.permute.xlu0 %2101
        %2103 = vrot.lane.b32.xlu0 %v1345, 96
        %v2104 = vpop.permute.xlu0 %2103
        %2105 = vrot.lane.b32.xlu0 %v1348, 96
        %v2106 = vpop.permute.xlu0 %2105
        %2107 = vrot.lane.b32.xlu0 %v1350, 96
        %v2108 = vpop.permute.xlu0 %2107
        %2109 = vrot.lane.b32.xlu0 %v1353, 96
        %v2110 = vpop.permute.xlu0 %2109
        %2111 = vrot.lane.b32.xlu0 %v1355, 96
        %v2112 = vpop.permute.xlu0 %2111
        %2113 = vrot.lane.b32.xlu0 %v1358, 96
        %v2114 = vpop.permute.xlu0 %2113
        %2115 = vrot.lane.b32.xlu0 %v1360, 96
        %v2116 = vpop.permute.xlu0 %2115
        %2117 = vrot.lane.b32.xlu0 %v1363, 96
        %v2118 = vpop.permute.xlu0 %2117
        %2119 = vrot.lane.b32.xlu0 %v1365, 96
        %v2120 = vpop.permute.xlu0 %2119
        %2121 = vrot.lane.b32.xlu0 %v1368, 96
        %v2122 = vpop.permute.xlu0 %2121
        %2123 = vrot.lane.b32.xlu0 %v1370, 96
        %v2124 = vpop.permute.xlu0 %2123
        %2125 = vrot.lane.b32.xlu0 %v1381, 96
        %v2126 = vpop.permute.xlu0 %2125
        %2127 = vrot.lane.b32.xlu0 %v1383, 96
        %v2128 = vpop.permute.xlu0 %2127
        %2129 = vrot.lane.b32.xlu0 %v1394, 96
        %v2130 = vpop.permute.xlu0 %2129
        %2131 = vrot.lane.b32.xlu0 %v1396, 96
        %v2132 = vpop.permute.xlu0 %2131
        %v2165 = vsel %vm1018, %v1107, %v1398
        %v2166 = vsel %vm1018, %v1108, %v1400
        %v2167 = vsel %vm1018, %v1110, %v1402
        %v2168 = vsel %vm1018, %v1111, %v1404
        %v2169 = vsel %vm1018, %v1113, %v1406
        %v2170 = vsel %vm1018, %v1114, %v1408
        %v2171 = vsel %vm1018, %v1116, %v1410
        %v2172 = vsel %vm1018, %v1117, %v1412
        %v2173 = vsel %vm1018, %v1119, %v1414
        %v2174 = vsel %vm1018, %v1120, %v1416
        %v2175 = vsel %vm1018, %v1122, %v1418
        %v2176 = vsel %vm1018, %v1123, %v1420
        %v2177 = vsel %vm1018, %v1125, %v1422
        %v2178 = vsel %vm1018, %v1126, %v1424
        %v2179 = vsel %vm1018, %v1128, %v1426
        %v2180 = vsel %vm1018, %v1129, %v1428
        %v2181 = vsel %vm1018, %v1131, %v1430
        %v2182 = vsel %vm1018, %v1132, %v1432
        %v2183 = vsel %vm1018, %v1134, %v1434
        %v2184 = vsel %vm1018, %v1135, %v1436
        %v2185 = vsel %vm1018, %v1137, %v1438
        %v2186 = vsel %vm1018, %v1138, %v1440
        %v2187 = vsel %vm1018, %v1140, %v1442
        %v2188 = vsel %vm1018, %v1141, %v1444
        %v2189 = vsel %vm1018, %v1143, %v1446
        %v2190 = vsel %vm1018, %v1144, %v1448
        %v2191 = vsel %vm1018, %v1146, %v1450
        %v2192 = vsel %vm1018, %v1147, %v1452
        %v2193 = vsel %vm1018, %v1149, %v1454
        %v2194 = vsel %vm1018, %v1150, %v1456
        %v2195 = vsel %vm1018, %v1152, %v1458
        %v2196 = vsel %vm1018, %v1153, %v1460
        %vm2197 = vcmask 195584
        %v2198 = vsel %vm2197, %v2165, %v1494
        %v2199 = vsel %vm2197, %v2166, %v1496
        %v2200 = vsel %vm2197, %v2167, %v1498
        %v2201 = vsel %vm2197, %v2168, %v1500
        %v2202 = vsel %vm2197, %v2169, %v1502
        %v2203 = vsel %vm2197, %v2170, %v1504
        %v2204 = vsel %vm2197, %v2171, %v1506
        %v2205 = vsel %vm2197, %v2172, %v1508
        %v2206 = vsel %vm2197, %v2173, %v1510
        %v2207 = vsel %vm2197, %v2174, %v1512
        %v2208 = vsel %vm2197, %v2175, %v1514
        %v2209 = vsel %vm2197, %v2176, %v1516
        %v2210 = vsel %vm2197, %v2177, %v1518
        %v2211 = vsel %vm2197, %v2178, %v1520
        %v2212 = vsel %vm2197, %v2179, %v1522
        %v2213 = vsel %vm2197, %v2180, %v1524
        %v2214 = vsel %vm2197, %v2181, %v1526
        %v2215 = vsel %vm2197, %v2182, %v1528
        %v2216 = vsel %vm2197, %v2183, %v1530
        %v2217 = vsel %vm2197, %v2184, %v1532
        %v2218 = vsel %vm2197, %v2185, %v1534
        %v2219 = vsel %vm2197, %v2186, %v1536
        %v2220 = vsel %vm2197, %v2187, %v1538
        %v2221 = vsel %vm2197, %v2188, %v1540
        %v2222 = vsel %vm2197, %v2189, %v1542
        %v2223 = vsel %vm2197, %v2190, %v1544
        %v2224 = vsel %vm2197, %v2191, %v1546
        %v2225 = vsel %vm2197, %v2192, %v1548
        %v2226 = vsel %vm2197, %v2193, %v1550
        %v2227 = vsel %vm2197, %v2194, %v1552
        %v2228 = vsel %vm2197, %v2195, %v1554
        %v2229 = vsel %vm2197, %v2196, %v1556
        %vm2230 = vcmask 293888
        %v2231 = vsel %vm2230, %v2198, %v1590
        %v2232 = vsel %vm2230, %v2199, %v1592
        %v2233 = vsel %vm2230, %v2200, %v1594
        %v2234 = vsel %vm2230, %v2201, %v1596
        %v2235 = vsel %vm2230, %v2202, %v1598
        %v2236 = vsel %vm2230, %v2203, %v1600
        %v2237 = vsel %vm2230, %v2204, %v1602
        %v2238 = vsel %vm2230, %v2205, %v1604
        %v2239 = vsel %vm2230, %v2206, %v1606
        %v2240 = vsel %vm2230, %v2207, %v1608
        %v2241 = vsel %vm2230, %v2208, %v1610
        %v2242 = vsel %vm2230, %v2209, %v1612
        %v2243 = vsel %vm2230, %v2210, %v1614
        %v2244 = vsel %vm2230, %v2211, %v1616
        %v2245 = vsel %vm2230, %v2212, %v1618
        %v2246 = vsel %vm2230, %v2213, %v1620
        %v2247 = vsel %vm2230, %v2214, %v1622
        %v2248 = vsel %vm2230, %v2215, %v1624
        %v2249 = vsel %vm2230, %v2216, %v1626
        %v2250 = vsel %vm2230, %v2217, %v1628
        %v2251 = vsel %vm2230, %v2218, %v1630
        %v2252 = vsel %vm2230, %v2219, %v1632
        %v2253 = vsel %vm2230, %v2220, %v1634
        %v2254 = vsel %vm2230, %v2221, %v1636
        %v2255 = vsel %vm2230, %v2222, %v1638
        %v2256 = vsel %vm2230, %v2223, %v1640
        %v2257 = vsel %vm2230, %v2224, %v1642
        %v2258 = vsel %vm2230, %v2225, %v1644
        %v2259 = vsel %vm2230, %v2226, %v1646
        %v2260 = vsel %vm2230, %v2227, %v1648
        %v2261 = vsel %vm2230, %v2228, %v1650
        %v2262 = vsel %vm2230, %v2229, %v1652
        %vm2263 = vcmask 392192
        %v2264 = vsel %vm2263, %v2231, %v1686
        %v2265 = vsel %vm2263, %v2232, %v1688
        %v2266 = vsel %vm2263, %v2233, %v1690
        %v2267 = vsel %vm2263, %v2234, %v1692
        %v2268 = vsel %vm2263, %v2235, %v1694
        %v2269 = vsel %vm2263, %v2236, %v1696
        %v2270 = vsel %vm2263, %v2237, %v1698
        %v2271 = vsel %vm2263, %v2238, %v1700
        %v2272 = vsel %vm2263, %v2239, %v1702
        %v2273 = vsel %vm2263, %v2240, %v1704
        %v2274 = vsel %vm2263, %v2241, %v1706
        %v2275 = vsel %vm2263, %v2242, %v1708
        %v2276 = vsel %vm2263, %v2243, %v1710
        %v2277 = vsel %vm2263, %v2244, %v1712
        %v2278 = vsel %vm2263, %v2245, %v1714
        %v2279 = vsel %vm2263, %v2246, %v1716
        %v2280 = vsel %vm2263, %v2247, %v1718
        %v2281 = vsel %vm2263, %v2248, %v1720
        %v2282 = vsel %vm2263, %v2249, %v1722
        %v2283 = vsel %vm2263, %v2250, %v1724
        %v2284 = vsel %vm2263, %v2251, %v1726
        %v2285 = vsel %vm2263, %v2252, %v1728
        %v2286 = vsel %vm2263, %v2253, %v1730
        %v2287 = vsel %vm2263, %v2254, %v1732
        %v2288 = vsel %vm2263, %v2255, %v1734
        %v2289 = vsel %vm2263, %v2256, %v1736
        %v2290 = vsel %vm2263, %v2257, %v1738
        %v2291 = vsel %vm2263, %v2258, %v1740
        %v2292 = vsel %vm2263, %v2259, %v1742
        %v2293 = vsel %vm2263, %v2260, %v1744
        %v2294 = vsel %vm2263, %v2261, %v1746
        %v2295 = vsel %vm2263, %v2262, %v1748
        %vm2296 = vcmask 490496
        %v2297 = vsel %vm2296, %v2264, %v1782
        %v2298 = vsel %vm2296, %v2265, %v1784
        %v2299 = vsel %vm2296, %v2266, %v1786
        %v2300 = vsel %vm2296, %v2267, %v1788
        %v2301 = vsel %vm2296, %v2268, %v1790
        %v2302 = vsel %vm2296, %v2269, %v1792
        %v2303 = vsel %vm2296, %v2270, %v1794
        %v2304 = vsel %vm2296, %v2271, %v1796
        %v2305 = vsel %vm2296, %v2272, %v1798
        %v2306 = vsel %vm2296, %v2273, %v1800
        %v2307 = vsel %vm2296, %v2274, %v1802
        %v2308 = vsel %vm2296, %v2275, %v1804
        %v2309 = vsel %vm2296, %v2276, %v1806
        %v2310 = vsel %vm2296, %v2277, %v1808
        %v2311 = vsel %vm2296, %v2278, %v1810
        %v2312 = vsel %vm2296, %v2279, %v1812
        %v2313 = vsel %vm2296, %v2280, %v1814
        %v2314 = vsel %vm2296, %v2281, %v1816
        %v2315 = vsel %vm2296, %v2282, %v1818
        %v2316 = vsel %vm2296, %v2283, %v1820
        %v2317 = vsel %vm2296, %v2284, %v1822
        %v2318 = vsel %vm2296, %v2285, %v1824
        %v2319 = vsel %vm2296, %v2286, %v1826
        %v2320 = vsel %vm2296, %v2287, %v1828
        %v2321 = vsel %vm2296, %v2288, %v1830
        %v2322 = vsel %vm2296, %v2289, %v1832
        %v2323 = vsel %vm2296, %v2290, %v1834
        %v2324 = vsel %vm2296, %v2291, %v1836
        %v2325 = vsel %vm2296, %v2292, %v1838
        %v2326 = vsel %vm2296, %v2293, %v1840
        %v2327 = vsel %vm2296, %v2294, %v1842
        %v2328 = vsel %vm2296, %v2295, %v1844
        %vm2329 = vcmask 588800
        %v2330 = vsel %vm2329, %v2297, %v1878
        %v2331 = vsel %vm2329, %v2298, %v1880
        %v2332 = vsel %vm2329, %v2299, %v1882
        %v2333 = vsel %vm2329, %v2300, %v1884
        %v2334 = vsel %vm2329, %v2301, %v1886
        %v2335 = vsel %vm2329, %v2302, %v1888
        %v2336 = vsel %vm2329, %v2303, %v1890
        %v2337 = vsel %vm2329, %v2304, %v1892
        %v2338 = vsel %vm2329, %v2305, %v1894
        %v2339 = vsel %vm2329, %v2306, %v1896
        %v2340 = vsel %vm2329, %v2307, %v1898
        %v2341 = vsel %vm2329, %v2308, %v1900
        %v2342 = vsel %vm2329, %v2309, %v1902
        %v2343 = vsel %vm2329, %v2310, %v1904
        %v2344 = vsel %vm2329, %v2311, %v1906
        %v2345 = vsel %vm2329, %v2312, %v1908
        %v2346 = vsel %vm2329, %v2313, %v1910
        %v2347 = vsel %vm2329, %v2314, %v1912
        %v2348 = vsel %vm2329, %v2315, %v1914
        %v2349 = vsel %vm2329, %v2316, %v1916
        %v2350 = vsel %vm2329, %v2317, %v1918
        %v2351 = vsel %vm2329, %v2318, %v1920
        %v2352 = vsel %vm2329, %v2319, %v1922
        %v2353 = vsel %vm2329, %v2320, %v1924
        %v2354 = vsel %vm2329, %v2321, %v1926
        %v2355 = vsel %vm2329, %v2322, %v1928
        %v2356 = vsel %vm2329, %v2323, %v1930
        %v2357 = vsel %vm2329, %v2324, %v1932
        %v2358 = vsel %vm2329, %v2325, %v1934
        %v2359 = vsel %vm2329, %v2326, %v1936
        %v2360 = vsel %vm2329, %v2327, %v1938
        %v2361 = vsel %vm2329, %v2328, %v1940
        %vm2362 = vcmask 687104
        %v2363 = vsel %vm2362, %v2330, %v1974
        %v2364 = vsel %vm2362, %v2331, %v1976
        %v2365 = vsel %vm2362, %v2332, %v1978
        %v2366 = vsel %vm2362, %v2333, %v1980
        %v2367 = vsel %vm2362, %v2334, %v1982
        %v2368 = vsel %vm2362, %v2335, %v1984
        %v2369 = vsel %vm2362, %v2336, %v1986
        %v2370 = vsel %vm2362, %v2337, %v1988
        %v2371 = vsel %vm2362, %v2338, %v1990
        %v2372 = vsel %vm2362, %v2339, %v1992
        %v2373 = vsel %vm2362, %v2340, %v1994
        %v2374 = vsel %vm2362, %v2341, %v1996
        %v2375 = vsel %vm2362, %v2342, %v1998
        %v2376 = vsel %vm2362, %v2343, %v2000
        %v2377 = vsel %vm2362, %v2344, %v2002
        %v2378 = vsel %vm2362, %v2345, %v2004
        %v2379 = vsel %vm2362, %v2346, %v2006
        %v2380 = vsel %vm2362, %v2347, %v2008
        %v2381 = vsel %vm2362, %v2348, %v2010
        %v2382 = vsel %vm2362, %v2349, %v2012
        %v2383 = vsel %vm2362, %v2350, %v2014
        %v2384 = vsel %vm2362, %v2351, %v2016
        %v2385 = vsel %vm2362, %v2352, %v2018
        %v2386 = vsel %vm2362, %v2353, %v2020
        %v2387 = vsel %vm2362, %v2354, %v2022
        %v2388 = vsel %vm2362, %v2355, %v2024
        %v2389 = vsel %vm2362, %v2356, %v2026
        %v2390 = vsel %vm2362, %v2357, %v2028
        %v2391 = vsel %vm2362, %v2358, %v2030
        %v2392 = vsel %vm2362, %v2359, %v2032
        %v2393 = vsel %vm2362, %v2360, %v2034
        %v2394 = vsel %vm2362, %v2361, %v2036
        %vm2395 = vcmask 785408
        %v2396 = vsel %vm2395, %v2363, %v2070
        %v2397 = vsel %vm2395, %v2364, %v2072
        %v2398 = vsel %vm2395, %v2365, %v2074
        %v2399 = vsel %vm2395, %v2366, %v2076
        %v2400 = vsel %vm2395, %v2367, %v2078
        %v2401 = vsel %vm2395, %v2368, %v2080
        %v2402 = vsel %vm2395, %v2369, %v2082
        %v2403 = vsel %vm2395, %v2370, %v2084
        %v2404 = vsel %vm2395, %v2371, %v2086
        %v2405 = vsel %vm2395, %v2372, %v2088
        %v2406 = vsel %vm2395, %v2373, %v2090
        %v2407 = vsel %vm2395, %v2374, %v2092
        %v2408 = vsel %vm2395, %v2375, %v2094
        %v2409 = vsel %vm2395, %v2376, %v2096
        %v2410 = vsel %vm2395, %v2377, %v2098
        %v2411 = vsel %vm2395, %v2378, %v2100
        %v2412 = vsel %vm2395, %v2379, %v2102
        %v2413 = vsel %vm2395, %v2380, %v2104
        %v2414 = vsel %vm2395, %v2381, %v2106
        %v2415 = vsel %vm2395, %v2382, %v2108
        %v2416 = vsel %vm2395, %v2383, %v2110
        %v2417 = vsel %vm2395, %v2384, %v2112
        %v2418 = vsel %vm2395, %v2385, %v2114
        %v2419 = vsel %vm2395, %v2386, %v2116
        %v2420 = vsel %vm2395, %v2387, %v2118
        %v2421 = vsel %vm2395, %v2388, %v2120
        %v2422 = vsel %vm2395, %v2389, %v2122
        %v2423 = vsel %vm2395, %v2390, %v2124
        %v2424 = vsel %vm2395, %v2391, %v2126
        %v2425 = vsel %vm2395, %v2392, %v2128
        %v2426 = vsel %vm2395, %v2393, %v2130
        %v2427 = vsel %vm2395, %v2394, %v2132
        %v2428 = vpack.c.bf16 %v2397, %v2396
        %v2429 = vpack.c.bf16 %v2399, %v2398
        %v2430 = vpack.c.bf16 %v2401, %v2400
        %v2431 = vpack.c.bf16 %v2403, %v2402
        %v2432 = vpack.c.bf16 %v2405, %v2404
        %v2433 = vpack.c.bf16 %v2407, %v2406
        %v2434 = vpack.c.bf16 %v2409, %v2408
        %v2435 = vpack.c.bf16 %v2411, %v2410
        %v2436 = vpack.c.bf16 %v2413, %v2412
        %v2437 = vpack.c.bf16 %v2415, %v2414
        %v2438 = vpack.c.bf16 %v2417, %v2416
        %v2439 = vpack.c.bf16 %v2419, %v2418
        %v2440 = vpack.c.bf16 %v2421, %v2420
        %v2441 = vpack.c.bf16 %v2423, %v2422
        %v2442 = vpack.c.bf16 %v2425, %v2424
        %v2443 = vpack.c.bf16 %v2427, %v2426
        %v2444 = vld [vmem:[%s3] sm:$0xf]
        %v2445 = vld [vmem:[%s3 + $0x4] sm:$0xf]
        %v2446 = vld [vmem:[%s3 + $0x8] sm:$0xf]
        %v2447 = vld [vmem:[%s3 + $0xc] sm:$0xf]
        %v2448 = vld [vmem:[%s3 + $0x10] sm:$0xf]
        %v2449 = vld [vmem:[%s3 + $0x14] sm:$0xf]
        %v2450 = vld [vmem:[%s3 + $0x18] sm:$0xf]
        %v2451 = vld [vmem:[%s3 + $0x1c] sm:$0xf]
        %v2452 = vld [vmem:[%s3 + $0x20] sm:$0xf]
        %v2453 = vld [vmem:[%s3 + $0x24] sm:$0xf]
        %v2454 = vld [vmem:[%s3 + $0x28] sm:$0xf]
        %v2455 = vld [vmem:[%s3 + $0x2c] sm:$0xf]
        %v2456 = vld [vmem:[%s3 + $0x30] sm:$0xf]
        %v2457 = vld [vmem:[%s3 + $0x34] sm:$0x3]
        %v2472 = vunpack.c.l.b16 %v2444
        %v2473 = vunpack.c.l.b16 %v2445
        %v2474 = vunpack.c.l.b16 %v2446
        %v2475 = vunpack.c.l.b16 %v2447
        %v2476 = vunpack.c.l.b16 %v2448
        %v2477 = vunpack.c.l.b16 %v2449
        %v2478 = vunpack.c.l.b16 %v2450
        %v2479 = vunpack.c.l.b16 %v2451
        %v2480 = vunpack.c.l.b16 %v2452
        %v2481 = vunpack.c.l.b16 %v2453
        %v2482 = vunpack.c.l.b16 %v2454
        %v2483 = vunpack.c.l.b16 %v2455
        %v2484 = vunpack.c.l.b16 %v2456
        %v2485 = vunpack.c.l.b16 %v2457
        %v2486 = vpack.c.b16 %v2473, %v2472
        %v2487 = vpack.c.b16 %v2475, %v2474
        %v2488 = vpack.c.b16 %v2477, %v2476
        %v2489 = vpack.c.b16 %v2479, %v2478
        %v2490 = vpack.c.b16 %v2481, %v2480
        %v2491 = vpack.c.b16 %v2483, %v2482
        %v2492 = vpack.c.b16 %v2485, %v2484
        %vm2499 = vcmask 883712
        %v2501 = vsel %vm2499, %v2428, 0
        %v2504 = vsel %vm2499, %v2429, 0
        %v2507 = vsel %vm2499, %v2430, 0
        %v2510 = vsel %vm2499, %v2431, 0
        %v2513 = vsel %vm2499, %v2432, 0
        %v2516 = vsel %vm2499, %v2433, 0
        %v2519 = vsel %vm2499, %v2434, 0
        %v2522 = vsel %vm2499, %v2435, 0
        %v2525 = vsel %vm2499, %v2436, 0
        %v2528 = vsel %vm2499, %v2437, 0
        %v2531 = vsel %vm2499, %v2438, 0
        %v2534 = vsel %vm2499, %v2439, 0
        %v2537 = vsel %vm2499, %v2440, 0
        %v2540 = vsel %vm2499, %v2441, 0
        %v2543 = vsel %vm2499, %v2442, 0
        %v2546 = vsel %vm2499, %v2443, 0
        %v2549 = vsel %vm1290, %v2492, 0
        %2551 = vmatprep.subr.bf16.mxu0 0
        %2552 = vmatpush1.bf16.msra.mxu0 0
        %2553 = vmatprep.subr.bf16.mxu0 0
        %2554 = vmatpush1.bf16.msra.mxu0 %v2549
        %2555 = vmatprep.subr.bf16.mxu0 0
        %2556 = vmatpush1.bf16.msra.mxu0 %v2491
        %2557 = vmatprep.subr.bf16.mxu0 0
        %2558 = vmatpush1.bf16.msra.mxu0 %v2490
        %2559 = vmatprep.subr.bf16.mxu0 0
        %2560 = vmatpush1.bf16.msra.mxu0 %v2489
        %2561 = vmatprep.subr.bf16.mxu0 0
        %2562 = vmatpush1.bf16.msra.mxu0 %v2488
        %2563 = vmatprep.subr.bf16.mxu0 0
        %2564 = vmatpush1.bf16.msra.mxu0 %v2487
        %2565 = vmatprep.subr.bf16.mxu0 0
        %2566 = vmatpush1.bf16.msra.mxu0 %v2486
        %2567 = vmatprep.subr.bf16.mxu0 0
        %2568 = vmatpush2.bf16.msra.mxu0 0
        %2569 = vmatprep.subr.bf16.mxu0 0
        %2570 = vmatpush2.bf16.msra.mxu0 0
        %2571 = vmatprep.subr.bf16.mxu0 0
        %2572 = vmatpush2.bf16.msra.mxu0 0
        %2573 = vmatprep.subr.bf16.mxu0 0
        %2574 = vmatpush2.bf16.msra.mxu0 0
        %2575 = vmatprep.subr.bf16.mxu0 0
        %2576 = vmatpush2.bf16.msra.mxu0 0
        %2577 = vmatprep.subr.bf16.mxu0 0
        %2578 = vmatpush2.bf16.msra.mxu0 0
        %2579 = vmatprep.subr.bf16.mxu0 0
        %2580 = vmatpush2.bf16.msra.mxu0 0
        %2581 = vmatprep.subr.bf16.mxu0 0
        %2582 = vmatpush2.bf16.msra.mxu0 0
        %2583 = vmatprep.mubr.bf16.mxu0 0
        %2584 = vmatmul.mubr.bf16.gmra.mxu0 %v2501
        %v2585 = vpop.f32.mrf.mxu0
        %v2586 = vadd.f32 0.0, %v2585
        %v2587 = vpop.f32.mrf.mxu0
        %v2588 = vpop.f32.mrf.mxu0
        %v2589 = vadd.f32 0.0, %v2588
        %v2590 = vpop.f32.mrf.mxu0
        %2591 = vmatprep.mubr.bf16.mxu0 0
        %2592 = vmatmul.mubr.bf16.gmra.mxu0 %v2504
        %v2593 = vpop.f32.mrf.mxu0
        %v2594 = vadd.f32 0.0, %v2593
        %v2595 = vpop.f32.mrf.mxu0
        %v2596 = vpop.f32.mrf.mxu0
        %v2597 = vadd.f32 0.0, %v2596
        %v2598 = vpop.f32.mrf.mxu0
        %2599 = vmatprep.mubr.bf16.mxu0 0
        %2600 = vmatmul.mubr.bf16.gmra.mxu0 %v2507
        %v2601 = vpop.f32.mrf.mxu0
        %v2602 = vadd.f32 0.0, %v2601
        %v2603 = vpop.f32.mrf.mxu0
        %v2604 = vpop.f32.mrf.mxu0
        %v2605 = vadd.f32 0.0, %v2604
        %v2606 = vpop.f32.mrf.mxu0
        %2607 = vmatprep.mubr.bf16.mxu0 0
        %2608 = vmatmul.mubr.bf16.gmra.mxu0 %v2510
        %v2609 = vpop.f32.mrf.mxu0
        %v2610 = vadd.f32 0.0, %v2609
        %v2611 = vpop.f32.mrf.mxu0
        %v2612 = vpop.f32.mrf.mxu0
        %v2613 = vadd.f32 0.0, %v2612
        %v2614 = vpop.f32.mrf.mxu0
        %2615 = vmatprep.mubr.bf16.mxu0 0
        %2616 = vmatmul.mubr.bf16.gmra.mxu0 %v2513
        %v2617 = vpop.f32.mrf.mxu0
        %v2618 = vadd.f32 0.0, %v2617
        %v2619 = vpop.f32.mrf.mxu0
        %v2620 = vpop.f32.mrf.mxu0
        %v2621 = vadd.f32 0.0, %v2620
        %v2622 = vpop.f32.mrf.mxu0
        %2623 = vmatprep.mubr.bf16.mxu0 0
        %2624 = vmatmul.mubr.bf16.gmra.mxu0 %v2516
        %v2625 = vpop.f32.mrf.mxu0
        %v2626 = vadd.f32 0.0, %v2625
        %v2627 = vpop.f32.mrf.mxu0
        %v2628 = vpop.f32.mrf.mxu0
        %v2629 = vadd.f32 0.0, %v2628
        %v2630 = vpop.f32.mrf.mxu0
        %2631 = vmatprep.mubr.bf16.mxu0 0
        %2632 = vmatmul.mubr.bf16.gmra.mxu0 %v2519
        %v2633 = vpop.f32.mrf.mxu0
        %v2634 = vadd.f32 0.0, %v2633
        %v2635 = vpop.f32.mrf.mxu0
        %v2636 = vpop.f32.mrf.mxu0
        %v2637 = vadd.f32 0.0, %v2636
        %v2638 = vpop.f32.mrf.mxu0
        %2639 = vmatprep.mubr.bf16.mxu0 0
        %2640 = vmatmul.mubr.bf16.gmra.mxu0 %v2522
        %v2641 = vpop.f32.mrf.mxu0
        %v2642 = vadd.f32 0.0, %v2641
        %v2643 = vpop.f32.mrf.mxu0
        %v2644 = vpop.f32.mrf.mxu0
        %v2645 = vadd.f32 0.0, %v2644
        %v2646 = vpop.f32.mrf.mxu0
        %2647 = vmatprep.mubr.bf16.mxu0 0
        %2648 = vmatmul.mubr.bf16.gmra.mxu0 %v2525
        %v2649 = vpop.f32.mrf.mxu0
        %v2650 = vadd.f32 0.0, %v2649
        %v2651 = vpop.f32.mrf.mxu0
        %v2652 = vpop.f32.mrf.mxu0
        %v2653 = vadd.f32 0.0, %v2652
        %v2654 = vpop.f32.mrf.mxu0
        %2655 = vmatprep.mubr.bf16.mxu0 0
        %2656 = vmatmul.mubr.bf16.gmra.mxu0 %v2528
        %v2657 = vpop.f32.mrf.mxu0
        %v2658 = vadd.f32 0.0, %v2657
        %v2659 = vpop.f32.mrf.mxu0
        %v2660 = vpop.f32.mrf.mxu0
        %v2661 = vadd.f32 0.0, %v2660
        %v2662 = vpop.f32.mrf.mxu0
        %2663 = vmatprep.mubr.bf16.mxu0 0
        %2664 = vmatmul.mubr.bf16.gmra.mxu0 %v2531
        %v2665 = vpop.f32.mrf.mxu0
        %v2666 = vadd.f32 0.0, %v2665
        %v2667 = vpop.f32.mrf.mxu0
        %v2668 = vpop.f32.mrf.mxu0
        %v2669 = vadd.f32 0.0, %v2668
        %v2670 = vpop.f32.mrf.mxu0
        %2671 = vmatprep.mubr.bf16.mxu0 0
        %2672 = vmatmul.mubr.bf16.gmra.mxu0 %v2534
        %v2673 = vpop.f32.mrf.mxu0
        %v2674 = vadd.f32 0.0, %v2673
        %v2675 = vpop.f32.mrf.mxu0
        %v2676 = vpop.f32.mrf.mxu0
        %v2677 = vadd.f32 0.0, %v2676
        %v2678 = vpop.f32.mrf.mxu0
        %2679 = vmatprep.mubr.bf16.mxu0 0
        %2680 = vmatmul.mubr.bf16.gmra.mxu0 %v2537
        %v2681 = vpop.f32.mrf.mxu0
        %v2682 = vadd.f32 0.0, %v2681
        %v2683 = vpop.f32.mrf.mxu0
        %v2684 = vpop.f32.mrf.mxu0
        %v2685 = vadd.f32 0.0, %v2684
        %v2686 = vpop.f32.mrf.mxu0
        %2687 = vmatprep.mubr.bf16.mxu0 0
        %2688 = vmatmul.mubr.bf16.gmra.mxu0 %v2540
        %v2689 = vpop.f32.mrf.mxu0
        %v2690 = vadd.f32 0.0, %v2689
        %v2691 = vpop.f32.mrf.mxu0
        %v2692 = vpop.f32.mrf.mxu0
        %v2693 = vadd.f32 0.0, %v2692
        %v2694 = vpop.f32.mrf.mxu0
        %2695 = vmatprep.mubr.bf16.mxu0 0
        %2696 = vmatmul.mubr.bf16.gmra.mxu0 %v2543
        %v2697 = vpop.f32.mrf.mxu0
        %v2698 = vadd.f32 0.0, %v2697
        %v2699 = vpop.f32.mrf.mxu0
        %v2700 = vpop.f32.mrf.mxu0
        %v2701 = vadd.f32 0.0, %v2700
        %v2702 = vpop.f32.mrf.mxu0
        %2703 = vmatprep.mubr.bf16.mxu0 0
        %2704 = vmatmul.mubr.bf16.gmra.mxu0 %v2546
        %v2705 = vpop.f32.mrf.mxu0
        %v2706 = vadd.f32 0.0, %v2705
        %v2707 = vpop.f32.mrf.mxu0
        %v2708 = vpop.f32.mrf.mxu0
        %v2709 = vadd.f32 0.0, %v2708
        %v2710 = vpop.f32.mrf.mxu0
        %2711 = vdwg.mxu0
        %v2712 = vld [vmem:[%s4] sm:$0x1]
        %v2714 = vlaneseq
        %v2715 = vshrl.u32 %v2714, 7
        %v2716 = vsub.s32 0, %v2715
        %v2717 = vrot.slane %v2712, %v2716
        %v2719 = vmul.f32 %v2586, %v2717
        %v2720 = vmul.f32 %v2589, %v2717
        %v2721 = vmul.f32 %v2594, %v2717
        %v2722 = vmul.f32 %v2597, %v2717
        %v2723 = vmul.f32 %v2602, %v2717
        %v2724 = vmul.f32 %v2605, %v2717
        %v2725 = vmul.f32 %v2610, %v2717
        %v2726 = vmul.f32 %v2613, %v2717
        %v2727 = vmul.f32 %v2618, %v2717
        %v2728 = vmul.f32 %v2621, %v2717
        %v2729 = vmul.f32 %v2626, %v2717
        %v2730 = vmul.f32 %v2629, %v2717
        %v2731 = vmul.f32 %v2634, %v2717
        %v2732 = vmul.f32 %v2637, %v2717
        %v2733 = vmul.f32 %v2642, %v2717
        %v2734 = vmul.f32 %v2645, %v2717
        %v2735 = vmul.f32 %v2650, %v2717
        %v2736 = vmul.f32 %v2653, %v2717
        %v2737 = vmul.f32 %v2658, %v2717
        %v2738 = vmul.f32 %v2661, %v2717
        %v2739 = vmul.f32 %v2666, %v2717
        %v2740 = vmul.f32 %v2669, %v2717
        %v2741 = vmul.f32 %v2674, %v2717
        %v2742 = vmul.f32 %v2677, %v2717
        %v2743 = vmul.f32 %v2682, %v2717
        %v2744 = vmul.f32 %v2685, %v2717
        %v2745 = vmul.f32 %v2690, %v2717
        %v2746 = vmul.f32 %v2693, %v2717
        %v2747 = vmul.f32 %v2698, %v2717
        %v2748 = vmul.f32 %v2701, %v2717
        %v2749 = vmul.f32 %v2706, %v2717
        %v2750 = vmul.f32 %v2709, %v2717
        %v2751 = vld [vmem:[%s5] sm:$0x1]
        %v2753 = vlaneseq
        %v2754 = vshrl.u32 %v2753, 7
        %v2755 = vsub.s32 0, %v2754
        %v2756 = vrot.slane %v2751, %v2755
        %v2758 = vadd.f32 %v2719, %v2756
        %v2759 = vadd.f32 %v2720, %v2756
        %v2760 = vadd.f32 %v2721, %v2756
        %v2761 = vadd.f32 %v2722, %v2756
        %v2762 = vadd.f32 %v2723, %v2756
        %v2763 = vadd.f32 %v2724, %v2756
        %v2764 = vadd.f32 %v2725, %v2756
        %v2765 = vadd.f32 %v2726, %v2756
        %v2766 = vadd.f32 %v2727, %v2756
        %v2767 = vadd.f32 %v2728, %v2756
        %v2768 = vadd.f32 %v2729, %v2756
        %v2769 = vadd.f32 %v2730, %v2756
        %v2770 = vadd.f32 %v2731, %v2756
        %v2771 = vadd.f32 %v2732, %v2756
        %v2772 = vadd.f32 %v2733, %v2756
        %v2773 = vadd.f32 %v2734, %v2756
        %v2774 = vadd.f32 %v2735, %v2756
        %v2775 = vadd.f32 %v2736, %v2756
        %v2776 = vadd.f32 %v2737, %v2756
        %v2777 = vadd.f32 %v2738, %v2756
        %v2778 = vadd.f32 %v2739, %v2756
        %v2779 = vadd.f32 %v2740, %v2756
        %v2780 = vadd.f32 %v2741, %v2756
        %v2781 = vadd.f32 %v2742, %v2756
        %v2782 = vadd.f32 %v2743, %v2756
        %v2783 = vadd.f32 %v2744, %v2756
        %v2784 = vadd.f32 %v2745, %v2756
        %v2785 = vadd.f32 %v2746, %v2756
        %v2786 = vadd.f32 %v2747, %v2756
        %v2787 = vadd.f32 %v2748, %v2756
        %v2788 = vadd.f32 %v2749, %v2756
        %v2789 = vadd.f32 %v2750, %v2756
        %v2790 = vmax.f32 %v2758, 0.0
        %v2791 = vmax.f32 %v2759, 0.0
        %v2792 = vmax.f32 %v2760, 0.0
        %v2793 = vmax.f32 %v2761, 0.0
        %v2794 = vmax.f32 %v2762, 0.0
        %v2795 = vmax.f32 %v2763, 0.0
        %v2796 = vmax.f32 %v2764, 0.0
        %v2797 = vmax.f32 %v2765, 0.0
        %v2798 = vmax.f32 %v2766, 0.0
        %v2799 = vmax.f32 %v2767, 0.0
        %v2800 = vmax.f32 %v2768, 0.0
        %v2801 = vmax.f32 %v2769, 0.0
        %v2802 = vmax.f32 %v2770, 0.0
        %v2803 = vmax.f32 %v2771, 0.0
        %v2804 = vmax.f32 %v2772, 0.0
        %v2805 = vmax.f32 %v2773, 0.0
        %v2806 = vmax.f32 %v2774, 0.0
        %v2807 = vmax.f32 %v2775, 0.0
        %v2808 = vmax.f32 %v2776, 0.0
        %v2809 = vmax.f32 %v2777, 0.0
        %v2810 = vmax.f32 %v2778, 0.0
        %v2811 = vmax.f32 %v2779, 0.0
        %v2812 = vmax.f32 %v2780, 0.0
        %v2813 = vmax.f32 %v2781, 0.0
        %v2814 = vmax.f32 %v2782, 0.0
        %v2815 = vmax.f32 %v2783, 0.0
        %v2816 = vmax.f32 %v2784, 0.0
        %v2817 = vmax.f32 %v2785, 0.0
        %v2818 = vmax.f32 %v2786, 0.0
        %v2819 = vmax.f32 %v2787, 0.0
        %v2820 = vmax.f32 %v2788, 0.0
        %v2821 = vmax.f32 %v2789, 0.0
        %2822 = vst.msk [vmem:[#allocation3] sm:$0xff] %vm985, 0.0
        %2823 = vst.msk [vmem:[#allocation3 + $0x8] sm:$0xff] %vm985, 0.0
        %vm2824 = vcmask 58368
        %2825 = vst.msk [vmem:[#allocation3 + $0x10] sm:$0x3] %vm2824, 0.0
        %2826 = vst.msk [vmem:[#allocation3 + $0x18] sm:$0xff] %vm985, 0.0
        %2827 = vst.msk [vmem:[#allocation3 + $0x20] sm:$0xff] %vm985, 0.0
        %2828 = vst.msk [vmem:[#allocation3 + $0x28] sm:$0x3] %vm2824, 0.0
        %2829 = vst.msk [vmem:[#allocation3 + $0x30] sm:$0xff] %vm985, 0.0
        %2830 = vst.msk [vmem:[#allocation3 + $0x38] sm:$0xff] %vm985, 0.0
        %2831 = vst.msk [vmem:[#allocation3 + $0x40] sm:$0x3] %vm2824, 0.0
        %2832 = vst.msk [vmem:[#allocation3 + $0x48] sm:$0xff] %vm985, 0.0
        %2833 = vst.msk [vmem:[#allocation3 + $0x50] sm:$0xff] %vm985, 0.0
        %2834 = vst.msk [vmem:[#allocation3 + $0x58] sm:$0x3] %vm2824, 0.0
        %2835 = vst.msk [vmem:[#allocation3 + $0x60] sm:$0xff] %vm985, 0.0
        %2836 = vst.msk [vmem:[#allocation3 + $0x68] sm:$0xff] %vm985, 0.0
        %2837 = vst.msk [vmem:[#allocation3 + $0x70] sm:$0x3] %vm2824, 0.0
        %2838 = vst.msk [vmem:[#allocation3 + $0x78] sm:$0xff] %vm985, 0.0
        %2839 = vst.msk [vmem:[#allocation3 + $0x80] sm:$0xff] %vm985, 0.0
        %2840 = vst.msk [vmem:[#allocation3 + $0x88] sm:$0x3] %vm2824, 0.0
        %2841 = vst.msk [vmem:[#allocation3 + $0x90] sm:$0xff] %vm985, 0.0
        %2842 = vst.msk [vmem:[#allocation3 + $0x98] sm:$0xff] %vm985, 0.0
        %2843 = vst.msk [vmem:[#allocation3 + $0xa0] sm:$0x3] %vm2824, 0.0
        %2844 = vst.msk [vmem:[#allocation3 + $0xa8] sm:$0xff] %vm985, 0.0
        %2845 = vst.msk [vmem:[#allocation3 + $0xb0] sm:$0xff] %vm985, 0.0
        %2846 = vst.msk [vmem:[#allocation3 + $0xb8] sm:$0x3] %vm2824, 0.0
        %2847 = vst.msk [vmem:[#allocation3 + $0xc0] sm:$0xff] %vm985, 0.0
        %2848 = vst.msk [vmem:[#allocation3 + $0xc8] sm:$0xff] %vm985, 0.0
        %2849 = vst.msk [vmem:[#allocation3 + $0xd0] sm:$0x3] %vm2824, 0.0
        %2850 = vst.msk [vmem:[#allocation3 + $0xd8] sm:$0xff] %vm985, 0.0
        %2851 = vst.msk [vmem:[#allocation3 + $0xe0] sm:$0xff] %vm985, 0.0
        %2852 = vst.msk [vmem:[#allocation3 + $0xe8] sm:$0x3] %vm2824, 0.0
        %2853 = vst.msk [vmem:[#allocation3 + $0xf0] sm:$0xff] %vm985, 0.0
        %2854 = vst.msk [vmem:[#allocation3 + $0xf8] sm:$0xff] %vm985, 0.0
        %2855 = vst.msk [vmem:[#allocation3 + $0x100] sm:$0x3] %vm2824, 0.0
        %2856 = vst.msk [vmem:[#allocation3 + $0x108] sm:$0xff] %vm985, 0.0
        %2857 = vst.msk [vmem:[#allocation3 + $0x110] sm:$0xff] %vm985, 0.0
        %2858 = vst.msk [vmem:[#allocation3 + $0x118] sm:$0x3] %vm2824, 0.0
        %2859 = vst.msk [vmem:[#allocation3 + $0x120] sm:$0xff] %vm985, 0.0
        %2860 = vst.msk [vmem:[#allocation3 + $0x128] sm:$0xff] %vm985, 0.0
        %2861 = vst.msk [vmem:[#allocation3 + $0x130] sm:$0x3] %vm2824, 0.0
        %2862 = vst.msk [vmem:[#allocation3 + $0x138] sm:$0xff] %vm985, 0.0
        %2863 = vst.msk [vmem:[#allocation3 + $0x140] sm:$0xff] %vm985, 0.0
        %2864 = vst.msk [vmem:[#allocation3 + $0x148] sm:$0x3] %vm2824, 0.0
        %2865 = vst.msk [vmem:[#allocation3 + $0x150] sm:$0xff] %vm985, 0.0
        %2866 = vst.msk [vmem:[#allocation3 + $0x158] sm:$0xff] %vm985, 0.0
        %2867 = vst.msk [vmem:[#allocation3 + $0x160] sm:$0x3] %vm2824, 0.0
        %2868 = vst.msk [vmem:[#allocation3 + $0x168] sm:$0xff] %vm985, 0.0
        %2869 = vst.msk [vmem:[#allocation3 + $0x170] sm:$0xff] %vm985, 0.0
        %2870 = vst.msk [vmem:[#allocation3 + $0x178] sm:$0x3] %vm2824, 0.0
        %2871 = vst.msk [vmem:[#allocation3 + $0x180] sm:$0xff] %vm985, 0.0
        %2872 = vst.msk [vmem:[#allocation3 + $0x188] sm:$0xff] %vm985, 0.0
        %2873 = vst.msk [vmem:[#allocation3 + $0x190] sm:$0x3] %vm2824, 0.0
        %2874 = vst.msk [vmem:[#allocation3 + $0x198] sm:$0xff] %vm985, 0.0
        %2875 = vst.msk [vmem:[#allocation3 + $0x1a0] sm:$0xff] %vm985, 0.0
        %2876 = vst.msk [vmem:[#allocation3 + $0x1a8] sm:$0x3] %vm2824, 0.0
        %s2877 = scalar_lea.vmem [#allocation3], 24
        %2878 = vst.msk [vmem:[%s2877 + $0x1] sm:$0xff] %vm985, %v2790
        %2879 = vst.msk [vmem:[%s2877 + $0x9] sm:$0xff] %vm985, %v2791
        %2880 = vst.msk [vmem:[%s2877 + $0x19] sm:$0xff] %vm985, %v2792
        %2881 = vst.msk [vmem:[%s2877 + $0x21] sm:$0xff] %vm985, %v2793
        %2882 = vst.msk [vmem:[%s2877 + $0x31] sm:$0xff] %vm985, %v2794
        %2883 = vst.msk [vmem:[%s2877 + $0x39] sm:$0xff] %vm985, %v2795
        %2884 = vst.msk [vmem:[%s2877 + $0x49] sm:$0xff] %vm985, %v2796
        %2885 = vst.msk [vmem:[%s2877 + $0x51] sm:$0xff] %vm985, %v2797
        %2886 = vst.msk [vmem:[%s2877 + $0x61] sm:$0xff] %vm985, %v2798
        %2887 = vst.msk [vmem:[%s2877 + $0x69] sm:$0xff] %vm985, %v2799
        %2888 = vst.msk [vmem:[%s2877 + $0x79] sm:$0xff] %vm985, %v2800
        %2889 = vst.msk [vmem:[%s2877 + $0x81] sm:$0xff] %vm985, %v2801
        %2890 = vst.msk [vmem:[%s2877 + $0x91] sm:$0xff] %vm985, %v2802
        %2891 = vst.msk [vmem:[%s2877 + $0x99] sm:$0xff] %vm985, %v2803
        %2892 = vst.msk [vmem:[%s2877 + $0xa9] sm:$0xff] %vm985, %v2804
        %2893 = vst.msk [vmem:[%s2877 + $0xb1] sm:$0xff] %vm985, %v2805
        %2894 = vst.msk [vmem:[%s2877 + $0xc1] sm:$0xff] %vm985, %v2806
        %2895 = vst.msk [vmem:[%s2877 + $0xc9] sm:$0xff] %vm985, %v2807
        %2896 = vst.msk [vmem:[%s2877 + $0xd9] sm:$0xff] %vm985, %v2808
        %2897 = vst.msk [vmem:[%s2877 + $0xe1] sm:$0xff] %vm985, %v2809
        %2898 = vst.msk [vmem:[%s2877 + $0xf1] sm:$0xff] %vm985, %v2810
        %2899 = vst.msk [vmem:[%s2877 + $0xf9] sm:$0xff] %vm985, %v2811
        %2900 = vst.msk [vmem:[%s2877 + $0x109] sm:$0xff] %vm985, %v2812
        %2901 = vst.msk [vmem:[%s2877 + $0x111] sm:$0xff] %vm985, %v2813
        %2902 = vst.msk [vmem:[%s2877 + $0x121] sm:$0xff] %vm985, %v2814
        %2903 = vst.msk [vmem:[%s2877 + $0x129] sm:$0xff] %vm985, %v2815
        %2904 = vst.msk [vmem:[%s2877 + $0x139] sm:$0xff] %vm985, %v2816
        %2905 = vst.msk [vmem:[%s2877 + $0x141] sm:$0xff] %vm985, %v2817
        %2906 = vst.msk [vmem:[%s2877 + $0x151] sm:$0xff] %vm985, %v2818
        %2907 = vst.msk [vmem:[%s2877 + $0x159] sm:$0xff] %vm985, %v2819
        %2908 = vst.msk [vmem:[%s2877 + $0x169] sm:$0xff] %vm985, %v2820
        %2909 = vst.msk [vmem:[%s2877 + $0x171] sm:$0xff] %vm985, %v2821
        %v2910 = vld [vmem:[#allocation3] sm:$0xff]
        %v2911 = vld [vmem:[#allocation3 + $0x8] sm:$0xff]
        %v2912 = vld [vmem:[#allocation3 + $0x10] sm:$0x3]
        %v2913 = vld [vmem:[#allocation3 + $0x18] sm:$0xff]
        %v2914 = vld [vmem:[#allocation3 + $0x20] sm:$0xff]
        %v2915 = vld [vmem:[#allocation3 + $0x28] sm:$0x3]
        %v2916 = vld [vmem:[#allocation3 + $0x30] sm:$0xff]
        %v2917 = vld [vmem:[#allocation3 + $0x38] sm:$0xff]
        %v2918 = vld [vmem:[#allocation3 + $0x40] sm:$0x3]
        %v2919 = vld [vmem:[#allocation3 + $0x48] sm:$0xff]
        %v2920 = vld [vmem:[#allocation3 + $0x50] sm:$0xff]
        %v2921 = vld [vmem:[#allocation3 + $0x58] sm:$0x3]
        %v2922 = vld [vmem:[#allocation3 + $0x60] sm:$0xff]
        %v2923 = vld [vmem:[#allocation3 + $0x68] sm:$0xff]
        %v2924 = vld [vmem:[#allocation3 + $0x70] sm:$0x3]
        %v2925 = vld [vmem:[#allocation3 + $0x78] sm:$0xff]
        %v2926 = vld [vmem:[#allocation3 + $0x80] sm:$0xff]
        %v2927 = vld [vmem:[#allocation3 + $0x88] sm:$0x3]
        %v2928 = vld [vmem:[#allocation3 + $0x90] sm:$0xff]
        %v2929 = vld [vmem:[#allocation3 + $0x98] sm:$0xff]
        %v2930 = vld [vmem:[#allocation3 + $0xa0] sm:$0x3]
        %v2931 = vld [vmem:[#allocation3 + $0xa8] sm:$0xff]
        %v2932 = vld [vmem:[#allocation3 + $0xb0] sm:$0xff]
        %v2933 = vld [vmem:[#allocation3 + $0xb8] sm:$0x3]
        %v2934 = vld [vmem:[#allocation3 + $0xc0] sm:$0xff]
        %v2935 = vld [vmem:[#allocation3 + $0xc8] sm:$0xff]
        %v2936 = vld [vmem:[#allocation3 + $0xd0] sm:$0x3]
        %v2937 = vld [vmem:[#allocation3 + $0xd8] sm:$0xff]
        %v2938 = vld [vmem:[#allocation3 + $0xe0] sm:$0xff]
        %v2939 = vld [vmem:[#allocation3 + $0xe8] sm:$0x3]
        %v2940 = vld [vmem:[#allocation3 + $0xf0] sm:$0xff]
        %v2941 = vld [vmem:[#allocation3 + $0xf8] sm:$0xff]
        %v2942 = vld [vmem:[#allocation3 + $0x100] sm:$0x3]
        %v2943 = vld [vmem:[#allocation3 + $0x108] sm:$0xff]
        %v2944 = vld [vmem:[#allocation3 + $0x110] sm:$0xff]
        %v2945 = vld [vmem:[#allocation3 + $0x118] sm:$0x3]
        %v2946 = vld [vmem:[#allocation3 + $0x120] sm:$0xff]
        %v2947 = vld [vmem:[#allocation3 + $0x128] sm:$0xff]
        %v2948 = vld [vmem:[#allocation3 + $0x130] sm:$0x3]
        %v2949 = vld [vmem:[#allocation3 + $0x138] sm:$0xff]
        %v2950 = vld [vmem:[#allocation3 + $0x140] sm:$0xff]
        %v2951 = vld [vmem:[#allocation3 + $0x148] sm:$0x3]
        %v2952 = vld [vmem:[#allocation3 + $0x150] sm:$0xff]
        %v2953 = vld [vmem:[#allocation3 + $0x158] sm:$0xff]
        %v2954 = vld [vmem:[#allocation3 + $0x160] sm:$0x3]
        %v2955 = vld [vmem:[#allocation3 + $0x168] sm:$0xff]
        %v2956 = vld [vmem:[#allocation3 + $0x170] sm:$0xff]
        %v2957 = vld [vmem:[#allocation3 + $0x178] sm:$0x3]
        %v2958 = vld [vmem:[#allocation3 + $0x180] sm:$0xff]
        %v2959 = vld [vmem:[#allocation3 + $0x188] sm:$0xff]
        %v2960 = vld [vmem:[#allocation3 + $0x190] sm:$0x3]
        %v2961 = vld [vmem:[#allocation3 + $0x198] sm:$0xff]
        %v2962 = vld [vmem:[#allocation3 + $0x1a0] sm:$0xff]
        %v2963 = vld [vmem:[#allocation3 + $0x1a8] sm:$0x3]
        %v3012 = vrot.slane %v2910, 1
        %v3013 = vrot.slane %v2911, 1
        %v3014 = vsel %vm1209, %v3012, %v3013
        %v3015 = vrot.slane %v2912, 1
        %v3016 = vsel %vm1209, %v3013, %v3015
        %v3017 = vrot.slane %v2913, 1
        %v3018 = vrot.slane %v2914, 1
        %v3019 = vsel %vm1209, %v3017, %v3018
        %v3020 = vrot.slane %v2915, 1
        %v3021 = vsel %vm1209, %v3018, %v3020
        %v3022 = vrot.slane %v2916, 1
        %v3023 = vrot.slane %v2917, 1
        %v3024 = vsel %vm1209, %v3022, %v3023
        %v3025 = vrot.slane %v2918, 1
        %v3026 = vsel %vm1209, %v3023, %v3025
        %v3027 = vrot.slane %v2919, 1
        %v3028 = vrot.slane %v2920, 1
        %v3029 = vsel %vm1209, %v3027, %v3028
        %v3030 = vrot.slane %v2921, 1
        %v3031 = vsel %vm1209, %v3028, %v3030
        %v3032 = vrot.slane %v2922, 1
        %v3033 = vrot.slane %v2923, 1
        %v3034 = vsel %vm1209, %v3032, %v3033
        %v3035 = vrot.slane %v2924, 1
        %v3036 = vsel %vm1209, %v3033, %v3035
        %v3037 = vrot.slane %v2925, 1
        %v3038 = vrot.slane %v2926, 1
        %v3039 = vsel %vm1209, %v3037, %v3038
        %v3040 = vrot.slane %v2927, 1
        %v3041 = vsel %vm1209, %v3038, %v3040
        %v3042 = vrot.slane %v2928, 1
        %v3043 = vrot.slane %v2929, 1
        %v3044 = vsel %vm1209, %v3042, %v3043
        %v3045 = vrot.slane %v2930, 1
        %v3046 = vsel %vm1209, %v3043, %v3045
        %v3047 = vrot.slane %v2931, 1
        %v3048 = vrot.slane %v2932, 1
        %v3049 = vsel %vm1209, %v3047, %v3048
        %v3050 = vrot.slane %v2933, 1
        %v3051 = vsel %vm1209, %v3048, %v3050
        %v3052 = vrot.slane %v2934, 1
        %v3053 = vrot.slane %v2935, 1
        %v3054 = vsel %vm1209, %v3052, %v3053
        %v3055 = vrot.slane %v2936, 1
        %v3056 = vsel %vm1209, %v3053, %v3055
        %v3057 = vrot.slane %v2937, 1
        %v3058 = vrot.slane %v2938, 1
        %v3059 = vsel %vm1209, %v3057, %v3058
        %v3060 = vrot.slane %v2939, 1
        %v3061 = vsel %vm1209, %v3058, %v3060
        %v3062 = vrot.slane %v2940, 1
        %v3063 = vrot.slane %v2941, 1
        %v3064 = vsel %vm1209, %v3062, %v3063
        %v3065 = vrot.slane %v2942, 1
        %v3066 = vsel %vm1209, %v3063, %v3065
        %v3067 = vrot.slane %v2943, 1
        %v3068 = vrot.slane %v2944, 1
        %v3069 = vsel %vm1209, %v3067, %v3068
        %v3070 = vrot.slane %v2945, 1
        %v3071 = vsel %vm1209, %v3068, %v3070
        %v3072 = vrot.slane %v2946, 1
        %v3073 = vrot.slane %v2947, 1
        %v3074 = vsel %vm1209, %v3072, %v3073
        %v3075 = vrot.slane %v2948, 1
        %v3076 = vsel %vm1209, %v3073, %v3075
        %v3077 = vrot.slane %v2949, 1
        %v3078 = vrot.slane %v2950, 1
        %v3079 = vsel %vm1209, %v3077, %v3078
        %v3080 = vrot.slane %v2951, 1
        %v3081 = vsel %vm1209, %v3078, %v3080
        %v3082 = vrot.slane %v2952, 1
        %v3083 = vrot.slane %v2953, 1
        %v3084 = vsel %vm1209, %v3082, %v3083
        %v3085 = vrot.slane %v2954, 1
        %v3086 = vsel %vm1209, %v3083, %v3085
        %v3087 = vrot.slane %v2955, 1
        %v3088 = vrot.slane %v2956, 1
        %v3089 = vsel %vm1209, %v3087, %v3088
        %v3090 = vrot.slane %v2957, 1
        %v3091 = vsel %vm1209, %v3088, %v3090
        %v3092 = vrot.slane %v2910, 2
        %v3093 = vrot.slane %v2911, 2
        %v3094 = vsel %vm1290, %v3092, %v3093
        %v3095 = vrot.slane %v2912, 2
        %v3096 = vsel %vm1290, %v3093, %v3095
        %v3097 = vrot.slane %v2913, 2
        %v3098 = vrot.slane %v2914, 2
        %v3099 = vsel %vm1290, %v3097, %v3098
        %v3100 = vrot.slane %v2915, 2
        %v3101 = vsel %vm1290, %v3098, %v3100
        %v3102 = vrot.slane %v2916, 2
        %v3103 = vrot.slane %v2917, 2
        %v3104 = vsel %vm1290, %v3102, %v3103
        %v3105 = vrot.slane %v2918, 2
        %v3106 = vsel %vm1290, %v3103, %v3105
        %v3107 = vrot.slane %v2919, 2
        %v3108 = vrot.slane %v2920, 2
        %v3109 = vsel %vm1290, %v3107, %v3108
        %v3110 = vrot.slane %v2921, 2
        %v3111 = vsel %vm1290, %v3108, %v3110
        %v3112 = vrot.slane %v2922, 2
        %v3113 = vrot.slane %v2923, 2
        %v3114 = vsel %vm1290, %v3112, %v3113
        %v3115 = vrot.slane %v2924, 2
        %v3116 = vsel %vm1290, %v3113, %v3115
        %v3117 = vrot.slane %v2925, 2
        %v3118 = vrot.slane %v2926, 2
        %v3119 = vsel %vm1290, %v3117, %v3118
        %v3120 = vrot.slane %v2927, 2
        %v3121 = vsel %vm1290, %v3118, %v3120
        %v3122 = vrot.slane %v2928, 2
        %v3123 = vrot.slane %v2929, 2
        %v3124 = vsel %vm1290, %v3122, %v3123
        %v3125 = vrot.slane %v2930, 2
        %v3126 = vsel %vm1290, %v3123, %v3125
        %v3127 = vrot.slane %v2931, 2
        %v3128 = vrot.slane %v2932, 2
        %v3129 = vsel %vm1290, %v3127, %v3128
        %v3130 = vrot.slane %v2933, 2
        %v3131 = vsel %vm1290, %v3128, %v3130
        %v3132 = vrot.slane %v2934, 2
        %v3133 = vrot.slane %v2935, 2
        %v3134 = vsel %vm1290, %v3132, %v3133
        %v3135 = vrot.slane %v2936, 2
        %v3136 = vsel %vm1290, %v3133, %v3135
        %v3137 = vrot.slane %v2937, 2
        %v3138 = vrot.slane %v2938, 2
        %v3139 = vsel %vm1290, %v3137, %v3138
        %v3140 = vrot.slane %v2939, 2
        %v3141 = vsel %vm1290, %v3138, %v3140
        %v3142 = vrot.slane %v2940, 2
        %v3143 = vrot.slane %v2941, 2
        %v3144 = vsel %vm1290, %v3142, %v3143
        %v3145 = vrot.slane %v2942, 2
        %v3146 = vsel %vm1290, %v3143, %v3145
        %v3147 = vrot.slane %v2943, 2
        %v3148 = vrot.slane %v2944, 2
        %v3149 = vsel %vm1290, %v3147, %v3148
        %v3150 = vrot.slane %v2945, 2
        %v3151 = vsel %vm1290, %v3148, %v3150
        %v3152 = vrot.slane %v2946, 2
        %v3153 = vrot.slane %v2947, 2
        %v3154 = vsel %vm1290, %v3152, %v3153
        %v3155 = vrot.slane %v2948, 2
        %v3156 = vsel %vm1290, %v3153, %v3155
        %v3157 = vrot.slane %v2949, 2
        %v3158 = vrot.slane %v2950, 2
        %v3159 = vsel %vm1290, %v3157, %v3158
        %v3160 = vrot.slane %v2951, 2
        %v3161 = vsel %vm1290, %v3158, %v3160
        %v3162 = vrot.slane %v2952, 2
        %v3163 = vrot.slane %v2953, 2
        %v3164 = vsel %vm1290, %v3162, %v3163
        %v3165 = vrot.slane %v2954, 2
        %v3166 = vsel %vm1290, %v3163, %v3165
        %v3167 = vrot.slane %v2955, 2
        %v3168 = vrot.slane %v2956, 2
        %v3169 = vsel %vm1290, %v3167, %v3168
        %v3170 = vrot.slane %v2957, 2
        %v3171 = vsel %vm1290, %v3168, %v3170
        %v3175 = vrot.slane %v2958, 1
        %v3176 = vrot.slane %v2959, 1
        %v3177 = vsel %vm1209, %v3175, %v3176
        %v3178 = vrot.slane %v2960, 1
        %v3179 = vsel %vm1209, %v3176, %v3178
        %v3180 = vrot.slane %v2958, 2
        %v3181 = vrot.slane %v2959, 2
        %v3182 = vsel %vm1290, %v3180, %v3181
        %v3183 = vrot.slane %v2960, 2
        %v3184 = vsel %vm1290, %v3181, %v3183
        %v3188 = vrot.slane %v2961, 1
        %v3189 = vrot.slane %v2962, 1
        %v3190 = vsel %vm1209, %v3188, %v3189
        %v3191 = vrot.slane %v2963, 1
        %v3192 = vsel %vm1209, %v3189, %v3191
        %v3193 = vrot.slane %v2961, 2
        %v3194 = vrot.slane %v2962, 2
        %v3195 = vsel %vm1290, %v3193, %v3194
        %v3196 = vrot.slane %v2963, 2
        %v3197 = vsel %vm1290, %v3194, %v3196
        %3198 = vrot.lane.b32.xlu0 %v3014, 8
        %v3199 = vpop.permute.xlu0 %3198
        %3200 = vrot.lane.b32.xlu0 %v3016, 8
        %v3201 = vpop.permute.xlu0 %3200
        %3202 = vrot.lane.b32.xlu0 %v3019, 8
        %v3203 = vpop.permute.xlu0 %3202
        %3204 = vrot.lane.b32.xlu0 %v3021, 8
        %v3205 = vpop.permute.xlu0 %3204
        %3206 = vrot.lane.b32.xlu0 %v3024, 8
        %v3207 = vpop.permute.xlu0 %3206
        %3208 = vrot.lane.b32.xlu0 %v3026, 8
        %v3209 = vpop.permute.xlu0 %3208
        %3210 = vrot.lane.b32.xlu0 %v3029, 8
        %v3211 = vpop.permute.xlu0 %3210
        %3212 = vrot.lane.b32.xlu0 %v3031, 8
        %v3213 = vpop.permute.xlu0 %3212
        %3214 = vrot.lane.b32.xlu0 %v3034, 8
        %v3215 = vpop.permute.xlu0 %3214
        %3216 = vrot.lane.b32.xlu0 %v3036, 8
        %v3217 = vpop.permute.xlu0 %3216
        %3218 = vrot.lane.b32.xlu0 %v3039, 8
        %v3219 = vpop.permute.xlu0 %3218
        %3220 = vrot.lane.b32.xlu0 %v3041, 8
        %v3221 = vpop.permute.xlu0 %3220
        %3222 = vrot.lane.b32.xlu0 %v3044, 8
        %v3223 = vpop.permute.xlu0 %3222
        %3224 = vrot.lane.b32.xlu0 %v3046, 8
        %v3225 = vpop.permute.xlu0 %3224
        %3226 = vrot.lane.b32.xlu0 %v3049, 8
        %v3227 = vpop.permute.xlu0 %3226
        %3228 = vrot.lane.b32.xlu0 %v3051, 8
        %v3229 = vpop.permute.xlu0 %3228
        %3230 = vrot.lane.b32.xlu0 %v3054, 8
        %v3231 = vpop.permute.xlu0 %3230
        %3232 = vrot.lane.b32.xlu0 %v3056, 8
        %v3233 = vpop.permute.xlu0 %3232
        %3234 = vrot.lane.b32.xlu0 %v3059, 8
        %v3235 = vpop.permute.xlu0 %3234
        %3236 = vrot.lane.b32.xlu0 %v3061, 8
        %v3237 = vpop.permute.xlu0 %3236
        %3238 = vrot.lane.b32.xlu0 %v3064, 8
        %v3239 = vpop.permute.xlu0 %3238
        %3240 = vrot.lane.b32.xlu0 %v3066, 8
        %v3241 = vpop.permute.xlu0 %3240
        %3242 = vrot.lane.b32.xlu0 %v3069, 8
        %v3243 = vpop.permute.xlu0 %3242
        %3244 = vrot.lane.b32.xlu0 %v3071, 8
        %v3245 = vpop.permute.xlu0 %3244
        %3246 = vrot.lane.b32.xlu0 %v3074, 8
        %v3247 = vpop.permute.xlu0 %3246
        %3248 = vrot.lane.b32.xlu0 %v3076, 8
        %v3249 = vpop.permute.xlu0 %3248
        %3250 = vrot.lane.b32.xlu0 %v3079, 8
        %v3251 = vpop.permute.xlu0 %3250
        %3252 = vrot.lane.b32.xlu0 %v3081, 8
        %v3253 = vpop.permute.xlu0 %3252
        %3254 = vrot.lane.b32.xlu0 %v3084, 8
        %v3255 = vpop.permute.xlu0 %3254
        %3256 = vrot.lane.b32.xlu0 %v3086, 8
        %v3257 = vpop.permute.xlu0 %3256
        %3258 = vrot.lane.b32.xlu0 %v3089, 8
        %v3259 = vpop.permute.xlu0 %3258
        %3260 = vrot.lane.b32.xlu0 %v3091, 8
        %v3261 = vpop.permute.xlu0 %3260
        %3294 = vrot.lane.b32.xlu0 %v3094, 16
        %v3295 = vpop.permute.xlu0 %3294
        %3296 = vrot.lane.b32.xlu0 %v3096, 16
        %v3297 = vpop.permute.xlu0 %3296
        %3298 = vrot.lane.b32.xlu0 %v3099, 16
        %v3299 = vpop.permute.xlu0 %3298
        %3300 = vrot.lane.b32.xlu0 %v3101, 16
        %v3301 = vpop.permute.xlu0 %3300
        %3302 = vrot.lane.b32.xlu0 %v3104, 16
        %v3303 = vpop.permute.xlu0 %3302
        %3304 = vrot.lane.b32.xlu0 %v3106, 16
        %v3305 = vpop.permute.xlu0 %3304
        %3306 = vrot.lane.b32.xlu0 %v3109, 16
        %v3307 = vpop.permute.xlu0 %3306
        %3308 = vrot.lane.b32.xlu0 %v3111, 16
        %v3309 = vpop.permute.xlu0 %3308
        %3310 = vrot.lane.b32.xlu0 %v3114, 16
        %v3311 = vpop.permute.xlu0 %3310
        %3312 = vrot.lane.b32.xlu0 %v3116, 16
        %v3313 = vpop.permute.xlu0 %3312
        %3314 = vrot.lane.b32.xlu0 %v3119, 16
        %v3315 = vpop.permute.xlu0 %3314
        %3316 = vrot.lane.b32.xlu0 %v3121, 16
        %v3317 = vpop.permute.xlu0 %3316
        %3318 = vrot.lane.b32.xlu0 %v3124, 16
        %v3319 = vpop.permute.xlu0 %3318
        %3320 = vrot.lane.b32.xlu0 %v3126, 16
        %v3321 = vpop.permute.xlu0 %3320
        %3322 = vrot.lane.b32.xlu0 %v3129, 16
        %v3323 = vpop.permute.xlu0 %3322
        %3324 = vrot.lane.b32.xlu0 %v3131, 16
        %v3325 = vpop.permute.xlu0 %3324
        %3326 = vrot.lane.b32.xlu0 %v3134, 16
        %v3327 = vpop.permute.xlu0 %3326
        %3328 = vrot.lane.b32.xlu0 %v3136, 16
        %v3329 = vpop.permute.xlu0 %3328
        %3330 = vrot.lane.b32.xlu0 %v3139, 16
        %v3331 = vpop.permute.xlu0 %3330
        %3332 = vrot.lane.b32.xlu0 %v3141, 16
        %v3333 = vpop.permute.xlu0 %3332
        %3334 = vrot.lane.b32.xlu0 %v3144, 16
        %v3335 = vpop.permute.xlu0 %3334
        %3336 = vrot.lane.b32.xlu0 %v3146, 16
        %v3337 = vpop.permute.xlu0 %3336
        %3338 = vrot.lane.b32.xlu0 %v3149, 16
        %v3339 = vpop.permute.xlu0 %3338
        %3340 = vrot.lane.b32.xlu0 %v3151, 16
        %v3341 = vpop.permute.xlu0 %3340
        %3342 = vrot.lane.b32.xlu0 %v3154, 16
        %v3343 = vpop.permute.xlu0 %3342
        %3344 = vrot.lane.b32.xlu0 %v3156, 16
        %v3345 = vpop.permute.xlu0 %3344
        %3346 = vrot.lane.b32.xlu0 %v3159, 16
        %v3347 = vpop.permute.xlu0 %3346
        %3348 = vrot.lane.b32.xlu0 %v3161, 16
        %v3349 = vpop.permute.xlu0 %3348
        %3350 = vrot.lane.b32.xlu0 %v3164, 16
        %v3351 = vpop.permute.xlu0 %3350
        %3352 = vrot.lane.b32.xlu0 %v3166, 16
        %v3353 = vpop.permute.xlu0 %3352
        %3354 = vrot.lane.b32.xlu0 %v3169, 16
        %v3355 = vpop.permute.xlu0 %3354
        %3356 = vrot.lane.b32.xlu0 %v3171, 16
        %v3357 = vpop.permute.xlu0 %3356
        %3390 = vrot.lane.b32.xlu0 %v2913, 24
        %v3391 = vpop.permute.xlu0 %3390
        %3392 = vrot.lane.b32.xlu0 %v2914, 24
        %v3393 = vpop.permute.xlu0 %3392
        %3394 = vrot.lane.b32.xlu0 %v2916, 24
        %v3395 = vpop.permute.xlu0 %3394
        %3396 = vrot.lane.b32.xlu0 %v2917, 24
        %v3397 = vpop.permute.xlu0 %3396
        %3398 = vrot.lane.b32.xlu0 %v2919, 24
        %v3399 = vpop.permute.xlu0 %3398
        %3400 = vrot.lane.b32.xlu0 %v2920, 24
        %v3401 = vpop.permute.xlu0 %3400
        %3402 = vrot.lane.b32.xlu0 %v2922, 24
        %v3403 = vpop.permute.xlu0 %3402
        %3404 = vrot.lane.b32.xlu0 %v2923, 24
        %v3405 = vpop.permute.xlu0 %3404
        %3406 = vrot.lane.b32.xlu0 %v2925, 24
        %v3407 = vpop.permute.xlu0 %3406
        %3408 = vrot.lane.b32.xlu0 %v2926, 24
        %v3409 = vpop.permute.xlu0 %3408
        %3410 = vrot.lane.b32.xlu0 %v2928, 24
        %v3411 = vpop.permute.xlu0 %3410
        %3412 = vrot.lane.b32.xlu0 %v2929, 24
        %v3413 = vpop.permute.xlu0 %3412
        %3414 = vrot.lane.b32.xlu0 %v2931, 24
        %v3415 = vpop.permute.xlu0 %3414
        %3416 = vrot.lane.b32.xlu0 %v2932, 24
        %v3417 = vpop.permute.xlu0 %3416
        %3418 = vrot.lane.b32.xlu0 %v2934, 24
        %v3419 = vpop.permute.xlu0 %3418
        %3420 = vrot.lane.b32.xlu0 %v2935, 24
        %v3421 = vpop.permute.xlu0 %3420
        %3422 = vrot.lane.b32.xlu0 %v2937, 24
        %v3423 = vpop.permute.xlu0 %3422
        %3424 = vrot.lane.b32.xlu0 %v2938, 24
        %v3425 = vpop.permute.xlu0 %3424
        %3426 = vrot.lane.b32.xlu0 %v2940, 24
        %v3427 = vpop.permute.xlu0 %3426
        %3428 = vrot.lane.b32.xlu0 %v2941, 24
        %v3429 = vpop.permute.xlu0 %3428
        %3430 = vrot.lane.b32.xlu0 %v2943, 24
        %v3431 = vpop.permute.xlu0 %3430
        %3432 = vrot.lane.b32.xlu0 %v2944, 24
        %v3433 = vpop.permute.xlu0 %3432
        %3434 = vrot.lane.b32.xlu0 %v2946, 24
        %v3435 = vpop.permute.xlu0 %3434
        %3436 = vrot.lane.b32.xlu0 %v2947, 24
        %v3437 = vpop.permute.xlu0 %3436
        %3438 = vrot.lane.b32.xlu0 %v2949, 24
        %v3439 = vpop.permute.xlu0 %3438
        %3440 = vrot.lane.b32.xlu0 %v2950, 24
        %v3441 = vpop.permute.xlu0 %3440
        %3442 = vrot.lane.b32.xlu0 %v2952, 24
        %v3443 = vpop.permute.xlu0 %3442
        %3444 = vrot.lane.b32.xlu0 %v2953, 24
        %v3445 = vpop.permute.xlu0 %3444
        %3446 = vrot.lane.b32.xlu0 %v2955, 24
        %v3447 = vpop.permute.xlu0 %3446
        %3448 = vrot.lane.b32.xlu0 %v2956, 24
        %v3449 = vpop.permute.xlu0 %3448
        %3450 = vrot.lane.b32.xlu0 %v2958, 24
        %v3451 = vpop.permute.xlu0 %3450
        %3452 = vrot.lane.b32.xlu0 %v2959, 24
        %v3453 = vpop.permute.xlu0 %3452
        %3486 = vrot.lane.b32.xlu0 %v3019, 32
        %v3487 = vpop.permute.xlu0 %3486
        %3488 = vrot.lane.b32.xlu0 %v3021, 32
        %v3489 = vpop.permute.xlu0 %3488
        %3490 = vrot.lane.b32.xlu0 %v3024, 32
        %v3491 = vpop.permute.xlu0 %3490
        %3492 = vrot.lane.b32.xlu0 %v3026, 32
        %v3493 = vpop.permute.xlu0 %3492
        %3494 = vrot.lane.b32.xlu0 %v3029, 32
        %v3495 = vpop.permute.xlu0 %3494
        %3496 = vrot.lane.b32.xlu0 %v3031, 32
        %v3497 = vpop.permute.xlu0 %3496
        %3498 = vrot.lane.b32.xlu0 %v3034, 32
        %v3499 = vpop.permute.xlu0 %3498
        %3500 = vrot.lane.b32.xlu0 %v3036, 32
        %v3501 = vpop.permute.xlu0 %3500
        %3502 = vrot.lane.b32.xlu0 %v3039, 32
        %v3503 = vpop.permute.xlu0 %3502
        %3504 = vrot.lane.b32.xlu0 %v3041, 32
        %v3505 = vpop.permute.xlu0 %3504
        %3506 = vrot.lane.b32.xlu0 %v3044, 32
        %v3507 = vpop.permute.xlu0 %3506
        %3508 = vrot.lane.b32.xlu0 %v3046, 32
        %v3509 = vpop.permute.xlu0 %3508
        %3510 = vrot.lane.b32.xlu0 %v3049, 32
        %v3511 = vpop.permute.xlu0 %3510
        %3512 = vrot.lane.b32.xlu0 %v3051, 32
        %v3513 = vpop.permute.xlu0 %3512
        %3514 = vrot.lane.b32.xlu0 %v3054, 32
        %v3515 = vpop.permute.xlu0 %3514
        %3516 = vrot.lane.b32.xlu0 %v3056, 32
        %v3517 = vpop.permute.xlu0 %3516
        %3518 = vrot.lane.b32.xlu0 %v3059, 32
        %v3519 = vpop.permute.xlu0 %3518
        %3520 = vrot.lane.b32.xlu0 %v3061, 32
        %v3521 = vpop.permute.xlu0 %3520
        %3522 = vrot.lane.b32.xlu0 %v3064, 32
        %v3523 = vpop.permute.xlu0 %3522
        %3524 = vrot.lane.b32.xlu0 %v3066, 32
        %v3525 = vpop.permute.xlu0 %3524
        %3526 = vrot.lane.b32.xlu0 %v3069, 32
        %v3527 = vpop.permute.xlu0 %3526
        %3528 = vrot.lane.b32.xlu0 %v3071, 32
        %v3529 = vpop.permute.xlu0 %3528
        %3530 = vrot.lane.b32.xlu0 %v3074, 32
        %v3531 = vpop.permute.xlu0 %3530
        %3532 = vrot.lane.b32.xlu0 %v3076, 32
        %v3533 = vpop.permute.xlu0 %3532
        %3534 = vrot.lane.b32.xlu0 %v3079, 32
        %v3535 = vpop.permute.xlu0 %3534
        %3536 = vrot.lane.b32.xlu0 %v3081, 32
        %v3537 = vpop.permute.xlu0 %3536
        %3538 = vrot.lane.b32.xlu0 %v3084, 32
        %v3539 = vpop.permute.xlu0 %3538
        %3540 = vrot.lane.b32.xlu0 %v3086, 32
        %v3541 = vpop.permute.xlu0 %3540
        %3542 = vrot.lane.b32.xlu0 %v3089, 32
        %v3543 = vpop.permute.xlu0 %3542
        %3544 = vrot.lane.b32.xlu0 %v3091, 32
        %v3545 = vpop.permute.xlu0 %3544
        %3546 = vrot.lane.b32.xlu0 %v3177, 32
        %v3547 = vpop.permute.xlu0 %3546
        %3548 = vrot.lane.b32.xlu0 %v3179, 32
        %v3549 = vpop.permute.xlu0 %3548
        %3582 = vrot.lane.b32.xlu0 %v3099, 40
        %v3583 = vpop.permute.xlu0 %3582
        %3584 = vrot.lane.b32.xlu0 %v3101, 40
        %v3585 = vpop.permute.xlu0 %3584
        %3586 = vrot.lane.b32.xlu0 %v3104, 40
        %v3587 = vpop.permute.xlu0 %3586
        %3588 = vrot.lane.b32.xlu0 %v3106, 40
        %v3589 = vpop.permute.xlu0 %3588
        %3590 = vrot.lane.b32.xlu0 %v3109, 40
        %v3591 = vpop.permute.xlu0 %3590
        %3592 = vrot.lane.b32.xlu0 %v3111, 40
        %v3593 = vpop.permute.xlu0 %3592
        %3594 = vrot.lane.b32.xlu0 %v3114, 40
        %v3595 = vpop.permute.xlu0 %3594
        %3596 = vrot.lane.b32.xlu0 %v3116, 40
        %v3597 = vpop.permute.xlu0 %3596
        %3598 = vrot.lane.b32.xlu0 %v3119, 40
        %v3599 = vpop.permute.xlu0 %3598
        %3600 = vrot.lane.b32.xlu0 %v3121, 40
        %v3601 = vpop.permute.xlu0 %3600
        %3602 = vrot.lane.b32.xlu0 %v3124, 40
        %v3603 = vpop.permute.xlu0 %3602
        %3604 = vrot.lane.b32.xlu0 %v3126, 40
        %v3605 = vpop.permute.xlu0 %3604
        %3606 = vrot.lane.b32.xlu0 %v3129, 40
        %v3607 = vpop.permute.xlu0 %3606
        %3608 = vrot.lane.b32.xlu0 %v3131, 40
        %v3609 = vpop.permute.xlu0 %3608
        %3610 = vrot.lane.b32.xlu0 %v3134, 40
        %v3611 = vpop.permute.xlu0 %3610
        %3612 = vrot.lane.b32.xlu0 %v3136, 40
        %v3613 = vpop.permute.xlu0 %3612
        %3614 = vrot.lane.b32.xlu0 %v3139, 40
        %v3615 = vpop.permute.xlu0 %3614
        %3616 = vrot.lane.b32.xlu0 %v3141, 40
        %v3617 = vpop.permute.xlu0 %3616
        %3618 = vrot.lane.b32.xlu0 %v3144, 40
        %v3619 = vpop.permute.xlu0 %3618
        %3620 = vrot.lane.b32.xlu0 %v3146, 40
        %v3621 = vpop.permute.xlu0 %3620
        %3622 = vrot.lane.b32.xlu0 %v3149, 40
        %v3623 = vpop.permute.xlu0 %3622
        %3624 = vrot.lane.b32.xlu0 %v3151, 40
        %v3625 = vpop.permute.xlu0 %3624
        %3626 = vrot.lane.b32.xlu0 %v3154, 40
        %v3627 = vpop.permute.xlu0 %3626
        %3628 = vrot.lane.b32.xlu0 %v3156, 40
        %v3629 = vpop.permute.xlu0 %3628
        %3630 = vrot.lane.b32.xlu0 %v3159, 40
        %v3631 = vpop.permute.xlu0 %3630
        %3632 = vrot.lane.b32.xlu0 %v3161, 40
        %v3633 = vpop.permute.xlu0 %3632
        %3634 = vrot.lane.b32.xlu0 %v3164, 40
        %v3635 = vpop.permute.xlu0 %3634
        %3636 = vrot.lane.b32.xlu0 %v3166, 40
        %v3637 = vpop.permute.xlu0 %3636
        %3638 = vrot.lane.b32.xlu0 %v3169, 40
        %v3639 = vpop.permute.xlu0 %3638
        %3640 = vrot.lane.b32.xlu0 %v3171, 40
        %v3641 = vpop.permute.xlu0 %3640
        %3642 = vrot.lane.b32.xlu0 %v3182, 40
        %v3643 = vpop.permute.xlu0 %3642
        %3644 = vrot.lane.b32.xlu0 %v3184, 40
        %v3645 = vpop.permute.xlu0 %3644
        %3678 = vrot.lane.b32.xlu0 %v2916, 48
        %v3679 = vpop.permute.xlu0 %3678
        %3680 = vrot.lane.b32.xlu0 %v2917, 48
        %v3681 = vpop.permute.xlu0 %3680
        %3682 = vrot.lane.b32.xlu0 %v2919, 48
        %v3683 = vpop.permute.xlu0 %3682
        %3684 = vrot.lane.b32.xlu0 %v2920, 48
        %v3685 = vpop.permute.xlu0 %3684
        %3686 = vrot.lane.b32.xlu0 %v2922, 48
        %v3687 = vpop.permute.xlu0 %3686
        %3688 = vrot.lane.b32.xlu0 %v2923, 48
        %v3689 = vpop.permute.xlu0 %3688
        %3690 = vrot.lane.b32.xlu0 %v2925, 48
        %v3691 = vpop.permute.xlu0 %3690
        %3692 = vrot.lane.b32.xlu0 %v2926, 48
        %v3693 = vpop.permute.xlu0 %3692
        %3694 = vrot.lane.b32.xlu0 %v2928, 48
        %v3695 = vpop.permute.xlu0 %3694
        %3696 = vrot.lane.b32.xlu0 %v2929, 48
        %v3697 = vpop.permute.xlu0 %3696
        %3698 = vrot.lane.b32.xlu0 %v2931, 48
        %v3699 = vpop.permute.xlu0 %3698
        %3700 = vrot.lane.b32.xlu0 %v2932, 48
        %v3701 = vpop.permute.xlu0 %3700
        %3702 = vrot.lane.b32.xlu0 %v2934, 48
        %v3703 = vpop.permute.xlu0 %3702
        %3704 = vrot.lane.b32.xlu0 %v2935, 48
        %v3705 = vpop.permute.xlu0 %3704
        %3706 = vrot.lane.b32.xlu0 %v2937, 48
        %v3707 = vpop.permute.xlu0 %3706
        %3708 = vrot.lane.b32.xlu0 %v2938, 48
        %v3709 = vpop.permute.xlu0 %3708
        %3710 = vrot.lane.b32.xlu0 %v2940, 48
        %v3711 = vpop.permute.xlu0 %3710
        %3712 = vrot.lane.b32.xlu0 %v2941, 48
        %v3713 = vpop.permute.xlu0 %3712
        %3714 = vrot.lane.b32.xlu0 %v2943, 48
        %v3715 = vpop.permute.xlu0 %3714
        %3716 = vrot.lane.b32.xlu0 %v2944, 48
        %v3717 = vpop.permute.xlu0 %3716
        %3718 = vrot.lane.b32.xlu0 %v2946, 48
        %v3719 = vpop.permute.xlu0 %3718
        %3720 = vrot.lane.b32.xlu0 %v2947, 48
        %v3721 = vpop.permute.xlu0 %3720
        %3722 = vrot.lane.b32.xlu0 %v2949, 48
        %v3723 = vpop.permute.xlu0 %3722
        %3724 = vrot.lane.b32.xlu0 %v2950, 48
        %v3725 = vpop.permute.xlu0 %3724
        %3726 = vrot.lane.b32.xlu0 %v2952, 48
        %v3727 = vpop.permute.xlu0 %3726
        %3728 = vrot.lane.b32.xlu0 %v2953, 48
        %v3729 = vpop.permute.xlu0 %3728
        %3730 = vrot.lane.b32.xlu0 %v2955, 48
        %v3731 = vpop.permute.xlu0 %3730
        %3732 = vrot.lane.b32.xlu0 %v2956, 48
        %v3733 = vpop.permute.xlu0 %3732
        %3734 = vrot.lane.b32.xlu0 %v2958, 48
        %v3735 = vpop.permute.xlu0 %3734
        %3736 = vrot.lane.b32.xlu0 %v2959, 48
        %v3737 = vpop.permute.xlu0 %3736
        %3738 = vrot.lane.b32.xlu0 %v2961, 48
        %v3739 = vpop.permute.xlu0 %3738
        %3740 = vrot.lane.b32.xlu0 %v2962, 48
        %v3741 = vpop.permute.xlu0 %3740
        %3774 = vrot.lane.b32.xlu0 %v3024, 56
        %v3775 = vpop.permute.xlu0 %3774
        %3776 = vrot.lane.b32.xlu0 %v3026, 56
        %v3777 = vpop.permute.xlu0 %3776
        %3778 = vrot.lane.b32.xlu0 %v3029, 56
        %v3779 = vpop.permute.xlu0 %3778
        %3780 = vrot.lane.b32.xlu0 %v3031, 56
        %v3781 = vpop.permute.xlu0 %3780
        %3782 = vrot.lane.b32.xlu0 %v3034, 56
        %v3783 = vpop.permute.xlu0 %3782
        %3784 = vrot.lane.b32.xlu0 %v3036, 56
        %v3785 = vpop.permute.xlu0 %3784
        %3786 = vrot.lane.b32.xlu0 %v3039, 56
        %v3787 = vpop.permute.xlu0 %3786
        %3788 = vrot.lane.b32.xlu0 %v3041, 56
        %v3789 = vpop.permute.xlu0 %3788
        %3790 = vrot.lane.b32.xlu0 %v3044, 56
        %v3791 = vpop.permute.xlu0 %3790
        %3792 = vrot.lane.b32.xlu0 %v3046, 56
        %v3793 = vpop.permute.xlu0 %3792
        %3794 = vrot.lane.b32.xlu0 %v3049, 56
        %v3795 = vpop.permute.xlu0 %3794
        %3796 = vrot.lane.b32.xlu0 %v3051, 56
        %v3797 = vpop.permute.xlu0 %3796
        %3798 = vrot.lane.b32.xlu0 %v3054, 56
        %v3799 = vpop.permute.xlu0 %3798
        %3800 = vrot.lane.b32.xlu0 %v3056, 56
        %v3801 = vpop.permute.xlu0 %3800
        %3802 = vrot.lane.b32.xlu0 %v3059, 56
        %v3803 = vpop.permute.xlu0 %3802
        %3804 = vrot.lane.b32.xlu0 %v3061, 56
        %v3805 = vpop.permute.xlu0 %3804
        %3806 = vrot.lane.b32.xlu0 %v3064, 56
        %v3807 = vpop.permute.xlu0 %3806
        %3808 = vrot.lane.b32.xlu0 %v3066, 56
        %v3809 = vpop.permute.xlu0 %3808
        %3810 = vrot.lane.b32.xlu0 %v3069, 56
        %v3811 = vpop.permute.xlu0 %3810
        %3812 = vrot.lane.b32.xlu0 %v3071, 56
        %v3813 = vpop.permute.xlu0 %3812
        %3814 = vrot.lane.b32.xlu0 %v3074, 56
        %v3815 = vpop.permute.xlu0 %3814
        %3816 = vrot.lane.b32.xlu0 %v3076, 56
        %v3817 = vpop.permute.xlu0 %3816
        %3818 = vrot.lane.b32.xlu0 %v3079, 56
        %v3819 = vpop.permute.xlu0 %3818
        %3820 = vrot.lane.b32.xlu0 %v3081, 56
        %v3821 = vpop.permute.xlu0 %3820
        %3822 = vrot.lane.b32.xlu0 %v3084, 56
        %v3823 = vpop.permute.xlu0 %3822
        %3824 = vrot.lane.b32.xlu0 %v3086, 56
        %v3825 = vpop.permute.xlu0 %3824
        %3826 = vrot.lane.b32.xlu0 %v3089, 56
        %v3827 = vpop.permute.xlu0 %3826
        %3828 = vrot.lane.b32.xlu0 %v3091, 56
        %v3829 = vpop.permute.xlu0 %3828
        %3830 = vrot.lane.b32.xlu0 %v3177, 56
        %v3831 = vpop.permute.xlu0 %3830
        %3832 = vrot.lane.b32.xlu0 %v3179, 56
        %v3833 = vpop.permute.xlu0 %3832
        %3834 = vrot.lane.b32.xlu0 %v3190, 56
        %v3835 = vpop.permute.xlu0 %3834
        %3836 = vrot.lane.b32.xlu0 %v3192, 56
        %v3837 = vpop.permute.xlu0 %3836
        %3870 = vrot.lane.b32.xlu0 %v3104, 64
        %v3871 = vpop.permute.xlu0 %3870
        %3872 = vrot.lane.b32.xlu0 %v3106, 64
        %v3873 = vpop.permute.xlu0 %3872
        %3874 = vrot.lane.b32.xlu0 %v3109, 64
        %v3875 = vpop.permute.xlu0 %3874
        %3876 = vrot.lane.b32.xlu0 %v3111, 64
        %v3877 = vpop.permute.xlu0 %3876
        %3878 = vrot.lane.b32.xlu0 %v3114, 64
        %v3879 = vpop.permute.xlu0 %3878
        %3880 = vrot.lane.b32.xlu0 %v3116, 64
        %v3881 = vpop.permute.xlu0 %3880
        %3882 = vrot.lane.b32.xlu0 %v3119, 64
        %v3883 = vpop.permute.xlu0 %3882
        %3884 = vrot.lane.b32.xlu0 %v3121, 64
        %v3885 = vpop.permute.xlu0 %3884
        %3886 = vrot.lane.b32.xlu0 %v3124, 64
        %v3887 = vpop.permute.xlu0 %3886
        %3888 = vrot.lane.b32.xlu0 %v3126, 64
        %v3889 = vpop.permute.xlu0 %3888
        %3890 = vrot.lane.b32.xlu0 %v3129, 64
        %v3891 = vpop.permute.xlu0 %3890
        %3892 = vrot.lane.b32.xlu0 %v3131, 64
        %v3893 = vpop.permute.xlu0 %3892
        %3894 = vrot.lane.b32.xlu0 %v3134, 64
        %v3895 = vpop.permute.xlu0 %3894
        %3896 = vrot.lane.b32.xlu0 %v3136, 64
        %v3897 = vpop.permute.xlu0 %3896
        %3898 = vrot.lane.b32.xlu0 %v3139, 64
        %v3899 = vpop.permute.xlu0 %3898
        %3900 = vrot.lane.b32.xlu0 %v3141, 64
        %v3901 = vpop.permute.xlu0 %3900
        %3902 = vrot.lane.b32.xlu0 %v3144, 64
        %v3903 = vpop.permute.xlu0 %3902
        %3904 = vrot.lane.b32.xlu0 %v3146, 64
        %v3905 = vpop.permute.xlu0 %3904
        %3906 = vrot.lane.b32.xlu0 %v3149, 64
        %v3907 = vpop.permute.xlu0 %3906
        %3908 = vrot.lane.b32.xlu0 %v3151, 64
        %v3909 = vpop.permute.xlu0 %3908
        %3910 = vrot.lane.b32.xlu0 %v3154, 64
        %v3911 = vpop.permute.xlu0 %3910
        %3912 = vrot.lane.b32.xlu0 %v3156, 64
        %v3913 = vpop.permute.xlu0 %3912
        %3914 = vrot.lane.b32.xlu0 %v3159, 64
        %v3915 = vpop.permute.xlu0 %3914
        %3916 = vrot.lane.b32.xlu0 %v3161, 64
        %v3917 = vpop.permute.xlu0 %3916
        %3918 = vrot.lane.b32.xlu0 %v3164, 64
        %v3919 = vpop.permute.xlu0 %3918
        %3920 = vrot.lane.b32.xlu0 %v3166, 64
        %v3921 = vpop.permute.xlu0 %3920
        %3922 = vrot.lane.b32.xlu0 %v3169, 64
        %v3923 = vpop.permute.xlu0 %3922
        %3924 = vrot.lane.b32.xlu0 %v3171, 64
        %v3925 = vpop.permute.xlu0 %3924
        %3926 = vrot.lane.b32.xlu0 %v3182, 64
        %v3927 = vpop.permute.xlu0 %3926
        %3928 = vrot.lane.b32.xlu0 %v3184, 64
        %v3929 = vpop.permute.xlu0 %3928
        %3930 = vrot.lane.b32.xlu0 %v3195, 64
        %v3931 = vpop.permute.xlu0 %3930
        %3932 = vrot.lane.b32.xlu0 %v3197, 64
        %v3933 = vpop.permute.xlu0 %3932
        %v3966 = vsel %vm985, %v2910, %v3199
        %v3967 = vsel %vm985, %v2911, %v3201
        %v3968 = vsel %vm985, %v2913, %v3203
        %v3969 = vsel %vm985, %v2914, %v3205
        %v3970 = vsel %vm985, %v2916, %v3207
        %v3971 = vsel %vm985, %v2917, %v3209
        %v3972 = vsel %vm985, %v2919, %v3211
        %v3973 = vsel %vm985, %v2920, %v3213
        %v3974 = vsel %vm985, %v2922, %v3215
        %v3975 = vsel %vm985, %v2923, %v3217
        %v3976 = vsel %vm985, %v2925, %v3219
        %v3977 = vsel %vm985, %v2926, %v3221
        %v3978 = vsel %vm985, %v2928, %v3223
        %v3979 = vsel %vm985, %v2929, %v3225
        %v3980 = vsel %vm985, %v2931, %v3227
        %v3981 = vsel %vm985, %v2932, %v3229
        %v3982 = vsel %vm985, %v2934, %v3231
        %v3983 = vsel %vm985, %v2935, %v3233
        %v3984 = vsel %vm985, %v2937, %v3235
        %v3985 = vsel %vm985, %v2938, %v3237
        %v3986 = vsel %vm985, %v2940, %v3239
        %v3987 = vsel %vm985, %v2941, %v3241
        %v3988 = vsel %vm985, %v2943, %v3243
        %v3989 = vsel %vm985, %v2944, %v3245
        %v3990 = vsel %vm985, %v2946, %v3247
        %v3991 = vsel %vm985, %v2947, %v3249
        %v3992 = vsel %vm985, %v2949, %v3251
        %v3993 = vsel %vm985, %v2950, %v3253
        %v3994 = vsel %vm985, %v2952, %v3255
        %v3995 = vsel %vm985, %v2953, %v3257
        %v3996 = vsel %vm985, %v2955, %v3259
        %v3997 = vsel %vm985, %v2956, %v3261
        %vm3998 = vcmask 130048
        %v3999 = vsel %vm3998, %v3966, %v3295
        %v4000 = vsel %vm3998, %v3967, %v3297
        %v4001 = vsel %vm3998, %v3968, %v3299
        %v4002 = vsel %vm3998, %v3969, %v3301
        %v4003 = vsel %vm3998, %v3970, %v3303
        %v4004 = vsel %vm3998, %v3971, %v3305
        %v4005 = vsel %vm3998, %v3972, %v3307
        %v4006 = vsel %vm3998, %v3973, %v3309
        %v4007 = vsel %vm3998, %v3974, %v3311
        %v4008 = vsel %vm3998, %v3975, %v3313
        %v4009 = vsel %vm3998, %v3976, %v3315
        %v4010 = vsel %vm3998, %v3977, %v3317
        %v4011 = vsel %vm3998, %v3978, %v3319
        %v4012 = vsel %vm3998, %v3979, %v3321
        %v4013 = vsel %vm3998, %v3980, %v3323
        %v4014 = vsel %vm3998, %v3981, %v3325
        %v4015 = vsel %vm3998, %v3982, %v3327
        %v4016 = vsel %vm3998, %v3983, %v3329
        %v4017 = vsel %vm3998, %v3984, %v3331
        %v4018 = vsel %vm3998, %v3985, %v3333
        %v4019 = vsel %vm3998, %v3986, %v3335
        %v4020 = vsel %vm3998, %v3987, %v3337
        %v4021 = vsel %vm3998, %v3988, %v3339
        %v4022 = vsel %vm3998, %v3989, %v3341
        %v4023 = vsel %vm3998, %v3990, %v3343
        %v4024 = vsel %vm3998, %v3991, %v3345
        %v4025 = vsel %vm3998, %v3992, %v3347
        %v4026 = vsel %vm3998, %v3993, %v3349
        %v4027 = vsel %vm3998, %v3994, %v3351
        %v4028 = vsel %vm3998, %v3995, %v3353
        %v4029 = vsel %vm3998, %v3996, %v3355
        %v4030 = vsel %vm3998, %v3997, %v3357
        %v4031 = vsel %vm2197, %v3999, %v3391
        %v4032 = vsel %vm2197, %v4000, %v3393
        %v4033 = vsel %vm2197, %v4001, %v3395
        %v4034 = vsel %vm2197, %v4002, %v3397
        %v4035 = vsel %vm2197, %v4003, %v3399
        %v4036 = vsel %vm2197, %v4004, %v3401
        %v4037 = vsel %vm2197, %v4005, %v3403
        %v4038 = vsel %vm2197, %v4006, %v3405
        %v4039 = vsel %vm2197, %v4007, %v3407
        %v4040 = vsel %vm2197, %v4008, %v3409
        %v4041 = vsel %vm2197, %v4009, %v3411
        %v4042 = vsel %vm2197, %v4010, %v3413
        %v4043 = vsel %vm2197, %v4011, %v3415
        %v4044 = vsel %vm2197, %v4012, %v3417
        %v4045 = vsel %vm2197, %v4013, %v3419
        %v4046 = vsel %vm2197, %v4014, %v3421
        %v4047 = vsel %vm2197, %v4015, %v3423
        %v4048 = vsel %vm2197, %v4016, %v3425
        %v4049 = vsel %vm2197, %v4017, %v3427
        %v4050 = vsel %vm2197, %v4018, %v3429
        %v4051 = vsel %vm2197, %v4019, %v3431
        %v4052 = vsel %vm2197, %v4020, %v3433
        %v4053 = vsel %vm2197, %v4021, %v3435
        %v4054 = vsel %vm2197, %v4022, %v3437
        %v4055 = vsel %vm2197, %v4023, %v3439
        %v4056 = vsel %vm2197, %v4024, %v3441
        %v4057 = vsel %vm2197, %v4025, %v3443
        %v4058 = vsel %vm2197, %v4026, %v3445
        %v4059 = vsel %vm2197, %v4027, %v3447
        %v4060 = vsel %vm2197, %v4028, %v3449
        %v4061 = vsel %vm2197, %v4029, %v3451
        %v4062 = vsel %vm2197, %v4030, %v3453
        %vm4063 = vcmask 261120
        %v4064 = vsel %vm4063, %v4031, %v3487
        %v4065 = vsel %vm4063, %v4032, %v3489
        %v4066 = vsel %vm4063, %v4033, %v3491
        %v4067 = vsel %vm4063, %v4034, %v3493
        %v4068 = vsel %vm4063, %v4035, %v3495
        %v4069 = vsel %vm4063, %v4036, %v3497
        %v4070 = vsel %vm4063, %v4037, %v3499
        %v4071 = vsel %vm4063, %v4038, %v3501
        %v4072 = vsel %vm4063, %v4039, %v3503
        %v4073 = vsel %vm4063, %v4040, %v3505
        %v4074 = vsel %vm4063, %v4041, %v3507
        %v4075 = vsel %vm4063, %v4042, %v3509
        %v4076 = vsel %vm4063, %v4043, %v3511
        %v4077 = vsel %vm4063, %v4044, %v3513
        %v4078 = vsel %vm4063, %v4045, %v3515
        %v4079 = vsel %vm4063, %v4046, %v3517
        %v4080 = vsel %vm4063, %v4047, %v3519
        %v4081 = vsel %vm4063, %v4048, %v3521
        %v4082 = vsel %vm4063, %v4049, %v3523
        %v4083 = vsel %vm4063, %v4050, %v3525
        %v4084 = vsel %vm4063, %v4051, %v3527
        %v4085 = vsel %vm4063, %v4052, %v3529
        %v4086 = vsel %vm4063, %v4053, %v3531
        %v4087 = vsel %vm4063, %v4054, %v3533
        %v4088 = vsel %vm4063, %v4055, %v3535
        %v4089 = vsel %vm4063, %v4056, %v3537
        %v4090 = vsel %vm4063, %v4057, %v3539
        %v4091 = vsel %vm4063, %v4058, %v3541
        %v4092 = vsel %vm4063, %v4059, %v3543
        %v4093 = vsel %vm4063, %v4060, %v3545
        %v4094 = vsel %vm4063, %v4061, %v3547
        %v4095 = vsel %vm4063, %v4062, %v3549
        %vm4096 = vcmask 326656
        %v4097 = vsel %vm4096, %v4064, %v3583
        %v4098 = vsel %vm4096, %v4065, %v3585
        %v4099 = vsel %vm4096, %v4066, %v3587
        %v4100 = vsel %vm4096, %v4067, %v3589
        %v4101 = vsel %vm4096, %v4068, %v3591
        %v4102 = vsel %vm4096, %v4069, %v3593
        %v4103 = vsel %vm4096, %v4070, %v3595
        %v4104 = vsel %vm4096, %v4071, %v3597
        %v4105 = vsel %vm4096, %v4072, %v3599
        %v4106 = vsel %vm4096, %v4073, %v3601
        %v4107 = vsel %vm4096, %v4074, %v3603
        %v4108 = vsel %vm4096, %v4075, %v3605
        %v4109 = vsel %vm4096, %v4076, %v3607
        %v4110 = vsel %vm4096, %v4077, %v3609
        %v4111 = vsel %vm4096, %v4078, %v3611
        %v4112 = vsel %vm4096, %v4079, %v3613
        %v4113 = vsel %vm4096, %v4080, %v3615
        %v4114 = vsel %vm4096, %v4081, %v3617
        %v4115 = vsel %vm4096, %v4082, %v3619
        %v4116 = vsel %vm4096, %v4083, %v3621
        %v4117 = vsel %vm4096, %v4084, %v3623
        %v4118 = vsel %vm4096, %v4085, %v3625
        %v4119 = vsel %vm4096, %v4086, %v3627
        %v4120 = vsel %vm4096, %v4087, %v3629
        %v4121 = vsel %vm4096, %v4088, %v3631
        %v4122 = vsel %vm4096, %v4089, %v3633
        %v4123 = vsel %vm4096, %v4090, %v3635
        %v4124 = vsel %vm4096, %v4091, %v3637
        %v4125 = vsel %vm4096, %v4092, %v3639
        %v4126 = vsel %vm4096, %v4093, %v3641
        %v4127 = vsel %vm4096, %v4094, %v3643
        %v4128 = vsel %vm4096, %v4095, %v3645
        %v4129 = vsel %vm2263, %v4097, %v3679
        %v4130 = vsel %vm2263, %v4098, %v3681
        %v4131 = vsel %vm2263, %v4099, %v3683
        %v4132 = vsel %vm2263, %v4100, %v3685
        %v4133 = vsel %vm2263, %v4101, %v3687
        %v4134 = vsel %vm2263, %v4102, %v3689
        %v4135 = vsel %vm2263, %v4103, %v3691
        %v4136 = vsel %vm2263, %v4104, %v3693
        %v4137 = vsel %vm2263, %v4105, %v3695
        %v4138 = vsel %vm2263, %v4106, %v3697
        %v4139 = vsel %vm2263, %v4107, %v3699
        %v4140 = vsel %vm2263, %v4108, %v3701
        %v4141 = vsel %vm2263, %v4109, %v3703
        %v4142 = vsel %vm2263, %v4110, %v3705
        %v4143 = vsel %vm2263, %v4111, %v3707
        %v4144 = vsel %vm2263, %v4112, %v3709
        %v4145 = vsel %vm2263, %v4113, %v3711
        %v4146 = vsel %vm2263, %v4114, %v3713
        %v4147 = vsel %vm2263, %v4115, %v3715
        %v4148 = vsel %vm2263, %v4116, %v3717
        %v4149 = vsel %vm2263, %v4117, %v3719
        %v4150 = vsel %vm2263, %v4118, %v3721
        %v4151 = vsel %vm2263, %v4119, %v3723
        %v4152 = vsel %vm2263, %v4120, %v3725
        %v4153 = vsel %vm2263, %v4121, %v3727
        %v4154 = vsel %vm2263, %v4122, %v3729
        %v4155 = vsel %vm2263, %v4123, %v3731
        %v4156 = vsel %vm2263, %v4124, %v3733
        %v4157 = vsel %vm2263, %v4125, %v3735
        %v4158 = vsel %vm2263, %v4126, %v3737
        %v4159 = vsel %vm2263, %v4127, %v3739
        %v4160 = vsel %vm2263, %v4128, %v3741
        %vm4161 = vcmask 457728
        %v4162 = vsel %vm4161, %v4129, %v3775
        %v4163 = vsel %vm4161, %v4130, %v3777
        %v4164 = vsel %vm4161, %v4131, %v3779
        %v4165 = vsel %vm4161, %v4132, %v3781
        %v4166 = vsel %vm4161, %v4133, %v3783
        %v4167 = vsel %vm4161, %v4134, %v3785
        %v4168 = vsel %vm4161, %v4135, %v3787
        %v4169 = vsel %vm4161, %v4136, %v3789
        %v4170 = vsel %vm4161, %v4137, %v3791
        %v4171 = vsel %vm4161, %v4138, %v3793
        %v4172 = vsel %vm4161, %v4139, %v3795
        %v4173 = vsel %vm4161, %v4140, %v3797
        %v4174 = vsel %vm4161, %v4141, %v3799
        %v4175 = vsel %vm4161, %v4142, %v3801
        %v4176 = vsel %vm4161, %v4143, %v3803
        %v4177 = vsel %vm4161, %v4144, %v3805
        %v4178 = vsel %vm4161, %v4145, %v3807
        %v4179 = vsel %vm4161, %v4146, %v3809
        %v4180 = vsel %vm4161, %v4147, %v3811
        %v4181 = vsel %vm4161, %v4148, %v3813
        %v4182 = vsel %vm4161, %v4149, %v3815
        %v4183 = vsel %vm4161, %v4150, %v3817
        %v4184 = vsel %vm4161, %v4151, %v3819
        %v4185 = vsel %vm4161, %v4152, %v3821
        %v4186 = vsel %vm4161, %v4153, %v3823
        %v4187 = vsel %vm4161, %v4154, %v3825
        %v4188 = vsel %vm4161, %v4155, %v3827
        %v4189 = vsel %vm4161, %v4156, %v3829
        %v4190 = vsel %vm4161, %v4157, %v3831
        %v4191 = vsel %vm4161, %v4158, %v3833
        %v4192 = vsel %vm4161, %v4159, %v3835
        %v4193 = vsel %vm4161, %v4160, %v3837
        %v4194 = vsel %vm471, %v4162, %v3871
        %v4195 = vsel %vm471, %v4163, %v3873
        %v4196 = vsel %vm471, %v4164, %v3875
        %v4197 = vsel %vm471, %v4165, %v3877
        %v4198 = vsel %vm471, %v4166, %v3879
        %v4199 = vsel %vm471, %v4167, %v3881
        %v4200 = vsel %vm471, %v4168, %v3883
        %v4201 = vsel %vm471, %v4169, %v3885
        %v4202 = vsel %vm471, %v4170, %v3887
        %v4203 = vsel %vm471, %v4171, %v3889
        %v4204 = vsel %vm471, %v4172, %v3891
        %v4205 = vsel %vm471, %v4173, %v3893
        %v4206 = vsel %vm471, %v4174, %v3895
        %v4207 = vsel %vm471, %v4175, %v3897
        %v4208 = vsel %vm471, %v4176, %v3899
        %v4209 = vsel %vm471, %v4177, %v3901
        %v4210 = vsel %vm471, %v4178, %v3903
        %v4211 = vsel %vm471, %v4179, %v3905
        %v4212 = vsel %vm471, %v4180, %v3907
        %v4213 = vsel %vm471, %v4181, %v3909
        %v4214 = vsel %vm471, %v4182, %v3911
        %v4215 = vsel %vm471, %v4183, %v3913
        %v4216 = vsel %vm471, %v4184, %v3915
        %v4217 = vsel %vm471, %v4185, %v3917
        %v4218 = vsel %vm471, %v4186, %v3919
        %v4219 = vsel %vm471, %v4187, %v3921
        %v4220 = vsel %vm471, %v4188, %v3923
        %v4221 = vsel %vm471, %v4189, %v3925
        %v4222 = vsel %vm471, %v4190, %v3927
        %v4223 = vsel %vm471, %v4191, %v3929
        %v4224 = vsel %vm471, %v4192, %v3931
        %v4225 = vsel %vm471, %v4193, %v3933
        %v4226 = vpack.c.bf16 %v4195, %v4194
        %v4227 = vpack.c.bf16 %v4197, %v4196
        %v4228 = vpack.c.bf16 %v4199, %v4198
        %v4229 = vpack.c.bf16 %v4201, %v4200
        %v4230 = vpack.c.bf16 %v4203, %v4202
        %v4231 = vpack.c.bf16 %v4205, %v4204
        %v4232 = vpack.c.bf16 %v4207, %v4206
        %v4233 = vpack.c.bf16 %v4209, %v4208
        %v4234 = vpack.c.bf16 %v4211, %v4210
        %v4235 = vpack.c.bf16 %v4213, %v4212
        %v4236 = vpack.c.bf16 %v4215, %v4214
        %v4237 = vpack.c.bf16 %v4217, %v4216
        %v4238 = vpack.c.bf16 %v4219, %v4218
        %v4239 = vpack.c.bf16 %v4221, %v4220
        %v4240 = vpack.c.bf16 %v4223, %v4222
        %v4241 = vpack.c.bf16 %v4225, %v4224
        %v4242 = vld [vmem:[%s6] sm:$0xf]
        %v4243 = vld [vmem:[%s6 + $0x4] sm:$0xf]
        %v4244 = vld [vmem:[%s6 + $0x8] sm:$0xf]
        %v4245 = vld [vmem:[%s6 + $0xc] sm:$0xf]
        %v4246 = vld [vmem:[%s6 + $0x10] sm:$0xf]
        %v4247 = vld [vmem:[%s6 + $0x14] sm:$0xf]
        %v4248 = vld [vmem:[%s6 + $0x18] sm:$0xf]
        %v4249 = vld [vmem:[%s6 + $0x1c] sm:$0xf]
        %v4250 = vld [vmem:[%s6 + $0x20] sm:$0xf]
        %v4260 = vunpack.c.l.b16 %v4242
        %v4261 = vunpack.c.l.b16 %v4243
        %v4262 = vunpack.c.l.b16 %v4244
        %v4263 = vunpack.c.l.b16 %v4245
        %v4264 = vunpack.c.l.b16 %v4246
        %v4265 = vunpack.c.l.b16 %v4247
        %v4266 = vunpack.c.l.b16 %v4248
        %v4267 = vunpack.c.l.b16 %v4249
        %v4268 = vunpack.c.l.b16 %v4250
        %v4269 = vpack.c.b16 %v4261, %v4260
        %v4270 = vpack.c.b16 %v4263, %v4262
        %v4271 = vpack.c.b16 %v4265, %v4264
        %v4272 = vpack.c.b16 %v4267, %v4266
        %v4273 = vpack.c.b16 %v4268, %v4268
        %v4279 = vsel %vm2329, %v4226, 0
        %v4282 = vsel %vm2329, %v4227, 0
        %v4285 = vsel %vm2329, %v4228, 0
        %v4288 = vsel %vm2329, %v4229, 0
        %v4291 = vsel %vm2329, %v4230, 0
        %v4294 = vsel %vm2329, %v4231, 0
        %v4297 = vsel %vm2329, %v4232, 0
        %v4300 = vsel %vm2329, %v4233, 0
        %v4303 = vsel %vm2329, %v4234, 0
        %v4306 = vsel %vm2329, %v4235, 0
        %v4309 = vsel %vm2329, %v4236, 0
        %v4312 = vsel %vm2329, %v4237, 0
        %v4315 = vsel %vm2329, %v4238, 0
        %v4318 = vsel %vm2329, %v4239, 0
        %v4321 = vsel %vm2329, %v4240, 0
        %v4324 = vsel %vm2329, %v4241, 0
        %vm4326 = vcmask 1043456
        %v4328 = vsel %vm4326, %v4273, 0
        %4330 = vmatprep.subr.bf16.mxu0 0
        %4331 = vmatpush1.bf16.msra.mxu0 0
        %4332 = vmatprep.subr.bf16.mxu0 0
        %4333 = vmatpush1.bf16.msra.mxu0 0
        %4334 = vmatprep.subr.bf16.mxu0 0
        %4335 = vmatpush1.bf16.msra.mxu0 0
        %4336 = vmatprep.subr.bf16.mxu0 0
        %4337 = vmatpush1.bf16.msra.mxu0 %v4328
        %4338 = vmatprep.subr.bf16.mxu0 0
        %4339 = vmatpush1.bf16.msra.mxu0 %v4272
        %4340 = vmatprep.subr.bf16.mxu0 0
        %4341 = vmatpush1.bf16.msra.mxu0 %v4271
        %4342 = vmatprep.subr.bf16.mxu0 0
        %4343 = vmatpush1.bf16.msra.mxu0 %v4270
        %4344 = vmatprep.subr.bf16.mxu0 0
        %4345 = vmatpush1.bf16.msra.mxu0 %v4269
        %4346 = vmatprep.subr.bf16.mxu0 0
        %4347 = vmatpush2.bf16.msra.mxu0 0
        %4348 = vmatprep.subr.bf16.mxu0 0
        %4349 = vmatpush2.bf16.msra.mxu0 0
        %4350 = vmatprep.subr.bf16.mxu0 0
        %4351 = vmatpush2.bf16.msra.mxu0 0
        %4352 = vmatprep.subr.bf16.mxu0 0
        %4353 = vmatpush2.bf16.msra.mxu0 0
        %4354 = vmatprep.subr.bf16.mxu0 0
        %4355 = vmatpush2.bf16.msra.mxu0 0
        %4356 = vmatprep.subr.bf16.mxu0 0
        %4357 = vmatpush2.bf16.msra.mxu0 0
        %4358 = vmatprep.subr.bf16.mxu0 0
        %4359 = vmatpush2.bf16.msra.mxu0 0
        %4360 = vmatprep.subr.bf16.mxu0 0
        %4361 = vmatpush2.bf16.msra.mxu0 0
        %4362 = vmatprep.mubr.bf16.mxu0 0
        %4363 = vmatmul.mubr.bf16.gmra.mxu0 %v4279
        %v4364 = vpop.f32.mrf.mxu0
        %v4365 = vadd.f32 0.0, %v4364
        %v4366 = vpop.f32.mrf.mxu0
        %v4367 = vpop.f32.mrf.mxu0
        %v4368 = vadd.f32 0.0, %v4367
        %v4369 = vpop.f32.mrf.mxu0
        %4370 = vmatprep.mubr.bf16.mxu0 0
        %4371 = vmatmul.mubr.bf16.gmra.mxu0 %v4282
        %v4372 = vpop.f32.mrf.mxu0
        %v4373 = vadd.f32 0.0, %v4372
        %v4374 = vpop.f32.mrf.mxu0
        %v4375 = vpop.f32.mrf.mxu0
        %v4376 = vadd.f32 0.0, %v4375
        %v4377 = vpop.f32.mrf.mxu0
        %4378 = vmatprep.mubr.bf16.mxu0 0
        %4379 = vmatmul.mubr.bf16.gmra.mxu0 %v4285
        %v4380 = vpop.f32.mrf.mxu0
        %v4381 = vadd.f32 0.0, %v4380
        %v4382 = vpop.f32.mrf.mxu0
        %v4383 = vpop.f32.mrf.mxu0
        %v4384 = vadd.f32 0.0, %v4383
        %v4385 = vpop.f32.mrf.mxu0
        %4386 = vmatprep.mubr.bf16.mxu0 0
        %4387 = vmatmul.mubr.bf16.gmra.mxu0 %v4288
        %v4388 = vpop.f32.mrf.mxu0
        %v4389 = vadd.f32 0.0, %v4388
        %v4390 = vpop.f32.mrf.mxu0
        %v4391 = vpop.f32.mrf.mxu0
        %v4392 = vadd.f32 0.0, %v4391
        %v4393 = vpop.f32.mrf.mxu0
        %4394 = vmatprep.mubr.bf16.mxu0 0
        %4395 = vmatmul.mubr.bf16.gmra.mxu0 %v4291
        %v4396 = vpop.f32.mrf.mxu0
        %v4397 = vadd.f32 0.0, %v4396
        %v4398 = vpop.f32.mrf.mxu0
        %v4399 = vpop.f32.mrf.mxu0
        %v4400 = vadd.f32 0.0, %v4399
        %v4401 = vpop.f32.mrf.mxu0
        %4402 = vmatprep.mubr.bf16.mxu0 0
        %4403 = vmatmul.mubr.bf16.gmra.mxu0 %v4294
        %v4404 = vpop.f32.mrf.mxu0
        %v4405 = vadd.f32 0.0, %v4404
        %v4406 = vpop.f32.mrf.mxu0
        %v4407 = vpop.f32.mrf.mxu0
        %v4408 = vadd.f32 0.0, %v4407
        %v4409 = vpop.f32.mrf.mxu0
        %4410 = vmatprep.mubr.bf16.mxu0 0
        %4411 = vmatmul.mubr.bf16.gmra.mxu0 %v4297
        %v4412 = vpop.f32.mrf.mxu0
        %v4413 = vadd.f32 0.0, %v4412
        %v4414 = vpop.f32.mrf.mxu0
        %v4415 = vpop.f32.mrf.mxu0
        %v4416 = vadd.f32 0.0, %v4415
        %v4417 = vpop.f32.mrf.mxu0
        %4418 = vmatprep.mubr.bf16.mxu0 0
        %4419 = vmatmul.mubr.bf16.gmra.mxu0 %v4300
        %v4420 = vpop.f32.mrf.mxu0
        %v4421 = vadd.f32 0.0, %v4420
        %v4422 = vpop.f32.mrf.mxu0
        %v4423 = vpop.f32.mrf.mxu0
        %v4424 = vadd.f32 0.0, %v4423
        %v4425 = vpop.f32.mrf.mxu0
        %4426 = vmatprep.mubr.bf16.mxu0 0
        %4427 = vmatmul.mubr.bf16.gmra.mxu0 %v4303
        %v4428 = vpop.f32.mrf.mxu0
        %v4429 = vadd.f32 0.0, %v4428
        %v4430 = vpop.f32.mrf.mxu0
        %v4431 = vpop.f32.mrf.mxu0
        %v4432 = vadd.f32 0.0, %v4431
        %v4433 = vpop.f32.mrf.mxu0
        %4434 = vmatprep.mubr.bf16.mxu0 0
        %4435 = vmatmul.mubr.bf16.gmra.mxu0 %v4306
        %v4436 = vpop.f32.mrf.mxu0
        %v4437 = vadd.f32 0.0, %v4436
        %v4438 = vpop.f32.mrf.mxu0
        %v4439 = vpop.f32.mrf.mxu0
        %v4440 = vadd.f32 0.0, %v4439
        %v4441 = vpop.f32.mrf.mxu0
        %4442 = vmatprep.mubr.bf16.mxu0 0
        %4443 = vmatmul.mubr.bf16.gmra.mxu0 %v4309
        %v4444 = vpop.f32.mrf.mxu0
        %v4445 = vadd.f32 0.0, %v4444
        %v4446 = vpop.f32.mrf.mxu0
        %v4447 = vpop.f32.mrf.mxu0
        %v4448 = vadd.f32 0.0, %v4447
        %v4449 = vpop.f32.mrf.mxu0
        %4450 = vmatprep.mubr.bf16.mxu0 0
        %4451 = vmatmul.mubr.bf16.gmra.mxu0 %v4312
        %v4452 = vpop.f32.mrf.mxu0
        %v4453 = vadd.f32 0.0, %v4452
        %v4454 = vpop.f32.mrf.mxu0
        %v4455 = vpop.f32.mrf.mxu0
        %v4456 = vadd.f32 0.0, %v4455
        %v4457 = vpop.f32.mrf.mxu0
        %4458 = vmatprep.mubr.bf16.mxu0 0
        %4459 = vmatmul.mubr.bf16.gmra.mxu0 %v4315
        %v4460 = vpop.f32.mrf.mxu0
        %v4461 = vadd.f32 0.0, %v4460
        %v4462 = vpop.f32.mrf.mxu0
        %v4463 = vpop.f32.mrf.mxu0
        %v4464 = vadd.f32 0.0, %v4463
        %v4465 = vpop.f32.mrf.mxu0
        %4466 = vmatprep.mubr.bf16.mxu0 0
        %4467 = vmatmul.mubr.bf16.gmra.mxu0 %v4318
        %v4468 = vpop.f32.mrf.mxu0
        %v4469 = vadd.f32 0.0, %v4468
        %v4470 = vpop.f32.mrf.mxu0
        %v4471 = vpop.f32.mrf.mxu0
        %v4472 = vadd.f32 0.0, %v4471
        %v4473 = vpop.f32.mrf.mxu0
        %4474 = vmatprep.mubr.bf16.mxu0 0
        %4475 = vmatmul.mubr.bf16.gmra.mxu0 %v4321
        %v4476 = vpop.f32.mrf.mxu0
        %v4477 = vadd.f32 0.0, %v4476
        %v4478 = vpop.f32.mrf.mxu0
        %v4479 = vpop.f32.mrf.mxu0
        %v4480 = vadd.f32 0.0, %v4479
        %v4481 = vpop.f32.mrf.mxu0
        %4482 = vmatprep.mubr.bf16.mxu0 0
        %4483 = vmatmul.mubr.bf16.gmra.mxu0 %v4324
        %v4484 = vpop.f32.mrf.mxu0
        %v4485 = vadd.f32 0.0, %v4484
        %v4486 = vpop.f32.mrf.mxu0
        %v4487 = vpop.f32.mrf.mxu0
        %v4488 = vadd.f32 0.0, %v4487
        %v4489 = vpop.f32.mrf.mxu0
        %4490 = vdwg.mxu0
        %v4491 = vld [vmem:[%s7] sm:$0x1]
        %v4493 = vlaneseq
        %v4494 = vshrl.u32 %v4493, 7
        %v4495 = vsub.s32 0, %v4494
        %v4496 = vrot.slane %v4491, %v4495
        %v4498 = vmul.f32 %v4365, %v4496
        %v4499 = vmul.f32 %v4368, %v4496
        %v4500 = vmul.f32 %v4373, %v4496
        %v4501 = vmul.f32 %v4376, %v4496
        %v4502 = vmul.f32 %v4381, %v4496
        %v4503 = vmul.f32 %v4384, %v4496
        %v4504 = vmul.f32 %v4389, %v4496
        %v4505 = vmul.f32 %v4392, %v4496
        %v4506 = vmul.f32 %v4397, %v4496
        %v4507 = vmul.f32 %v4400, %v4496
        %v4508 = vmul.f32 %v4405, %v4496
        %v4509 = vmul.f32 %v4408, %v4496
        %v4510 = vmul.f32 %v4413, %v4496
        %v4511 = vmul.f32 %v4416, %v4496
        %v4512 = vmul.f32 %v4421, %v4496
        %v4513 = vmul.f32 %v4424, %v4496
        %v4514 = vmul.f32 %v4429, %v4496
        %v4515 = vmul.f32 %v4432, %v4496
        %v4516 = vmul.f32 %v4437, %v4496
        %v4517 = vmul.f32 %v4440, %v4496
        %v4518 = vmul.f32 %v4445, %v4496
        %v4519 = vmul.f32 %v4448, %v4496
        %v4520 = vmul.f32 %v4453, %v4496
        %v4521 = vmul.f32 %v4456, %v4496
        %v4522 = vmul.f32 %v4461, %v4496
        %v4523 = vmul.f32 %v4464, %v4496
        %v4524 = vmul.f32 %v4469, %v4496
        %v4525 = vmul.f32 %v4472, %v4496
        %v4526 = vmul.f32 %v4477, %v4496
        %v4527 = vmul.f32 %v4480, %v4496
        %v4528 = vmul.f32 %v4485, %v4496
        %v4529 = vmul.f32 %v4488, %v4496
        %v4530 = vld [vmem:[%s8] sm:$0x1]
        %v4532 = vlaneseq
        %v4533 = vshrl.u32 %v4532, 7
        %v4534 = vsub.s32 0, %v4533
        %v4535 = vrot.slane %v4530, %v4534
        %v4537 = vadd.f32 %v4498, %v4535
        %v4538 = vadd.f32 %v4499, %v4535
        %v4539 = vadd.f32 %v4500, %v4535
        %v4540 = vadd.f32 %v4501, %v4535
        %v4541 = vadd.f32 %v4502, %v4535
        %v4542 = vadd.f32 %v4503, %v4535
        %v4543 = vadd.f32 %v4504, %v4535
        %v4544 = vadd.f32 %v4505, %v4535
        %v4545 = vadd.f32 %v4506, %v4535
        %v4546 = vadd.f32 %v4507, %v4535
        %v4547 = vadd.f32 %v4508, %v4535
        %v4548 = vadd.f32 %v4509, %v4535
        %v4549 = vadd.f32 %v4510, %v4535
        %v4550 = vadd.f32 %v4511, %v4535
        %v4551 = vadd.f32 %v4512, %v4535
        %v4552 = vadd.f32 %v4513, %v4535
        %v4553 = vadd.f32 %v4514, %v4535
        %v4554 = vadd.f32 %v4515, %v4535
        %v4555 = vadd.f32 %v4516, %v4535
        %v4556 = vadd.f32 %v4517, %v4535
        %v4557 = vadd.f32 %v4518, %v4535
        %v4558 = vadd.f32 %v4519, %v4535
        %v4559 = vadd.f32 %v4520, %v4535
        %v4560 = vadd.f32 %v4521, %v4535
        %v4561 = vadd.f32 %v4522, %v4535
        %v4562 = vadd.f32 %v4523, %v4535
        %v4563 = vadd.f32 %v4524, %v4535
        %v4564 = vadd.f32 %v4525, %v4535
        %v4565 = vadd.f32 %v4526, %v4535
        %v4566 = vadd.f32 %v4527, %v4535
        %v4567 = vadd.f32 %v4528, %v4535
        %v4568 = vadd.f32 %v4529, %v4535
        %v4569 = vmax.f32 %v4537, 0.0
        %v4570 = vmax.f32 %v4538, 0.0
        %v4571 = vmax.f32 %v4539, 0.0
        %v4572 = vmax.f32 %v4540, 0.0
        %v4573 = vmax.f32 %v4541, 0.0
        %v4574 = vmax.f32 %v4542, 0.0
        %v4575 = vmax.f32 %v4543, 0.0
        %v4576 = vmax.f32 %v4544, 0.0
        %v4577 = vmax.f32 %v4545, 0.0
        %v4578 = vmax.f32 %v4546, 0.0
        %v4579 = vmax.f32 %v4547, 0.0
        %v4580 = vmax.f32 %v4548, 0.0
        %v4581 = vmax.f32 %v4549, 0.0
        %v4582 = vmax.f32 %v4550, 0.0
        %v4583 = vmax.f32 %v4551, 0.0
        %v4584 = vmax.f32 %v4552, 0.0
        %v4585 = vmax.f32 %v4553, 0.0
        %v4586 = vmax.f32 %v4554, 0.0
        %v4587 = vmax.f32 %v4555, 0.0
        %v4588 = vmax.f32 %v4556, 0.0
        %v4589 = vmax.f32 %v4557, 0.0
        %v4590 = vmax.f32 %v4558, 0.0
        %v4591 = vmax.f32 %v4559, 0.0
        %v4592 = vmax.f32 %v4560, 0.0
        %v4593 = vmax.f32 %v4561, 0.0
        %v4594 = vmax.f32 %v4562, 0.0
        %v4595 = vmax.f32 %v4563, 0.0
        %v4596 = vmax.f32 %v4564, 0.0
        %v4597 = vmax.f32 %v4565, 0.0
        %v4598 = vmax.f32 %v4566, 0.0
        %v4599 = vmax.f32 %v4567, 0.0
        %v4600 = vmax.f32 %v4568, 0.0
        %vm4601 = vcmask 179200
        %4602 = vst.msk [vmem:[#allocation4] sm:$0xff] %vm4601, 0.0
        %4603 = vst.msk [vmem:[#allocation4 + $0x8] sm:$0xff] %vm4601, 0.0
        %vm4604 = vcmask 177152
        %4605 = vst.msk [vmem:[#allocation4 + $0x10] sm:$0x3f] %vm4604, 0.0
        %4606 = vst.msk [vmem:[#allocation5] sm:$0xff] %vm4601, 0.0
        %4607 = vst.msk [vmem:[#allocation5 + $0x8] sm:$0xff] %vm4601, 0.0
        %4608 = vst.msk [vmem:[#allocation5 + $0x10] sm:$0x3f] %vm4604, 0.0
        %v4609 = vsel %vm985, %v4569, -inf
        %4610 = vmax.xlane.f32.xlu0 %v4609
        %v4611 = vpop.xlane.xlu0 %4610
        %v4612 = vsel %vm985, %v4570, -inf
        %4613 = vmax.xlane.f32.xlu0 %v4612
        %v4614 = vpop.xlane.xlu0 %4613
        %v4615 = vsel %vm985, %v4571, -inf
        %4616 = vmax.xlane.f32.xlu0 %v4615
        %v4617 = vpop.xlane.xlu0 %4616
        %v4618 = vsel %vm985, %v4572, -inf
        %4619 = vmax.xlane.f32.xlu0 %v4618
        %v4620 = vpop.xlane.xlu0 %4619
        %v4621 = vsel %vm985, %v4573, -inf
        %4622 = vmax.xlane.f32.xlu0 %v4621
        %v4623 = vpop.xlane.xlu0 %4622
        %v4624 = vsel %vm985, %v4574, -inf
        %4625 = vmax.xlane.f32.xlu0 %v4624
        %v4626 = vpop.xlane.xlu0 %4625
        %v4627 = vsel %vm985, %v4575, -inf
        %4628 = vmax.xlane.f32.xlu0 %v4627
        %v4629 = vpop.xlane.xlu0 %4628
        %v4630 = vsel %vm985, %v4576, -inf
        %4631 = vmax.xlane.f32.xlu0 %v4630
        %v4632 = vpop.xlane.xlu0 %4631
        %v4633 = vsel %vm985, %v4577, -inf
        %4634 = vmax.xlane.f32.xlu0 %v4633
        %v4635 = vpop.xlane.xlu0 %4634
        %v4636 = vsel %vm985, %v4578, -inf
        %4637 = vmax.xlane.f32.xlu0 %v4636
        %v4638 = vpop.xlane.xlu0 %4637
        %v4639 = vsel %vm985, %v4579, -inf
        %4640 = vmax.xlane.f32.xlu0 %v4639
        %v4641 = vpop.xlane.xlu0 %4640
        %v4642 = vsel %vm985, %v4580, -inf
        %4643 = vmax.xlane.f32.xlu0 %v4642
        %v4644 = vpop.xlane.xlu0 %4643
        %v4645 = vsel %vm985, %v4581, -inf
        %4646 = vmax.xlane.f32.xlu0 %v4645
        %v4647 = vpop.xlane.xlu0 %4646
        %v4648 = vsel %vm985, %v4582, -inf
        %4649 = vmax.xlane.f32.xlu0 %v4648
        %v4650 = vpop.xlane.xlu0 %4649
        %v4651 = vsel %vm985, %v4583, -inf
        %4652 = vmax.xlane.f32.xlu0 %v4651
        %v4653 = vpop.xlane.xlu0 %4652
        %v4654 = vsel %vm985, %v4584, -inf
        %4655 = vmax.xlane.f32.xlu0 %v4654
        %v4656 = vpop.xlane.xlu0 %4655
        %v4657 = vsel %vm985, %v4585, -inf
        %4658 = vmax.xlane.f32.xlu0 %v4657
        %v4659 = vpop.xlane.xlu0 %4658
        %v4660 = vsel %vm985, %v4586, -inf
        %4661 = vmax.xlane.f32.xlu0 %v4660
        %v4662 = vpop.xlane.xlu0 %4661
        %v4663 = vsel %vm985, %v4587, -inf
        %4664 = vmax.xlane.f32.xlu0 %v4663
        %v4665 = vpop.xlane.xlu0 %4664
        %v4666 = vsel %vm985, %v4588, -inf
        %4667 = vmax.xlane.f32.xlu0 %v4666
        %v4668 = vpop.xlane.xlu0 %4667
        %v4669 = vsel %vm985, %v4589, -inf
        %4670 = vmax.xlane.f32.xlu0 %v4669
        %v4671 = vpop.xlane.xlu0 %4670
        %v4672 = vsel %vm985, %v4590, -inf
        %4673 = vmax.xlane.f32.xlu0 %v4672
        %v4674 = vpop.xlane.xlu0 %4673
        %v4675 = vsel %vm985, %v4591, -inf
        %4676 = vmax.xlane.f32.xlu0 %v4675
        %v4677 = vpop.xlane.xlu0 %4676
        %v4678 = vsel %vm985, %v4592, -inf
        %4679 = vmax.xlane.f32.xlu0 %v4678
        %v4680 = vpop.xlane.xlu0 %4679
        %v4681 = vsel %vm985, %v4593, -inf
        %4682 = vmax.xlane.f32.xlu0 %v4681
        %v4683 = vpop.xlane.xlu0 %4682
        %v4684 = vsel %vm985, %v4594, -inf
        %4685 = vmax.xlane.f32.xlu0 %v4684
        %v4686 = vpop.xlane.xlu0 %4685
        %v4687 = vsel %vm985, %v4595, -inf
        %4688 = vmax.xlane.f32.xlu0 %v4687
        %v4689 = vpop.xlane.xlu0 %4688
        %v4690 = vsel %vm985, %v4596, -inf
        %4691 = vmax.xlane.f32.xlu0 %v4690
        %v4692 = vpop.xlane.xlu0 %4691
        %v4693 = vsel %vm985, %v4597, -inf
        %4694 = vmax.xlane.f32.xlu0 %v4693
        %v4695 = vpop.xlane.xlu0 %4694
        %v4696 = vsel %vm985, %v4598, -inf
        %4697 = vmax.xlane.f32.xlu0 %v4696
        %v4698 = vpop.xlane.xlu0 %4697
        %v4699 = vsel %vm985, %v4599, -inf
        %4700 = vmax.xlane.f32.xlu0 %v4699
        %v4701 = vpop.xlane.xlu0 %4700
        %v4702 = vsel %vm985, %v4600, -inf
        %4703 = vmax.xlane.f32.xlu0 %v4702
        %v4704 = vpop.xlane.xlu0 %4703
        %v4737 = vlaneseq
        %v4738 = vand.u32 %v4737, 127
        %v4739 = vadd.s32 %v4738, 4294967293
        %v4740 = vlaneseq
        %v4741 = vshrl.u32 %v4740, 7
        %v4742 = vsub.s32 %v4739, %v4741
        %v4743 = vrot.slane %v4611, %v4742
        %v4744 = vadd.s32 %v4738, 4294967285
        %v4745 = vlaneseq
        %v4746 = vshrl.u32 %v4745, 7
        %v4747 = vsub.s32 %v4744, %v4746
        %v4748 = vrot.slane %v4614, %v4747
        %vm4749 = vcmask 154712
        %v4750 = vsel %vm4749, %v4748, %v4743
        %v4751 = vlaneseq
        %v4752 = vshrl.u32 %v4751, 7
        %v4753 = vsub.s32 %v4739, %v4752
        %v4754 = vrot.slane %v4617, %v4753
        %v4755 = vlaneseq
        %v4756 = vshrl.u32 %v4755, 7
        %v4757 = vsub.s32 %v4744, %v4756
        %v4758 = vrot.slane %v4620, %v4757
        %v4759 = vsel %vm4749, %v4758, %v4754
        %v4760 = vlaneseq
        %v4761 = vshrl.u32 %v4760, 7
        %v4762 = vsub.s32 %v4739, %v4761
        %v4763 = vrot.slane %v4623, %v4762
        %v4764 = vlaneseq
        %v4765 = vshrl.u32 %v4764, 7
        %v4766 = vsub.s32 %v4744, %v4765
        %v4767 = vrot.slane %v4626, %v4766
        %v4768 = vsel %vm4749, %v4767, %v4763
        %v4769 = vlaneseq
        %v4770 = vshrl.u32 %v4769, 7
        %v4771 = vsub.s32 %v4739, %v4770
        %v4772 = vrot.slane %v4629, %v4771
        %v4773 = vlaneseq
        %v4774 = vshrl.u32 %v4773, 7
        %v4775 = vsub.s32 %v4744, %v4774
        %v4776 = vrot.slane %v4632, %v4775
        %v4777 = vsel %vm4749, %v4776, %v4772
        %v4778 = vlaneseq
        %v4779 = vshrl.u32 %v4778, 7
        %v4780 = vsub.s32 %v4739, %v4779
        %v4781 = vrot.slane %v4635, %v4780
        %v4782 = vlaneseq
        %v4783 = vshrl.u32 %v4782, 7
        %v4784 = vsub.s32 %v4744, %v4783
        %v4785 = vrot.slane %v4638, %v4784
        %v4786 = vsel %vm4749, %v4785, %v4781
        %v4787 = vlaneseq
        %v4788 = vshrl.u32 %v4787, 7
        %v4789 = vsub.s32 %v4739, %v4788
        %v4790 = vrot.slane %v4641, %v4789
        %v4791 = vlaneseq
        %v4792 = vshrl.u32 %v4791, 7
        %v4793 = vsub.s32 %v4744, %v4792
        %v4794 = vrot.slane %v4644, %v4793
        %v4795 = vsel %vm4749, %v4794, %v4790
        %v4796 = vlaneseq
        %v4797 = vshrl.u32 %v4796, 7
        %v4798 = vsub.s32 %v4739, %v4797
        %v4799 = vrot.slane %v4647, %v4798
        %v4800 = vlaneseq
        %v4801 = vshrl.u32 %v4800, 7
        %v4802 = vsub.s32 %v4744, %v4801
        %v4803 = vrot.slane %v4650, %v4802
        %v4804 = vsel %vm4749, %v4803, %v4799
        %v4805 = vlaneseq
        %v4806 = vshrl.u32 %v4805, 7
        %v4807 = vsub.s32 %v4739, %v4806
        %v4808 = vrot.slane %v4653, %v4807
        %v4809 = vlaneseq
        %v4810 = vshrl.u32 %v4809, 7
        %v4811 = vsub.s32 %v4744, %v4810
        %v4812 = vrot.slane %v4656, %v4811
        %v4813 = vsel %vm4749, %v4812, %v4808
        %v4814 = vlaneseq
        %v4815 = vshrl.u32 %v4814, 7
        %v4816 = vsub.s32 %v4739, %v4815
        %v4817 = vrot.slane %v4659, %v4816
        %v4818 = vlaneseq
        %v4819 = vshrl.u32 %v4818, 7
        %v4820 = vsub.s32 %v4744, %v4819
        %v4821 = vrot.slane %v4662, %v4820
        %v4822 = vsel %vm4749, %v4821, %v4817
        %v4823 = vlaneseq
        %v4824 = vshrl.u32 %v4823, 7
        %v4825 = vsub.s32 %v4739, %v4824
        %v4826 = vrot.slane %v4665, %v4825
        %v4827 = vlaneseq
        %v4828 = vshrl.u32 %v4827, 7
        %v4829 = vsub.s32 %v4744, %v4828
        %v4830 = vrot.slane %v4668, %v4829
        %v4831 = vsel %vm4749, %v4830, %v4826
        %v4832 = vlaneseq
        %v4833 = vshrl.u32 %v4832, 7
        %v4834 = vsub.s32 %v4739, %v4833
        %v4835 = vrot.slane %v4671, %v4834
        %v4836 = vlaneseq
        %v4837 = vshrl.u32 %v4836, 7
        %v4838 = vsub.s32 %v4744, %v4837
        %v4839 = vrot.slane %v4674, %v4838
        %v4840 = vsel %vm4749, %v4839, %v4835
        %v4841 = vlaneseq
        %v4842 = vshrl.u32 %v4841, 7
        %v4843 = vsub.s32 %v4739, %v4842
        %v4844 = vrot.slane %v4677, %v4843
        %v4845 = vlaneseq
        %v4846 = vshrl.u32 %v4845, 7
        %v4847 = vsub.s32 %v4744, %v4846
        %v4848 = vrot.slane %v4680, %v4847
        %v4849 = vsel %vm4749, %v4848, %v4844
        %v4850 = vlaneseq
        %v4851 = vshrl.u32 %v4850, 7
        %v4852 = vsub.s32 %v4739, %v4851
        %v4853 = vrot.slane %v4683, %v4852
        %v4854 = vlaneseq
        %v4855 = vshrl.u32 %v4854, 7
        %v4856 = vsub.s32 %v4744, %v4855
        %v4857 = vrot.slane %v4686, %v4856
        %v4858 = vsel %vm4749, %v4857, %v4853
        %v4859 = vlaneseq
        %v4860 = vshrl.u32 %v4859, 7
        %v4861 = vsub.s32 %v4739, %v4860
        %v4862 = vrot.slane %v4689, %v4861
        %v4863 = vlaneseq
        %v4864 = vshrl.u32 %v4863, 7
        %v4865 = vsub.s32 %v4744, %v4864
        %v4866 = vrot.slane %v4692, %v4865
        %v4867 = vsel %vm4749, %v4866, %v4862
        %v4868 = vlaneseq
        %v4869 = vshrl.u32 %v4868, 7
        %v4870 = vsub.s32 %v4739, %v4869
        %v4871 = vrot.slane %v4695, %v4870
        %v4872 = vlaneseq
        %v4873 = vshrl.u32 %v4872, 7
        %v4874 = vsub.s32 %v4744, %v4873
        %v4875 = vrot.slane %v4698, %v4874
        %v4876 = vsel %vm4749, %v4875, %v4871
        %v4877 = vlaneseq
        %v4878 = vshrl.u32 %v4877, 7
        %v4879 = vsub.s32 %v4739, %v4878
        %v4880 = vrot.slane %v4701, %v4879
        %v4881 = vlaneseq
        %v4882 = vshrl.u32 %v4881, 7
        %v4883 = vsub.s32 %v4744, %v4882
        %v4884 = vrot.slane %v4704, %v4883
        %v4885 = vsel %vm4749, %v4884, %v4880
        %vm4886 = vcmask 1041409
        %v4887 = vsel %vm4886, %v4759, %v4750
        %vm4888 = vcmask 1042434
        %v4889 = vsel %vm4888, %v4768, %v4887
        %vm4890 = vcmask 1043459
        %v4891 = vsel %vm4890, %v4777, %v4889
        %vm4892 = vcmask 1044484
        %v4893 = vsel %vm4892, %v4786, %v4891
        %vm4894 = vcmask 1045509
        %v4895 = vsel %vm4894, %v4795, %v4893
        %vm4896 = vcmask 1046534
        %v4897 = vsel %vm4896, %v4804, %v4895
        %vm4898 = vcmask 1047559
        %v4899 = vsel %vm4898, %v4813, %v4897
        %v4900 = vsel %vm4886, %v4831, %v4822
        %v4901 = vsel %vm4888, %v4840, %v4900
        %v4902 = vsel %vm4890, %v4849, %v4901
        %v4903 = vsel %vm4892, %v4858, %v4902
        %v4904 = vsel %vm4894, %v4867, %v4903
        %v4905 = vsel %vm4896, %v4876, %v4904
        %v4906 = vsel %vm4898, %v4885, %v4905
        %vm4909 = vcmask 154648
        %4910 = vst.msk [vmem:[#allocation4 + $0x3] sm:$0xff] %vm4909, %v4899
        %4911 = vst.msk [vmem:[#allocation4 + $0xb] sm:$0xff] %vm4909, %v4906
        %v4912 = vsel %vm985, %v4569, 0.0
        %4913 = vadd.xlane.f32.xlu0 %v4912
        %v4914 = vpop.xlane.xlu0 %4913
        %v4915 = vsel %vm985, %v4570, 0.0
        %4916 = vadd.xlane.f32.xlu0 %v4915
        %v4917 = vpop.xlane.xlu0 %4916
        %v4918 = vsel %vm985, %v4571, 0.0
        %4919 = vadd.xlane.f32.xlu0 %v4918
        %v4920 = vpop.xlane.xlu0 %4919
        %v4921 = vsel %vm985, %v4572, 0.0
        %4922 = vadd.xlane.f32.xlu0 %v4921
        %v4923 = vpop.xlane.xlu0 %4922
        %v4924 = vsel %vm985, %v4573, 0.0
        %4925 = vadd.xlane.f32.xlu0 %v4924
        %v4926 = vpop.xlane.xlu0 %4925
        %v4927 = vsel %vm985, %v4574, 0.0
        %4928 = vadd.xlane.f32.xlu0 %v4927
        %v4929 = vpop.xlane.xlu0 %4928
        %v4930 = vsel %vm985, %v4575, 0.0
        %4931 = vadd.xlane.f32.xlu0 %v4930
        %v4932 = vpop.xlane.xlu0 %4931
        %v4933 = vsel %vm985, %v4576, 0.0
        %4934 = vadd.xlane.f32.xlu0 %v4933
        %v4935 = vpop.xlane.xlu0 %4934
        %v4936 = vsel %vm985, %v4577, 0.0
        %4937 = vadd.xlane.f32.xlu0 %v4936
        %v4938 = vpop.xlane.xlu0 %4937
        %v4939 = vsel %vm985, %v4578, 0.0
        %4940 = vadd.xlane.f32.xlu0 %v4939
        %v4941 = vpop.xlane.xlu0 %4940
        %v4942 = vsel %vm985, %v4579, 0.0
        %4943 = vadd.xlane.f32.xlu0 %v4942
        %v4944 = vpop.xlane.xlu0 %4943
        %v4945 = vsel %vm985, %v4580, 0.0
        %4946 = vadd.xlane.f32.xlu0 %v4945
        %v4947 = vpop.xlane.xlu0 %4946
        %v4948 = vsel %vm985, %v4581, 0.0
        %4949 = vadd.xlane.f32.xlu0 %v4948
        %v4950 = vpop.xlane.xlu0 %4949
        %v4951 = vsel %vm985, %v4582, 0.0
        %4952 = vadd.xlane.f32.xlu0 %v4951
        %v4953 = vpop.xlane.xlu0 %4952
        %v4954 = vsel %vm985, %v4583, 0.0
        %4955 = vadd.xlane.f32.xlu0 %v4954
        %v4956 = vpop.xlane.xlu0 %4955
        %v4957 = vsel %vm985, %v4584, 0.0
        %4958 = vadd.xlane.f32.xlu0 %v4957
        %v4959 = vpop.xlane.xlu0 %4958
        %v4960 = vsel %vm985, %v4585, 0.0
        %4961 = vadd.xlane.f32.xlu0 %v4960
        %v4962 = vpop.xlane.xlu0 %4961
        %v4963 = vsel %vm985, %v4586, 0.0
        %4964 = vadd.xlane.f32.xlu0 %v4963
        %v4965 = vpop.xlane.xlu0 %4964
        %v4966 = vsel %vm985, %v4587, 0.0
        %4967 = vadd.xlane.f32.xlu0 %v4966
        %v4968 = vpop.xlane.xlu0 %4967
        %v4969 = vsel %vm985, %v4588, 0.0
        %4970 = vadd.xlane.f32.xlu0 %v4969
        %v4971 = vpop.xlane.xlu0 %4970
        %v4972 = vsel %vm985, %v4589, 0.0
        %4973 = vadd.xlane.f32.xlu0 %v4972
        %v4974 = vpop.xlane.xlu0 %4973
        %v4975 = vsel %vm985, %v4590, 0.0
        %4976 = vadd.xlane.f32.xlu0 %v4975
        %v4977 = vpop.xlane.xlu0 %4976
        %v4978 = vsel %vm985, %v4591, 0.0
        %4979 = vadd.xlane.f32.xlu0 %v4978
        %v4980 = vpop.xlane.xlu0 %4979
        %v4981 = vsel %vm985, %v4592, 0.0
        %4982 = vadd.xlane.f32.xlu0 %v4981
        %v4983 = vpop.xlane.xlu0 %4982
        %v4984 = vsel %vm985, %v4593, 0.0
        %4985 = vadd.xlane.f32.xlu0 %v4984
        %v4986 = vpop.xlane.xlu0 %4985
        %v4987 = vsel %vm985, %v4594, 0.0
        %4988 = vadd.xlane.f32.xlu0 %v4987
        %v4989 = vpop.xlane.xlu0 %4988
        %v4990 = vsel %vm985, %v4595, 0.0
        %4991 = vadd.xlane.f32.xlu0 %v4990
        %v4992 = vpop.xlane.xlu0 %4991
        %v4993 = vsel %vm985, %v4596, 0.0
        %4994 = vadd.xlane.f32.xlu0 %v4993
        %v4995 = vpop.xlane.xlu0 %4994
        %v4996 = vsel %vm985, %v4597, 0.0
        %4997 = vadd.xlane.f32.xlu0 %v4996
        %v4998 = vpop.xlane.xlu0 %4997
        %v4999 = vsel %vm985, %v4598, 0.0
        %5000 = vadd.xlane.f32.xlu0 %v4999
        %v5001 = vpop.xlane.xlu0 %5000
        %v5002 = vsel %vm985, %v4599, 0.0
        %5003 = vadd.xlane.f32.xlu0 %v5002
        %v5004 = vpop.xlane.xlu0 %5003
        %v5005 = vsel %vm985, %v4600, 0.0
        %5006 = vadd.xlane.f32.xlu0 %v5005
        %v5007 = vpop.xlane.xlu0 %5006
        %v5008 = vrcp.pop 8.0
        %v5009 = vmul.f32 %v4914, %v5008
        %v5010 = vmul.f32 %v4917, %v5008
        %v5011 = vmul.f32 %v4920, %v5008
        %v5012 = vmul.f32 %v4923, %v5008
        %v5013 = vmul.f32 %v4926, %v5008
        %v5014 = vmul.f32 %v4929, %v5008
        %v5015 = vmul.f32 %v4932, %v5008
        %v5016 = vmul.f32 %v4935, %v5008
        %v5017 = vmul.f32 %v4938, %v5008
        %v5018 = vmul.f32 %v4941, %v5008
        %v5019 = vmul.f32 %v4944, %v5008
        %v5020 = vmul.f32 %v4947, %v5008
        %v5021 = vmul.f32 %v4950, %v5008
        %v5022 = vmul.f32 %v4953, %v5008
        %v5023 = vmul.f32 %v4956, %v5008
        %v5024 = vmul.f32 %v4959, %v5008
        %v5025 = vmul.f32 %v4962, %v5008
        %v5026 = vmul.f32 %v4965, %v5008
        %v5027 = vmul.f32 %v4968, %v5008
        %v5028 = vmul.f32 %v4971, %v5008
        %v5029 = vmul.f32 %v4974, %v5008
        %v5030 = vmul.f32 %v4977, %v5008
        %v5031 = vmul.f32 %v4980, %v5008
        %v5032 = vmul.f32 %v4983, %v5008
        %v5033 = vmul.f32 %v4986, %v5008
        %v5034 = vmul.f32 %v4989, %v5008
        %v5035 = vmul.f32 %v4992, %v5008
        %v5036 = vmul.f32 %v4995, %v5008
        %v5037 = vmul.f32 %v4998, %v5008
        %v5038 = vmul.f32 %v5001, %v5008
        %v5039 = vmul.f32 %v5004, %v5008
        %v5040 = vmul.f32 %v5007, %v5008
        %v5073 = vlaneseq
        %v5074 = vshrl.u32 %v5073, 7
        %v5075 = vsub.s32 %v4739, %v5074
        %v5076 = vrot.slane %v5009, %v5075
        %v5077 = vlaneseq
        %v5078 = vshrl.u32 %v5077, 7
        %v5079 = vsub.s32 %v4744, %v5078
        %v5080 = vrot.slane %v5010, %v5079
        %v5081 = vsel %vm4749, %v5080, %v5076
        %v5082 = vlaneseq
        %v5083 = vshrl.u32 %v5082, 7
        %v5084 = vsub.s32 %v4739, %v5083
        %v5085 = vrot.slane %v5011, %v5084
        %v5086 = vlaneseq
        %v5087 = vshrl.u32 %v5086, 7
        %v5088 = vsub.s32 %v4744, %v5087
        %v5089 = vrot.slane %v5012, %v5088
        %v5090 = vsel %vm4749, %v5089, %v5085
        %v5091 = vlaneseq
        %v5092 = vshrl.u32 %v5091, 7
        %v5093 = vsub.s32 %v4739, %v5092
        %v5094 = vrot.slane %v5013, %v5093
        %v5095 = vlaneseq
        %v5096 = vshrl.u32 %v5095, 7
        %v5097 = vsub.s32 %v4744, %v5096
        %v5098 = vrot.slane %v5014, %v5097
        %v5099 = vsel %vm4749, %v5098, %v5094
        %v5100 = vlaneseq
        %v5101 = vshrl.u32 %v5100, 7
        %v5102 = vsub.s32 %v4739, %v5101
        %v5103 = vrot.slane %v5015, %v5102
        %v5104 = vlaneseq
        %v5105 = vshrl.u32 %v5104, 7
        %v5106 = vsub.s32 %v4744, %v5105
        %v5107 = vrot.slane %v5016, %v5106
        %v5108 = vsel %vm4749, %v5107, %v5103
        %v5109 = vlaneseq
        %v5110 = vshrl.u32 %v5109, 7
        %v5111 = vsub.s32 %v4739, %v5110
        %v5112 = vrot.slane %v5017, %v5111
        %v5113 = vlaneseq
        %v5114 = vshrl.u32 %v5113, 7
        %v5115 = vsub.s32 %v4744, %v5114
        %v5116 = vrot.slane %v5018, %v5115
        %v5117 = vsel %vm4749, %v5116, %v5112
        %v5118 = vlaneseq
        %v5119 = vshrl.u32 %v5118, 7
        %v5120 = vsub.s32 %v4739, %v5119
        %v5121 = vrot.slane %v5019, %v5120
        %v5122 = vlaneseq
        %v5123 = vshrl.u32 %v5122, 7
        %v5124 = vsub.s32 %v4744, %v5123
        %v5125 = vrot.slane %v5020, %v5124
        %v5126 = vsel %vm4749, %v5125, %v5121
        %v5127 = vlaneseq
        %v5128 = vshrl.u32 %v5127, 7
        %v5129 = vsub.s32 %v4739, %v5128
        %v5130 = vrot.slane %v5021, %v5129
        %v5131 = vlaneseq
        %v5132 = vshrl.u32 %v5131, 7
        %v5133 = vsub.s32 %v4744, %v5132
        %v5134 = vrot.slane %v5022, %v5133
        %v5135 = vsel %vm4749, %v5134, %v5130
        %v5136 = vlaneseq
        %v5137 = vshrl.u32 %v5136, 7
        %v5138 = vsub.s32 %v4739, %v5137
        %v5139 = vrot.slane %v5023, %v5138
        %v5140 = vlaneseq
        %v5141 = vshrl.u32 %v5140, 7
        %v5142 = vsub.s32 %v4744, %v5141
        %v5143 = vrot.slane %v5024, %v5142
        %v5144 = vsel %vm4749, %v5143, %v5139
        %v5145 = vlaneseq
        %v5146 = vshrl.u32 %v5145, 7
        %v5147 = vsub.s32 %v4739, %v5146
        %v5148 = vrot.slane %v5025, %v5147
        %v5149 = vlaneseq
        %v5150 = vshrl.u32 %v5149, 7
        %v5151 = vsub.s32 %v4744, %v5150
        %v5152 = vrot.slane %v5026, %v5151
        %v5153 = vsel %vm4749, %v5152, %v5148
        %v5154 = vlaneseq
        %v5155 = vshrl.u32 %v5154, 7
        %v5156 = vsub.s32 %v4739, %v5155
        %v5157 = vrot.slane %v5027, %v5156
        %v5158 = vlaneseq
        %v5159 = vshrl.u32 %v5158, 7
        %v5160 = vsub.s32 %v4744, %v5159
        %v5161 = vrot.slane %v5028, %v5160
        %v5162 = vsel %vm4749, %v5161, %v5157
        %v5163 = vlaneseq
        %v5164 = vshrl.u32 %v5163, 7
        %v5165 = vsub.s32 %v4739, %v5164
        %v5166 = vrot.slane %v5029, %v5165
        %v5167 = vlaneseq
        %v5168 = vshrl.u32 %v5167, 7
        %v5169 = vsub.s32 %v4744, %v5168
        %v5170 = vrot.slane %v5030, %v5169
        %v5171 = vsel %vm4749, %v5170, %v5166
        %v5172 = vlaneseq
        %v5173 = vshrl.u32 %v5172, 7
        %v5174 = vsub.s32 %v4739, %v5173
        %v5175 = vrot.slane %v5031, %v5174
        %v5176 = vlaneseq
        %v5177 = vshrl.u32 %v5176, 7
        %v5178 = vsub.s32 %v4744, %v5177
        %v5179 = vrot.slane %v5032, %v5178
        %v5180 = vsel %vm4749, %v5179, %v5175
        %v5181 = vlaneseq
        %v5182 = vshrl.u32 %v5181, 7
        %v5183 = vsub.s32 %v4739, %v5182
        %v5184 = vrot.slane %v5033, %v5183
        %v5185 = vlaneseq
        %v5186 = vshrl.u32 %v5185, 7
        %v5187 = vsub.s32 %v4744, %v5186
        %v5188 = vrot.slane %v5034, %v5187
        %v5189 = vsel %vm4749, %v5188, %v5184
        %v5190 = vlaneseq
        %v5191 = vshrl.u32 %v5190, 7
        %v5192 = vsub.s32 %v4739, %v5191
        %v5193 = vrot.slane %v5035, %v5192
        %v5194 = vlaneseq
        %v5195 = vshrl.u32 %v5194, 7
        %v5196 = vsub.s32 %v4744, %v5195
        %v5197 = vrot.slane %v5036, %v5196
        %v5198 = vsel %vm4749, %v5197, %v5193
        %v5199 = vlaneseq
        %v5200 = vshrl.u32 %v5199, 7
        %v5201 = vsub.s32 %v4739, %v5200
        %v5202 = vrot.slane %v5037, %v5201
        %v5203 = vlaneseq
        %v5204 = vshrl.u32 %v5203, 7
        %v5205 = vsub.s32 %v4744, %v5204
        %v5206 = vrot.slane %v5038, %v5205
        %v5207 = vsel %vm4749, %v5206, %v5202
        %v5208 = vlaneseq
        %v5209 = vshrl.u32 %v5208, 7
        %v5210 = vsub.s32 %v4739, %v5209
        %v5211 = vrot.slane %v5039, %v5210
        %v5212 = vlaneseq
        %v5213 = vshrl.u32 %v5212, 7
        %v5214 = vsub.s32 %v4744, %v5213
        %v5215 = vrot.slane %v5040, %v5214
        %v5216 = vsel %vm4749, %v5215, %v5211
        %v5217 = vsel %vm4886, %v5090, %v5081
        %v5218 = vsel %vm4888, %v5099, %v5217
        %v5219 = vsel %vm4890, %v5108, %v5218
        %v5220 = vsel %vm4892, %v5117, %v5219
        %v5221 = vsel %vm4894, %v5126, %v5220
        %v5222 = vsel %vm4896, %v5135, %v5221
        %v5223 = vsel %vm4898, %v5144, %v5222
        %v5224 = vsel %vm4886, %v5162, %v5153
        %v5225 = vsel %vm4888, %v5171, %v5224
        %v5226 = vsel %vm4890, %v5180, %v5225
        %v5227 = vsel %vm4892, %v5189, %v5226
        %v5228 = vsel %vm4894, %v5198, %v5227
        %v5229 = vsel %vm4896, %v5207, %v5228
        %v5230 = vsel %vm4898, %v5216, %v5229
        %5233 = vst.msk [vmem:[#allocation5 + $0x3] sm:$0xff] %vm4909, %v5223
        %5234 = vst.msk [vmem:[#allocation5 + $0xb] sm:$0xff] %vm4909, %v5230
        %v5235 = vld [vmem:[#allocation4] sm:$0xff]
        %v5236 = vld [vmem:[#allocation4 + $0x8] sm:$0xff]
        %v5237 = vld [vmem:[#allocation4 + $0x10] sm:$0x3f]
        %v5238 = vld [vmem:[#allocation5] sm:$0xff]
        %v5239 = vld [vmem:[#allocation5 + $0x8] sm:$0xff]
        %v5240 = vld [vmem:[#allocation5 + $0x10] sm:$0x3f]
        %s5241 = sld [smem:[#allocation6]]
        %v5242 = vstv %s5241
        %v5243 = vadd.f32 %v5242, 0.0
        %s5244 = sld [smem:[#allocation7]]
        %v5245 = vstv %s5244
        %v5246 = vmul.f32 %v5245, %v5235
        %v5247 = vmul.f32 %v5245, %v5236
        %v5248 = vadd.f32 %v5243, %v5246
        %v5249 = vadd.f32 %v5243, %v5247
        %s5250 = sld [smem:[#allocation7 + $0x31]]
        %v5251 = vstv %s5250
        %v5252 = vmul.f32 %v5251, %v5238
        %v5253 = vmul.f32 %v5251, %v5239
        %v5254 = vadd.f32 %v5248, %v5252
        %v5255 = vadd.f32 %v5249, %v5253
        %s5256 = sld [smem:[#allocation7 + $0x1]]
        %v5257 = vstv %s5256
        %v5258 = vmul.f32 %v5257, %v5235
        %v5259 = vmul.f32 %v5257, %v5236
        %5262 = vrot.lane.b32.xlu0 %v5258, 127
        %v5263 = vpop.permute.xlu0 %5262
        %5264 = vrot.lane.b32.xlu0 %v5259, 127
        %v5265 = vpop.permute.xlu0 %5264
        %v5268 = vadd.f32 %v5254, %v5263
        %v5269 = vadd.f32 %v5255, %v5265
        %s5270 = sld [smem:[#allocation7 + $0x32]]
        %v5271 = vstv %s5270
        %v5272 = vmul.f32 %v5271, %v5238
        %v5273 = vmul.f32 %v5271, %v5239
        %5276 = vrot.lane.b32.xlu0 %v5272, 127
        %v5277 = vpop.permute.xlu0 %5276
        %5278 = vrot.lane.b32.xlu0 %v5273, 127
        %v5279 = vpop.permute.xlu0 %5278
        %v5282 = vadd.f32 %v5268, %v5277
        %v5283 = vadd.f32 %v5269, %v5279
        %s5284 = sld [smem:[#allocation7 + $0x2]]
        %v5285 = vstv %s5284
        %v5286 = vmul.f32 %v5285, %v5235
        %v5287 = vmul.f32 %v5285, %v5236
        %5290 = vrot.lane.b32.xlu0 %v5286, 126
        %v5291 = vpop.permute.xlu0 %5290
        %5292 = vrot.lane.b32.xlu0 %v5287, 126
        %v5293 = vpop.permute.xlu0 %5292
        %v5296 = vadd.f32 %v5282, %v5291
        %v5297 = vadd.f32 %v5283, %v5293
        %s5298 = sld [smem:[#allocation7 + $0x33]]
        %v5299 = vstv %s5298
        %v5300 = vmul.f32 %v5299, %v5238
        %v5301 = vmul.f32 %v5299, %v5239
        %5304 = vrot.lane.b32.xlu0 %v5300, 126
        %v5305 = vpop.permute.xlu0 %5304
        %5306 = vrot.lane.b32.xlu0 %v5301, 126
        %v5307 = vpop.permute.xlu0 %5306
        %v5310 = vadd.f32 %v5296, %v5305
        %v5311 = vadd.f32 %v5297, %v5307
        %s5312 = sld [smem:[#allocation7 + $0x3]]
        %v5313 = vstv %s5312
        %v5314 = vmul.f32 %v5313, %v5235
        %v5315 = vmul.f32 %v5313, %v5236
        %5318 = vrot.lane.b32.xlu0 %v5314, 125
        %v5319 = vpop.permute.xlu0 %5318
        %5320 = vrot.lane.b32.xlu0 %v5315, 125
        %v5321 = vpop.permute.xlu0 %5320
        %v5324 = vadd.f32 %v5310, %v5319
        %v5325 = vadd.f32 %v5311, %v5321
        %s5326 = sld [smem:[#allocation7 + $0x34]]
        %v5327 = vstv %s5326
        %v5328 = vmul.f32 %v5327, %v5238
        %v5329 = vmul.f32 %v5327, %v5239
        %5332 = vrot.lane.b32.xlu0 %v5328, 125
        %v5333 = vpop.permute.xlu0 %5332
        %5334 = vrot.lane.b32.xlu0 %v5329, 125
        %v5335 = vpop.permute.xlu0 %5334
        %v5338 = vadd.f32 %v5324, %v5333
        %v5339 = vadd.f32 %v5325, %v5335
        %s5340 = sld [smem:[#allocation7 + $0x4]]
        %v5341 = vstv %s5340
        %v5342 = vmul.f32 %v5341, %v5235
        %v5343 = vmul.f32 %v5341, %v5236
        %5346 = vrot.lane.b32.xlu0 %v5342, 124
        %v5347 = vpop.permute.xlu0 %5346
        %5348 = vrot.lane.b32.xlu0 %v5343, 124
        %v5349 = vpop.permute.xlu0 %5348
        %v5352 = vadd.f32 %v5338, %v5347
        %v5353 = vadd.f32 %v5339, %v5349
        %s5354 = sld [smem:[#allocation7 + $0x35]]
        %v5355 = vstv %s5354
        %v5356 = vmul.f32 %v5355, %v5238
        %v5357 = vmul.f32 %v5355, %v5239
        %5360 = vrot.lane.b32.xlu0 %v5356, 124
        %v5361 = vpop.permute.xlu0 %5360
        %5362 = vrot.lane.b32.xlu0 %v5357, 124
        %v5363 = vpop.permute.xlu0 %5362
        %v5366 = vadd.f32 %v5352, %v5361
        %v5367 = vadd.f32 %v5353, %v5363
        %s5368 = sld [smem:[#allocation7 + $0x5]]
        %v5369 = vstv %s5368
        %v5370 = vmul.f32 %v5369, %v5235
        %v5371 = vmul.f32 %v5369, %v5236
        %5374 = vrot.lane.b32.xlu0 %v5370, 123
        %v5375 = vpop.permute.xlu0 %5374
        %5376 = vrot.lane.b32.xlu0 %v5371, 123
        %v5377 = vpop.permute.xlu0 %5376
        %v5380 = vadd.f32 %v5366, %v5375
        %v5381 = vadd.f32 %v5367, %v5377
        %s5382 = sld [smem:[#allocation7 + $0x36]]
        %v5383 = vstv %s5382
        %v5384 = vmul.f32 %v5383, %v5238
        %v5385 = vmul.f32 %v5383, %v5239
        %5388 = vrot.lane.b32.xlu0 %v5384, 123
        %v5389 = vpop.permute.xlu0 %5388
        %5390 = vrot.lane.b32.xlu0 %v5385, 123
        %v5391 = vpop.permute.xlu0 %5390
        %v5394 = vadd.f32 %v5380, %v5389
        %v5395 = vadd.f32 %v5381, %v5391
        %s5396 = sld [smem:[#allocation7 + $0x6]]
        %v5397 = vstv %s5396
        %v5398 = vmul.f32 %v5397, %v5235
        %v5399 = vmul.f32 %v5397, %v5236
        %5402 = vrot.lane.b32.xlu0 %v5398, 122
        %v5403 = vpop.permute.xlu0 %5402
        %5404 = vrot.lane.b32.xlu0 %v5399, 122
        %v5405 = vpop.permute.xlu0 %5404
        %v5408 = vadd.f32 %v5394, %v5403
        %v5409 = vadd.f32 %v5395, %v5405
        %s5410 = sld [smem:[#allocation7 + $0x37]]
        %v5411 = vstv %s5410
        %v5412 = vmul.f32 %v5411, %v5238
        %v5413 = vmul.f32 %v5411, %v5239
        %5416 = vrot.lane.b32.xlu0 %v5412, 122
        %v5417 = vpop.permute.xlu0 %5416
        %5418 = vrot.lane.b32.xlu0 %v5413, 122
        %v5419 = vpop.permute.xlu0 %5418
        %v5422 = vadd.f32 %v5408, %v5417
        %v5423 = vadd.f32 %v5409, %v5419
        %s5424 = sld [smem:[#allocation7 + $0x7]]
        %v5425 = vstv %s5424
        %v5426 = vmul.f32 %v5425, %v5235
        %v5427 = vmul.f32 %v5425, %v5236
        %v5428 = vmul.f32 %v5425, %v5237
        %v5432 = vrot.slane %v5426, 1
        %v5433 = vrot.slane %v5427, 1
        %v5434 = vsel %vm1209, %v5432, %v5433
        %v5435 = vrot.slane %v5428, 1
        %v5436 = vsel %vm1209, %v5433, %v5435
        %v5439 = vadd.f32 %v5422, %v5434
        %v5440 = vadd.f32 %v5423, %v5436
        %s5441 = sld [smem:[#allocation7 + $0x38]]
        %v5442 = vstv %s5441
        %v5443 = vmul.f32 %v5442, %v5238
        %v5444 = vmul.f32 %v5442, %v5239
        %v5445 = vmul.f32 %v5442, %v5240
        %v5449 = vrot.slane %v5443, 1
        %v5450 = vrot.slane %v5444, 1
        %v5451 = vsel %vm1209, %v5449, %v5450
        %v5452 = vrot.slane %v5445, 1
        %v5453 = vsel %vm1209, %v5450, %v5452
        %v5456 = vadd.f32 %v5439, %v5451
        %v5457 = vadd.f32 %v5440, %v5453
        %s5458 = sld [smem:[#allocation7 + $0x8]]
        %v5459 = vstv %s5458
        %v5460 = vmul.f32 %v5459, %v5235
        %v5461 = vmul.f32 %v5459, %v5236
        %v5462 = vmul.f32 %v5459, %v5237
        %v5466 = vrot.slane %v5460, 1
        %v5467 = vrot.slane %v5461, 1
        %v5468 = vsel %vm1209, %v5466, %v5467
        %v5469 = vrot.slane %v5462, 1
        %v5470 = vsel %vm1209, %v5467, %v5469
        %5471 = vrot.lane.b32.xlu0 %v5468, 127
        %v5472 = vpop.permute.xlu0 %5471
        %5473 = vrot.lane.b32.xlu0 %v5470, 127
        %v5474 = vpop.permute.xlu0 %5473
        %v5477 = vadd.f32 %v5456, %v5472
        %v5478 = vadd.f32 %v5457, %v5474
        %s5479 = sld [smem:[#allocation7 + $0x39]]
        %v5480 = vstv %s5479
        %v5481 = vmul.f32 %v5480, %v5238
        %v5482 = vmul.f32 %v5480, %v5239
        %v5483 = vmul.f32 %v5480, %v5240
        %v5487 = vrot.slane %v5481, 1
        %v5488 = vrot.slane %v5482, 1
        %v5489 = vsel %vm1209, %v5487, %v5488
        %v5490 = vrot.slane %v5483, 1
        %v5491 = vsel %vm1209, %v5488, %v5490
        %5492 = vrot.lane.b32.xlu0 %v5489, 127
        %v5493 = vpop.permute.xlu0 %5492
        %5494 = vrot.lane.b32.xlu0 %v5491, 127
        %v5495 = vpop.permute.xlu0 %5494
        %v5498 = vadd.f32 %v5477, %v5493
        %v5499 = vadd.f32 %v5478, %v5495
        %s5500 = sld [smem:[#allocation7 + $0x9]]
        %v5501 = vstv %s5500
        %v5502 = vmul.f32 %v5501, %v5235
        %v5503 = vmul.f32 %v5501, %v5236
        %v5504 = vmul.f32 %v5501, %v5237
        %v5508 = vrot.slane %v5502, 1
        %v5509 = vrot.slane %v5503, 1
        %v5510 = vsel %vm1209, %v5508, %v5509
        %v5511 = vrot.slane %v5504, 1
        %v5512 = vsel %vm1209, %v5509, %v5511
        %5513 = vrot.lane.b32.xlu0 %v5510, 126
        %v5514 = vpop.permute.xlu0 %5513
        %5515 = vrot.lane.b32.xlu0 %v5512, 126
        %v5516 = vpop.permute.xlu0 %5515
        %v5519 = vadd.f32 %v5498, %v5514
        %v5520 = vadd.f32 %v5499, %v5516
        %s5521 = sld [smem:[#allocation7 + $0x3a]]
        %v5522 = vstv %s5521
        %v5523 = vmul.f32 %v5522, %v5238
        %v5524 = vmul.f32 %v5522, %v5239
        %v5525 = vmul.f32 %v5522, %v5240
        %v5529 = vrot.slane %v5523, 1
        %v5530 = vrot.slane %v5524, 1
        %v5531 = vsel %vm1209, %v5529, %v5530
        %v5532 = vrot.slane %v5525, 1
        %v5533 = vsel %vm1209, %v5530, %v5532
        %5534 = vrot.lane.b32.xlu0 %v5531, 126
        %v5535 = vpop.permute.xlu0 %5534
        %5536 = vrot.lane.b32.xlu0 %v5533, 126
        %v5537 = vpop.permute.xlu0 %5536
        %v5540 = vadd.f32 %v5519, %v5535
        %v5541 = vadd.f32 %v5520, %v5537
        %s5542 = sld [smem:[#allocation7 + $0xa]]
        %v5543 = vstv %s5542
        %v5544 = vmul.f32 %v5543, %v5235
        %v5545 = vmul.f32 %v5543, %v5236
        %v5546 = vmul.f32 %v5543, %v5237
        %v5550 = vrot.slane %v5544, 1
        %v5551 = vrot.slane %v5545, 1
        %v5552 = vsel %vm1209, %v5550, %v5551
        %v5553 = vrot.slane %v5546, 1
        %v5554 = vsel %vm1209, %v5551, %v5553
        %5555 = vrot.lane.b32.xlu0 %v5552, 125
        %v5556 = vpop.permute.xlu0 %5555
        %5557 = vrot.lane.b32.xlu0 %v5554, 125
        %v5558 = vpop.permute.xlu0 %5557
        %v5561 = vadd.f32 %v5540, %v5556
        %v5562 = vadd.f32 %v5541, %v5558
        %s5563 = sld [smem:[#allocation7 + $0x3b]]
        %v5564 = vstv %s5563
        %v5565 = vmul.f32 %v5564, %v5238
        %v5566 = vmul.f32 %v5564, %v5239
        %v5567 = vmul.f32 %v5564, %v5240
        %v5571 = vrot.slane %v5565, 1
        %v5572 = vrot.slane %v5566, 1
        %v5573 = vsel %vm1209, %v5571, %v5572
        %v5574 = vrot.slane %v5567, 1
        %v5575 = vsel %vm1209, %v5572, %v5574
        %5576 = vrot.lane.b32.xlu0 %v5573, 125
        %v5577 = vpop.permute.xlu0 %5576
        %5578 = vrot.lane.b32.xlu0 %v5575, 125
        %v5579 = vpop.permute.xlu0 %5578
        %v5582 = vadd.f32 %v5561, %v5577
        %v5583 = vadd.f32 %v5562, %v5579
        %s5584 = sld [smem:[#allocation7 + $0xb]]
        %v5585 = vstv %s5584
        %v5586 = vmul.f32 %v5585, %v5235
        %v5587 = vmul.f32 %v5585, %v5236
        %v5588 = vmul.f32 %v5585, %v5237
        %v5592 = vrot.slane %v5586, 1
        %v5593 = vrot.slane %v5587, 1
        %v5594 = vsel %vm1209, %v5592, %v5593
        %v5595 = vrot.slane %v5588, 1
        %v5596 = vsel %vm1209, %v5593, %v5595
        %5597 = vrot.lane.b32.xlu0 %v5594, 124
        %v5598 = vpop.permute.xlu0 %5597
        %5599 = vrot.lane.b32.xlu0 %v5596, 124
        %v5600 = vpop.permute.xlu0 %5599
        %v5603 = vadd.f32 %v5582, %v5598
        %v5604 = vadd.f32 %v5583, %v5600
        %s5605 = sld [smem:[#allocation7 + $0x3c]]
        %v5606 = vstv %s5605
        %v5607 = vmul.f32 %v5606, %v5238
        %v5608 = vmul.f32 %v5606, %v5239
        %v5609 = vmul.f32 %v5606, %v5240
        %v5613 = vrot.slane %v5607, 1
        %v5614 = vrot.slane %v5608, 1
        %v5615 = vsel %vm1209, %v5613, %v5614
        %v5616 = vrot.slane %v5609, 1
        %v5617 = vsel %vm1209, %v5614, %v5616
        %5618 = vrot.lane.b32.xlu0 %v5615, 124
        %v5619 = vpop.permute.xlu0 %5618
        %5620 = vrot.lane.b32.xlu0 %v5617, 124
        %v5621 = vpop.permute.xlu0 %5620
        %v5624 = vadd.f32 %v5603, %v5619
        %v5625 = vadd.f32 %v5604, %v5621
        %s5626 = sld [smem:[#allocation7 + $0xc]]
        %v5627 = vstv %s5626
        %v5628 = vmul.f32 %v5627, %v5235
        %v5629 = vmul.f32 %v5627, %v5236
        %v5630 = vmul.f32 %v5627, %v5237
        %v5634 = vrot.slane %v5628, 1
        %v5635 = vrot.slane %v5629, 1
        %v5636 = vsel %vm1209, %v5634, %v5635
        %v5637 = vrot.slane %v5630, 1
        %v5638 = vsel %vm1209, %v5635, %v5637
        %5639 = vrot.lane.b32.xlu0 %v5636, 123
        %v5640 = vpop.permute.xlu0 %5639
        %5641 = vrot.lane.b32.xlu0 %v5638, 123
        %v5642 = vpop.permute.xlu0 %5641
        %v5645 = vadd.f32 %v5624, %v5640
        %v5646 = vadd.f32 %v5625, %v5642
        %s5647 = sld [smem:[#allocation7 + $0x3d]]
        %v5648 = vstv %s5647
        %v5649 = vmul.f32 %v5648, %v5238
        %v5650 = vmul.f32 %v5648, %v5239
        %v5651 = vmul.f32 %v5648, %v5240
        %v5655 = vrot.slane %v5649, 1
        %v5656 = vrot.slane %v5650, 1
        %v5657 = vsel %vm1209, %v5655, %v5656
        %v5658 = vrot.slane %v5651, 1
        %v5659 = vsel %vm1209, %v5656, %v5658
        %5660 = vrot.lane.b32.xlu0 %v5657, 123
        %v5661 = vpop.permute.xlu0 %5660
        %5662 = vrot.lane.b32.xlu0 %v5659, 123
        %v5663 = vpop.permute.xlu0 %5662
        %v5666 = vadd.f32 %v5645, %v5661
        %v5667 = vadd.f32 %v5646, %v5663
        %s5668 = sld [smem:[#allocation7 + $0xd]]
        %v5669 = vstv %s5668
        %v5670 = vmul.f32 %v5669, %v5235
        %v5671 = vmul.f32 %v5669, %v5236
        %v5672 = vmul.f32 %v5669, %v5237
        %v5676 = vrot.slane %v5670, 1
        %v5677 = vrot.slane %v5671, 1
        %v5678 = vsel %vm1209, %v5676, %v5677
        %v5679 = vrot.slane %v5672, 1
        %v5680 = vsel %vm1209, %v5677, %v5679
        %5681 = vrot.lane.b32.xlu0 %v5678, 122
        %v5682 = vpop.permute.xlu0 %5681
        %5683 = vrot.lane.b32.xlu0 %v5680, 122
        %v5684 = vpop.permute.xlu0 %5683
        %v5687 = vadd.f32 %v5666, %v5682
        %v5688 = vadd.f32 %v5667, %v5684
        %s5689 = sld [smem:[#allocation7 + $0x3e]]
        %v5690 = vstv %s5689
        %v5691 = vmul.f32 %v5690, %v5238
        %v5692 = vmul.f32 %v5690, %v5239
        %v5693 = vmul.f32 %v5690, %v5240
        %v5697 = vrot.slane %v5691, 1
        %v5698 = vrot.slane %v5692, 1
        %v5699 = vsel %vm1209, %v5697, %v5698
        %v5700 = vrot.slane %v5693, 1
        %v5701 = vsel %vm1209, %v5698, %v5700
        %5702 = vrot.lane.b32.xlu0 %v5699, 122
        %v5703 = vpop.permute.xlu0 %5702
        %5704 = vrot.lane.b32.xlu0 %v5701, 122
        %v5705 = vpop.permute.xlu0 %5704
        %v5708 = vadd.f32 %v5687, %v5703
        %v5709 = vadd.f32 %v5688, %v5705
        %s5710 = sld [smem:[#allocation7 + $0xe]]
        %v5711 = vstv %s5710
        %v5712 = vmul.f32 %v5711, %v5235
        %v5713 = vmul.f32 %v5711, %v5236
        %v5714 = vmul.f32 %v5711, %v5237
        %v5718 = vrot.slane %v5712, 2
        %v5719 = vrot.slane %v5713, 2
        %v5720 = vsel %vm1290, %v5718, %v5719
        %v5721 = vrot.slane %v5714, 2
        %v5722 = vsel %vm1290, %v5719, %v5721
        %v5725 = vadd.f32 %v5708, %v5720
        %v5726 = vadd.f32 %v5709, %v5722
        %s5727 = sld [smem:[#allocation7 + $0x3f]]
        %v5728 = vstv %s5727
        %v5729 = vmul.f32 %v5728, %v5238
        %v5730 = vmul.f32 %v5728, %v5239
        %v5731 = vmul.f32 %v5728, %v5240
        %v5735 = vrot.slane %v5729, 2
        %v5736 = vrot.slane %v5730, 2
        %v5737 = vsel %vm1290, %v5735, %v5736
        %v5738 = vrot.slane %v5731, 2
        %v5739 = vsel %vm1290, %v5736, %v5738
        %v5742 = vadd.f32 %v5725, %v5737
        %v5743 = vadd.f32 %v5726, %v5739
        %s5744 = sld [smem:[#allocation7 + $0xf]]
        %v5745 = vstv %s5744
        %v5746 = vmul.f32 %v5745, %v5235
        %v5747 = vmul.f32 %v5745, %v5236
        %v5748 = vmul.f32 %v5745, %v5237
        %v5752 = vrot.slane %v5746, 2
        %v5753 = vrot.slane %v5747, 2
        %v5754 = vsel %vm1290, %v5752, %v5753
        %v5755 = vrot.slane %v5748, 2
        %v5756 = vsel %vm1290, %v5753, %v5755
        %5757 = vrot.lane.b32.xlu0 %v5754, 127
        %v5758 = vpop.permute.xlu0 %5757
        %5759 = vrot.lane.b32.xlu0 %v5756, 127
        %v5760 = vpop.permute.xlu0 %5759
        %v5763 = vadd.f32 %v5742, %v5758
        %v5764 = vadd.f32 %v5743, %v5760
        %s5765 = sld [smem:[#allocation7 + $0x40]]
        %v5766 = vstv %s5765
        %v5767 = vmul.f32 %v5766, %v5238
        %v5768 = vmul.f32 %v5766, %v5239
        %v5769 = vmul.f32 %v5766, %v5240
        %v5773 = vrot.slane %v5767, 2
        %v5774 = vrot.slane %v5768, 2
        %v5775 = vsel %vm1290, %v5773, %v5774
        %v5776 = vrot.slane %v5769, 2
        %v5777 = vsel %vm1290, %v5774, %v5776
        %5778 = vrot.lane.b32.xlu0 %v5775, 127
        %v5779 = vpop.permute.xlu0 %5778
        %5780 = vrot.lane.b32.xlu0 %v5777, 127
        %v5781 = vpop.permute.xlu0 %5780
        %v5784 = vadd.f32 %v5763, %v5779
        %v5785 = vadd.f32 %v5764, %v5781
        %s5786 = sld [smem:[#allocation7 + $0x10]]
        %v5787 = vstv %s5786
        %v5788 = vmul.f32 %v5787, %v5235
        %v5789 = vmul.f32 %v5787, %v5236
        %v5790 = vmul.f32 %v5787, %v5237
        %v5794 = vrot.slane %v5788, 2
        %v5795 = vrot.slane %v5789, 2
        %v5796 = vsel %vm1290, %v5794, %v5795
        %v5797 = vrot.slane %v5790, 2
        %v5798 = vsel %vm1290, %v5795, %v5797
        %5799 = vrot.lane.b32.xlu0 %v5796, 126
        %v5800 = vpop.permute.xlu0 %5799
        %5801 = vrot.lane.b32.xlu0 %v5798, 126
        %v5802 = vpop.permute.xlu0 %5801
        %v5805 = vadd.f32 %v5784, %v5800
        %v5806 = vadd.f32 %v5785, %v5802
        %s5807 = sld [smem:[#allocation7 + $0x41]]
        %v5808 = vstv %s5807
        %v5809 = vmul.f32 %v5808, %v5238
        %v5810 = vmul.f32 %v5808, %v5239
        %v5811 = vmul.f32 %v5808, %v5240
        %v5815 = vrot.slane %v5809, 2
        %v5816 = vrot.slane %v5810, 2
        %v5817 = vsel %vm1290, %v5815, %v5816
        %v5818 = vrot.slane %v5811, 2
        %v5819 = vsel %vm1290, %v5816, %v5818
        %5820 = vrot.lane.b32.xlu0 %v5817, 126
        %v5821 = vpop.permute.xlu0 %5820
        %5822 = vrot.lane.b32.xlu0 %v5819, 126
        %v5823 = vpop.permute.xlu0 %5822
        %v5826 = vadd.f32 %v5805, %v5821
        %v5827 = vadd.f32 %v5806, %v5823
        %s5828 = sld [smem:[#allocation7 + $0x11]]
        %v5829 = vstv %s5828
        %v5830 = vmul.f32 %v5829, %v5235
        %v5831 = vmul.f32 %v5829, %v5236
        %v5832 = vmul.f32 %v5829, %v5237
        %v5836 = vrot.slane %v5830, 2
        %v5837 = vrot.slane %v5831, 2
        %v5838 = vsel %vm1290, %v5836, %v5837
        %v5839 = vrot.slane %v5832, 2
        %v5840 = vsel %vm1290, %v5837, %v5839
        %5841 = vrot.lane.b32.xlu0 %v5838, 125
        %v5842 = vpop.permute.xlu0 %5841
        %5843 = vrot.lane.b32.xlu0 %v5840, 125
        %v5844 = vpop.permute.xlu0 %5843
        %v5847 = vadd.f32 %v5826, %v5842
        %v5848 = vadd.f32 %v5827, %v5844
        %s5849 = sld [smem:[#allocation7 + $0x42]]
        %v5850 = vstv %s5849
        %v5851 = vmul.f32 %v5850, %v5238
        %v5852 = vmul.f32 %v5850, %v5239
        %v5853 = vmul.f32 %v5850, %v5240
        %v5857 = vrot.slane %v5851, 2
        %v5858 = vrot.slane %v5852, 2
        %v5859 = vsel %vm1290, %v5857, %v5858
        %v5860 = vrot.slane %v5853, 2
        %v5861 = vsel %vm1290, %v5858, %v5860
        %5862 = vrot.lane.b32.xlu0 %v5859, 125
        %v5863 = vpop.permute.xlu0 %5862
        %5864 = vrot.lane.b32.xlu0 %v5861, 125
        %v5865 = vpop.permute.xlu0 %5864
        %v5868 = vadd.f32 %v5847, %v5863
        %v5869 = vadd.f32 %v5848, %v5865
        %s5870 = sld [smem:[#allocation7 + $0x12]]
        %v5871 = vstv %s5870
        %v5872 = vmul.f32 %v5871, %v5235
        %v5873 = vmul.f32 %v5871, %v5236
        %v5874 = vmul.f32 %v5871, %v5237
        %v5878 = vrot.slane %v5872, 2
        %v5879 = vrot.slane %v5873, 2
        %v5880 = vsel %vm1290, %v5878, %v5879
        %v5881 = vrot.slane %v5874, 2
        %v5882 = vsel %vm1290, %v5879, %v5881
        %5883 = vrot.lane.b32.xlu0 %v5880, 124
        %v5884 = vpop.permute.xlu0 %5883
        %5885 = vrot.lane.b32.xlu0 %v5882, 124
        %v5886 = vpop.permute.xlu0 %5885
        %v5889 = vadd.f32 %v5868, %v5884
        %v5890 = vadd.f32 %v5869, %v5886
        %s5891 = sld [smem:[#allocation7 + $0x43]]
        %v5892 = vstv %s5891
        %v5893 = vmul.f32 %v5892, %v5238
        %v5894 = vmul.f32 %v5892, %v5239
        %v5895 = vmul.f32 %v5892, %v5240
        %v5899 = vrot.slane %v5893, 2
        %v5900 = vrot.slane %v5894, 2
        %v5901 = vsel %vm1290, %v5899, %v5900
        %v5902 = vrot.slane %v5895, 2
        %v5903 = vsel %vm1290, %v5900, %v5902
        %5904 = vrot.lane.b32.xlu0 %v5901, 124
        %v5905 = vpop.permute.xlu0 %5904
        %5906 = vrot.lane.b32.xlu0 %v5903, 124
        %v5907 = vpop.permute.xlu0 %5906
        %v5910 = vadd.f32 %v5889, %v5905
        %v5911 = vadd.f32 %v5890, %v5907
        %s5912 = sld [smem:[#allocation7 + $0x13]]
        %v5913 = vstv %s5912
        %v5914 = vmul.f32 %v5913, %v5235
        %v5915 = vmul.f32 %v5913, %v5236
        %v5916 = vmul.f32 %v5913, %v5237
        %v5920 = vrot.slane %v5914, 2
        %v5921 = vrot.slane %v5915, 2
        %v5922 = vsel %vm1290, %v5920, %v5921
        %v5923 = vrot.slane %v5916, 2
        %v5924 = vsel %vm1290, %v5921, %v5923
        %5925 = vrot.lane.b32.xlu0 %v5922, 123
        %v5926 = vpop.permute.xlu0 %5925
        %5927 = vrot.lane.b32.xlu0 %v5924, 123
        %v5928 = vpop.permute.xlu0 %5927
        %v5931 = vadd.f32 %v5910, %v5926
        %v5932 = vadd.f32 %v5911, %v5928
        %s5933 = sld [smem:[#allocation7 + $0x44]]
        %v5934 = vstv %s5933
        %v5935 = vmul.f32 %v5934, %v5238
        %v5936 = vmul.f32 %v5934, %v5239
        %v5937 = vmul.f32 %v5934, %v5240
        %v5941 = vrot.slane %v5935, 2
        %v5942 = vrot.slane %v5936, 2
        %v5943 = vsel %vm1290, %v5941, %v5942
        %v5944 = vrot.slane %v5937, 2
        %v5945 = vsel %vm1290, %v5942, %v5944
        %5946 = vrot.lane.b32.xlu0 %v5943, 123
        %v5947 = vpop.permute.xlu0 %5946
        %5948 = vrot.lane.b32.xlu0 %v5945, 123
        %v5949 = vpop.permute.xlu0 %5948
        %v5952 = vadd.f32 %v5931, %v5947
        %v5953 = vadd.f32 %v5932, %v5949
        %s5954 = sld [smem:[#allocation7 + $0x14]]
        %v5955 = vstv %s5954
        %v5956 = vmul.f32 %v5955, %v5235
        %v5957 = vmul.f32 %v5955, %v5236
        %v5958 = vmul.f32 %v5955, %v5237
        %v5962 = vrot.slane %v5956, 2
        %v5963 = vrot.slane %v5957, 2
        %v5964 = vsel %vm1290, %v5962, %v5963
        %v5965 = vrot.slane %v5958, 2
        %v5966 = vsel %vm1290, %v5963, %v5965
        %5967 = vrot.lane.b32.xlu0 %v5964, 122
        %v5968 = vpop.permute.xlu0 %5967
        %5969 = vrot.lane.b32.xlu0 %v5966, 122
        %v5970 = vpop.permute.xlu0 %5969
        %v5973 = vadd.f32 %v5952, %v5968
        %v5974 = vadd.f32 %v5953, %v5970
        %s5975 = sld [smem:[#allocation7 + $0x45]]
        %v5976 = vstv %s5975
        %v5977 = vmul.f32 %v5976, %v5238
        %v5978 = vmul.f32 %v5976, %v5239
        %v5979 = vmul.f32 %v5976, %v5240
        %v5983 = vrot.slane %v5977, 2
        %v5984 = vrot.slane %v5978, 2
        %v5985 = vsel %vm1290, %v5983, %v5984
        %v5986 = vrot.slane %v5979, 2
        %v5987 = vsel %vm1290, %v5984, %v5986
        %5988 = vrot.lane.b32.xlu0 %v5985, 122
        %v5989 = vpop.permute.xlu0 %5988
        %5990 = vrot.lane.b32.xlu0 %v5987, 122
        %v5991 = vpop.permute.xlu0 %5990
        %v5994 = vadd.f32 %v5973, %v5989
        %v5995 = vadd.f32 %v5974, %v5991
        %s5996 = sld [smem:[#allocation7 + $0x15]]
        %v5997 = vstv %s5996
        %v5998 = vmul.f32 %v5997, %v5235
        %v5999 = vmul.f32 %v5997, %v5236
        %v6000 = vmul.f32 %v5997, %v5237
        %vm6004 = vcmask 1044480
        %v6005 = vrot.slane %v5998, 3
        %v6006 = vrot.slane %v5999, 3
        %v6007 = vsel %vm6004, %v6005, %v6006
        %v6008 = vrot.slane %v6000, 3
        %v6009 = vsel %vm6004, %v6006, %v6008
        %v6012 = vadd.f32 %v5994, %v6007
        %v6013 = vadd.f32 %v5995, %v6009
        %s6014 = sld [smem:[#allocation7 + $0x46]]
        %v6015 = vstv %s6014
        %v6016 = vmul.f32 %v6015, %v5238
        %v6017 = vmul.f32 %v6015, %v5239
        %v6018 = vmul.f32 %v6015, %v5240
        %v6022 = vrot.slane %v6016, 3
        %v6023 = vrot.slane %v6017, 3
        %v6024 = vsel %vm6004, %v6022, %v6023
        %v6025 = vrot.slane %v6018, 3
        %v6026 = vsel %vm6004, %v6023, %v6025
        %v6029 = vadd.f32 %v6012, %v6024
        %v6030 = vadd.f32 %v6013, %v6026
        %s6031 = sld [smem:[#allocation7 + $0x16]]
        %v6032 = vstv %s6031
        %v6033 = vmul.f32 %v6032, %v5235
        %v6034 = vmul.f32 %v6032, %v5236
        %v6035 = vmul.f32 %v6032, %v5237
        %v6039 = vrot.slane %v6033, 3
        %v6040 = vrot.slane %v6034, 3
        %v6041 = vsel %vm6004, %v6039, %v6040
        %v6042 = vrot.slane %v6035, 3
        %v6043 = vsel %vm6004, %v6040, %v6042
        %6044 = vrot.lane.b32.xlu0 %v6041, 127
        %v6045 = vpop.permute.xlu0 %6044
        %6046 = vrot.lane.b32.xlu0 %v6043, 127
        %v6047 = vpop.permute.xlu0 %6046
        %v6050 = vadd.f32 %v6029, %v6045
        %v6051 = vadd.f32 %v6030, %v6047
        %s6052 = sld [smem:[#allocation7 + $0x47]]
        %v6053 = vstv %s6052
        %v6054 = vmul.f32 %v6053, %v5238
        %v6055 = vmul.f32 %v6053, %v5239
        %v6056 = vmul.f32 %v6053, %v5240
        %v6060 = vrot.slane %v6054, 3
        %v6061 = vrot.slane %v6055, 3
        %v6062 = vsel %vm6004, %v6060, %v6061
        %v6063 = vrot.slane %v6056, 3
        %v6064 = vsel %vm6004, %v6061, %v6063
        %6065 = vrot.lane.b32.xlu0 %v6062, 127
        %v6066 = vpop.permute.xlu0 %6065
        %6067 = vrot.lane.b32.xlu0 %v6064, 127
        %v6068 = vpop.permute.xlu0 %6067
        %v6071 = vadd.f32 %v6050, %v6066
        %v6072 = vadd.f32 %v6051, %v6068
        %s6073 = sld [smem:[#allocation7 + $0x17]]
        %v6074 = vstv %s6073
        %v6075 = vmul.f32 %v6074, %v5235
        %v6076 = vmul.f32 %v6074, %v5236
        %v6077 = vmul.f32 %v6074, %v5237
        %v6081 = vrot.slane %v6075, 3
        %v6082 = vrot.slane %v6076, 3
        %v6083 = vsel %vm6004, %v6081, %v6082
        %v6084 = vrot.slane %v6077, 3
        %v6085 = vsel %vm6004, %v6082, %v6084
        %6086 = vrot.lane.b32.xlu0 %v6083, 126
        %v6087 = vpop.permute.xlu0 %6086
        %6088 = vrot.lane.b32.xlu0 %v6085, 126
        %v6089 = vpop.permute.xlu0 %6088
        %v6092 = vadd.f32 %v6071, %v6087
        %v6093 = vadd.f32 %v6072, %v6089
        %s6094 = sld [smem:[#allocation7 + $0x48]]
        %v6095 = vstv %s6094
        %v6096 = vmul.f32 %v6095, %v5238
        %v6097 = vmul.f32 %v6095, %v5239
        %v6098 = vmul.f32 %v6095, %v5240
        %v6102 = vrot.slane %v6096, 3
        %v6103 = vrot.slane %v6097, 3
        %v6104 = vsel %vm6004, %v6102, %v6103
        %v6105 = vrot.slane %v6098, 3
        %v6106 = vsel %vm6004, %v6103, %v6105
        %6107 = vrot.lane.b32.xlu0 %v6104, 126
        %v6108 = vpop.permute.xlu0 %6107
        %6109 = vrot.lane.b32.xlu0 %v6106, 126
        %v6110 = vpop.permute.xlu0 %6109
        %v6113 = vadd.f32 %v6092, %v6108
        %v6114 = vadd.f32 %v6093, %v6110
        %s6115 = sld [smem:[#allocation7 + $0x18]]
        %v6116 = vstv %s6115
        %v6117 = vmul.f32 %v6116, %v5235
        %v6118 = vmul.f32 %v6116, %v5236
        %v6119 = vmul.f32 %v6116, %v5237
        %v6123 = vrot.slane %v6117, 3
        %v6124 = vrot.slane %v6118, 3
        %v6125 = vsel %vm6004, %v6123, %v6124
        %v6126 = vrot.slane %v6119, 3
        %v6127 = vsel %vm6004, %v6124, %v6126
        %6128 = vrot.lane.b32.xlu0 %v6125, 125
        %v6129 = vpop.permute.xlu0 %6128
        %6130 = vrot.lane.b32.xlu0 %v6127, 125
        %v6131 = vpop.permute.xlu0 %6130
        %v6134 = vadd.f32 %v6113, %v6129
        %v6135 = vadd.f32 %v6114, %v6131
        %s6136 = sld [smem:[#allocation7 + $0x49]]
        %v6137 = vstv %s6136
        %v6138 = vmul.f32 %v6137, %v5238
        %v6139 = vmul.f32 %v6137, %v5239
        %v6140 = vmul.f32 %v6137, %v5240
        %v6144 = vrot.slane %v6138, 3
        %v6145 = vrot.slane %v6139, 3
        %v6146 = vsel %vm6004, %v6144, %v6145
        %v6147 = vrot.slane %v6140, 3
        %v6148 = vsel %vm6004, %v6145, %v6147
        %6149 = vrot.lane.b32.xlu0 %v6146, 125
        %v6150 = vpop.permute.xlu0 %6149
        %6151 = vrot.lane.b32.xlu0 %v6148, 125
        %v6152 = vpop.permute.xlu0 %6151
        %v6155 = vadd.f32 %v6134, %v6150
        %v6156 = vadd.f32 %v6135, %v6152
        %s6157 = sld [smem:[#allocation7 + $0x19]]
        %v6158 = vstv %s6157
        %v6159 = vmul.f32 %v6158, %v5235
        %v6160 = vmul.f32 %v6158, %v5236
        %v6161 = vmul.f32 %v6158, %v5237
        %v6165 = vrot.slane %v6159, 3
        %v6166 = vrot.slane %v6160, 3
        %v6167 = vsel %vm6004, %v6165, %v6166
        %v6168 = vrot.slane %v6161, 3
        %v6169 = vsel %vm6004, %v6166, %v6168
        %6170 = vrot.lane.b32.xlu0 %v6167, 124
        %v6171 = vpop.permute.xlu0 %6170
        %6172 = vrot.lane.b32.xlu0 %v6169, 124
        %v6173 = vpop.permute.xlu0 %6172
        %v6176 = vadd.f32 %v6155, %v6171
        %v6177 = vadd.f32 %v6156, %v6173
        %s6178 = sld [smem:[#allocation7 + $0x4a]]
        %v6179 = vstv %s6178
        %v6180 = vmul.f32 %v6179, %v5238
        %v6181 = vmul.f32 %v6179, %v5239
        %v6182 = vmul.f32 %v6179, %v5240
        %v6186 = vrot.slane %v6180, 3
        %v6187 = vrot.slane %v6181, 3
        %v6188 = vsel %vm6004, %v6186, %v6187
        %v6189 = vrot.slane %v6182, 3
        %v6190 = vsel %vm6004, %v6187, %v6189
        %6191 = vrot.lane.b32.xlu0 %v6188, 124
        %v6192 = vpop.permute.xlu0 %6191
        %6193 = vrot.lane.b32.xlu0 %v6190, 124
        %v6194 = vpop.permute.xlu0 %6193
        %v6197 = vadd.f32 %v6176, %v6192
        %v6198 = vadd.f32 %v6177, %v6194
        %s6199 = sld [smem:[#allocation7 + $0x1a]]
        %v6200 = vstv %s6199
        %v6201 = vmul.f32 %v6200, %v5235
        %v6202 = vmul.f32 %v6200, %v5236
        %v6203 = vmul.f32 %v6200, %v5237
        %v6207 = vrot.slane %v6201, 3
        %v6208 = vrot.slane %v6202, 3
        %v6209 = vsel %vm6004, %v6207, %v6208
        %v6210 = vrot.slane %v6203, 3
        %v6211 = vsel %vm6004, %v6208, %v6210
        %6212 = vrot.lane.b32.xlu0 %v6209, 123
        %v6213 = vpop.permute.xlu0 %6212
        %6214 = vrot.lane.b32.xlu0 %v6211, 123
        %v6215 = vpop.permute.xlu0 %6214
        %v6218 = vadd.f32 %v6197, %v6213
        %v6219 = vadd.f32 %v6198, %v6215
        %s6220 = sld [smem:[#allocation7 + $0x4b]]
        %v6221 = vstv %s6220
        %v6222 = vmul.f32 %v6221, %v5238
        %v6223 = vmul.f32 %v6221, %v5239
        %v6224 = vmul.f32 %v6221, %v5240
        %v6228 = vrot.slane %v6222, 3
        %v6229 = vrot.slane %v6223, 3
        %v6230 = vsel %vm6004, %v6228, %v6229
        %v6231 = vrot.slane %v6224, 3
        %v6232 = vsel %vm6004, %v6229, %v6231
        %6233 = vrot.lane.b32.xlu0 %v6230, 123
        %v6234 = vpop.permute.xlu0 %6233
        %6235 = vrot.lane.b32.xlu0 %v6232, 123
        %v6236 = vpop.permute.xlu0 %6235
        %v6239 = vadd.f32 %v6218, %v6234
        %v6240 = vadd.f32 %v6219, %v6236
        %s6241 = sld [smem:[#allocation7 + $0x1b]]
        %v6242 = vstv %s6241
        %v6243 = vmul.f32 %v6242, %v5235
        %v6244 = vmul.f32 %v6242, %v5236
        %v6245 = vmul.f32 %v6242, %v5237
        %v6249 = vrot.slane %v6243, 3
        %v6250 = vrot.slane %v6244, 3
        %v6251 = vsel %vm6004, %v6249, %v6250
        %v6252 = vrot.slane %v6245, 3
        %v6253 = vsel %vm6004, %v6250, %v6252
        %6254 = vrot.lane.b32.xlu0 %v6251, 122
        %v6255 = vpop.permute.xlu0 %6254
        %6256 = vrot.lane.b32.xlu0 %v6253, 122
        %v6257 = vpop.permute.xlu0 %6256
        %v6260 = vadd.f32 %v6239, %v6255
        %v6261 = vadd.f32 %v6240, %v6257
        %s6262 = sld [smem:[#allocation7 + $0x4c]]
        %v6263 = vstv %s6262
        %v6264 = vmul.f32 %v6263, %v5238
        %v6265 = vmul.f32 %v6263, %v5239
        %v6266 = vmul.f32 %v6263, %v5240
        %v6270 = vrot.slane %v6264, 3
        %v6271 = vrot.slane %v6265, 3
        %v6272 = vsel %vm6004, %v6270, %v6271
        %v6273 = vrot.slane %v6266, 3
        %v6274 = vsel %vm6004, %v6271, %v6273
        %6275 = vrot.lane.b32.xlu0 %v6272, 122
        %v6276 = vpop.permute.xlu0 %6275
        %6277 = vrot.lane.b32.xlu0 %v6274, 122
        %v6278 = vpop.permute.xlu0 %6277
        %v6281 = vadd.f32 %v6260, %v6276
        %v6282 = vadd.f32 %v6261, %v6278
        %s6283 = sld [smem:[#allocation7 + $0x1c]]
        %v6284 = vstv %s6283
        %v6285 = vmul.f32 %v6284, %v5235
        %v6286 = vmul.f32 %v6284, %v5236
        %v6287 = vmul.f32 %v6284, %v5237
        %v6291 = vrot.slane %v6285, 4
        %v6292 = vrot.slane %v6286, 4
        %v6293 = vsel %vm4326, %v6291, %v6292
        %v6294 = vrot.slane %v6287, 4
        %v6295 = vsel %vm4326, %v6292, %v6294
        %v6298 = vadd.f32 %v6281, %v6293
        %v6299 = vadd.f32 %v6282, %v6295
        %s6300 = sld [smem:[#allocation7 + $0x4d]]
        %v6301 = vstv %s6300
        %v6302 = vmul.f32 %v6301, %v5238
        %v6303 = vmul.f32 %v6301, %v5239
        %v6304 = vmul.f32 %v6301, %v5240
        %v6308 = vrot.slane %v6302, 4
        %v6309 = vrot.slane %v6303, 4
        %v6310 = vsel %vm4326, %v6308, %v6309
        %v6311 = vrot.slane %v6304, 4
        %v6312 = vsel %vm4326, %v6309, %v6311
        %v6315 = vadd.f32 %v6298, %v6310
        %v6316 = vadd.f32 %v6299, %v6312
        %s6317 = sld [smem:[#allocation7 + $0x1d]]
        %v6318 = vstv %s6317
        %v6319 = vmul.f32 %v6318, %v5235
        %v6320 = vmul.f32 %v6318, %v5236
        %v6321 = vmul.f32 %v6318, %v5237
        %v6325 = vrot.slane %v6319, 4
        %v6326 = vrot.slane %v6320, 4
        %v6327 = vsel %vm4326, %v6325, %v6326
        %v6328 = vrot.slane %v6321, 4
        %v6329 = vsel %vm4326, %v6326, %v6328
        %6330 = vrot.lane.b32.xlu0 %v6327, 127
        %v6331 = vpop.permute.xlu0 %6330
        %6332 = vrot.lane.b32.xlu0 %v6329, 127
        %v6333 = vpop.permute.xlu0 %6332
        %v6336 = vadd.f32 %v6315, %v6331
        %v6337 = vadd.f32 %v6316, %v6333
        %s6338 = sld [smem:[#allocation7 + $0x4e]]
        %v6339 = vstv %s6338
        %v6340 = vmul.f32 %v6339, %v5238
        %v6341 = vmul.f32 %v6339, %v5239
        %v6342 = vmul.f32 %v6339, %v5240
        %v6346 = vrot.slane %v6340, 4
        %v6347 = vrot.slane %v6341, 4
        %v6348 = vsel %vm4326, %v6346, %v6347
        %v6349 = vrot.slane %v6342, 4
        %v6350 = vsel %vm4326, %v6347, %v6349
        %6351 = vrot.lane.b32.xlu0 %v6348, 127
        %v6352 = vpop.permute.xlu0 %6351
        %6353 = vrot.lane.b32.xlu0 %v6350, 127
        %v6354 = vpop.permute.xlu0 %6353
        %v6357 = vadd.f32 %v6336, %v6352
        %v6358 = vadd.f32 %v6337, %v6354
        %s6359 = sld [smem:[#allocation7 + $0x1e]]
        %v6360 = vstv %s6359
        %v6361 = vmul.f32 %v6360, %v5235
        %v6362 = vmul.f32 %v6360, %v5236
        %v6363 = vmul.f32 %v6360, %v5237
        %v6367 = vrot.slane %v6361, 4
        %v6368 = vrot.slane %v6362, 4
        %v6369 = vsel %vm4326, %v6367, %v6368
        %v6370 = vrot.slane %v6363, 4
        %v6371 = vsel %vm4326, %v6368, %v6370
        %6372 = vrot.lane.b32.xlu0 %v6369, 126
        %v6373 = vpop.permute.xlu0 %6372
        %6374 = vrot.lane.b32.xlu0 %v6371, 126
        %v6375 = vpop.permute.xlu0 %6374
        %v6378 = vadd.f32 %v6357, %v6373
        %v6379 = vadd.f32 %v6358, %v6375
        %s6380 = sld [smem:[#allocation7 + $0x4f]]
        %v6381 = vstv %s6380
        %v6382 = vmul.f32 %v6381, %v5238
        %v6383 = vmul.f32 %v6381, %v5239
        %v6384 = vmul.f32 %v6381, %v5240
        %v6388 = vrot.slane %v6382, 4
        %v6389 = vrot.slane %v6383, 4
        %v6390 = vsel %vm4326, %v6388, %v6389
        %v6391 = vrot.slane %v6384, 4
        %v6392 = vsel %vm4326, %v6389, %v6391
        %6393 = vrot.lane.b32.xlu0 %v6390, 126
        %v6394 = vpop.permute.xlu0 %6393
        %6395 = vrot.lane.b32.xlu0 %v6392, 126
        %v6396 = vpop.permute.xlu0 %6395
        %v6399 = vadd.f32 %v6378, %v6394
        %v6400 = vadd.f32 %v6379, %v6396
        %s6401 = sld [smem:[#allocation7 + $0x1f]]
        %v6402 = vstv %s6401
        %v6403 = vmul.f32 %v6402, %v5235
        %v6404 = vmul.f32 %v6402, %v5236
        %v6405 = vmul.f32 %v6402, %v5237
        %v6409 = vrot.slane %v6403, 4
        %v6410 = vrot.slane %v6404, 4
        %v6411 = vsel %vm4326, %v6409, %v6410
        %v6412 = vrot.slane %v6405, 4
        %v6413 = vsel %vm4326, %v6410, %v6412
        %6414 = vrot.lane.b32.xlu0 %v6411, 125
        %v6415 = vpop.permute.xlu0 %6414
        %6416 = vrot.lane.b32.xlu0 %v6413, 125
        %v6417 = vpop.permute.xlu0 %6416
        %v6420 = vadd.f32 %v6399, %v6415
        %v6421 = vadd.f32 %v6400, %v6417
        %s6422 = sld [smem:[#allocation7 + $0x50]]
        %v6423 = vstv %s6422
        %v6424 = vmul.f32 %v6423, %v5238
        %v6425 = vmul.f32 %v6423, %v5239
        %v6426 = vmul.f32 %v6423, %v5240
        %v6430 = vrot.slane %v6424, 4
        %v6431 = vrot.slane %v6425, 4
        %v6432 = vsel %vm4326, %v6430, %v6431
        %v6433 = vrot.slane %v6426, 4
        %v6434 = vsel %vm4326, %v6431, %v6433
        %6435 = vrot.lane.b32.xlu0 %v6432, 125
        %v6436 = vpop.permute.xlu0 %6435
        %6437 = vrot.lane.b32.xlu0 %v6434, 125
        %v6438 = vpop.permute.xlu0 %6437
        %v6441 = vadd.f32 %v6420, %v6436
        %v6442 = vadd.f32 %v6421, %v6438
        %s6443 = sld [smem:[#allocation7 + $0x20]]
        %v6444 = vstv %s6443
        %v6445 = vmul.f32 %v6444, %v5235
        %v6446 = vmul.f32 %v6444, %v5236
        %v6447 = vmul.f32 %v6444, %v5237
        %v6451 = vrot.slane %v6445, 4
        %v6452 = vrot.slane %v6446, 4
        %v6453 = vsel %vm4326, %v6451, %v6452
        %v6454 = vrot.slane %v6447, 4
        %v6455 = vsel %vm4326, %v6452, %v6454
        %6456 = vrot.lane.b32.xlu0 %v6453, 124
        %v6457 = vpop.permute.xlu0 %6456
        %6458 = vrot.lane.b32.xlu0 %v6455, 124
        %v6459 = vpop.permute.xlu0 %6458
        %v6462 = vadd.f32 %v6441, %v6457
        %v6463 = vadd.f32 %v6442, %v6459
        %s6464 = sld [smem:[#allocation7 + $0x51]]
        %v6465 = vstv %s6464
        %v6466 = vmul.f32 %v6465, %v5238
        %v6467 = vmul.f32 %v6465, %v5239
        %v6468 = vmul.f32 %v6465, %v5240
        %v6472 = vrot.slane %v6466, 4
        %v6473 = vrot.slane %v6467, 4
        %v6474 = vsel %vm4326, %v6472, %v6473
        %v6475 = vrot.slane %v6468, 4
        %v6476 = vsel %vm4326, %v6473, %v6475
        %6477 = vrot.lane.b32.xlu0 %v6474, 124
        %v6478 = vpop.permute.xlu0 %6477
        %6479 = vrot.lane.b32.xlu0 %v6476, 124
        %v6480 = vpop.permute.xlu0 %6479
        %v6483 = vadd.f32 %v6462, %v6478
        %v6484 = vadd.f32 %v6463, %v6480
        %s6485 = sld [smem:[#allocation7 + $0x21]]
        %v6486 = vstv %s6485
        %v6487 = vmul.f32 %v6486, %v5235
        %v6488 = vmul.f32 %v6486, %v5236
        %v6489 = vmul.f32 %v6486, %v5237
        %v6493 = vrot.slane %v6487, 4
        %v6494 = vrot.slane %v6488, 4
        %v6495 = vsel %vm4326, %v6493, %v6494
        %v6496 = vrot.slane %v6489, 4
        %v6497 = vsel %vm4326, %v6494, %v6496
        %6498 = vrot.lane.b32.xlu0 %v6495, 123
        %v6499 = vpop.permute.xlu0 %6498
        %6500 = vrot.lane.b32.xlu0 %v6497, 123
        %v6501 = vpop.permute.xlu0 %6500
        %v6504 = vadd.f32 %v6483, %v6499
        %v6505 = vadd.f32 %v6484, %v6501
        %s6506 = sld [smem:[#allocation7 + $0x52]]
        %v6507 = vstv %s6506
        %v6508 = vmul.f32 %v6507, %v5238
        %v6509 = vmul.f32 %v6507, %v5239
        %v6510 = vmul.f32 %v6507, %v5240
        %v6514 = vrot.slane %v6508, 4
        %v6515 = vrot.slane %v6509, 4
        %v6516 = vsel %vm4326, %v6514, %v6515
        %v6517 = vrot.slane %v6510, 4
        %v6518 = vsel %vm4326, %v6515, %v6517
        %6519 = vrot.lane.b32.xlu0 %v6516, 123
        %v6520 = vpop.permute.xlu0 %6519
        %6521 = vrot.lane.b32.xlu0 %v6518, 123
        %v6522 = vpop.permute.xlu0 %6521
        %v6525 = vadd.f32 %v6504, %v6520
        %v6526 = vadd.f32 %v6505, %v6522
        %s6527 = sld [smem:[#allocation7 + $0x22]]
        %v6528 = vstv %s6527
        %v6529 = vmul.f32 %v6528, %v5235
        %v6530 = vmul.f32 %v6528, %v5236
        %v6531 = vmul.f32 %v6528, %v5237
        %v6535 = vrot.slane %v6529, 4
        %v6536 = vrot.slane %v6530, 4
        %v6537 = vsel %vm4326, %v6535, %v6536
        %v6538 = vrot.slane %v6531, 4
        %v6539 = vsel %vm4326, %v6536, %v6538
        %6540 = vrot.lane.b32.xlu0 %v6537, 122
        %v6541 = vpop.permute.xlu0 %6540
        %6542 = vrot.lane.b32.xlu0 %v6539, 122
        %v6543 = vpop.permute.xlu0 %6542
        %v6546 = vadd.f32 %v6525, %v6541
        %v6547 = vadd.f32 %v6526, %v6543
        %s6548 = sld [smem:[#allocation7 + $0x53]]
        %v6549 = vstv %s6548
        %v6550 = vmul.f32 %v6549, %v5238
        %v6551 = vmul.f32 %v6549, %v5239
        %v6552 = vmul.f32 %v6549, %v5240
        %v6556 = vrot.slane %v6550, 4
        %v6557 = vrot.slane %v6551, 4
        %v6558 = vsel %vm4326, %v6556, %v6557
        %v6559 = vrot.slane %v6552, 4
        %v6560 = vsel %vm4326, %v6557, %v6559
        %6561 = vrot.lane.b32.xlu0 %v6558, 122
        %v6562 = vpop.permute.xlu0 %6561
        %6563 = vrot.lane.b32.xlu0 %v6560, 122
        %v6564 = vpop.permute.xlu0 %6563
        %v6567 = vadd.f32 %v6546, %v6562
        %v6568 = vadd.f32 %v6547, %v6564
        %s6569 = sld [smem:[#allocation7 + $0x23]]
        %v6570 = vstv %s6569
        %v6571 = vmul.f32 %v6570, %v5235
        %v6572 = vmul.f32 %v6570, %v5236
        %v6573 = vmul.f32 %v6570, %v5237
        %vm6577 = vcmask 1042432
        %v6578 = vrot.slane %v6571, 5
        %v6579 = vrot.slane %v6572, 5
        %v6580 = vsel %vm6577, %v6578, %v6579
        %v6581 = vrot.slane %v6573, 5
        %v6582 = vsel %vm6577, %v6579, %v6581
        %v6585 = vadd.f32 %v6567, %v6580
        %v6586 = vadd.f32 %v6568, %v6582
        %s6587 = sld [smem:[#allocation7 + $0x54]]
        %v6588 = vstv %s6587
        %v6589 = vmul.f32 %v6588, %v5238
        %v6590 = vmul.f32 %v6588, %v5239
        %v6591 = vmul.f32 %v6588, %v5240
        %v6595 = vrot.slane %v6589, 5
        %v6596 = vrot.slane %v6590, 5
        %v6597 = vsel %vm6577, %v6595, %v6596
        %v6598 = vrot.slane %v6591, 5
        %v6599 = vsel %vm6577, %v6596, %v6598
        %v6602 = vadd.f32 %v6585, %v6597
        %v6603 = vadd.f32 %v6586, %v6599
        %s6604 = sld [smem:[#allocation7 + $0x24]]
        %v6605 = vstv %s6604
        %v6606 = vmul.f32 %v6605, %v5235
        %v6607 = vmul.f32 %v6605, %v5236
        %v6608 = vmul.f32 %v6605, %v5237
        %v6612 = vrot.slane %v6606, 5
        %v6613 = vrot.slane %v6607, 5
        %v6614 = vsel %vm6577, %v6612, %v6613
        %v6615 = vrot.slane %v6608, 5
        %v6616 = vsel %vm6577, %v6613, %v6615
        %6617 = vrot.lane.b32.xlu0 %v6614, 127
        %v6618 = vpop.permute.xlu0 %6617
        %6619 = vrot.lane.b32.xlu0 %v6616, 127
        %v6620 = vpop.permute.xlu0 %6619
        %v6623 = vadd.f32 %v6602, %v6618
        %v6624 = vadd.f32 %v6603, %v6620
        %s6625 = sld [smem:[#allocation7 + $0x55]]
        %v6626 = vstv %s6625
        %v6627 = vmul.f32 %v6626, %v5238
        %v6628 = vmul.f32 %v6626, %v5239
        %v6629 = vmul.f32 %v6626, %v5240
        %v6633 = vrot.slane %v6627, 5
        %v6634 = vrot.slane %v6628, 5
        %v6635 = vsel %vm6577, %v6633, %v6634
        %v6636 = vrot.slane %v6629, 5
        %v6637 = vsel %vm6577, %v6634, %v6636
        %6638 = vrot.lane.b32.xlu0 %v6635, 127
        %v6639 = vpop.permute.xlu0 %6638
        %6640 = vrot.lane.b32.xlu0 %v6637, 127
        %v6641 = vpop.permute.xlu0 %6640
        %v6644 = vadd.f32 %v6623, %v6639
        %v6645 = vadd.f32 %v6624, %v6641
        %s6646 = sld [smem:[#allocation7 + $0x25]]
        %v6647 = vstv %s6646
        %v6648 = vmul.f32 %v6647, %v5235
        %v6649 = vmul.f32 %v6647, %v5236
        %v6650 = vmul.f32 %v6647, %v5237
        %v6654 = vrot.slane %v6648, 5
        %v6655 = vrot.slane %v6649, 5
        %v6656 = vsel %vm6577, %v6654, %v6655
        %v6657 = vrot.slane %v6650, 5
        %v6658 = vsel %vm6577, %v6655, %v6657
        %6659 = vrot.lane.b32.xlu0 %v6656, 126
        %v6660 = vpop.permute.xlu0 %6659
        %6661 = vrot.lane.b32.xlu0 %v6658, 126
        %v6662 = vpop.permute.xlu0 %6661
        %v6665 = vadd.f32 %v6644, %v6660
        %v6666 = vadd.f32 %v6645, %v6662
        %s6667 = sld [smem:[#allocation7 + $0x56]]
        %v6668 = vstv %s6667
        %v6669 = vmul.f32 %v6668, %v5238
        %v6670 = vmul.f32 %v6668, %v5239
        %v6671 = vmul.f32 %v6668, %v5240
        %v6675 = vrot.slane %v6669, 5
        %v6676 = vrot.slane %v6670, 5
        %v6677 = vsel %vm6577, %v6675, %v6676
        %v6678 = vrot.slane %v6671, 5
        %v6679 = vsel %vm6577, %v6676, %v6678
        %6680 = vrot.lane.b32.xlu0 %v6677, 126
        %v6681 = vpop.permute.xlu0 %6680
        %6682 = vrot.lane.b32.xlu0 %v6679, 126
        %v6683 = vpop.permute.xlu0 %6682
        %v6686 = vadd.f32 %v6665, %v6681
        %v6687 = vadd.f32 %v6666, %v6683
        %s6688 = sld [smem:[#allocation7 + $0x26]]
        %v6689 = vstv %s6688
        %v6690 = vmul.f32 %v6689, %v5235
        %v6691 = vmul.f32 %v6689, %v5236
        %v6692 = vmul.f32 %v6689, %v5237
        %v6696 = vrot.slane %v6690, 5
        %v6697 = vrot.slane %v6691, 5
        %v6698 = vsel %vm6577, %v6696, %v6697
        %v6699 = vrot.slane %v6692, 5
        %v6700 = vsel %vm6577, %v6697, %v6699
        %6701 = vrot.lane.b32.xlu0 %v6698, 125
        %v6702 = vpop.permute.xlu0 %6701
        %6703 = vrot.lane.b32.xlu0 %v6700, 125
        %v6704 = vpop.permute.xlu0 %6703
        %v6707 = vadd.f32 %v6686, %v6702
        %v6708 = vadd.f32 %v6687, %v6704
        %s6709 = sld [smem:[#allocation7 + $0x57]]
        %v6710 = vstv %s6709
        %v6711 = vmul.f32 %v6710, %v5238
        %v6712 = vmul.f32 %v6710, %v5239
        %v6713 = vmul.f32 %v6710, %v5240
        %v6717 = vrot.slane %v6711, 5
        %v6718 = vrot.slane %v6712, 5
        %v6719 = vsel %vm6577, %v6717, %v6718
        %v6720 = vrot.slane %v6713, 5
        %v6721 = vsel %vm6577, %v6718, %v6720
        %6722 = vrot.lane.b32.xlu0 %v6719, 125
        %v6723 = vpop.permute.xlu0 %6722
        %6724 = vrot.lane.b32.xlu0 %v6721, 125
        %v6725 = vpop.permute.xlu0 %6724
        %v6728 = vadd.f32 %v6707, %v6723
        %v6729 = vadd.f32 %v6708, %v6725
        %s6730 = sld [smem:[#allocation7 + $0x27]]
        %v6731 = vstv %s6730
        %v6732 = vmul.f32 %v6731, %v5235
        %v6733 = vmul.f32 %v6731, %v5236
        %v6734 = vmul.f32 %v6731, %v5237
        %v6738 = vrot.slane %v6732, 5
        %v6739 = vrot.slane %v6733, 5
        %v6740 = vsel %vm6577, %v6738, %v6739
        %v6741 = vrot.slane %v6734, 5
        %v6742 = vsel %vm6577, %v6739, %v6741
        %6743 = vrot.lane.b32.xlu0 %v6740, 124
        %v6744 = vpop.permute.xlu0 %6743
        %6745 = vrot.lane.b32.xlu0 %v6742, 124
        %v6746 = vpop.permute.xlu0 %6745
        %v6749 = vadd.f32 %v6728, %v6744
        %v6750 = vadd.f32 %v6729, %v6746
        %s6751 = sld [smem:[#allocation7 + $0x58]]
        %v6752 = vstv %s6751
        %v6753 = vmul.f32 %v6752, %v5238
        %v6754 = vmul.f32 %v6752, %v5239
        %v6755 = vmul.f32 %v6752, %v5240
        %v6759 = vrot.slane %v6753, 5
        %v6760 = vrot.slane %v6754, 5
        %v6761 = vsel %vm6577, %v6759, %v6760
        %v6762 = vrot.slane %v6755, 5
        %v6763 = vsel %vm6577, %v6760, %v6762
        %6764 = vrot.lane.b32.xlu0 %v6761, 124
        %v6765 = vpop.permute.xlu0 %6764
        %6766 = vrot.lane.b32.xlu0 %v6763, 124
        %v6767 = vpop.permute.xlu0 %6766
        %v6770 = vadd.f32 %v6749, %v6765
        %v6771 = vadd.f32 %v6750, %v6767
        %s6772 = sld [smem:[#allocation7 + $0x28]]
        %v6773 = vstv %s6772
        %v6774 = vmul.f32 %v6773, %v5235
        %v6775 = vmul.f32 %v6773, %v5236
        %v6776 = vmul.f32 %v6773, %v5237
        %v6780 = vrot.slane %v6774, 5
        %v6781 = vrot.slane %v6775, 5
        %v6782 = vsel %vm6577, %v6780, %v6781
        %v6783 = vrot.slane %v6776, 5
        %v6784 = vsel %vm6577, %v6781, %v6783
        %6785 = vrot.lane.b32.xlu0 %v6782, 123
        %v6786 = vpop.permute.xlu0 %6785
        %6787 = vrot.lane.b32.xlu0 %v6784, 123
        %v6788 = vpop.permute.xlu0 %6787
        %v6791 = vadd.f32 %v6770, %v6786
        %v6792 = vadd.f32 %v6771, %v6788
        %s6793 = sld [smem:[#allocation7 + $0x59]]
        %v6794 = vstv %s6793
        %v6795 = vmul.f32 %v6794, %v5238
        %v6796 = vmul.f32 %v6794, %v5239
        %v6797 = vmul.f32 %v6794, %v5240
        %v6801 = vrot.slane %v6795, 5
        %v6802 = vrot.slane %v6796, 5
        %v6803 = vsel %vm6577, %v6801, %v6802
        %v6804 = vrot.slane %v6797, 5
        %v6805 = vsel %vm6577, %v6802, %v6804
        %6806 = vrot.lane.b32.xlu0 %v6803, 123
        %v6807 = vpop.permute.xlu0 %6806
        %6808 = vrot.lane.b32.xlu0 %v6805, 123
        %v6809 = vpop.permute.xlu0 %6808
        %v6812 = vadd.f32 %v6791, %v6807
        %v6813 = vadd.f32 %v6792, %v6809
        %s6814 = sld [smem:[#allocation7 + $0x29]]
        %v6815 = vstv %s6814
        %v6816 = vmul.f32 %v6815, %v5235
        %v6817 = vmul.f32 %v6815, %v5236
        %v6818 = vmul.f32 %v6815, %v5237
        %v6822 = vrot.slane %v6816, 5
        %v6823 = vrot.slane %v6817, 5
        %v6824 = vsel %vm6577, %v6822, %v6823
        %v6825 = vrot.slane %v6818, 5
        %v6826 = vsel %vm6577, %v6823, %v6825
        %6827 = vrot.lane.b32.xlu0 %v6824, 122
        %v6828 = vpop.permute.xlu0 %6827
        %6829 = vrot.lane.b32.xlu0 %v6826, 122
        %v6830 = vpop.permute.xlu0 %6829
        %v6833 = vadd.f32 %v6812, %v6828
        %v6834 = vadd.f32 %v6813, %v6830
        %s6835 = sld [smem:[#allocation7 + $0x5a]]
        %v6836 = vstv %s6835
        %v6837 = vmul.f32 %v6836, %v5238
        %v6838 = vmul.f32 %v6836, %v5239
        %v6839 = vmul.f32 %v6836, %v5240
        %v6843 = vrot.slane %v6837, 5
        %v6844 = vrot.slane %v6838, 5
        %v6845 = vsel %vm6577, %v6843, %v6844
        %v6846 = vrot.slane %v6839, 5
        %v6847 = vsel %vm6577, %v6844, %v6846
        %6848 = vrot.lane.b32.xlu0 %v6845, 122
        %v6849 = vpop.permute.xlu0 %6848
        %6850 = vrot.lane.b32.xlu0 %v6847, 122
        %v6851 = vpop.permute.xlu0 %6850
        %v6854 = vadd.f32 %v6833, %v6849
        %v6855 = vadd.f32 %v6834, %v6851
        %s6856 = sld [smem:[#allocation7 + $0x2a]]
        %v6857 = vstv %s6856
        %v6858 = vmul.f32 %v6857, %v5235
        %v6859 = vmul.f32 %v6857, %v5236
        %v6860 = vmul.f32 %v6857, %v5237
        %vm6864 = vcmask 1041408
        %v6865 = vrot.slane %v6858, 6
        %v6866 = vrot.slane %v6859, 6
        %v6867 = vsel %vm6864, %v6865, %v6866
        %v6868 = vrot.slane %v6860, 6
        %v6869 = vsel %vm6864, %v6866, %v6868
        %v6872 = vadd.f32 %v6854, %v6867
        %v6873 = vadd.f32 %v6855, %v6869
        %s6874 = sld [smem:[#allocation7 + $0x5b]]
        %v6875 = vstv %s6874
        %v6876 = vmul.f32 %v6875, %v5238
        %v6877 = vmul.f32 %v6875, %v5239
        %v6878 = vmul.f32 %v6875, %v5240
        %v6882 = vrot.slane %v6876, 6
        %v6883 = vrot.slane %v6877, 6
        %v6884 = vsel %vm6864, %v6882, %v6883
        %v6885 = vrot.slane %v6878, 6
        %v6886 = vsel %vm6864, %v6883, %v6885
        %v6889 = vadd.f32 %v6872, %v6884
        %v6890 = vadd.f32 %v6873, %v6886
        %s6891 = sld [smem:[#allocation7 + $0x2b]]
        %v6892 = vstv %s6891
        %v6893 = vmul.f32 %v6892, %v5235
        %v6894 = vmul.f32 %v6892, %v5236
        %v6895 = vmul.f32 %v6892, %v5237
        %v6899 = vrot.slane %v6893, 6
        %v6900 = vrot.slane %v6894, 6
        %v6901 = vsel %vm6864, %v6899, %v6900
        %v6902 = vrot.slane %v6895, 6
        %v6903 = vsel %vm6864, %v6900, %v6902
        %6904 = vrot.lane.b32.xlu0 %v6901, 127
        %v6905 = vpop.permute.xlu0 %6904
        %6906 = vrot.lane.b32.xlu0 %v6903, 127
        %v6907 = vpop.permute.xlu0 %6906
        %v6910 = vadd.f32 %v6889, %v6905
        %v6911 = vadd.f32 %v6890, %v6907
        %s6912 = sld [smem:[#allocation7 + $0x5c]]
        %v6913 = vstv %s6912
        %v6914 = vmul.f32 %v6913, %v5238
        %v6915 = vmul.f32 %v6913, %v5239
        %v6916 = vmul.f32 %v6913, %v5240
        %v6920 = vrot.slane %v6914, 6
        %v6921 = vrot.slane %v6915, 6
        %v6922 = vsel %vm6864, %v6920, %v6921
        %v6923 = vrot.slane %v6916, 6
        %v6924 = vsel %vm6864, %v6921, %v6923
        %6925 = vrot.lane.b32.xlu0 %v6922, 127
        %v6926 = vpop.permute.xlu0 %6925
        %6927 = vrot.lane.b32.xlu0 %v6924, 127
        %v6928 = vpop.permute.xlu0 %6927
        %v6931 = vadd.f32 %v6910, %v6926
        %v6932 = vadd.f32 %v6911, %v6928
        %s6933 = sld [smem:[#allocation7 + $0x2c]]
        %v6934 = vstv %s6933
        %v6935 = vmul.f32 %v6934, %v5235
        %v6936 = vmul.f32 %v6934, %v5236
        %v6937 = vmul.f32 %v6934, %v5237
        %v6941 = vrot.slane %v6935, 6
        %v6942 = vrot.slane %v6936, 6
        %v6943 = vsel %vm6864, %v6941, %v6942
        %v6944 = vrot.slane %v6937, 6
        %v6945 = vsel %vm6864, %v6942, %v6944
        %6946 = vrot.lane.b32.xlu0 %v6943, 126
        %v6947 = vpop.permute.xlu0 %6946
        %6948 = vrot.lane.b32.xlu0 %v6945, 126
        %v6949 = vpop.permute.xlu0 %6948
        %v6952 = vadd.f32 %v6931, %v6947
        %v6953 = vadd.f32 %v6932, %v6949
        %s6954 = sld [smem:[#allocation7 + $0x5d]]
        %v6955 = vstv %s6954
        %v6956 = vmul.f32 %v6955, %v5238
        %v6957 = vmul.f32 %v6955, %v5239
        %v6958 = vmul.f32 %v6955, %v5240
        %v6962 = vrot.slane %v6956, 6
        %v6963 = vrot.slane %v6957, 6
        %v6964 = vsel %vm6864, %v6962, %v6963
        %v6965 = vrot.slane %v6958, 6
        %v6966 = vsel %vm6864, %v6963, %v6965
        %6967 = vrot.lane.b32.xlu0 %v6964, 126
        %v6968 = vpop.permute.xlu0 %6967
        %6969 = vrot.lane.b32.xlu0 %v6966, 126
        %v6970 = vpop.permute.xlu0 %6969
        %v6973 = vadd.f32 %v6952, %v6968
        %v6974 = vadd.f32 %v6953, %v6970
        %s6975 = sld [smem:[#allocation7 + $0x2d]]
        %v6976 = vstv %s6975
        %v6977 = vmul.f32 %v6976, %v5235
        %v6978 = vmul.f32 %v6976, %v5236
        %v6979 = vmul.f32 %v6976, %v5237
        %v6983 = vrot.slane %v6977, 6
        %v6984 = vrot.slane %v6978, 6
        %v6985 = vsel %vm6864, %v6983, %v6984
        %v6986 = vrot.slane %v6979, 6
        %v6987 = vsel %vm6864, %v6984, %v6986
        %6988 = vrot.lane.b32.xlu0 %v6985, 125
        %v6989 = vpop.permute.xlu0 %6988
        %6990 = vrot.lane.b32.xlu0 %v6987, 125
        %v6991 = vpop.permute.xlu0 %6990
        %v6994 = vadd.f32 %v6973, %v6989
        %v6995 = vadd.f32 %v6974, %v6991
        %s6996 = sld [smem:[#allocation7 + $0x5e]]
        %v6997 = vstv %s6996
        %v6998 = vmul.f32 %v6997, %v5238
        %v6999 = vmul.f32 %v6997, %v5239
        %v7000 = vmul.f32 %v6997, %v5240
        %v7004 = vrot.slane %v6998, 6
        %v7005 = vrot.slane %v6999, 6
        %v7006 = vsel %vm6864, %v7004, %v7005
        %v7007 = vrot.slane %v7000, 6
        %v7008 = vsel %vm6864, %v7005, %v7007
        %7009 = vrot.lane.b32.xlu0 %v7006, 125
        %v7010 = vpop.permute.xlu0 %7009
        %7011 = vrot.lane.b32.xlu0 %v7008, 125
        %v7012 = vpop.permute.xlu0 %7011
        %v7015 = vadd.f32 %v6994, %v7010
        %v7016 = vadd.f32 %v6995, %v7012
        %s7017 = sld [smem:[#allocation7 + $0x2e]]
        %v7018 = vstv %s7017
        %v7019 = vmul.f32 %v7018, %v5235
        %v7020 = vmul.f32 %v7018, %v5236
        %v7021 = vmul.f32 %v7018, %v5237
        %v7025 = vrot.slane %v7019, 6
        %v7026 = vrot.slane %v7020, 6
        %v7027 = vsel %vm6864, %v7025, %v7026
        %v7028 = vrot.slane %v7021, 6
        %v7029 = vsel %vm6864, %v7026, %v7028
        %7030 = vrot.lane.b32.xlu0 %v7027, 124
        %v7031 = vpop.permute.xlu0 %7030
        %7032 = vrot.lane.b32.xlu0 %v7029, 124
        %v7033 = vpop.permute.xlu0 %7032
        %v7036 = vadd.f32 %v7015, %v7031
        %v7037 = vadd.f32 %v7016, %v7033
        %s7038 = sld [smem:[#allocation7 + $0x5f]]
        %v7039 = vstv %s7038
        %v7040 = vmul.f32 %v7039, %v5238
        %v7041 = vmul.f32 %v7039, %v5239
        %v7042 = vmul.f32 %v7039, %v5240
        %v7046 = vrot.slane %v7040, 6
        %v7047 = vrot.slane %v7041, 6
        %v7048 = vsel %vm6864, %v7046, %v7047
        %v7049 = vrot.slane %v7042, 6
        %v7050 = vsel %vm6864, %v7047, %v7049
        %7051 = vrot.lane.b32.xlu0 %v7048, 124
        %v7052 = vpop.permute.xlu0 %7051
        %7053 = vrot.lane.b32.xlu0 %v7050, 124
        %v7054 = vpop.permute.xlu0 %7053
        %v7057 = vadd.f32 %v7036, %v7052
        %v7058 = vadd.f32 %v7037, %v7054
        %s7059 = sld [smem:[#allocation7 + $0x2f]]
        %v7060 = vstv %s7059
        %v7061 = vmul.f32 %v7060, %v5235
        %v7062 = vmul.f32 %v7060, %v5236
        %v7063 = vmul.f32 %v7060, %v5237
        %v7067 = vrot.slane %v7061, 6
        %v7068 = vrot.slane %v7062, 6
        %v7069 = vsel %vm6864, %v7067, %v7068
        %v7070 = vrot.slane %v7063, 6
        %v7071 = vsel %vm6864, %v7068, %v7070
        %7072 = vrot.lane.b32.xlu0 %v7069, 123
        %v7073 = vpop.permute.xlu0 %7072
        %7074 = vrot.lane.b32.xlu0 %v7071, 123
        %v7075 = vpop.permute.xlu0 %7074
        %v7078 = vadd.f32 %v7057, %v7073
        %v7079 = vadd.f32 %v7058, %v7075
        %s7080 = sld [smem:[#allocation7 + $0x60]]
        %v7081 = vstv %s7080
        %v7082 = vmul.f32 %v7081, %v5238
        %v7083 = vmul.f32 %v7081, %v5239
        %v7084 = vmul.f32 %v7081, %v5240
        %v7088 = vrot.slane %v7082, 6
        %v7089 = vrot.slane %v7083, 6
        %v7090 = vsel %vm6864, %v7088, %v7089
        %v7091 = vrot.slane %v7084, 6
        %v7092 = vsel %vm6864, %v7089, %v7091
        %7093 = vrot.lane.b32.xlu0 %v7090, 123
        %v7094 = vpop.permute.xlu0 %7093
        %7095 = vrot.lane.b32.xlu0 %v7092, 123
        %v7096 = vpop.permute.xlu0 %7095
        %v7099 = vadd.f32 %v7078, %v7094
        %v7100 = vadd.f32 %v7079, %v7096
        %s7101 = sld [smem:[#allocation7 + $0x30]]
        %v7102 = vstv %s7101
        %v7103 = vmul.f32 %v7102, %v5235
        %v7104 = vmul.f32 %v7102, %v5236
        %v7105 = vmul.f32 %v7102, %v5237
        %v7109 = vrot.slane %v7103, 6
        %v7110 = vrot.slane %v7104, 6
        %v7111 = vsel %vm6864, %v7109, %v7110
        %v7112 = vrot.slane %v7105, 6
        %v7113 = vsel %vm6864, %v7110, %v7112
        %7114 = vrot.lane.b32.xlu0 %v7111, 122
        %v7115 = vpop.permute.xlu0 %7114
        %7116 = vrot.lane.b32.xlu0 %v7113, 122
        %v7117 = vpop.permute.xlu0 %7116
        %v7120 = vadd.f32 %v7099, %v7115
        %v7121 = vadd.f32 %v7100, %v7117
        %s7122 = sld [smem:[#allocation7 + $0x61]]
        %v7123 = vstv %s7122
        %v7124 = vmul.f32 %v7123, %v5238
        %v7125 = vmul.f32 %v7123, %v5239
        %v7126 = vmul.f32 %v7123, %v5240
        %v7130 = vrot.slane %v7124, 6
        %v7131 = vrot.slane %v7125, 6
        %v7132 = vsel %vm6864, %v7130, %v7131
        %v7133 = vrot.slane %v7126, 6
        %v7134 = vsel %vm6864, %v7131, %v7133
        %7135 = vrot.lane.b32.xlu0 %v7132, 122
        %v7136 = vpop.permute.xlu0 %7135
        %7137 = vrot.lane.b32.xlu0 %v7134, 122
        %v7138 = vpop.permute.xlu0 %7137
        %v7141 = vadd.f32 %v7120, %v7136
        %v7142 = vadd.f32 %v7121, %v7138
        %v7143 = vxor.u32 %v7141, 2147483648
        %v7144 = vxor.u32 %v7142, 2147483648
        %v7145 = vmul.f32 %v7143, 1.442695
        %v7146 = vpow.pop %v7145
        %v7147 = vmul.f32 %v7144, 1.442695
        %v7148 = vpow.pop %v7147
        %v7149 = vadd.f32 %v7146, 1.0
        %v7150 = vadd.f32 %v7148, 1.0
        %v7151 = vrcp.pop %v7149
        %v7152 = vmul.f32 1.0, %v7151
        %v7153 = vrcp.pop %v7150
        %v7154 = vmul.f32 1.0, %v7153
        %v7155 = vlaneseq
        %v7156 = vshrl.u32 %v7155, 7
        %v7157 = vsub.s32 0, %v7156
        %v7158 = vrot.slane %v7152, %v7157
        %7160 = vbcast.lane.b32.xlu0 %v7158, 256
        %v7161 = vpop.permute.xlu0 %7160
        %s7163 = sor.u32 256, 8
        %7164 = vbcast.lane.b32.xlu0 %v7158, %s7163
        %v7165 = vpop.permute.xlu0 %7164
        %v7166 = vlaneseq
        %v7167 = vshrl.u32 %v7166, 7
        %v7168 = vsub.s32 1, %v7167
        %v7169 = vrot.slane %v7152, %v7168
        %7171 = vbcast.lane.b32.xlu0 %v7169, 256
        %v7172 = vpop.permute.xlu0 %7171
        %s7174 = sor.u32 256, 8
        %7175 = vbcast.lane.b32.xlu0 %v7169, %s7174
        %v7176 = vpop.permute.xlu0 %7175
        %v7177 = vlaneseq
        %v7178 = vshrl.u32 %v7177, 7
        %v7179 = vsub.s32 2, %v7178
        %v7180 = vrot.slane %v7152, %v7179
        %7182 = vbcast.lane.b32.xlu0 %v7180, 256
        %v7183 = vpop.permute.xlu0 %7182
        %s7185 = sor.u32 256, 8
        %7186 = vbcast.lane.b32.xlu0 %v7180, %s7185
        %v7187 = vpop.permute.xlu0 %7186
        %v7188 = vlaneseq
        %v7189 = vshrl.u32 %v7188, 7
        %v7190 = vsub.s32 3, %v7189
        %v7191 = vrot.slane %v7152, %v7190
        %7193 = vbcast.lane.b32.xlu0 %v7191, 256
        %v7194 = vpop.permute.xlu0 %7193
        %s7196 = sor.u32 256, 8
        %7197 = vbcast.lane.b32.xlu0 %v7191, %s7196
        %v7198 = vpop.permute.xlu0 %7197
        %v7199 = vlaneseq
        %v7200 = vshrl.u32 %v7199, 7
        %v7201 = vsub.s32 4, %v7200
        %v7202 = vrot.slane %v7152, %v7201
        %7204 = vbcast.lane.b32.xlu0 %v7202, 256
        %v7205 = vpop.permute.xlu0 %7204
        %s7207 = sor.u32 256, 8
        %7208 = vbcast.lane.b32.xlu0 %v7202, %s7207
        %v7209 = vpop.permute.xlu0 %7208
        %v7210 = vlaneseq
        %v7211 = vshrl.u32 %v7210, 7
        %v7212 = vsub.s32 5, %v7211
        %v7213 = vrot.slane %v7152, %v7212
        %7215 = vbcast.lane.b32.xlu0 %v7213, 256
        %v7216 = vpop.permute.xlu0 %7215
        %s7218 = sor.u32 256, 8
        %7219 = vbcast.lane.b32.xlu0 %v7213, %s7218
        %v7220 = vpop.permute.xlu0 %7219
        %v7221 = vlaneseq
        %v7222 = vshrl.u32 %v7221, 7
        %v7223 = vsub.s32 6, %v7222
        %v7224 = vrot.slane %v7152, %v7223
        %7226 = vbcast.lane.b32.xlu0 %v7224, 256
        %v7227 = vpop.permute.xlu0 %7226
        %s7229 = sor.u32 256, 8
        %7230 = vbcast.lane.b32.xlu0 %v7224, %s7229
        %v7231 = vpop.permute.xlu0 %7230
        %v7232 = vlaneseq
        %v7233 = vshrl.u32 %v7232, 7
        %v7234 = vsub.s32 7, %v7233
        %v7235 = vrot.slane %v7152, %v7234
        %7237 = vbcast.lane.b32.xlu0 %v7235, 256
        %v7238 = vpop.permute.xlu0 %7237
        %s7240 = sor.u32 256, 8
        %7241 = vbcast.lane.b32.xlu0 %v7235, %s7240
        %v7242 = vpop.permute.xlu0 %7241
        %v7243 = vlaneseq
        %v7244 = vshrl.u32 %v7243, 7
        %v7245 = vsub.s32 0, %v7244
        %v7246 = vrot.slane %v7154, %v7245
        %7248 = vbcast.lane.b32.xlu0 %v7246, 256
        %v7249 = vpop.permute.xlu0 %7248
        %s7251 = sor.u32 256, 8
        %7252 = vbcast.lane.b32.xlu0 %v7246, %s7251
        %v7253 = vpop.permute.xlu0 %7252
        %v7254 = vlaneseq
        %v7255 = vshrl.u32 %v7254, 7
        %v7256 = vsub.s32 1, %v7255
        %v7257 = vrot.slane %v7154, %v7256
        %7259 = vbcast.lane.b32.xlu0 %v7257, 256
        %v7260 = vpop.permute.xlu0 %7259
        %s7262 = sor.u32 256, 8
        %7263 = vbcast.lane.b32.xlu0 %v7257, %s7262
        %v7264 = vpop.permute.xlu0 %7263
        %v7265 = vlaneseq
        %v7266 = vshrl.u32 %v7265, 7
        %v7267 = vsub.s32 2, %v7266
        %v7268 = vrot.slane %v7154, %v7267
        %7270 = vbcast.lane.b32.xlu0 %v7268, 256
        %v7271 = vpop.permute.xlu0 %7270
        %s7273 = sor.u32 256, 8
        %7274 = vbcast.lane.b32.xlu0 %v7268, %s7273
        %v7275 = vpop.permute.xlu0 %7274
        %v7276 = vlaneseq
        %v7277 = vshrl.u32 %v7276, 7
        %v7278 = vsub.s32 3, %v7277
        %v7279 = vrot.slane %v7154, %v7278
        %7281 = vbcast.lane.b32.xlu0 %v7279, 256
        %v7282 = vpop.permute.xlu0 %7281
        %s7284 = sor.u32 256, 8
        %7285 = vbcast.lane.b32.xlu0 %v7279, %s7284
        %v7286 = vpop.permute.xlu0 %7285
        %v7287 = vlaneseq
        %v7288 = vshrl.u32 %v7287, 7
        %v7289 = vsub.s32 4, %v7288
        %v7290 = vrot.slane %v7154, %v7289
        %7292 = vbcast.lane.b32.xlu0 %v7290, 256
        %v7293 = vpop.permute.xlu0 %7292
        %s7295 = sor.u32 256, 8
        %7296 = vbcast.lane.b32.xlu0 %v7290, %s7295
        %v7297 = vpop.permute.xlu0 %7296
        %v7298 = vlaneseq
        %v7299 = vshrl.u32 %v7298, 7
        %v7300 = vsub.s32 5, %v7299
        %v7301 = vrot.slane %v7154, %v7300
        %7303 = vbcast.lane.b32.xlu0 %v7301, 256
        %v7304 = vpop.permute.xlu0 %7303
        %s7306 = sor.u32 256, 8
        %7307 = vbcast.lane.b32.xlu0 %v7301, %s7306
        %v7308 = vpop.permute.xlu0 %7307
        %v7309 = vlaneseq
        %v7310 = vshrl.u32 %v7309, 7
        %v7311 = vsub.s32 6, %v7310
        %v7312 = vrot.slane %v7154, %v7311
        %7314 = vbcast.lane.b32.xlu0 %v7312, 256
        %v7315 = vpop.permute.xlu0 %7314
        %s7317 = sor.u32 256, 8
        %7318 = vbcast.lane.b32.xlu0 %v7312, %s7317
        %v7319 = vpop.permute.xlu0 %7318
        %v7320 = vlaneseq
        %v7321 = vshrl.u32 %v7320, 7
        %v7322 = vsub.s32 7, %v7321
        %v7323 = vrot.slane %v7154, %v7322
        %7325 = vbcast.lane.b32.xlu0 %v7323, 256
        %v7326 = vpop.permute.xlu0 %7325
        %s7328 = sor.u32 256, 8
        %7329 = vbcast.lane.b32.xlu0 %v7323, %s7328
        %v7330 = vpop.permute.xlu0 %7329
        %v7331 = vmul.f32 %v4569, %v7161
        %v7332 = vmul.f32 %v4570, %v7165
        %v7333 = vmul.f32 %v4571, %v7172
        %v7334 = vmul.f32 %v4572, %v7176
        %v7335 = vmul.f32 %v4573, %v7183
        %v7336 = vmul.f32 %v4574, %v7187
        %v7337 = vmul.f32 %v4575, %v7194
        %v7338 = vmul.f32 %v4576, %v7198
        %v7339 = vmul.f32 %v4577, %v7205
        %v7340 = vmul.f32 %v4578, %v7209
        %v7341 = vmul.f32 %v4579, %v7216
        %v7342 = vmul.f32 %v4580, %v7220
        %v7343 = vmul.f32 %v4581, %v7227
        %v7344 = vmul.f32 %v4582, %v7231
        %v7345 = vmul.f32 %v4583, %v7238
        %v7346 = vmul.f32 %v4584, %v7242
        %v7347 = vmul.f32 %v4585, %v7249
        %v7348 = vmul.f32 %v4586, %v7253
        %v7349 = vmul.f32 %v4587, %v7260
        %v7350 = vmul.f32 %v4588, %v7264
        %v7351 = vmul.f32 %v4589, %v7271
        %v7352 = vmul.f32 %v4590, %v7275
        %v7353 = vmul.f32 %v4591, %v7282
        %v7354 = vmul.f32 %v4592, %v7286
        %v7355 = vmul.f32 %v4593, %v7293
        %v7356 = vmul.f32 %v4594, %v7297
        %v7357 = vmul.f32 %v4595, %v7304
        %v7358 = vmul.f32 %v4596, %v7308
        %v7359 = vmul.f32 %v4597, %v7315
        %v7360 = vmul.f32 %v4598, %v7319
        %v7361 = vmul.f32 %v4599, %v7326
        %v7362 = vmul.f32 %v4600, %v7330
        %7363 = vst.msk [vmem:[%s421] sm:$0xff] %vm985, %v7331
        %7364 = vst.msk [vmem:[%s421 + $0x8] sm:$0xff] %vm985, %v7332
        %7365 = vst.msk [vmem:[%s421 + $0x10] sm:$0xff] %vm985, %v7333
        %7366 = vst.msk [vmem:[%s421 + $0x18] sm:$0xff] %vm985, %v7334
        %7367 = vst.msk [vmem:[%s421 + $0x20] sm:$0xff] %vm985, %v7335
        %7368 = vst.msk [vmem:[%s421 + $0x28] sm:$0xff] %vm985, %v7336
        %7369 = vst.msk [vmem:[%s421 + $0x30] sm:$0xff] %vm985, %v7337
        %7370 = vst.msk [vmem:[%s421 + $0x38] sm:$0xff] %vm985, %v7338
        %7371 = vst.msk [vmem:[%s421 + $0x40] sm:$0xff] %vm985, %v7339
        %7372 = vst.msk [vmem:[%s421 + $0x48] sm:$0xff] %vm985, %v7340
        %7373 = vst.msk [vmem:[%s421 + $0x50] sm:$0xff] %vm985, %v7341
        %7374 = vst.msk [vmem:[%s421 + $0x58] sm:$0xff] %vm985, %v7342
        %7375 = vst.msk [vmem:[%s421 + $0x60] sm:$0xff] %vm985, %v7343
        %7376 = vst.msk [vmem:[%s421 + $0x68] sm:$0xff] %vm985, %v7344
        %7377 = vst.msk [vmem:[%s421 + $0x70] sm:$0xff] %vm985, %v7345
        %7378 = vst.msk [vmem:[%s421 + $0x78] sm:$0xff] %vm985, %v7346
        %7379 = vst.msk [vmem:[%s421 + $0x80] sm:$0xff] %vm985, %v7347
        %7380 = vst.msk [vmem:[%s421 + $0x88] sm:$0xff] %vm985, %v7348
        %7381 = vst.msk [vmem:[%s421 + $0x90] sm:$0xff] %vm985, %v7349
        %7382 = vst.msk [vmem:[%s421 + $0x98] sm:$0xff] %vm985, %v7350
        %7383 = vst.msk [vmem:[%s421 + $0xa0] sm:$0xff] %vm985, %v7351
        %7384 = vst.msk [vmem:[%s421 + $0xa8] sm:$0xff] %vm985, %v7352
        %7385 = vst.msk [vmem:[%s421 + $0xb0] sm:$0xff] %vm985, %v7353
        %7386 = vst.msk [vmem:[%s421 + $0xb8] sm:$0xff] %vm985, %v7354
        %7387 = vst.msk [vmem:[%s421 + $0xc0] sm:$0xff] %vm985, %v7355
        %7388 = vst.msk [vmem:[%s421 + $0xc8] sm:$0xff] %vm985, %v7356
        %7389 = vst.msk [vmem:[%s421 + $0xd0] sm:$0xff] %vm985, %v7357
        %7390 = vst.msk [vmem:[%s421 + $0xd8] sm:$0xff] %vm985, %v7358
        %7391 = vst.msk [vmem:[%s421 + $0xe0] sm:$0xff] %vm985, %v7359
        %7392 = vst.msk [vmem:[%s421 + $0xe8] sm:$0xff] %vm985, %v7360
        %7393 = vst.msk [vmem:[%s421 + $0xf0] sm:$0xff] %vm985, %v7361
        %7394 = vst.msk [vmem:[%s421 + $0xf8] sm:$0xff] %vm985, %v7362
        %p7395 = scmp.lt.s32.totalorder %s24, 1
        %s7396 = scalar_select %p7395, %s24, 1
        %s7397 = smul.addr %s7396, 32
        %s7398 = smul.addr %s7397, 8
        %s7399 = scalar_lea.vmem %s11, %s7398
        // Predicated region
        $region69: #{decoder_block_forward.1} parent=63 // pred_check
          %p7400 = pneg %p283
        $region70: #{decoder_block_forward.1} parent=63 // pred_check_branch
          %7402 = sbr.rel (%p7400) target = $region72
        $region71: #{decoder_block_forward.1} parent=63 // pred_region
          _
        $region72: #{decoder_block_forward.1} parent=63 // pred_fallthru
          _
      $region64: #{decoder_block_forward.1} parent=5 // pred_fallthru
        _
      %p7403 = scmp.le.s32.totalorder 2, %s19
      // Predicated region
      $region73: #{decoder_block_forward.1} parent=5 // pred_check
        %p7404 = pneg %p7403
      $region74: #{decoder_block_forward.1} parent=5 // pred_check_branch
        %7406 = sbr.rel (%p7404) target = $region76
      $region75: #{decoder_block_forward.1} parent=5 // pred_region
        %s7407 = ssub.s32 %s19, 2
        // Predicated region
        $region77: #{decoder_block_forward.1} parent=75 // pred_check
          %p7408 = pneg %p289
        $region78: #{decoder_block_forward.1} parent=75 // pred_check_branch
          %7410 = sbr.rel (%p7408) target = $region80
        $region79: #{decoder_block_forward.1} parent=75 // pred_region
          %p7411 = scmp.lt.s32.totalorder %s25, 1
          %s7412 = scalar_select %p7411, %s25, 1
          %s7413 = smul.addr %s7412, 32
          %s7414 = smul.addr %s7413, 8
          %s7415 = scalar_lea.vmem %s11, %s7414
        $region80: #{decoder_block_forward.1} parent=75 // pred_fallthru
          _
      $region76: #{decoder_block_forward.1} parent=5 // pred_fallthru
        _
    $region6: #{decoder_block_forward.1} parent=1 // loop_footer
      %s23 = sadd.s32 1, %s19
    $region7: #{decoder_block_forward.1} parent=1 // loop_footer_branch
      %18 = sbr.rel target = $region3
    $region8: #{decoder_block_forward.1} parent=1 // loop_exit
      _
    %7416 = vsyncpa [#allocation8], 1
    %s7417 = scalar_lea.sflag [#allocation8], 1
    %7418 = vsyncpa %s7417, 1

</llo_original>
